<compile_context>
chip_gen: v5e
topology: v5e:2x2
jax: 0.10.0
libtpu: 0.0.40
codegen_flags: <defaults>
</compile_context>

<pallas_src>
import functools

import jax
import jax.numpy as jnp
from jax.experimental import pallas as pl
from jax.experimental.pallas import tpu as pltpu

T_QRELU = 32.0            # qReLU t
BN_EPS = 1e-5             # nn.BatchNorm2d default eps
_SUB = 8                  # sublane granularity
_P0 = 7                   # head pad rows -> interior offset (Wp + 8) is aligned
_P1 = 9                   # tail pad rows (>= 2 keeps edge-tap slices in bounds)
_VMEM_BUDGET = 20 * 1024 * 1024   # conservative per-step working-set target


def _round_up(x, m):
    return (x + m - 1) // m * m


def _basic_block_kernel(x_ref, w1_ref, w2_ref, c_ref, mask_ref, out_ref,
                        mid_ref, *, Wp, Mtot, RT, Cp):
    """One grid step == Nb images, flattened-row (row stride Wp) layout.

    x_ref   : [RT, Cp]    bf16  zero-padded input, flattened
    w1/w2   : [9, Cp, Cp] bf16  tap weights, w[ky*3+kx, ci, co]
    c_ref   : [6, Cp]     f32   folded constants rows: A1,B1,C2,E2,F2,G2
    mask_ref: [Mtot, 1]   f32   1 on valid (h<H, w<W) output rows, else 0
    out_ref : [Mtot, Cp]  f32
    mid_ref : [RT, Cp]    bf16  persistent scratch: padded conv2 input (q1)
    """
    off = Wp + _SUB                      # 8-aligned start of the interior slab
    t = T_QRELU

    def conv9(src_ref, w_ref):
        # 9 tap matmuls; each LHS is a contiguous leading-dim shift (no copy).
        acc = None
        for tap in range(9):
            ky, kx = divmod(tap, 3)
            lhs = src_ref[pl.ds(_P0 + ky * Wp + kx, Mtot), :]
            d = jnp.dot(lhs, w_ref[tap], preferred_element_type=jnp.float32)
            acc = d if acc is None else acc + d
        return acc

    # conv1 -> bn1 -> qrelu1 (folded):  q1 = clip(floor(h1*A1 + B1), 0, t)
    h1 = conv9(x_ref, w1_ref)
    z1 = h1 * c_ref[0:1, :] + c_ref[1:2, :]
    q1 = jnp.clip(jnp.floor(z1), 0.0, t) * mask_ref[...]

    # Rebuild the padded conv2 input in the same flattened layout.  The row
    # mask already zeroes every halo row/column inside the single contiguous
    # store; only the head/tail slabs outside it need explicit zeroing (done
    # every step -> correct under megacore 'parallel' sharding).
    mid_ref[pl.ds(0, off), :] = jnp.zeros((off, Cp), jnp.bfloat16)
    mid_ref[pl.ds(off + Mtot, RT - off - Mtot), :] = jnp.zeros(
        (RT - off - Mtot, Cp), jnp.bfloat16)
    mid_ref[pl.ds(off, Mtot), :] = q1.astype(jnp.bfloat16)

    # conv2 -> bn2 -> +residual -> qrelu2 (folded):
    #   z2 = conv2(q1)*C2 + x*E2 + F2 ; out = clip(floor(z2), 0, t) * G2
    h2 = conv9(mid_ref, w2_ref)
    res = x_ref[pl.ds(off, Mtot), :].astype(jnp.float32)
    z2 = h2 * c_ref[2:3, :] + res * c_ref[3:4, :] + c_ref[4:5, :]
    out_ref[...] = jnp.clip(jnp.floor(z2), 0.0, t) * c_ref[5:6, :]


def _fold_constants(params, C, Cp):
    t = T_QRELU

    def fold_bn(bn):
        s = bn["gamma"] / jnp.sqrt(bn["var"] + BN_EPS)
        b = bn["beta"] - bn["mean"] * s
        return s.astype(jnp.float32), b.astype(jnp.float32)

    s1, b1 = fold_bn(params["bn1"])
    s2, b2 = fold_bn(params["bn2"])
    up1 = jnp.asarray(params["up1"], jnp.float32).reshape(())
    up2 = jnp.asarray(params["up2"], jnp.float32).reshape(())

    padc = lambda v: jnp.pad(v, (0, Cp - C))
    a1 = padc(s1 * t / up1)                       # z1 = h1*A1 + B1
    b1c = padc(b1 * t / up1 + 0.5)
    c2 = padc(s2 * up1 / up2)                     # absorbs qrelu1's *up1/t
    e2 = jnp.full((Cp,), t / up2, jnp.float32)    # residual scale
    f2 = padc(b2 * t / up2 + 0.5)
    g2 = jnp.full((Cp,), up2 / t, jnp.float32)    # final rescale
    return jnp.stack([a1, b1c, c2, e2, f2, g2], axis=0).astype(jnp.float32)


def _prep_weights(w_oihw, C, Cp):
    # OIHW -> [ky, kx, ci, co] -> [9, Cp, Cp] bf16 per-tap slabs.
    w = jnp.transpose(jnp.asarray(w_oihw, jnp.float32), (2, 3, 1, 0))
    w = jnp.pad(w, ((0, 0), (0, 0), (0, Cp - C), (0, Cp - C)))
    return w.reshape(9, Cp, Cp).astype(jnp.bfloat16)


def _vmem_bytes(nb, R1, Wp, Cp):
    rt = nb * R1 + _P0 + _P1
    mtot = nb * R1 - 2 * Wp
    b = 2 * rt * Cp * 2            # x block, double buffered, bf16
    b += 2 * mtot * Cp * 4         # out block, double buffered, f32
    b += rt * Cp * 2               # mid scratch, bf16
    b += 2 * 2 * 9 * Cp * Cp * 2   # both weight arrays, double buffered, bf16
    b += 2 * (6 * Cp + mtot) * 4   # consts + mask
    b += 6 * mtot * Cp * 4         # headroom for f32 temporaries
    return b


def _pick_nb(N, R1, Wp, Cp):
    best = 0
    for nb in range(1, N + 1):
        if N % nb:
            continue
        if N >= 2 and N // nb < 2:
            continue                  # keep >= 2 grid steps for v7x megacore
        if _vmem_bytes(nb, R1, Wp, Cp) <= _VMEM_BUDGET:
            best = max(best, nb)
    if best == 0:
        # TODO(synk): H-row tiling with a 2-row halo for very large images.
        raise NotImplementedError(
            "per-image working set exceeds the VMEM budget; H-row tiling is "
            "not implemented")
    return best


def basic_block_forward(x_nchw, params, *, stride=1):
    """Forward of BasicBlock(inplanes=C, planes=C, stride=1, downsample=None).

    x_nchw: [N, C, H, W] float32 (PyTorch layout). Returns [N, C, H, W] f32.
    """
    if stride != 1 or params.get("downsample") is not None:
        raise NotImplementedError("stride>1 / downsample path not implemented")

    N, C, H, W = x_nchw.shape
    w1, w2 = params["w1"], params["w2"]
    assert w1.shape == (C, C, 3, 3) and w2.shape == (C, C, 3, 3), \
        "identity residual requires inplanes == planes (stride=1)"

    Cp = _round_up(C, _SUB)       # lane-compact channels (no 128-lane zero fill)
    Wp = _round_up(W + 2, _SUB)   # flattened row stride
    R1 = (H + 2) * Wp             # flattened rows per padded image

    Nb = _pick_nb(N, R1, Wp, Cp)
    G = N // Nb                   # grid size
    RT = Nb * R1 + _P0 + _P1      # flattened rows per grid block
    Mtot = Nb * R1 - 2 * Wp       # conv-output rows per grid block

    consts = _fold_constants(params, C, Cp)
    w1p = _prep_weights(w1, C, Cp)
    w2p = _prep_weights(w2, C, Cp)

    # ---- input: NCHW -> NHWC, pad (1px halo + width-to-Wp + channels),
    #      flatten rows, group Nb images per block, ship as bf16 -------------
    x_nhwc = jnp.transpose(jnp.asarray(x_nchw, jnp.float32), (0, 2, 3, 1))
    xp = jnp.pad(x_nhwc, ((0, 0), (1, 1), (1, Wp - W - 1), (0, Cp - C)))
    xflat = xp.reshape(G, Nb * R1, Cp)
    xflat = jnp.pad(xflat, ((0, 0), (_P0, _P1), (0, 0))).astype(jnp.bfloat16)

    # ---- row mask: 1 where the flattened output row is a real pixel --------
    m_idx = jnp.arange(Mtot, dtype=jnp.int32)
    col = m_idx % Wp
    row = (m_idx // Wp) % (H + 2)
    mask = ((col < W) & (row < H)).astype(jnp.float32).reshape(Mtot, 1)

    kernel = functools.partial(_basic_block_kernel, Wp=Wp, Mtot=Mtot, RT=RT,
                               Cp=Cp)

    flops = int(N) * H * W * 9 * C * C * 2 * 2      # two 3x3 convs, 2*MACs
    bytes_accessed = int(xflat.size * 2 + G * Mtot * Cp * 4
                         + w1p.size * 2 + w2p.size * 2
                         + consts.size * 4 + mask.size * 4)
    vmem_limit = int(min(max(2 * _vmem_bytes(Nb, R1, Wp, Cp),
                             32 * 1024 * 1024), 48 * 1024 * 1024))

    out_flat = pl.pallas_call(
        kernel,
        out_shape=jax.ShapeDtypeStruct((G, Mtot, Cp), jnp.float32),
        grid_spec=pltpu.PrefetchScalarGridSpec(
            num_scalar_prefetch=0,
            grid=(G,),
            in_specs=[
                pl.BlockSpec((None, RT, Cp), lambda i: (i, 0, 0)),   # x
                pl.BlockSpec((9, Cp, Cp), lambda i: (0, 0, 0)),      # w1
                pl.BlockSpec((9, Cp, Cp), lambda i: (0, 0, 0)),      # w2
                pl.BlockSpec((6, Cp), lambda i: (0, 0)),             # consts
                pl.BlockSpec((Mtot, 1), lambda i: (0, 0)),           # mask
            ],
            out_specs=pl.BlockSpec((None, Mtot, Cp), lambda i: (i, 0, 0)),
            scratch_shapes=[pltpu.VMEM((RT, Cp), jnp.bfloat16)],
        ),
        compiler_params=pltpu.CompilerParams(
            dimension_semantics=("parallel",),
            vmem_limit_bytes=vmem_limit,
        ),
        cost_estimate=pl.CostEstimate(flops=flops, transcendentals=0,
                                      bytes_accessed=bytes_accessed),
    )(xflat, w1p, w2p, consts, mask)

    # ---- decode: drop junk rows/cols, un-flatten, NHWC -> NCHW -------------
    out = out_flat.reshape(G, Nb * (H + 2) - 2, Wp, Cp)
    out = jnp.pad(out, ((0, 0), (0, 2), (0, 0), (0, 0)))
    out = out.reshape(G, Nb, H + 2, Wp, Cp)[:, :, :H, :W, :C]
    return jnp.transpose(out.reshape(N, H, W, C), (0, 3, 1, 2))


def _reference(x, params):
    """Pure-JAX f32 reference of the module's forward (inference-form BN)."""
    def conv(v, w):
        return jax.lax.conv_general_dilated(
            v, w, window_strides=(1, 1), padding=((1, 1), (1, 1)),
            dimension_numbers=("NCHW", "OIHW", "NCHW"))

    def bn(v, p):
        s = p["gamma"] / jnp.sqrt(p["var"] + BN_EPS)
        b = p["beta"] - p["mean"] * s
        return v * s[None, :, None, None] + b[None, :, None, None]

    def qrelu(v, up):
        up = jnp.asarray(up, jnp.float32).reshape(())
        y = v / up
        y = jnp.floor(y * T_QRELU + 0.5) / T_QRELU
        return jnp.clip(y, 0.0, 1.0) * up

    out = qrelu(bn(conv(x, params["w1"]), params["bn1"]), params["up1"])
    out = bn(conv(out, params["w2"]), params["bn2"]) + x
    return qrelu(out, params["up2"])


if __name__ == "__main__":
    key = jax.random.PRNGKey(0)
    ks = jax.random.split(key, 11)

    N, C, H, W = 2, 4, 16, 16   # inplanes = planes = 4, stride = 1

    x = jax.random.normal(ks[0], (N, C, H, W), jnp.float32)

    def make_bn(k0, k1, k2, k3):
        return {
            "gamma": 1.0 + 0.1 * jax.random.normal(k0, (C,), jnp.float32),
            "beta": 0.1 * jax.random.normal(k1, (C,), jnp.float32),
            "mean": 0.1 * jax.random.normal(k2, (C,), jnp.float32),
            "var": 0.5 + jax.nn.softplus(jax.random.normal(k3, (C,), jnp.float32)),
        }

    params = {
        # nn.Conv2d weight layout [out_ch, in_ch, kh, kw]
        "w1": 0.1 * jax.random.normal(ks[1], (C, C, 3, 3), jnp.float32),
        "w2": 0.1 * jax.random.normal(ks[2], (C, C, 3, 3), jnp.float32),
        "bn1": make_bn(ks[3], ks[4], ks[5], ks[6]),
        "bn2": make_bn(ks[7], ks[8], ks[9], ks[10]),
        "up1": jnp.array([2.0], jnp.float32),   # qReLU default up=2.0
        "up2": jnp.array([2.0], jnp.float32),
    }

    out = basic_block_forward(x, params)
    jax.block_until_ready(out)
    assert out.shape == (N, C, H, W)
    assert out.dtype == jnp.float32

    # Loose-tolerance self-check vs a pure-JAX f32 reference.  The kernel feeds
    # the convs bf16 operands, so values near a floor() boundary can move by a
    # quantization step (up/t = 0.0625); anything structural would be off O(1).
    ref = _reference(x, params)
    max_err = float(jnp.max(jnp.abs(out - ref)))
    assert max_err < 0.2, f"max abs err {max_err}"

    print("KERNEL_OK")
</pallas_src>

<mosaic_0001>
module attributes {stable_mosaic.version = 11 : i64} {
  func.func @_basic_block_kernel(%arg0: i32, %arg1: memref<1x448x8xbf16, #tpu.memory_space<vmem>>, %arg2: memref<9x8x8xbf16, #tpu.memory_space<vmem>>, %arg3: memref<9x8x8xbf16, #tpu.memory_space<vmem>>, %arg4: memref<6x8xf32, #tpu.memory_space<vmem>>, %arg5: memref<384x1xf32, #tpu.memory_space<vmem>>, %arg6: memref<1x384x8xf32, #tpu.memory_space<vmem>>, %arg7: memref<448x8xbf16, #tpu.memory_space<vmem>>) attributes {dimension_semantics = [#tpu.dimension_semantics<parallel>], iteration_bounds = array<i64: 2>, scalar_prefetch = 0 : i64, scratch_operands = 1 : i64, tpu.core_type = #tpu.core_type<tc>, window_params = [{transform_indices = @transform_0, window_bounds = array<i64: 1, 448, 8>}, {pipeline_mode = #tpu.pipeline_mode<synchronous>, transform_indices = @transform_1, window_bounds = array<i64: 9, 8, 8>}, {pipeline_mode = #tpu.pipeline_mode<synchronous>, transform_indices = @transform_2, window_bounds = array<i64: 9, 8, 8>}, {pipeline_mode = #tpu.pipeline_mode<synchronous>, transform_indices = @transform_3, window_bounds = array<i64: 6, 8>}, {pipeline_mode = #tpu.pipeline_mode<synchronous>, transform_indices = @transform_4, window_bounds = array<i64: 384, 1>}, {transform_indices = @transform_5, window_bounds = array<i64: 1, 384, 8>}]} {
    %c0 = arith.constant 0 : index
    %c7 = arith.constant 7 : index
    %c0_0 = arith.constant 0 : index
    %0 = vector.load %arg1[%c0, %c7, %c0_0] : memref<1x448x8xbf16, #tpu.memory_space<vmem>>, vector<1x384x8xbf16>
    %1 = vector.shape_cast %0 : vector<1x384x8xbf16> to vector<384x8xbf16>
    %c0_1 = arith.constant 0 : index
    %c0_2 = arith.constant 0 : index
    %c0_3 = arith.constant 0 : index
    %2 = vector.load %arg2[%c0_1, %c0_2, %c0_3] : memref<9x8x8xbf16, #tpu.memory_space<vmem>>, vector<1x8x8xbf16>
    %3 = vector.shape_cast %2 : vector<1x8x8xbf16> to vector<8x8xbf16>
    %cst = arith.constant dense<0.000000e+00> : vector<384x8xf32>
    %4 = tpu.matmul %1, %3, %cst {dimension_numbers = #tpu.dot_dimension_numbers<[1], [0], [0], [1], [0, 0, 1, 1], [], []>} : vector<384x8xbf16>, vector<8x8xbf16>, vector<384x8xf32> -> vector<384x8xf32>
    %c0_4 = arith.constant 0 : index
    %c8 = arith.constant 8 : index
    %c0_5 = arith.constant 0 : index
    %5 = vector.load %arg1[%c0_4, %c8, %c0_5] : memref<1x448x8xbf16, #tpu.memory_space<vmem>>, vector<1x384x8xbf16>
    %6 = vector.shape_cast %5 : vector<1x384x8xbf16> to vector<384x8xbf16>
    %c1 = arith.constant 1 : index
    %c0_6 = arith.constant 0 : index
    %c0_7 = arith.constant 0 : index
    %7 = vector.load %arg2[%c1, %c0_6, %c0_7] : memref<9x8x8xbf16, #tpu.memory_space<vmem>>, vector<1x8x8xbf16>
    %8 = vector.shape_cast %7 : vector<1x8x8xbf16> to vector<8x8xbf16>
    %cst_8 = arith.constant dense<0.000000e+00> : vector<384x8xf32>
    %9 = tpu.matmul %6, %8, %cst_8 {dimension_numbers = #tpu.dot_dimension_numbers<[1], [0], [0], [1], [0, 0, 1, 1], [], []>} : vector<384x8xbf16>, vector<8x8xbf16>, vector<384x8xf32> -> vector<384x8xf32>
    %10 = arith.addf %4, %9 : vector<384x8xf32>
    %c0_9 = arith.constant 0 : index
    %c9 = arith.constant 9 : index
    %c0_10 = arith.constant 0 : index
    %11 = vector.load %arg1[%c0_9, %c9, %c0_10] : memref<1x448x8xbf16, #tpu.memory_space<vmem>>, vector<1x384x8xbf16>
    %12 = vector.shape_cast %11 : vector<1x384x8xbf16> to vector<384x8xbf16>
    %c2 = arith.constant 2 : index
    %c0_11 = arith.constant 0 : index
    %c0_12 = arith.constant 0 : index
    %13 = vector.load %arg2[%c2, %c0_11, %c0_12] : memref<9x8x8xbf16, #tpu.memory_space<vmem>>, vector<1x8x8xbf16>
    %14 = vector.shape_cast %13 : vector<1x8x8xbf16> to vector<8x8xbf16>
    %cst_13 = arith.constant dense<0.000000e+00> : vector<384x8xf32>
    %15 = tpu.matmul %12, %14, %cst_13 {dimension_numbers = #tpu.dot_dimension_numbers<[1], [0], [0], [1], [0, 0, 1, 1], [], []>} : vector<384x8xbf16>, vector<8x8xbf16>, vector<384x8xf32> -> vector<384x8xf32>
    %16 = arith.addf %10, %15 : vector<384x8xf32>
    %c0_14 = arith.constant 0 : index
    %c31 = arith.constant 31 : index
    %c0_15 = arith.constant 0 : index
    %17 = vector.load %arg1[%c0_14, %c31, %c0_15] : memref<1x448x8xbf16, #tpu.memory_space<vmem>>, vector<1x384x8xbf16>
    %18 = vector.shape_cast %17 : vector<1x384x8xbf16> to vector<384x8xbf16>
    %c3 = arith.constant 3 : index
    %c0_16 = arith.constant 0 : index
    %c0_17 = arith.constant 0 : index
    %19 = vector.load %arg2[%c3, %c0_16, %c0_17] : memref<9x8x8xbf16, #tpu.memory_space<vmem>>, vector<1x8x8xbf16>
    %20 = vector.shape_cast %19 : vector<1x8x8xbf16> to vector<8x8xbf16>
    %cst_18 = arith.constant dense<0.000000e+00> : vector<384x8xf32>
    %21 = tpu.matmul %18, %20, %cst_18 {dimension_numbers = #tpu.dot_dimension_numbers<[1], [0], [0], [1], [0, 0, 1, 1], [], []>} : vector<384x8xbf16>, vector<8x8xbf16>, vector<384x8xf32> -> vector<384x8xf32>
    %22 = arith.addf %16, %21 : vector<384x8xf32>
    %c0_19 = arith.constant 0 : index
    %c32 = arith.constant 32 : index
    %c0_20 = arith.constant 0 : index
    %23 = vector.load %arg1[%c0_19, %c32, %c0_20] : memref<1x448x8xbf16, #tpu.memory_space<vmem>>, vector<1x384x8xbf16>
    %24 = vector.shape_cast %23 : vector<1x384x8xbf16> to vector<384x8xbf16>
    %c4 = arith.constant 4 : index
    %c0_21 = arith.constant 0 : index
    %c0_22 = arith.constant 0 : index
    %25 = vector.load %arg2[%c4, %c0_21, %c0_22] : memref<9x8x8xbf16, #tpu.memory_space<vmem>>, vector<1x8x8xbf16>
    %26 = vector.shape_cast %25 : vector<1x8x8xbf16> to vector<8x8xbf16>
    %cst_23 = arith.constant dense<0.000000e+00> : vector<384x8xf32>
    %27 = tpu.matmul %24, %26, %cst_23 {dimension_numbers = #tpu.dot_dimension_numbers<[1], [0], [0], [1], [0, 0, 1, 1], [], []>} : vector<384x8xbf16>, vector<8x8xbf16>, vector<384x8xf32> -> vector<384x8xf32>
    %28 = arith.addf %22, %27 : vector<384x8xf32>
    %c0_24 = arith.constant 0 : index
    %c33 = arith.constant 33 : index
    %c0_25 = arith.constant 0 : index
    %29 = vector.load %arg1[%c0_24, %c33, %c0_25] : memref<1x448x8xbf16, #tpu.memory_space<vmem>>, vector<1x384x8xbf16>
    %30 = vector.shape_cast %29 : vector<1x384x8xbf16> to vector<384x8xbf16>
    %c5 = arith.constant 5 : index
    %c0_26 = arith.constant 0 : index
    %c0_27 = arith.constant 0 : index
    %31 = vector.load %arg2[%c5, %c0_26, %c0_27] : memref<9x8x8xbf16, #tpu.memory_space<vmem>>, vector<1x8x8xbf16>
    %32 = vector.shape_cast %31 : vector<1x8x8xbf16> to vector<8x8xbf16>
    %cst_28 = arith.constant dense<0.000000e+00> : vector<384x8xf32>
    %33 = tpu.matmul %30, %32, %cst_28 {dimension_numbers = #tpu.dot_dimension_numbers<[1], [0], [0], [1], [0, 0, 1, 1], [], []>} : vector<384x8xbf16>, vector<8x8xbf16>, vector<384x8xf32> -> vector<384x8xf32>
    %34 = arith.addf %28, %33 : vector<384x8xf32>
    %c0_29 = arith.constant 0 : index
    %c55 = arith.constant 55 : index
    %c0_30 = arith.constant 0 : index
    %35 = vector.load %arg1[%c0_29, %c55, %c0_30] : memref<1x448x8xbf16, #tpu.memory_space<vmem>>, vector<1x384x8xbf16>
    %36 = vector.shape_cast %35 : vector<1x384x8xbf16> to vector<384x8xbf16>
    %c6 = arith.constant 6 : index
    %c0_31 = arith.constant 0 : index
    %c0_32 = arith.constant 0 : index
    %37 = vector.load %arg2[%c6, %c0_31, %c0_32] : memref<9x8x8xbf16, #tpu.memory_space<vmem>>, vector<1x8x8xbf16>
    %38 = vector.shape_cast %37 : vector<1x8x8xbf16> to vector<8x8xbf16>
    %cst_33 = arith.constant dense<0.000000e+00> : vector<384x8xf32>
    %39 = tpu.matmul %36, %38, %cst_33 {dimension_numbers = #tpu.dot_dimension_numbers<[1], [0], [0], [1], [0, 0, 1, 1], [], []>} : vector<384x8xbf16>, vector<8x8xbf16>, vector<384x8xf32> -> vector<384x8xf32>
    %40 = arith.addf %34, %39 : vector<384x8xf32>
    %c0_34 = arith.constant 0 : index
    %c56 = arith.constant 56 : index
    %c0_35 = arith.constant 0 : index
    %41 = vector.load %arg1[%c0_34, %c56, %c0_35] : memref<1x448x8xbf16, #tpu.memory_space<vmem>>, vector<1x384x8xbf16>
    %42 = vector.shape_cast %41 : vector<1x384x8xbf16> to vector<384x8xbf16>
    %c7_36 = arith.constant 7 : index
    %c0_37 = arith.constant 0 : index
    %c0_38 = arith.constant 0 : index
    %43 = vector.load %arg2[%c7_36, %c0_37, %c0_38] : memref<9x8x8xbf16, #tpu.memory_space<vmem>>, vector<1x8x8xbf16>
    %44 = vector.shape_cast %43 : vector<1x8x8xbf16> to vector<8x8xbf16>
    %cst_39 = arith.constant dense<0.000000e+00> : vector<384x8xf32>
    %45 = tpu.matmul %42, %44, %cst_39 {dimension_numbers = #tpu.dot_dimension_numbers<[1], [0], [0], [1], [0, 0, 1, 1], [], []>} : vector<384x8xbf16>, vector<8x8xbf16>, vector<384x8xf32> -> vector<384x8xf32>
    %46 = arith.addf %40, %45 : vector<384x8xf32>
    %c0_40 = arith.constant 0 : index
    %c57 = arith.constant 57 : index
    %c0_41 = arith.constant 0 : index
    %47 = vector.load %arg1[%c0_40, %c57, %c0_41] : memref<1x448x8xbf16, #tpu.memory_space<vmem>>, vector<1x384x8xbf16>
    %48 = vector.shape_cast %47 : vector<1x384x8xbf16> to vector<384x8xbf16>
    %c8_42 = arith.constant 8 : index
    %c0_43 = arith.constant 0 : index
    %c0_44 = arith.constant 0 : index
    %49 = vector.load %arg2[%c8_42, %c0_43, %c0_44] : memref<9x8x8xbf16, #tpu.memory_space<vmem>>, vector<1x8x8xbf16>
    %50 = vector.shape_cast %49 : vector<1x8x8xbf16> to vector<8x8xbf16>
    %cst_45 = arith.constant dense<0.000000e+00> : vector<384x8xf32>
    %51 = tpu.matmul %48, %50, %cst_45 {dimension_numbers = #tpu.dot_dimension_numbers<[1], [0], [0], [1], [0, 0, 1, 1], [], []>} : vector<384x8xbf16>, vector<8x8xbf16>, vector<384x8xf32> -> vector<384x8xf32>
    %52 = arith.addf %46, %51 : vector<384x8xf32>
    %c0_46 = arith.constant 0 : index
    %c0_47 = arith.constant 0 : index
    %53 = vector.load %arg4[%c0_46, %c0_47] : memref<6x8xf32, #tpu.memory_space<vmem>>, vector<1x8xf32>
    %54 = vector.broadcast %53 : vector<1x8xf32> to vector<384x8xf32>
    %55 = arith.mulf %52, %54 : vector<384x8xf32>
    %c1_48 = arith.constant 1 : index
    %c0_49 = arith.constant 0 : index
    %56 = vector.load %arg4[%c1_48, %c0_49] : memref<6x8xf32, #tpu.memory_space<vmem>>, vector<1x8xf32>
    %57 = vector.broadcast %56 : vector<1x8xf32> to vector<384x8xf32>
    %58 = arith.addf %55, %57 : vector<384x8xf32>
    %59 = math.floor %58 : vector<384x8xf32>
    %cst_50 = arith.constant 0.000000e+00 : f32
    %cst_51 = arith.constant 3.200000e+01 : f32
    %60 = vector.broadcast %cst_50 : f32 to vector<384x8xf32>
    %61 = arith.maximumf %60, %59 : vector<384x8xf32>
    %62 = vector.broadcast %cst_51 : f32 to vector<384x8xf32>
    %63 = arith.minimumf %62, %61 : vector<384x8xf32>
    %c0_52 = arith.constant 0 : index
    %c0_53 = arith.constant 0 : index
    %64 = vector.load %arg5[%c0_52, %c0_53] : memref<384x1xf32, #tpu.memory_space<vmem>>, vector<384x1xf32>
    %65 = vector.broadcast %64 : vector<384x1xf32> to vector<384x8xf32>
    %66 = arith.mulf %63, %65 : vector<384x8xf32>
    %cst_54 = arith.constant 0.000000e+00 : bf16
    %67 = vector.broadcast %cst_54 : bf16 to vector<32x8xbf16>
    %c0_55 = arith.constant 0 : index
    %c0_56 = arith.constant 0 : index
    %68 = vector.load %arg7[%c0_55, %c0_56] : memref<448x8xbf16, #tpu.memory_space<vmem>>, vector<32x8xbf16>
    tpu.vector_store %arg7[%c0_55, %c0_56], %67 {strides = array<i32>} : memref<448x8xbf16, #tpu.memory_space<vmem>>, vector<32x8xbf16>,
    %cst_57 = arith.constant 0.000000e+00 : bf16
    %69 = vector.broadcast %cst_57 : bf16 to vector<32x8xbf16>
    %c416 = arith.constant 416 : index
    %c0_58 = arith.constant 0 : index
    %70 = vector.load %arg7[%c416, %c0_58] : memref<448x8xbf16, #tpu.memory_space<vmem>>, vector<32x8xbf16>
    tpu.vector_store %arg7[%c416, %c0_58], %69 {strides = array<i32>} : memref<448x8xbf16, #tpu.memory_space<vmem>>, vector<32x8xbf16>,
    %71 = arith.truncf %66 : vector<384x8xf32> to vector<384x8xbf16>
    %c32_59 = arith.constant 32 : index
    %c0_60 = arith.constant 0 : index
    %72 = vector.load %arg7[%c32_59, %c0_60] : memref<448x8xbf16, #tpu.memory_space<vmem>>, vector<384x8xbf16>
    tpu.vector_store %arg7[%c32_59, %c0_60], %71 {strides = array<i32>} : memref<448x8xbf16, #tpu.memory_space<vmem>>, vector<384x8xbf16>,
    %c7_61 = arith.constant 7 : index
    %c0_62 = arith.constant 0 : index
    %73 = vector.load %arg7[%c7_61, %c0_62] : memref<448x8xbf16, #tpu.memory_space<vmem>>, vector<384x8xbf16>
    %c0_63 = arith.constant 0 : index
    %c0_64 = arith.constant 0 : index
    %c0_65 = arith.constant 0 : index
    %74 = vector.load %arg3[%c0_63, %c0_64, %c0_65] : memref<9x8x8xbf16, #tpu.memory_space<vmem>>, vector<1x8x8xbf16>
    %75 = vector.shape_cast %74 : vector<1x8x8xbf16> to vector<8x8xbf16>
    %cst_66 = arith.constant dense<0.000000e+00> : vector<384x8xf32>
    %76 = tpu.matmul %73, %75, %cst_66 {dimension_numbers = #tpu.dot_dimension_numbers<[1], [0], [0], [1], [0, 0, 1, 1], [], []>} : vector<384x8xbf16>, vector<8x8xbf16>, vector<384x8xf32> -> vector<384x8xf32>
    %c8_67 = arith.constant 8 : index
    %c0_68 = arith.constant 0 : index
    %77 = vector.load %arg7[%c8_67, %c0_68] : memref<448x8xbf16, #tpu.memory_space<vmem>>, vector<384x8xbf16>
    %c1_69 = arith.constant 1 : index
    %c0_70 = arith.constant 0 : index
    %c0_71 = arith.constant 0 : index
    %78 = vector.load %arg3[%c1_69, %c0_70, %c0_71] : memref<9x8x8xbf16, #tpu.memory_space<vmem>>, vector<1x8x8xbf16>
    %79 = vector.shape_cast %78 : vector<1x8x8xbf16> to vector<8x8xbf16>
    %cst_72 = arith.constant dense<0.000000e+00> : vector<384x8xf32>
    %80 = tpu.matmul %77, %79, %cst_72 {dimension_numbers = #tpu.dot_dimension_numbers<[1], [0], [0], [1], [0, 0, 1, 1], [], []>} : vector<384x8xbf16>, vector<8x8xbf16>, vector<384x8xf32> -> vector<384x8xf32>
    %81 = arith.addf %76, %80 : vector<384x8xf32>
    %c9_73 = arith.constant 9 : index
    %c0_74 = arith.constant 0 : index
    %82 = vector.load %arg7[%c9_73, %c0_74] : memref<448x8xbf16, #tpu.memory_space<vmem>>, vector<384x8xbf16>
    %c2_75 = arith.constant 2 : index
    %c0_76 = arith.constant 0 : index
    %c0_77 = arith.constant 0 : index
    %83 = vector.load %arg3[%c2_75, %c0_76, %c0_77] : memref<9x8x8xbf16, #tpu.memory_space<vmem>>, vector<1x8x8xbf16>
    %84 = vector.shape_cast %83 : vector<1x8x8xbf16> to vector<8x8xbf16>
    %cst_78 = arith.constant dense<0.000000e+00> : vector<384x8xf32>
    %85 = tpu.matmul %82, %84, %cst_78 {dimension_numbers = #tpu.dot_dimension_numbers<[1], [0], [0], [1], [0, 0, 1, 1], [], []>} : vector<384x8xbf16>, vector<8x8xbf16>, vector<384x8xf32> -> vector<384x8xf32>
    %86 = arith.addf %81, %85 : vector<384x8xf32>
    %c31_79 = arith.constant 31 : index
    %c0_80 = arith.constant 0 : index
    %87 = vector.load %arg7[%c31_79, %c0_80] : memref<448x8xbf16, #tpu.memory_space<vmem>>, vector<384x8xbf16>
    %c3_81 = arith.constant 3 : index
    %c0_82 = arith.constant 0 : index
    %c0_83 = arith.constant 0 : index
    %88 = vector.load %arg3[%c3_81, %c0_82, %c0_83] : memref<9x8x8xbf16, #tpu.memory_space<vmem>>, vector<1x8x8xbf16>
    %89 = vector.shape_cast %88 : vector<1x8x8xbf16> to vector<8x8xbf16>
    %cst_84 = arith.constant dense<0.000000e+00> : vector<384x8xf32>
    %90 = tpu.matmul %87, %89, %cst_84 {dimension_numbers = #tpu.dot_dimension_numbers<[1], [0], [0], [1], [0, 0, 1, 1], [], []>} : vector<384x8xbf16>, vector<8x8xbf16>, vector<384x8xf32> -> vector<384x8xf32>
    %91 = arith.addf %86, %90 : vector<384x8xf32>
    %c32_85 = arith.constant 32 : index
    %c0_86 = arith.constant 0 : index
    %92 = vector.load %arg7[%c32_85, %c0_86] : memref<448x8xbf16, #tpu.memory_space<vmem>>, vector<384x8xbf16>
    %c4_87 = arith.constant 4 : index
    %c0_88 = arith.constant 0 : index
    %c0_89 = arith.constant 0 : index
    %93 = vector.load %arg3[%c4_87, %c0_88, %c0_89] : memref<9x8x8xbf16, #tpu.memory_space<vmem>>, vector<1x8x8xbf16>
    %94 = vector.shape_cast %93 : vector<1x8x8xbf16> to vector<8x8xbf16>
    %cst_90 = arith.constant dense<0.000000e+00> : vector<384x8xf32>
    %95 = tpu.matmul %92, %94, %cst_90 {dimension_numbers = #tpu.dot_dimension_numbers<[1], [0], [0], [1], [0, 0, 1, 1], [], []>} : vector<384x8xbf16>, vector<8x8xbf16>, vector<384x8xf32> -> vector<384x8xf32>
    %96 = arith.addf %91, %95 : vector<384x8xf32>
    %c33_91 = arith.constant 33 : index
    %c0_92 = arith.constant 0 : index
    %97 = vector.load %arg7[%c33_91, %c0_92] : memref<448x8xbf16, #tpu.memory_space<vmem>>, vector<384x8xbf16>
    %c5_93 = arith.constant 5 : index
    %c0_94 = arith.constant 0 : index
    %c0_95 = arith.constant 0 : index
    %98 = vector.load %arg3[%c5_93, %c0_94, %c0_95] : memref<9x8x8xbf16, #tpu.memory_space<vmem>>, vector<1x8x8xbf16>
    %99 = vector.shape_cast %98 : vector<1x8x8xbf16> to vector<8x8xbf16>
    %cst_96 = arith.constant dense<0.000000e+00> : vector<384x8xf32>
    %100 = tpu.matmul %97, %99, %cst_96 {dimension_numbers = #tpu.dot_dimension_numbers<[1], [0], [0], [1], [0, 0, 1, 1], [], []>} : vector<384x8xbf16>, vector<8x8xbf16>, vector<384x8xf32> -> vector<384x8xf32>
    %101 = arith.addf %96, %100 : vector<384x8xf32>
    %c55_97 = arith.constant 55 : index
    %c0_98 = arith.constant 0 : index
    %102 = vector.load %arg7[%c55_97, %c0_98] : memref<448x8xbf16, #tpu.memory_space<vmem>>, vector<384x8xbf16>
    %c6_99 = arith.constant 6 : index
    %c0_100 = arith.constant 0 : index
    %c0_101 = arith.constant 0 : index
    %103 = vector.load %arg3[%c6_99, %c0_100, %c0_101] : memref<9x8x8xbf16, #tpu.memory_space<vmem>>, vector<1x8x8xbf16>
    %104 = vector.shape_cast %103 : vector<1x8x8xbf16> to vector<8x8xbf16>
    %cst_102 = arith.constant dense<0.000000e+00> : vector<384x8xf32>
    %105 = tpu.matmul %102, %104, %cst_102 {dimension_numbers = #tpu.dot_dimension_numbers<[1], [0], [0], [1], [0, 0, 1, 1], [], []>} : vector<384x8xbf16>, vector<8x8xbf16>, vector<384x8xf32> -> vector<384x8xf32>
    %106 = arith.addf %101, %105 : vector<384x8xf32>
    %c56_103 = arith.constant 56 : index
    %c0_104 = arith.constant 0 : index
    %107 = vector.load %arg7[%c56_103, %c0_104] : memref<448x8xbf16, #tpu.memory_space<vmem>>, vector<384x8xbf16>
    %c7_105 = arith.constant 7 : index
    %c0_106 = arith.constant 0 : index
    %c0_107 = arith.constant 0 : index
    %108 = vector.load %arg3[%c7_105, %c0_106, %c0_107] : memref<9x8x8xbf16, #tpu.memory_space<vmem>>, vector<1x8x8xbf16>
    %109 = vector.shape_cast %108 : vector<1x8x8xbf16> to vector<8x8xbf16>
    %cst_108 = arith.constant dense<0.000000e+00> : vector<384x8xf32>
    %110 = tpu.matmul %107, %109, %cst_108 {dimension_numbers = #tpu.dot_dimension_numbers<[1], [0], [0], [1], [0, 0, 1, 1], [], []>} : vector<384x8xbf16>, vector<8x8xbf16>, vector<384x8xf32> -> vector<384x8xf32>
    %111 = arith.addf %106, %110 : vector<384x8xf32>
    %c57_109 = arith.constant 57 : index
    %c0_110 = arith.constant 0 : index
    %112 = vector.load %arg7[%c57_109, %c0_110] : memref<448x8xbf16, #tpu.memory_space<vmem>>, vector<384x8xbf16>
    %c8_111 = arith.constant 8 : index
    %c0_112 = arith.constant 0 : index
    %c0_113 = arith.constant 0 : index
    %113 = vector.load %arg3[%c8_111, %c0_112, %c0_113] : memref<9x8x8xbf16, #tpu.memory_space<vmem>>, vector<1x8x8xbf16>
    %114 = vector.shape_cast %113 : vector<1x8x8xbf16> to vector<8x8xbf16>
    %cst_114 = arith.constant dense<0.000000e+00> : vector<384x8xf32>
    %115 = tpu.matmul %112, %114, %cst_114 {dimension_numbers = #tpu.dot_dimension_numbers<[1], [0], [0], [1], [0, 0, 1, 1], [], []>} : vector<384x8xbf16>, vector<8x8xbf16>, vector<384x8xf32> -> vector<384x8xf32>
    %116 = arith.addf %111, %115 : vector<384x8xf32>
    %c0_115 = arith.constant 0 : index
    %c32_116 = arith.constant 32 : index
    %c0_117 = arith.constant 0 : index
    %117 = vector.load %arg1[%c0_115, %c32_116, %c0_117] : memref<1x448x8xbf16, #tpu.memory_space<vmem>>, vector<1x384x8xbf16>
    %118 = vector.shape_cast %117 : vector<1x384x8xbf16> to vector<384x8xbf16>
    %119 = arith.extf %118 : vector<384x8xbf16> to vector<384x8xf32>
    %c2_118 = arith.constant 2 : index
    %c0_119 = arith.constant 0 : index
    %120 = vector.load %arg4[%c2_118, %c0_119] : memref<6x8xf32, #tpu.memory_space<vmem>>, vector<1x8xf32>
    %121 = vector.broadcast %120 : vector<1x8xf32> to vector<384x8xf32>
    %122 = arith.mulf %116, %121 : vector<384x8xf32>
    %c3_120 = arith.constant 3 : index
    %c0_121 = arith.constant 0 : index
    %123 = vector.load %arg4[%c3_120, %c0_121] : memref<6x8xf32, #tpu.memory_space<vmem>>, vector<1x8xf32>
    %124 = vector.broadcast %123 : vector<1x8xf32> to vector<384x8xf32>
    %125 = arith.mulf %119, %124 : vector<384x8xf32>
    %126 = arith.addf %122, %125 : vector<384x8xf32>
    %c4_122 = arith.constant 4 : index
    %c0_123 = arith.constant 0 : index
    %127 = vector.load %arg4[%c4_122, %c0_123] : memref<6x8xf32, #tpu.memory_space<vmem>>, vector<1x8xf32>
    %128 = vector.broadcast %127 : vector<1x8xf32> to vector<384x8xf32>
    %129 = arith.addf %126, %128 : vector<384x8xf32>
    %130 = math.floor %129 : vector<384x8xf32>
    %cst_124 = arith.constant 0.000000e+00 : f32
    %cst_125 = arith.constant 3.200000e+01 : f32
    %131 = vector.broadcast %cst_124 : f32 to vector<384x8xf32>
    %132 = arith.maximumf %131, %130 : vector<384x8xf32>
    %133 = vector.broadcast %cst_125 : f32 to vector<384x8xf32>
    %134 = arith.minimumf %133, %132 : vector<384x8xf32>
    %c5_126 = arith.constant 5 : index
    %c0_127 = arith.constant 0 : index
    %135 = vector.load %arg4[%c5_126, %c0_127] : memref<6x8xf32, #tpu.memory_space<vmem>>, vector<1x8xf32>
    %136 = vector.broadcast %135 : vector<1x8xf32> to vector<384x8xf32>
    %137 = arith.mulf %134, %136 : vector<384x8xf32>
    %c0_128 = arith.constant 0 : index
    %c0_129 = arith.constant 0 : index
    %c0_130 = arith.constant 0 : index
    %138 = vector.load %arg6[%c0_128, %c0_129, %c0_130] : memref<1x384x8xf32, #tpu.memory_space<vmem>>, vector<1x384x8xf32>
    %139 = vector.shape_cast %138 : vector<1x384x8xf32> to vector<384x8xf32>
    %140 = vector.shape_cast %137 : vector<384x8xf32> to vector<1x384x8xf32>
    tpu.vector_store %arg6[%c0_128, %c0_129, %c0_130], %140 {strides = array<i32>} : memref<1x384x8xf32, #tpu.memory_space<vmem>>, vector<1x384x8xf32>,
    return
  }
  func.func @transform_0(%arg0: i32) -> (i32, i32, i32) {
    %c0_i32 = arith.constant 0 : i32
    %c0_i32_0 = arith.constant 0 : i32
    %c0_i32_1 = arith.constant 0 : i32
    return %arg0, %c0_i32, %c0_i32_0 : i32, i32, i32
  }
  func.func @transform_1(%arg0: i32) -> (i32, i32, i32) {
    %c0_i32 = arith.constant 0 : i32
    %c0_i32_0 = arith.constant 0 : i32
    %c0_i32_1 = arith.constant 0 : i32
    %c0_i32_2 = arith.constant 0 : i32
    return %c0_i32, %c0_i32_0, %c0_i32_1 : i32, i32, i32
  }
  func.func @transform_2(%arg0: i32) -> (i32, i32, i32) {
    %c0_i32 = arith.constant 0 : i32
    %c0_i32_0 = arith.constant 0 : i32
    %c0_i32_1 = arith.constant 0 : i32
    %c0_i32_2 = arith.constant 0 : i32
    return %c0_i32, %c0_i32_0, %c0_i32_1 : i32, i32, i32
  }
  func.func @transform_3(%arg0: i32) -> (i32, i32) {
    %c0_i32 = arith.constant 0 : i32
    %c0_i32_0 = arith.constant 0 : i32
    %c0_i32_1 = arith.constant 0 : i32
    return %c0_i32, %c0_i32_0 : i32, i32
  }
  func.func @transform_4(%arg0: i32) -> (i32, i32) {
    %c0_i32 = arith.constant 0 : i32
    %c0_i32_0 = arith.constant 0 : i32
    %c0_i32_1 = arith.constant 0 : i32
    return %c0_i32, %c0_i32_0 : i32, i32
  }
  func.func @transform_5(%arg0: i32) -> (i32, i32, i32) {
    %c0_i32 = arith.constant 0 : i32
    %c0_i32_0 = arith.constant 0 : i32
    %c0_i32_1 = arith.constant 0 : i32
    return %arg0, %c0_i32, %c0_i32_0 : i32, i32, i32
  }
}

</mosaic_0001>

<llo_original>
// kernel: tpu_custom_call.1
$region0: #{tpu_custom_call.1}
  #allocation0 [shape = 'u32[]', space=smem, size = 0x4, offset = 0x4, fixed_abs, tag = 'smem constant byte address 0x4 - core index']
  #allocation1 [shape = 'u32[72,128]{1,0:T(1,128)}', space=vmem, size = 0x9000, scoped, tag = 'internal scratch']
  #allocation2 [shape = 'bf16[448,8]{1,0:T(8,128)(2,1)}', space=vmem, size = 0x1c000, scoped, tag = 'scratch operand']
  %s0 = inlined_call_operand.vmem [shape: bf16[2,448,8], index: 0, kind: input, shape index: {}]
  %s1 = inlined_call_operand.vmem [shape: bf16[9,8,8], index: 1, kind: input, shape index: {}]
  %s2 = inlined_call_operand.vmem [shape: bf16[9,8,8], index: 2, kind: input, shape index: {}]
  %s3 = inlined_call_operand.vmem [shape: f32[6,8], index: 3, kind: input, shape index: {}]
  %s4 = inlined_call_operand.vmem [shape: f32[384,1], index: 4, kind: input, shape index: {}]
  %s5 = inlined_call_operand.vmem [shape: f32[2,384,8], index: 5, kind: output, shape index: {}]
  %s6 = sld [smem:[#allocation0]]
  $region53: #{tpu_custom_call.1} parent=0
    _
  %s8 = ssub.s32 1, %s6
  %s9 = scalar_select 0, %s8, %s6
  loop: start=0, step=1, limit=4
  $region2: #{tpu_custom_call.1} parent=0 // loop_pre_header
    _
  $region3: #{tpu_custom_call.1} parent=0 // loop_header
    %s11 = sphi 0, %s15
    %p12 = scmp.ge.s32.totalorder %s11, 4
    %s21 = sphi 0, %s23
    %s24 = sphi 0, %s21
    %s25 = sphi 0, %s24
    %s41 = sphi 0, %s25
    %s45 = sphi 0, %s45
    %s47 = sphi 0, %s45
    %s48 = sphi 0, %s47
    %s62 = sphi 0, %s48
    %s66 = sphi 0, %s66
    %s68 = sphi 0, %s66
    %s69 = sphi 0, %s68
    %s83 = sphi 0, %s69
    %s87 = sphi 0, %s87
    %s89 = sphi 0, %s87
    %s90 = sphi 0, %s89
    %s104 = sphi 0, %s90
    %s108 = sphi 0, %s108
    %s110 = sphi 0, %s108
    %s111 = sphi 0, %s110
    %s125 = sphi 0, %s111
    %s131 = sphi 0, %s133
    %s134 = sphi 0, %s131
    %s135 = sphi 0, %s134
    %s151 = sphi 0, %s135
  $region4: #{tpu_custom_call.1} parent=0 // loop_header_branch
    %14 = sbr.rel (%p12) target = $region8
  $region5: #{tpu_custom_call.1} parent=0 // loop_body
    %s16 = ssub.s32 %s11, 1
    %s17 = ssub.s32 %s11, 2
    %s18 = sadd.s32 %s11, 1
    %s19 = ssub.s32 %s11, %s18
    %p20 = scmp.eq.s32.totalorder %s19, 0
    %s22 = sadd.s32 %s21, 1
    %s23 = scalar_select %p20, %s21, %s22
    %p26 = pneg %p20
    %p27 = scmp.eq.s32.totalorder %s11, 1
    %p28 = por %p26, %p27
    %p29 = scmp.ne.s32.totalorder %s21, %s24
    %p30 = scmp.eq.s32.totalorder %s11, 0
    %p31 = por %p29, %p30
    %p32 = scmp.ne.s32.totalorder %s21, %s24
    %p33 = scmp.eq.s32.totalorder %s16, 1
    %p34 = por %p32, %p33
    %p35 = scmp.ne.s32.totalorder %s24, %s25
    %p36 = scmp.eq.s32.totalorder %s16, 0
    %p37 = por %p35, %p36
    %p38 = scmp.ne.s32.totalorder %s24, %s25
    %p39 = scmp.eq.s32.totalorder %s17, 1
    %p40 = por %p38, %p39
    %p42 = scmp.ne.s32.totalorder %s25, %s41
    %p43 = scmp.eq.s32.totalorder %s17, 0
    %p44 = por %p42, %p43
    %s46 = sadd.s32 %s45, 1
    %p49 = scmp.eq.s32.totalorder %s11, 1
    %p50 = scmp.ne.s32.totalorder %s45, %s47
    %p51 = scmp.eq.s32.totalorder %s11, 0
    %p52 = por %p50, %p51
    %p53 = scmp.ne.s32.totalorder %s45, %s47
    %p54 = scmp.eq.s32.totalorder %s16, 1
    %p55 = por %p53, %p54
    %p56 = scmp.ne.s32.totalorder %s47, %s48
    %p57 = scmp.eq.s32.totalorder %s16, 0
    %p58 = por %p56, %p57
    %p59 = scmp.ne.s32.totalorder %s47, %s48
    %p60 = scmp.eq.s32.totalorder %s17, 1
    %p61 = por %p59, %p60
    %p63 = scmp.ne.s32.totalorder %s48, %s62
    %p64 = scmp.eq.s32.totalorder %s17, 0
    %p65 = por %p63, %p64
    %s67 = sadd.s32 %s66, 1
    %p70 = scmp.eq.s32.totalorder %s11, 1
    %p71 = scmp.ne.s32.totalorder %s66, %s68
    %p72 = scmp.eq.s32.totalorder %s11, 0
    %p73 = por %p71, %p72
    %p74 = scmp.ne.s32.totalorder %s66, %s68
    %p75 = scmp.eq.s32.totalorder %s16, 1
    %p76 = por %p74, %p75
    %p77 = scmp.ne.s32.totalorder %s68, %s69
    %p78 = scmp.eq.s32.totalorder %s16, 0
    %p79 = por %p77, %p78
    %p80 = scmp.ne.s32.totalorder %s68, %s69
    %p81 = scmp.eq.s32.totalorder %s17, 1
    %p82 = por %p80, %p81
    %p84 = scmp.ne.s32.totalorder %s69, %s83
    %p85 = scmp.eq.s32.totalorder %s17, 0
    %p86 = por %p84, %p85
    %s88 = sadd.s32 %s87, 1
    %p91 = scmp.eq.s32.totalorder %s11, 1
    %p92 = scmp.ne.s32.totalorder %s87, %s89
    %p93 = scmp.eq.s32.totalorder %s11, 0
    %p94 = por %p92, %p93
    %p95 = scmp.ne.s32.totalorder %s87, %s89
    %p96 = scmp.eq.s32.totalorder %s16, 1
    %p97 = por %p95, %p96
    %p98 = scmp.ne.s32.totalorder %s89, %s90
    %p99 = scmp.eq.s32.totalorder %s16, 0
    %p100 = por %p98, %p99
    %p101 = scmp.ne.s32.totalorder %s89, %s90
    %p102 = scmp.eq.s32.totalorder %s17, 1
    %p103 = por %p101, %p102
    %p105 = scmp.ne.s32.totalorder %s90, %s104
    %p106 = scmp.eq.s32.totalorder %s17, 0
    %p107 = por %p105, %p106
    %s109 = sadd.s32 %s108, 1
    %p112 = scmp.eq.s32.totalorder %s11, 1
    %p113 = scmp.ne.s32.totalorder %s108, %s110
    %p114 = scmp.eq.s32.totalorder %s11, 0
    %p115 = por %p113, %p114
    %p116 = scmp.ne.s32.totalorder %s108, %s110
    %p117 = scmp.eq.s32.totalorder %s16, 1
    %p118 = por %p116, %p117
    %p119 = scmp.ne.s32.totalorder %s110, %s111
    %p120 = scmp.eq.s32.totalorder %s16, 0
    %p121 = por %p119, %p120
    %p122 = scmp.ne.s32.totalorder %s110, %s111
    %p123 = scmp.eq.s32.totalorder %s17, 1
    %p124 = por %p122, %p123
    %p126 = scmp.ne.s32.totalorder %s111, %s125
    %p127 = scmp.eq.s32.totalorder %s17, 0
    %p128 = por %p126, %p127
    %s129 = ssub.s32 %s11, %s18
    %p130 = scmp.eq.s32.totalorder %s129, 0
    %s132 = sadd.s32 %s131, 1
    %s133 = scalar_select %p130, %s131, %s132
    %p136 = pneg %p130
    %p137 = scmp.eq.s32.totalorder %s11, 1
    %p138 = por %p136, %p137
    %p139 = scmp.ne.s32.totalorder %s131, %s134
    %p140 = scmp.eq.s32.totalorder %s11, 0
    %p141 = por %p139, %p140
    %p142 = scmp.ne.s32.totalorder %s131, %s134
    %p143 = scmp.eq.s32.totalorder %s16, 1
    %p144 = por %p142, %p143
    %p145 = scmp.ne.s32.totalorder %s134, %s135
    %p146 = scmp.eq.s32.totalorder %s16, 0
    %p147 = por %p145, %p146
    %p148 = scmp.ne.s32.totalorder %s134, %s135
    %p149 = scmp.eq.s32.totalorder %s17, 1
    %p150 = por %p148, %p149
    %p152 = scmp.ne.s32.totalorder %s135, %s151
    %p153 = scmp.eq.s32.totalorder %s17, 0
    %p154 = por %p152, %p153
    %p155 = scmp.le.s32.totalorder 1, %s11
    %p156 = scmp.lt.s32.totalorder %s11, 3
    %p157 = pnand %p155, %p156
    %p158 = pneg %p157
    // Predicated region
    $region9: #{tpu_custom_call.1} parent=5 // pred_check
      _
    $region10: #{tpu_custom_call.1} parent=5 // pred_check_branch
      %160 = sbr.rel (%p157) target = $region12
    $region11: #{tpu_custom_call.1} parent=5 // pred_region
      %s161 = ssub.s32 %s11, 1
      // Predicated region
      $region13: #{tpu_custom_call.1} parent=11 // pred_check
        %p162 = pneg %p58
      $region14: #{tpu_custom_call.1} parent=11 // pred_check_branch
        %164 = sbr.rel (%p162) target = $region16
      $region15: #{tpu_custom_call.1} parent=11 // pred_region
        _
      $region16: #{tpu_custom_call.1} parent=11 // pred_fallthru
        _
      // Predicated region
      $region17: #{tpu_custom_call.1} parent=11 // pred_check
        %p165 = pneg %p79
      $region18: #{tpu_custom_call.1} parent=11 // pred_check_branch
        %167 = sbr.rel (%p165) target = $region20
      $region19: #{tpu_custom_call.1} parent=11 // pred_region
        _
      $region20: #{tpu_custom_call.1} parent=11 // pred_fallthru
        _
      // Predicated region
      $region21: #{tpu_custom_call.1} parent=11 // pred_check
        %p168 = pneg %p100
      $region22: #{tpu_custom_call.1} parent=11 // pred_check_branch
        %170 = sbr.rel (%p168) target = $region24
      $region23: #{tpu_custom_call.1} parent=11 // pred_region
        _
      $region24: #{tpu_custom_call.1} parent=11 // pred_fallthru
        _
      // Predicated region
      $region25: #{tpu_custom_call.1} parent=11 // pred_check
        %p171 = pneg %p121
      $region26: #{tpu_custom_call.1} parent=11 // pred_check_branch
        %173 = sbr.rel (%p171) target = $region28
      $region27: #{tpu_custom_call.1} parent=11 // pred_region
        _
      $region28: #{tpu_custom_call.1} parent=11 // pred_fallthru
        _
    $region12: #{tpu_custom_call.1} parent=5 // pred_fallthru
      _
    %p174 = scmp.lt.s32.totalorder %s11, 2
    // Predicated region
    $region29: #{tpu_custom_call.1} parent=5 // pred_check
      %p175 = pneg %p174
    $region30: #{tpu_custom_call.1} parent=5 // pred_check_branch
      %177 = sbr.rel (%p175) target = $region32
    $region31: #{tpu_custom_call.1} parent=5 // pred_region
      // Predicated region
      $region33: #{tpu_custom_call.1} parent=31 // pred_check
        %p178 = pneg %p31
      $region34: #{tpu_custom_call.1} parent=31 // pred_check_branch
        %180 = sbr.rel (%p178) target = $region36
      $region35: #{tpu_custom_call.1} parent=31 // pred_region
        %p181 = scmp.lt.s32.totalorder %s11, 1
        %s182 = scalar_select %p181, %s11, 1
        %s183 = smul.addr %s182, 56
        %s184 = smul.addr %s183, 4
        %s185 = scalar_lea.vmem %s0, %s184
      $region36: #{tpu_custom_call.1} parent=31 // pred_fallthru
        _
    $region32: #{tpu_custom_call.1} parent=5 // pred_fallthru
      _
    %p186 = scmp.le.s32.totalorder 1, %s11
    %p187 = scmp.lt.s32.totalorder %s11, 3
    %p188 = pnand %p186, %p187
    %p189 = pneg %p188
    // Predicated region
    $region37: #{tpu_custom_call.1} parent=5 // pred_check
      _
    $region38: #{tpu_custom_call.1} parent=5 // pred_check_branch
      %191 = sbr.rel (%p188) target = $region40
    $region39: #{tpu_custom_call.1} parent=5 // pred_region
      %s192 = ssub.s32 %s11, 1
      %p193 = scmp.lt.s32.totalorder %s16, 1
      %s194 = scalar_select %p193, %s16, 1
      %s195 = smul.addr %s194, 56
      %s196 = smul.addr %s195, 4
      %s197 = scalar_lea.vmem %s0, %s196
      %p198 = pneg %p37
      %p199 = pneg %p34
      %p200 = pneg %p58
      %p201 = pneg %p55
      %p202 = pneg %p79
      %p203 = pneg %p76
      %p204 = pneg %p100
      %p205 = pneg %p97
      %p206 = pneg %p121
      %p207 = pneg %p118
      %p208 = pneg %p147
      %p209 = pneg %p144
      %p210 = scmp.lt.s32.totalorder %s16, 1
      %s211 = scalar_select %p210, %s16, 1
      %s212 = smul.addr %s211, 48
      %s213 = smul.addr %s212, 8
      %s214 = scalar_lea.vmem %s5, %s213
      %p215 = scmp.lt.s32.totalorder %s16, 1
      %s216 = scalar_select %p215, %s16, 1
      %s217 = smul.addr %s216, 56
      %s218 = smul.addr %s217, 4
      %s219 = scalar_lea.vmem %s0, %s218
      %p220 = scmp.lt.s32.totalorder %s16, 1
      %s221 = scalar_select %p220, %s16, 1
      %s222 = smul.addr %s221, 48
      %s223 = smul.addr %s222, 8
      %s224 = scalar_lea.vmem %s5, %s223
      %v226 = vld [vmem:[%s219] sm:$0x8]
      %v227 = vld [vmem:[%s219 + $0x4] sm:$0xf]
      %v228 = vld [vmem:[%s219 + $0x8] sm:$0xf]
      %v229 = vld [vmem:[%s219 + $0xc] sm:$0xf]
      %v230 = vld [vmem:[%s219 + $0x10] sm:$0xf]
      %v231 = vld [vmem:[%s219 + $0x14] sm:$0xf]
      %v232 = vld [vmem:[%s219 + $0x18] sm:$0xf]
      %v233 = vld [vmem:[%s219 + $0x1c] sm:$0xf]
      %v234 = vld [vmem:[%s219 + $0x20] sm:$0xf]
      %v235 = vld [vmem:[%s219 + $0x24] sm:$0xf]
      %v236 = vld [vmem:[%s219 + $0x28] sm:$0xf]
      %v237 = vld [vmem:[%s219 + $0x2c] sm:$0xf]
      %v238 = vld [vmem:[%s219 + $0x30] sm:$0xf]
      %v239 = vld [vmem:[%s219 + $0x34] sm:$0xf]
      %v240 = vld [vmem:[%s219 + $0x38] sm:$0xf]
      %v241 = vld [vmem:[%s219 + $0x3c] sm:$0xf]
      %v242 = vld [vmem:[%s219 + $0x40] sm:$0xf]
      %v243 = vld [vmem:[%s219 + $0x44] sm:$0xf]
      %v244 = vld [vmem:[%s219 + $0x48] sm:$0xf]
      %v245 = vld [vmem:[%s219 + $0x4c] sm:$0xf]
      %v246 = vld [vmem:[%s219 + $0x50] sm:$0xf]
      %v247 = vld [vmem:[%s219 + $0x54] sm:$0xf]
      %v248 = vld [vmem:[%s219 + $0x58] sm:$0xf]
      %v249 = vld [vmem:[%s219 + $0x5c] sm:$0xf]
      %v250 = vld [vmem:[%s219 + $0x60] sm:$0xf]
      %v251 = vld [vmem:[%s219 + $0x64] sm:$0xf]
      %v252 = vld [vmem:[%s219 + $0x68] sm:$0xf]
      %v253 = vld [vmem:[%s219 + $0x6c] sm:$0xf]
      %v254 = vld [vmem:[%s219 + $0x70] sm:$0xf]
      %v255 = vld [vmem:[%s219 + $0x74] sm:$0xf]
      %v256 = vld [vmem:[%s219 + $0x78] sm:$0xf]
      %v257 = vld [vmem:[%s219 + $0x7c] sm:$0xf]
      %v258 = vld [vmem:[%s219 + $0x80] sm:$0xf]
      %v259 = vld [vmem:[%s219 + $0x84] sm:$0xf]
      %v260 = vld [vmem:[%s219 + $0x88] sm:$0xf]
      %v261 = vld [vmem:[%s219 + $0x8c] sm:$0xf]
      %v262 = vld [vmem:[%s219 + $0x90] sm:$0xf]
      %v263 = vld [vmem:[%s219 + $0x94] sm:$0xf]
      %v264 = vld [vmem:[%s219 + $0x98] sm:$0xf]
      %v265 = vld [vmem:[%s219 + $0x9c] sm:$0xf]
      %v266 = vld [vmem:[%s219 + $0xa0] sm:$0xf]
      %v267 = vld [vmem:[%s219 + $0xa4] sm:$0xf]
      %v268 = vld [vmem:[%s219 + $0xa8] sm:$0xf]
      %v269 = vld [vmem:[%s219 + $0xac] sm:$0xf]
      %v270 = vld [vmem:[%s219 + $0xb0] sm:$0xf]
      %v271 = vld [vmem:[%s219 + $0xb4] sm:$0xf]
      %v272 = vld [vmem:[%s219 + $0xb8] sm:$0xf]
      %v273 = vld [vmem:[%s219 + $0xbc] sm:$0xf]
      %v274 = vld [vmem:[%s219 + $0xc0] sm:$0xf]
      %v275 = vld [vmem:[%s1] sm:$0xf]
      %s276 = scalar_lea.vmem %s1, 4
      %v277 = vld [vmem:[%s276] sm:$0xf]
      %v326 = vunpack.c.l.b16 %v227
      %v327 = vunpack.c.l.b16 %v228
      %v328 = vunpack.c.l.b16 %v229
      %v329 = vunpack.c.l.b16 %v230
      %v330 = vunpack.c.l.b16 %v231
      %v331 = vunpack.c.l.b16 %v232
      %v332 = vunpack.c.l.b16 %v233
      %v333 = vunpack.c.l.b16 %v234
      %v334 = vunpack.c.l.b16 %v235
      %v335 = vunpack.c.l.b16 %v236
      %v336 = vunpack.c.l.b16 %v237
      %v337 = vunpack.c.l.b16 %v238
      %v338 = vunpack.c.l.b16 %v239
      %v339 = vunpack.c.l.b16 %v240
      %v340 = vunpack.c.l.b16 %v241
      %v341 = vunpack.c.l.b16 %v242
      %v342 = vunpack.c.l.b16 %v243
      %v343 = vunpack.c.l.b16 %v244
      %v344 = vunpack.c.l.b16 %v245
      %v345 = vunpack.c.l.b16 %v246
      %v346 = vunpack.c.l.b16 %v247
      %v347 = vunpack.c.l.b16 %v248
      %v348 = vunpack.c.l.b16 %v249
      %v349 = vunpack.c.l.b16 %v250
      %v350 = vunpack.c.l.b16 %v251
      %v351 = vunpack.c.l.b16 %v252
      %v352 = vunpack.c.l.b16 %v253
      %v353 = vunpack.c.l.b16 %v254
      %v354 = vunpack.c.l.b16 %v255
      %v355 = vunpack.c.l.b16 %v256
      %v356 = vunpack.c.l.b16 %v257
      %v357 = vunpack.c.l.b16 %v258
      %v358 = vunpack.c.l.b16 %v259
      %v359 = vunpack.c.l.b16 %v260
      %v360 = vunpack.c.l.b16 %v261
      %v361 = vunpack.c.l.b16 %v262
      %v362 = vunpack.c.l.b16 %v263
      %v363 = vunpack.c.l.b16 %v264
      %v364 = vunpack.c.l.b16 %v265
      %v365 = vunpack.c.l.b16 %v266
      %v366 = vunpack.c.l.b16 %v267
      %v367 = vunpack.c.l.b16 %v268
      %v368 = vunpack.c.l.b16 %v269
      %v369 = vunpack.c.l.b16 %v270
      %v370 = vunpack.c.l.b16 %v271
      %v371 = vunpack.c.l.b16 %v272
      %v372 = vunpack.c.l.b16 %v273
      %v373 = vunpack.c.l.b16 %v274
      %v374 = vpack.c.b16 %v327, %v326
      %v375 = vpack.c.b16 %v329, %v328
      %v376 = vpack.c.b16 %v331, %v330
      %v377 = vpack.c.b16 %v333, %v332
      %v378 = vpack.c.b16 %v335, %v334
      %v379 = vpack.c.b16 %v337, %v336
      %v380 = vpack.c.b16 %v339, %v338
      %v381 = vpack.c.b16 %v341, %v340
      %v382 = vpack.c.b16 %v343, %v342
      %v383 = vpack.c.b16 %v345, %v344
      %v384 = vpack.c.b16 %v347, %v346
      %v385 = vpack.c.b16 %v349, %v348
      %v386 = vpack.c.b16 %v351, %v350
      %v387 = vpack.c.b16 %v353, %v352
      %v388 = vpack.c.b16 %v355, %v354
      %v389 = vpack.c.b16 %v357, %v356
      %v390 = vpack.c.b16 %v359, %v358
      %v391 = vpack.c.b16 %v361, %v360
      %v392 = vpack.c.b16 %v363, %v362
      %v393 = vpack.c.b16 %v365, %v364
      %v394 = vpack.c.b16 %v367, %v366
      %v395 = vpack.c.b16 %v369, %v368
      %v396 = vpack.c.b16 %v371, %v370
      %v397 = vpack.c.b16 %v373, %v372
      %vm398 = vcmask 64512
      %v400 = vsel %vm398, %v374, 0
      %v403 = vsel %vm398, %v375, 0
      %v406 = vsel %vm398, %v376, 0
      %v409 = vsel %vm398, %v377, 0
      %v412 = vsel %vm398, %v378, 0
      %v415 = vsel %vm398, %v379, 0
      %v418 = vsel %vm398, %v380, 0
      %v421 = vsel %vm398, %v381, 0
      %v424 = vsel %vm398, %v382, 0
      %v427 = vsel %vm398, %v383, 0
      %v430 = vsel %vm398, %v384, 0
      %v433 = vsel %vm398, %v385, 0
      %v436 = vsel %vm398, %v386, 0
      %v439 = vsel %vm398, %v387, 0
      %v442 = vsel %vm398, %v388, 0
      %v445 = vsel %vm398, %v389, 0
      %v448 = vsel %vm398, %v390, 0
      %v451 = vsel %vm398, %v391, 0
      %v454 = vsel %vm398, %v392, 0
      %v457 = vsel %vm398, %v393, 0
      %v460 = vsel %vm398, %v394, 0
      %v463 = vsel %vm398, %v395, 0
      %v466 = vsel %vm398, %v396, 0
      %v469 = vsel %vm398, %v397, 0
      %vm471 = vcmask 1043456
      %v473 = vsel %vm471, %v277, 0
      %475 = vmatpush.bf16.msra.mxu0 0
      %476 = vmatpush.bf16.msra.mxu0 0
      %477 = vmatpush.bf16.msra.mxu0 0
      %478 = vmatpush.bf16.msra.mxu0 0
      %479 = vmatpush.bf16.msra.mxu0 0
      %480 = vmatpush.bf16.msra.mxu0 0
      %481 = vmatpush.bf16.msra.mxu0 0
      %482 = vmatpush.bf16.msra.mxu0 %v473
      %483 = vmatmul.bf16.gmra.mxu0 %v400
      %v484 = vpop.f32.mrf.mxu0
      %v485 = vadd.f32 0.0, %v484
      %v486 = vpop.f32.mrf.mxu0
      %v487 = vadd.f32 0.0, %v486
      %488 = vmatmul.bf16.gmra.mxu0 %v403
      %v489 = vpop.f32.mrf.mxu0
      %v490 = vadd.f32 0.0, %v489
      %v491 = vpop.f32.mrf.mxu0
      %v492 = vadd.f32 0.0, %v491
      %493 = vmatmul.bf16.gmra.mxu0 %v406
      %v494 = vpop.f32.mrf.mxu0
      %v495 = vadd.f32 0.0, %v494
      %v496 = vpop.f32.mrf.mxu0
      %v497 = vadd.f32 0.0, %v496
      %498 = vmatmul.bf16.gmra.mxu0 %v409
      %v499 = vpop.f32.mrf.mxu0
      %v500 = vadd.f32 0.0, %v499
      %v501 = vpop.f32.mrf.mxu0
      %v502 = vadd.f32 0.0, %v501
      %503 = vmatmul.bf16.gmra.mxu0 %v412
      %v504 = vpop.f32.mrf.mxu0
      %v505 = vadd.f32 0.0, %v504
      %v506 = vpop.f32.mrf.mxu0
      %v507 = vadd.f32 0.0, %v506
      %508 = vmatmul.bf16.gmra.mxu0 %v415
      %v509 = vpop.f32.mrf.mxu0
      %v510 = vadd.f32 0.0, %v509
      %v511 = vpop.f32.mrf.mxu0
      %v512 = vadd.f32 0.0, %v511
      %513 = vmatmul.bf16.gmra.mxu0 %v418
      %v514 = vpop.f32.mrf.mxu0
      %v515 = vadd.f32 0.0, %v514
      %v516 = vpop.f32.mrf.mxu0
      %v517 = vadd.f32 0.0, %v516
      %518 = vmatmul.bf16.gmra.mxu0 %v421
      %v519 = vpop.f32.mrf.mxu0
      %v520 = vadd.f32 0.0, %v519
      %v521 = vpop.f32.mrf.mxu0
      %v522 = vadd.f32 0.0, %v521
      %523 = vmatmul.bf16.gmra.mxu0 %v424
      %v524 = vpop.f32.mrf.mxu0
      %v525 = vadd.f32 0.0, %v524
      %v526 = vpop.f32.mrf.mxu0
      %v527 = vadd.f32 0.0, %v526
      %528 = vmatmul.bf16.gmra.mxu0 %v427
      %v529 = vpop.f32.mrf.mxu0
      %v530 = vadd.f32 0.0, %v529
      %v531 = vpop.f32.mrf.mxu0
      %v532 = vadd.f32 0.0, %v531
      %533 = vmatmul.bf16.gmra.mxu0 %v430
      %v534 = vpop.f32.mrf.mxu0
      %v535 = vadd.f32 0.0, %v534
      %v536 = vpop.f32.mrf.mxu0
      %v537 = vadd.f32 0.0, %v536
      %538 = vmatmul.bf16.gmra.mxu0 %v433
      %v539 = vpop.f32.mrf.mxu0
      %v540 = vadd.f32 0.0, %v539
      %v541 = vpop.f32.mrf.mxu0
      %v542 = vadd.f32 0.0, %v541
      %543 = vmatmul.bf16.gmra.mxu0 %v436
      %v544 = vpop.f32.mrf.mxu0
      %v545 = vadd.f32 0.0, %v544
      %v546 = vpop.f32.mrf.mxu0
      %v547 = vadd.f32 0.0, %v546
      %548 = vmatmul.bf16.gmra.mxu0 %v439
      %v549 = vpop.f32.mrf.mxu0
      %v550 = vadd.f32 0.0, %v549
      %v551 = vpop.f32.mrf.mxu0
      %v552 = vadd.f32 0.0, %v551
      %553 = vmatmul.bf16.gmra.mxu0 %v442
      %v554 = vpop.f32.mrf.mxu0
      %v555 = vadd.f32 0.0, %v554
      %v556 = vpop.f32.mrf.mxu0
      %v557 = vadd.f32 0.0, %v556
      %558 = vmatmul.bf16.gmra.mxu0 %v445
      %v559 = vpop.f32.mrf.mxu0
      %v560 = vadd.f32 0.0, %v559
      %v561 = vpop.f32.mrf.mxu0
      %v562 = vadd.f32 0.0, %v561
      %563 = vmatmul.bf16.gmra.mxu0 %v448
      %v564 = vpop.f32.mrf.mxu0
      %v565 = vadd.f32 0.0, %v564
      %v566 = vpop.f32.mrf.mxu0
      %v567 = vadd.f32 0.0, %v566
      %568 = vmatmul.bf16.gmra.mxu0 %v451
      %v569 = vpop.f32.mrf.mxu0
      %v570 = vadd.f32 0.0, %v569
      %v571 = vpop.f32.mrf.mxu0
      %v572 = vadd.f32 0.0, %v571
      %573 = vmatmul.bf16.gmra.mxu0 %v454
      %v574 = vpop.f32.mrf.mxu0
      %v575 = vadd.f32 0.0, %v574
      %v576 = vpop.f32.mrf.mxu0
      %v577 = vadd.f32 0.0, %v576
      %578 = vmatmul.bf16.gmra.mxu0 %v457
      %v579 = vpop.f32.mrf.mxu0
      %v580 = vadd.f32 0.0, %v579
      %v581 = vpop.f32.mrf.mxu0
      %v582 = vadd.f32 0.0, %v581
      %583 = vmatmul.bf16.gmra.mxu0 %v460
      %v584 = vpop.f32.mrf.mxu0
      %v585 = vadd.f32 0.0, %v584
      %v586 = vpop.f32.mrf.mxu0
      %v587 = vadd.f32 0.0, %v586
      %588 = vmatmul.bf16.gmra.mxu0 %v463
      %v589 = vpop.f32.mrf.mxu0
      %v590 = vadd.f32 0.0, %v589
      %v591 = vpop.f32.mrf.mxu0
      %v592 = vadd.f32 0.0, %v591
      %593 = vmatmul.bf16.gmra.mxu0 %v466
      %v594 = vpop.f32.mrf.mxu0
      %v595 = vadd.f32 0.0, %v594
      %v596 = vpop.f32.mrf.mxu0
      %v597 = vadd.f32 0.0, %v596
      %598 = vmatmul.bf16.gmra.mxu0 %v469
      %v599 = vpop.f32.mrf.mxu0
      %v600 = vadd.f32 0.0, %v599
      %v601 = vpop.f32.mrf.mxu0
      %v602 = vadd.f32 0.0, %v601
      %603 = vdwg.mxu0
      %v605 = vunpack.c.l.b16 %v226
      %v606 = vpack.c.b16 %v326, %v605
      %v607 = vpack.c.b16 %v328, %v327
      %v608 = vpack.c.b16 %v330, %v329
      %v609 = vpack.c.b16 %v332, %v331
      %v610 = vpack.c.b16 %v334, %v333
      %v611 = vpack.c.b16 %v336, %v335
      %v612 = vpack.c.b16 %v338, %v337
      %v613 = vpack.c.b16 %v340, %v339
      %v614 = vpack.c.b16 %v342, %v341
      %v615 = vpack.c.b16 %v344, %v343
      %v616 = vpack.c.b16 %v346, %v345
      %v617 = vpack.c.b16 %v348, %v347
      %v618 = vpack.c.b16 %v350, %v349
      %v619 = vpack.c.b16 %v352, %v351
      %v620 = vpack.c.b16 %v354, %v353
      %v621 = vpack.c.b16 %v356, %v355
      %v622 = vpack.c.b16 %v358, %v357
      %v623 = vpack.c.b16 %v360, %v359
      %v624 = vpack.c.b16 %v362, %v361
      %v625 = vpack.c.b16 %v364, %v363
      %v626 = vpack.c.b16 %v366, %v365
      %v627 = vpack.c.b16 %v368, %v367
      %v628 = vpack.c.b16 %v370, %v369
      %v629 = vpack.c.b16 %v372, %v371
      %v630 = vpack.c.b16 %v373, %v373
      %vm631 = vsmask.f32 4352
      %v633 = vshrl.u32 %v606, 16
      %v635 = vrot.slane %v633, 3
      %v636 = vshll.u32 %v606, 16
      %v638 = vrot.slane %v636, 4
      %v639 = vor.u32 %v635, %v638
      %v641 = vshrl.u32 %v607, 16
      %v643 = vrot.slane %v641, 3
      %v644 = vshll.u32 %v607, 16
      %v646 = vrot.slane %v644, 4
      %v647 = vor.u32 %v643, %v646
      %v648 = vsel %vm631, %v639, %v647
      %v650 = vshrl.u32 %v608, 16
      %v652 = vrot.slane %v650, 3
      %v653 = vshll.u32 %v608, 16
      %v655 = vrot.slane %v653, 4
      %v656 = vor.u32 %v652, %v655
      %v657 = vsel %vm631, %v647, %v656
      %v659 = vshrl.u32 %v609, 16
      %v661 = vrot.slane %v659, 3
      %v662 = vshll.u32 %v609, 16
      %v664 = vrot.slane %v662, 4
      %v665 = vor.u32 %v661, %v664
      %v666 = vsel %vm631, %v656, %v665
      %v668 = vshrl.u32 %v610, 16
      %v670 = vrot.slane %v668, 3
      %v671 = vshll.u32 %v610, 16
      %v673 = vrot.slane %v671, 4
      %v674 = vor.u32 %v670, %v673
      %v675 = vsel %vm631, %v665, %v674
      %v677 = vshrl.u32 %v611, 16
      %v679 = vrot.slane %v677, 3
      %v680 = vshll.u32 %v611, 16
      %v682 = vrot.slane %v680, 4
      %v683 = vor.u32 %v679, %v682
      %v684 = vsel %vm631, %v674, %v683
      %v686 = vshrl.u32 %v612, 16
      %v688 = vrot.slane %v686, 3
      %v689 = vshll.u32 %v612, 16
      %v691 = vrot.slane %v689, 4
      %v692 = vor.u32 %v688, %v691
      %v693 = vsel %vm631, %v683, %v692
      %v695 = vshrl.u32 %v613, 16
      %v697 = vrot.slane %v695, 3
      %v698 = vshll.u32 %v613, 16
      %v700 = vrot.slane %v698, 4
      %v701 = vor.u32 %v697, %v700
      %v702 = vsel %vm631, %v692, %v701
      %v704 = vshrl.u32 %v614, 16
      %v706 = vrot.slane %v704, 3
      %v707 = vshll.u32 %v614, 16
      %v709 = vrot.slane %v707, 4
      %v710 = vor.u32 %v706, %v709
      %v711 = vsel %vm631, %v701, %v710
      %v713 = vshrl.u32 %v615, 16
      %v715 = vrot.slane %v713, 3
      %v716 = vshll.u32 %v615, 16
      %v718 = vrot.slane %v716, 4
      %v719 = vor.u32 %v715, %v718
      %v720 = vsel %vm631, %v710, %v719
      %v722 = vshrl.u32 %v616, 16
      %v724 = vrot.slane %v722, 3
      %v725 = vshll.u32 %v616, 16
      %v727 = vrot.slane %v725, 4
      %v728 = vor.u32 %v724, %v727
      %v729 = vsel %vm631, %v719, %v728
      %v731 = vshrl.u32 %v617, 16
      %v733 = vrot.slane %v731, 3
      %v734 = vshll.u32 %v617, 16
      %v736 = vrot.slane %v734, 4
      %v737 = vor.u32 %v733, %v736
      %v738 = vsel %vm631, %v728, %v737
      %v740 = vshrl.u32 %v618, 16
      %v742 = vrot.slane %v740, 3
      %v743 = vshll.u32 %v618, 16
      %v745 = vrot.slane %v743, 4
      %v746 = vor.u32 %v742, %v745
      %v747 = vsel %vm631, %v737, %v746
      %v749 = vshrl.u32 %v619, 16
      %v751 = vrot.slane %v749, 3
      %v752 = vshll.u32 %v619, 16
      %v754 = vrot.slane %v752, 4
      %v755 = vor.u32 %v751, %v754
      %v756 = vsel %vm631, %v746, %v755
      %v758 = vshrl.u32 %v620, 16
      %v760 = vrot.slane %v758, 3
      %v761 = vshll.u32 %v620, 16
      %v763 = vrot.slane %v761, 4
      %v764 = vor.u32 %v760, %v763
      %v765 = vsel %vm631, %v755, %v764
      %v767 = vshrl.u32 %v621, 16
      %v769 = vrot.slane %v767, 3
      %v770 = vshll.u32 %v621, 16
      %v772 = vrot.slane %v770, 4
      %v773 = vor.u32 %v769, %v772
      %v774 = vsel %vm631, %v764, %v773
      %v776 = vshrl.u32 %v622, 16
      %v778 = vrot.slane %v776, 3
      %v779 = vshll.u32 %v622, 16
      %v781 = vrot.slane %v779, 4
      %v782 = vor.u32 %v778, %v781
      %v783 = vsel %vm631, %v773, %v782
      %v785 = vshrl.u32 %v623, 16
      %v787 = vrot.slane %v785, 3
      %v788 = vshll.u32 %v623, 16
      %v790 = vrot.slane %v788, 4
      %v791 = vor.u32 %v787, %v790
      %v792 = vsel %vm631, %v782, %v791
      %v794 = vshrl.u32 %v624, 16
      %v796 = vrot.slane %v794, 3
      %v797 = vshll.u32 %v624, 16
      %v799 = vrot.slane %v797, 4
      %v800 = vor.u32 %v796, %v799
      %v801 = vsel %vm631, %v791, %v800
      %v803 = vshrl.u32 %v625, 16
      %v805 = vrot.slane %v803, 3
      %v806 = vshll.u32 %v625, 16
      %v808 = vrot.slane %v806, 4
      %v809 = vor.u32 %v805, %v808
      %v810 = vsel %vm631, %v800, %v809
      %v812 = vshrl.u32 %v626, 16
      %v814 = vrot.slane %v812, 3
      %v815 = vshll.u32 %v626, 16
      %v817 = vrot.slane %v815, 4
      %v818 = vor.u32 %v814, %v817
      %v819 = vsel %vm631, %v809, %v818
      %v821 = vshrl.u32 %v627, 16
      %v823 = vrot.slane %v821, 3
      %v824 = vshll.u32 %v627, 16
      %v826 = vrot.slane %v824, 4
      %v827 = vor.u32 %v823, %v826
      %v828 = vsel %vm631, %v818, %v827
      %v830 = vshrl.u32 %v628, 16
      %v832 = vrot.slane %v830, 3
      %v833 = vshll.u32 %v628, 16
      %v835 = vrot.slane %v833, 4
      %v836 = vor.u32 %v832, %v835
      %v837 = vsel %vm631, %v827, %v836
      %v839 = vshrl.u32 %v629, 16
      %v841 = vrot.slane %v839, 3
      %v842 = vshll.u32 %v629, 16
      %v844 = vrot.slane %v842, 4
      %v845 = vor.u32 %v841, %v844
      %v846 = vsel %vm631, %v836, %v845
      %v848 = vshrl.u32 %v630, 16
      %v850 = vrot.slane %v848, 3
      %v851 = vshll.u32 %v630, 16
      %v853 = vrot.slane %v851, 4
      %v854 = vor.u32 %v850, %v853
      %v855 = vsel %vm631, %v845, %v854
      %v857 = vsel %vm398, %v648, 0
      %v860 = vsel %vm398, %v657, 0
      %v863 = vsel %vm398, %v666, 0
      %v866 = vsel %vm398, %v675, 0
      %v869 = vsel %vm398, %v684, 0
      %v872 = vsel %vm398, %v693, 0
      %v875 = vsel %vm398, %v702, 0
      %v878 = vsel %vm398, %v711, 0
      %v881 = vsel %vm398, %v720, 0
      %v884 = vsel %vm398, %v729, 0
      %v887 = vsel %vm398, %v738, 0
      %v890 = vsel %vm398, %v747, 0
      %v893 = vsel %vm398, %v756, 0
      %v896 = vsel %vm398, %v765, 0
      %v899 = vsel %vm398, %v774, 0
      %v902 = vsel %vm398, %v783, 0
      %v905 = vsel %vm398, %v792, 0
      %v908 = vsel %vm398, %v801, 0
      %v911 = vsel %vm398, %v810, 0
      %v914 = vsel %vm398, %v819, 0
      %v917 = vsel %vm398, %v828, 0
      %v920 = vsel %vm398, %v837, 0
      %v923 = vsel %vm398, %v846, 0
      %v926 = vsel %vm398, %v855, 0
      %v929 = vsel %vm471, %v275, 0
      %931 = vmatpush.bf16.msra.mxu0 0
      %932 = vmatpush.bf16.msra.mxu0 0
      %933 = vmatpush.bf16.msra.mxu0 0
      %934 = vmatpush.bf16.msra.mxu0 0
      %935 = vmatpush.bf16.msra.mxu0 0
      %936 = vmatpush.bf16.msra.mxu0 0
      %937 = vmatpush.bf16.msra.mxu0 0
      %938 = vmatpush.bf16.msra.mxu0 %v929
      %939 = vmatmul.bf16.gmra.mxu0 %v857
      %v940 = vpop.f32.mrf.mxu0
      %v941 = vadd.f32 %v485, %v940
      %v942 = vpop.f32.mrf.mxu0
      %v943 = vadd.f32 %v487, %v942
      %944 = vmatmul.bf16.gmra.mxu0 %v860
      %v945 = vpop.f32.mrf.mxu0
      %v946 = vadd.f32 %v490, %v945
      %v947 = vpop.f32.mrf.mxu0
      %v948 = vadd.f32 %v492, %v947
      %949 = vmatmul.bf16.gmra.mxu0 %v863
      %v950 = vpop.f32.mrf.mxu0
      %v951 = vadd.f32 %v495, %v950
      %v952 = vpop.f32.mrf.mxu0
      %v953 = vadd.f32 %v497, %v952
      %954 = vmatmul.bf16.gmra.mxu0 %v866
      %v955 = vpop.f32.mrf.mxu0
      %v956 = vadd.f32 %v500, %v955
      %v957 = vpop.f32.mrf.mxu0
      %v958 = vadd.f32 %v502, %v957
      %959 = vmatmul.bf16.gmra.mxu0 %v869
      %v960 = vpop.f32.mrf.mxu0
      %v961 = vadd.f32 %v505, %v960
      %v962 = vpop.f32.mrf.mxu0
      %v963 = vadd.f32 %v507, %v962
      %964 = vmatmul.bf16.gmra.mxu0 %v872
      %v965 = vpop.f32.mrf.mxu0
      %v966 = vadd.f32 %v510, %v965
      %v967 = vpop.f32.mrf.mxu0
      %v968 = vadd.f32 %v512, %v967
      %969 = vmatmul.bf16.gmra.mxu0 %v875
      %v970 = vpop.f32.mrf.mxu0
      %v971 = vadd.f32 %v515, %v970
      %v972 = vpop.f32.mrf.mxu0
      %v973 = vadd.f32 %v517, %v972
      %974 = vmatmul.bf16.gmra.mxu0 %v878
      %v975 = vpop.f32.mrf.mxu0
      %v976 = vadd.f32 %v520, %v975
      %v977 = vpop.f32.mrf.mxu0
      %v978 = vadd.f32 %v522, %v977
      %979 = vmatmul.bf16.gmra.mxu0 %v881
      %v980 = vpop.f32.mrf.mxu0
      %v981 = vadd.f32 %v525, %v980
      %v982 = vpop.f32.mrf.mxu0
      %v983 = vadd.f32 %v527, %v982
      %984 = vmatmul.bf16.gmra.mxu0 %v884
      %v985 = vpop.f32.mrf.mxu0
      %v986 = vadd.f32 %v530, %v985
      %v987 = vpop.f32.mrf.mxu0
      %v988 = vadd.f32 %v532, %v987
      %989 = vmatmul.bf16.gmra.mxu0 %v887
      %v990 = vpop.f32.mrf.mxu0
      %v991 = vadd.f32 %v535, %v990
      %v992 = vpop.f32.mrf.mxu0
      %v993 = vadd.f32 %v537, %v992
      %994 = vmatmul.bf16.gmra.mxu0 %v890
      %v995 = vpop.f32.mrf.mxu0
      %v996 = vadd.f32 %v540, %v995
      %v997 = vpop.f32.mrf.mxu0
      %v998 = vadd.f32 %v542, %v997
      %999 = vmatmul.bf16.gmra.mxu0 %v893
      %v1000 = vpop.f32.mrf.mxu0
      %v1001 = vadd.f32 %v545, %v1000
      %v1002 = vpop.f32.mrf.mxu0
      %v1003 = vadd.f32 %v547, %v1002
      %1004 = vmatmul.bf16.gmra.mxu0 %v896
      %v1005 = vpop.f32.mrf.mxu0
      %v1006 = vadd.f32 %v550, %v1005
      %v1007 = vpop.f32.mrf.mxu0
      %v1008 = vadd.f32 %v552, %v1007
      %1009 = vmatmul.bf16.gmra.mxu0 %v899
      %v1010 = vpop.f32.mrf.mxu0
      %v1011 = vadd.f32 %v555, %v1010
      %v1012 = vpop.f32.mrf.mxu0
      %v1013 = vadd.f32 %v557, %v1012
      %1014 = vmatmul.bf16.gmra.mxu0 %v902
      %v1015 = vpop.f32.mrf.mxu0
      %v1016 = vadd.f32 %v560, %v1015
      %v1017 = vpop.f32.mrf.mxu0
      %v1018 = vadd.f32 %v562, %v1017
      %1019 = vmatmul.bf16.gmra.mxu0 %v905
      %v1020 = vpop.f32.mrf.mxu0
      %v1021 = vadd.f32 %v565, %v1020
      %v1022 = vpop.f32.mrf.mxu0
      %v1023 = vadd.f32 %v567, %v1022
      %1024 = vmatmul.bf16.gmra.mxu0 %v908
      %v1025 = vpop.f32.mrf.mxu0
      %v1026 = vadd.f32 %v570, %v1025
      %v1027 = vpop.f32.mrf.mxu0
      %v1028 = vadd.f32 %v572, %v1027
      %1029 = vmatmul.bf16.gmra.mxu0 %v911
      %v1030 = vpop.f32.mrf.mxu0
      %v1031 = vadd.f32 %v575, %v1030
      %v1032 = vpop.f32.mrf.mxu0
      %v1033 = vadd.f32 %v577, %v1032
      %1034 = vmatmul.bf16.gmra.mxu0 %v914
      %v1035 = vpop.f32.mrf.mxu0
      %v1036 = vadd.f32 %v580, %v1035
      %v1037 = vpop.f32.mrf.mxu0
      %v1038 = vadd.f32 %v582, %v1037
      %1039 = vmatmul.bf16.gmra.mxu0 %v917
      %v1040 = vpop.f32.mrf.mxu0
      %v1041 = vadd.f32 %v585, %v1040
      %v1042 = vpop.f32.mrf.mxu0
      %v1043 = vadd.f32 %v587, %v1042
      %1044 = vmatmul.bf16.gmra.mxu0 %v920
      %v1045 = vpop.f32.mrf.mxu0
      %v1046 = vadd.f32 %v590, %v1045
      %v1047 = vpop.f32.mrf.mxu0
      %v1048 = vadd.f32 %v592, %v1047
      %1049 = vmatmul.bf16.gmra.mxu0 %v923
      %v1050 = vpop.f32.mrf.mxu0
      %v1051 = vadd.f32 %v595, %v1050
      %v1052 = vpop.f32.mrf.mxu0
      %v1053 = vadd.f32 %v597, %v1052
      %1054 = vmatmul.bf16.gmra.mxu0 %v926
      %v1055 = vpop.f32.mrf.mxu0
      %v1056 = vadd.f32 %v600, %v1055
      %v1057 = vpop.f32.mrf.mxu0
      %v1058 = vadd.f32 %v602, %v1057
      %1059 = vdwg.mxu0
      %v1060 = vld [vmem:[%s219 + $0x4] sm:$0xf]
      %v1061 = vld [vmem:[%s219 + $0x8] sm:$0xf]
      %v1062 = vld [vmem:[%s219 + $0xc] sm:$0xf]
      %v1063 = vld [vmem:[%s219 + $0x10] sm:$0xf]
      %v1064 = vld [vmem:[%s219 + $0x14] sm:$0xf]
      %v1065 = vld [vmem:[%s219 + $0x18] sm:$0xf]
      %v1066 = vld [vmem:[%s219 + $0x1c] sm:$0xf]
      %v1067 = vld [vmem:[%s219 + $0x20] sm:$0xf]
      %v1068 = vld [vmem:[%s219 + $0x24] sm:$0xf]
      %v1069 = vld [vmem:[%s219 + $0x28] sm:$0xf]
      %v1070 = vld [vmem:[%s219 + $0x2c] sm:$0xf]
      %v1071 = vld [vmem:[%s219 + $0x30] sm:$0xf]
      %v1072 = vld [vmem:[%s219 + $0x34] sm:$0xf]
      %v1073 = vld [vmem:[%s219 + $0x38] sm:$0xf]
      %v1074 = vld [vmem:[%s219 + $0x3c] sm:$0xf]
      %v1075 = vld [vmem:[%s219 + $0x40] sm:$0xf]
      %v1076 = vld [vmem:[%s219 + $0x44] sm:$0xf]
      %v1077 = vld [vmem:[%s219 + $0x48] sm:$0xf]
      %v1078 = vld [vmem:[%s219 + $0x4c] sm:$0xf]
      %v1079 = vld [vmem:[%s219 + $0x50] sm:$0xf]
      %v1080 = vld [vmem:[%s219 + $0x54] sm:$0xf]
      %v1081 = vld [vmem:[%s219 + $0x58] sm:$0xf]
      %v1082 = vld [vmem:[%s219 + $0x5c] sm:$0xf]
      %v1083 = vld [vmem:[%s219 + $0x60] sm:$0xf]
      %v1084 = vld [vmem:[%s219 + $0x64] sm:$0xf]
      %v1085 = vld [vmem:[%s219 + $0x68] sm:$0xf]
      %v1086 = vld [vmem:[%s219 + $0x6c] sm:$0xf]
      %v1087 = vld [vmem:[%s219 + $0x70] sm:$0xf]
      %v1088 = vld [vmem:[%s219 + $0x74] sm:$0xf]
      %v1089 = vld [vmem:[%s219 + $0x78] sm:$0xf]
      %v1090 = vld [vmem:[%s219 + $0x7c] sm:$0xf]
      %v1091 = vld [vmem:[%s219 + $0x80] sm:$0xf]
      %v1092 = vld [vmem:[%s219 + $0x84] sm:$0xf]
      %v1093 = vld [vmem:[%s219 + $0x88] sm:$0xf]
      %v1094 = vld [vmem:[%s219 + $0x8c] sm:$0xf]
      %v1095 = vld [vmem:[%s219 + $0x90] sm:$0xf]
      %v1096 = vld [vmem:[%s219 + $0x94] sm:$0xf]
      %v1097 = vld [vmem:[%s219 + $0x98] sm:$0xf]
      %v1098 = vld [vmem:[%s219 + $0x9c] sm:$0xf]
      %v1099 = vld [vmem:[%s219 + $0xa0] sm:$0xf]
      %v1100 = vld [vmem:[%s219 + $0xa4] sm:$0xf]
      %v1101 = vld [vmem:[%s219 + $0xa8] sm:$0xf]
      %v1102 = vld [vmem:[%s219 + $0xac] sm:$0xf]
      %v1103 = vld [vmem:[%s219 + $0xb0] sm:$0xf]
      %v1104 = vld [vmem:[%s219 + $0xb4] sm:$0xf]
      %v1105 = vld [vmem:[%s219 + $0xb8] sm:$0xf]
      %v1106 = vld [vmem:[%s219 + $0xbc] sm:$0xf]
      %v1107 = vld [vmem:[%s219 + $0xc0] sm:$0xf]
      %v1108 = vld [vmem:[%s219 + $0xc4] sm:$0x1]
      %s1109 = scalar_lea.vmem %s1, 8
      %v1110 = vld [vmem:[%s1109] sm:$0xf]
      %v1160 = vunpack.c.l.b16 %v1060
      %v1161 = vunpack.c.l.b16 %v1061
      %v1162 = vunpack.c.l.b16 %v1062
      %v1163 = vunpack.c.l.b16 %v1063
      %v1164 = vunpack.c.l.b16 %v1064
      %v1165 = vunpack.c.l.b16 %v1065
      %v1166 = vunpack.c.l.b16 %v1066
      %v1167 = vunpack.c.l.b16 %v1067
      %v1168 = vunpack.c.l.b16 %v1068
      %v1169 = vunpack.c.l.b16 %v1069
      %v1170 = vunpack.c.l.b16 %v1070
      %v1171 = vunpack.c.l.b16 %v1071
      %v1172 = vunpack.c.l.b16 %v1072
      %v1173 = vunpack.c.l.b16 %v1073
      %v1174 = vunpack.c.l.b16 %v1074
      %v1175 = vunpack.c.l.b16 %v1075
      %v1176 = vunpack.c.l.b16 %v1076
      %v1177 = vunpack.c.l.b16 %v1077
      %v1178 = vunpack.c.l.b16 %v1078
      %v1179 = vunpack.c.l.b16 %v1079
      %v1180 = vunpack.c.l.b16 %v1080
      %v1181 = vunpack.c.l.b16 %v1081
      %v1182 = vunpack.c.l.b16 %v1082
      %v1183 = vunpack.c.l.b16 %v1083
      %v1184 = vunpack.c.l.b16 %v1084
      %v1185 = vunpack.c.l.b16 %v1085
      %v1186 = vunpack.c.l.b16 %v1086
      %v1187 = vunpack.c.l.b16 %v1087
      %v1188 = vunpack.c.l.b16 %v1088
      %v1189 = vunpack.c.l.b16 %v1089
      %v1190 = vunpack.c.l.b16 %v1090
      %v1191 = vunpack.c.l.b16 %v1091
      %v1192 = vunpack.c.l.b16 %v1092
      %v1193 = vunpack.c.l.b16 %v1093
      %v1194 = vunpack.c.l.b16 %v1094
      %v1195 = vunpack.c.l.b16 %v1095
      %v1196 = vunpack.c.l.b16 %v1096
      %v1197 = vunpack.c.l.b16 %v1097
      %v1198 = vunpack.c.l.b16 %v1098
      %v1199 = vunpack.c.l.b16 %v1099
      %v1200 = vunpack.c.l.b16 %v1100
      %v1201 = vunpack.c.l.b16 %v1101
      %v1202 = vunpack.c.l.b16 %v1102
      %v1203 = vunpack.c.l.b16 %v1103
      %v1204 = vunpack.c.l.b16 %v1104
      %v1205 = vunpack.c.l.b16 %v1105
      %v1206 = vunpack.c.l.b16 %v1106
      %v1207 = vunpack.c.l.b16 %v1107
      %v1208 = vunpack.c.l.b16 %v1108
      %v1209 = vpack.c.b16 %v1161, %v1160
      %v1210 = vpack.c.b16 %v1163, %v1162
      %v1211 = vpack.c.b16 %v1165, %v1164
      %v1212 = vpack.c.b16 %v1167, %v1166
      %v1213 = vpack.c.b16 %v1169, %v1168
      %v1214 = vpack.c.b16 %v1171, %v1170
      %v1215 = vpack.c.b16 %v1173, %v1172
      %v1216 = vpack.c.b16 %v1175, %v1174
      %v1217 = vpack.c.b16 %v1177, %v1176
      %v1218 = vpack.c.b16 %v1179, %v1178
      %v1219 = vpack.c.b16 %v1181, %v1180
      %v1220 = vpack.c.b16 %v1183, %v1182
      %v1221 = vpack.c.b16 %v1185, %v1184
      %v1222 = vpack.c.b16 %v1187, %v1186
      %v1223 = vpack.c.b16 %v1189, %v1188
      %v1224 = vpack.c.b16 %v1191, %v1190
      %v1225 = vpack.c.b16 %v1193, %v1192
      %v1226 = vpack.c.b16 %v1195, %v1194
      %v1227 = vpack.c.b16 %v1197, %v1196
      %v1228 = vpack.c.b16 %v1199, %v1198
      %v1229 = vpack.c.b16 %v1201, %v1200
      %v1230 = vpack.c.b16 %v1203, %v1202
      %v1231 = vpack.c.b16 %v1205, %v1204
      %v1232 = vpack.c.b16 %v1207, %v1206
      %v1233 = vpack.c.b16 %v1208, %v1208
      %vm1234 = vsmask.f32 7424
      %v1236 = vshrl.u32 %v1209, 16
      %v1238 = vshll.u32 %v1209, 16
      %v1240 = vrot.slane %v1238, 1
      %v1241 = vor.u32 %v1236, %v1240
      %v1243 = vshll.u32 %v1210, 16
      %v1245 = vrot.slane %v1243, 1
      %v1246 = vsel %vm1234, %v1241, %v1245
      %v1247 = vshrl.u32 %v1210, 16
      %v1249 = vor.u32 %v1247, %v1245
      %v1251 = vshll.u32 %v1211, 16
      %v1253 = vrot.slane %v1251, 1
      %v1254 = vsel %vm1234, %v1249, %v1253
      %v1255 = vshrl.u32 %v1211, 16
      %v1257 = vor.u32 %v1255, %v1253
      %v1259 = vshll.u32 %v1212, 16
      %v1261 = vrot.slane %v1259, 1
      %v1262 = vsel %vm1234, %v1257, %v1261
      %v1263 = vshrl.u32 %v1212, 16
      %v1265 = vor.u32 %v1263, %v1261
      %v1267 = vshll.u32 %v1213, 16
      %v1269 = vrot.slane %v1267, 1
      %v1270 = vsel %vm1234, %v1265, %v1269
      %v1271 = vshrl.u32 %v1213, 16
      %v1273 = vor.u32 %v1271, %v1269
      %v1275 = vshll.u32 %v1214, 16
      %v1277 = vrot.slane %v1275, 1
      %v1278 = vsel %vm1234, %v1273, %v1277
      %v1279 = vshrl.u32 %v1214, 16
      %v1281 = vor.u32 %v1279, %v1277
      %v1283 = vshll.u32 %v1215, 16
      %v1285 = vrot.slane %v1283, 1
      %v1286 = vsel %vm1234, %v1281, %v1285
      %v1287 = vshrl.u32 %v1215, 16
      %v1289 = vor.u32 %v1287, %v1285
      %v1291 = vshll.u32 %v1216, 16
      %v1293 = vrot.slane %v1291, 1
      %v1294 = vsel %vm1234, %v1289, %v1293
      %v1295 = vshrl.u32 %v1216, 16
      %v1297 = vor.u32 %v1295, %v1293
      %v1299 = vshll.u32 %v1217, 16
      %v1301 = vrot.slane %v1299, 1
      %v1302 = vsel %vm1234, %v1297, %v1301
      %v1303 = vshrl.u32 %v1217, 16
      %v1305 = vor.u32 %v1303, %v1301
      %v1307 = vshll.u32 %v1218, 16
      %v1309 = vrot.slane %v1307, 1
      %v1310 = vsel %vm1234, %v1305, %v1309
      %v1311 = vshrl.u32 %v1218, 16
      %v1313 = vor.u32 %v1311, %v1309
      %v1315 = vshll.u32 %v1219, 16
      %v1317 = vrot.slane %v1315, 1
      %v1318 = vsel %vm1234, %v1313, %v1317
      %v1319 = vshrl.u32 %v1219, 16
      %v1321 = vor.u32 %v1319, %v1317
      %v1323 = vshll.u32 %v1220, 16
      %v1325 = vrot.slane %v1323, 1
      %v1326 = vsel %vm1234, %v1321, %v1325
      %v1327 = vshrl.u32 %v1220, 16
      %v1329 = vor.u32 %v1327, %v1325
      %v1331 = vshll.u32 %v1221, 16
      %v1333 = vrot.slane %v1331, 1
      %v1334 = vsel %vm1234, %v1329, %v1333
      %v1335 = vshrl.u32 %v1221, 16
      %v1337 = vor.u32 %v1335, %v1333
      %v1339 = vshll.u32 %v1222, 16
      %v1341 = vrot.slane %v1339, 1
      %v1342 = vsel %vm1234, %v1337, %v1341
      %v1343 = vshrl.u32 %v1222, 16
      %v1345 = vor.u32 %v1343, %v1341
      %v1347 = vshll.u32 %v1223, 16
      %v1349 = vrot.slane %v1347, 1
      %v1350 = vsel %vm1234, %v1345, %v1349
      %v1351 = vshrl.u32 %v1223, 16
      %v1353 = vor.u32 %v1351, %v1349
      %v1355 = vshll.u32 %v1224, 16
      %v1357 = vrot.slane %v1355, 1
      %v1358 = vsel %vm1234, %v1353, %v1357
      %v1359 = vshrl.u32 %v1224, 16
      %v1361 = vor.u32 %v1359, %v1357
      %v1363 = vshll.u32 %v1225, 16
      %v1365 = vrot.slane %v1363, 1
      %v1366 = vsel %vm1234, %v1361, %v1365
      %v1367 = vshrl.u32 %v1225, 16
      %v1369 = vor.u32 %v1367, %v1365
      %v1371 = vshll.u32 %v1226, 16
      %v1373 = vrot.slane %v1371, 1
      %v1374 = vsel %vm1234, %v1369, %v1373
      %v1375 = vshrl.u32 %v1226, 16
      %v1377 = vor.u32 %v1375, %v1373
      %v1379 = vshll.u32 %v1227, 16
      %v1381 = vrot.slane %v1379, 1
      %v1382 = vsel %vm1234, %v1377, %v1381
      %v1383 = vshrl.u32 %v1227, 16
      %v1385 = vor.u32 %v1383, %v1381
      %v1387 = vshll.u32 %v1228, 16
      %v1389 = vrot.slane %v1387, 1
      %v1390 = vsel %vm1234, %v1385, %v1389
      %v1391 = vshrl.u32 %v1228, 16
      %v1393 = vor.u32 %v1391, %v1389
      %v1395 = vshll.u32 %v1229, 16
      %v1397 = vrot.slane %v1395, 1
      %v1398 = vsel %vm1234, %v1393, %v1397
      %v1399 = vshrl.u32 %v1229, 16
      %v1401 = vor.u32 %v1399, %v1397
      %v1403 = vshll.u32 %v1230, 16
      %v1405 = vrot.slane %v1403, 1
      %v1406 = vsel %vm1234, %v1401, %v1405
      %v1407 = vshrl.u32 %v1230, 16
      %v1409 = vor.u32 %v1407, %v1405
      %v1411 = vshll.u32 %v1231, 16
      %v1413 = vrot.slane %v1411, 1
      %v1414 = vsel %vm1234, %v1409, %v1413
      %v1415 = vshrl.u32 %v1231, 16
      %v1417 = vor.u32 %v1415, %v1413
      %v1419 = vshll.u32 %v1232, 16
      %v1421 = vrot.slane %v1419, 1
      %v1422 = vsel %vm1234, %v1417, %v1421
      %v1423 = vshrl.u32 %v1232, 16
      %v1425 = vor.u32 %v1423, %v1421
      %v1427 = vshll.u32 %v1233, 16
      %v1429 = vrot.slane %v1427, 1
      %v1430 = vsel %vm1234, %v1425, %v1429
      %v1432 = vsel %vm398, %v1246, 0
      %v1435 = vsel %vm398, %v1254, 0
      %v1438 = vsel %vm398, %v1262, 0
      %v1441 = vsel %vm398, %v1270, 0
      %v1444 = vsel %vm398, %v1278, 0
      %v1447 = vsel %vm398, %v1286, 0
      %v1450 = vsel %vm398, %v1294, 0
      %v1453 = vsel %vm398, %v1302, 0
      %v1456 = vsel %vm398, %v1310, 0
      %v1459 = vsel %vm398, %v1318, 0
      %v1462 = vsel %vm398, %v1326, 0
      %v1465 = vsel %vm398, %v1334, 0
      %v1468 = vsel %vm398, %v1342, 0
      %v1471 = vsel %vm398, %v1350, 0
      %v1474 = vsel %vm398, %v1358, 0
      %v1477 = vsel %vm398, %v1366, 0
      %v1480 = vsel %vm398, %v1374, 0
      %v1483 = vsel %vm398, %v1382, 0
      %v1486 = vsel %vm398, %v1390, 0
      %v1489 = vsel %vm398, %v1398, 0
      %v1492 = vsel %vm398, %v1406, 0
      %v1495 = vsel %vm398, %v1414, 0
      %v1498 = vsel %vm398, %v1422, 0
      %v1501 = vsel %vm398, %v1430, 0
      %v1504 = vsel %vm471, %v1110, 0
      %1506 = vmatpush.bf16.msra.mxu0 0
      %1507 = vmatpush.bf16.msra.mxu0 0
      %1508 = vmatpush.bf16.msra.mxu0 0
      %1509 = vmatpush.bf16.msra.mxu0 0
      %1510 = vmatpush.bf16.msra.mxu0 0
      %1511 = vmatpush.bf16.msra.mxu0 0
      %1512 = vmatpush.bf16.msra.mxu0 0
      %1513 = vmatpush.bf16.msra.mxu0 %v1504
      %1514 = vmatmul.bf16.gmra.mxu0 %v1432
      %v1515 = vpop.f32.mrf.mxu0
      %v1516 = vadd.f32 0.0, %v1515
      %v1517 = vpop.f32.mrf.mxu0
      %v1518 = vadd.f32 0.0, %v1517
      %1519 = vmatmul.bf16.gmra.mxu0 %v1435
      %v1520 = vpop.f32.mrf.mxu0
      %v1521 = vadd.f32 0.0, %v1520
      %v1522 = vpop.f32.mrf.mxu0
      %v1523 = vadd.f32 0.0, %v1522
      %1524 = vmatmul.bf16.gmra.mxu0 %v1438
      %v1525 = vpop.f32.mrf.mxu0
      %v1526 = vadd.f32 0.0, %v1525
      %v1527 = vpop.f32.mrf.mxu0
      %v1528 = vadd.f32 0.0, %v1527
      %1529 = vmatmul.bf16.gmra.mxu0 %v1441
      %v1530 = vpop.f32.mrf.mxu0
      %v1531 = vadd.f32 0.0, %v1530
      %v1532 = vpop.f32.mrf.mxu0
      %v1533 = vadd.f32 0.0, %v1532
      %1534 = vmatmul.bf16.gmra.mxu0 %v1444
      %v1535 = vpop.f32.mrf.mxu0
      %v1536 = vadd.f32 0.0, %v1535
      %v1537 = vpop.f32.mrf.mxu0
      %v1538 = vadd.f32 0.0, %v1537
      %1539 = vmatmul.bf16.gmra.mxu0 %v1447
      %v1540 = vpop.f32.mrf.mxu0
      %v1541 = vadd.f32 0.0, %v1540
      %v1542 = vpop.f32.mrf.mxu0
      %v1543 = vadd.f32 0.0, %v1542
      %1544 = vmatmul.bf16.gmra.mxu0 %v1450
      %v1545 = vpop.f32.mrf.mxu0
      %v1546 = vadd.f32 0.0, %v1545
      %v1547 = vpop.f32.mrf.mxu0
      %v1548 = vadd.f32 0.0, %v1547
      %1549 = vmatmul.bf16.gmra.mxu0 %v1453
      %v1550 = vpop.f32.mrf.mxu0
      %v1551 = vadd.f32 0.0, %v1550
      %v1552 = vpop.f32.mrf.mxu0
      %v1553 = vadd.f32 0.0, %v1552
      %1554 = vmatmul.bf16.gmra.mxu0 %v1456
      %v1555 = vpop.f32.mrf.mxu0
      %v1556 = vadd.f32 0.0, %v1555
      %v1557 = vpop.f32.mrf.mxu0
      %v1558 = vadd.f32 0.0, %v1557
      %1559 = vmatmul.bf16.gmra.mxu0 %v1459
      %v1560 = vpop.f32.mrf.mxu0
      %v1561 = vadd.f32 0.0, %v1560
      %v1562 = vpop.f32.mrf.mxu0
      %v1563 = vadd.f32 0.0, %v1562
      %1564 = vmatmul.bf16.gmra.mxu0 %v1462
      %v1565 = vpop.f32.mrf.mxu0
      %v1566 = vadd.f32 0.0, %v1565
      %v1567 = vpop.f32.mrf.mxu0
      %v1568 = vadd.f32 0.0, %v1567
      %1569 = vmatmul.bf16.gmra.mxu0 %v1465
      %v1570 = vpop.f32.mrf.mxu0
      %v1571 = vadd.f32 0.0, %v1570
      %v1572 = vpop.f32.mrf.mxu0
      %v1573 = vadd.f32 0.0, %v1572
      %1574 = vmatmul.bf16.gmra.mxu0 %v1468
      %v1575 = vpop.f32.mrf.mxu0
      %v1576 = vadd.f32 0.0, %v1575
      %v1577 = vpop.f32.mrf.mxu0
      %v1578 = vadd.f32 0.0, %v1577
      %1579 = vmatmul.bf16.gmra.mxu0 %v1471
      %v1580 = vpop.f32.mrf.mxu0
      %v1581 = vadd.f32 0.0, %v1580
      %v1582 = vpop.f32.mrf.mxu0
      %v1583 = vadd.f32 0.0, %v1582
      %1584 = vmatmul.bf16.gmra.mxu0 %v1474
      %v1585 = vpop.f32.mrf.mxu0
      %v1586 = vadd.f32 0.0, %v1585
      %v1587 = vpop.f32.mrf.mxu0
      %v1588 = vadd.f32 0.0, %v1587
      %1589 = vmatmul.bf16.gmra.mxu0 %v1477
      %v1590 = vpop.f32.mrf.mxu0
      %v1591 = vadd.f32 0.0, %v1590
      %v1592 = vpop.f32.mrf.mxu0
      %v1593 = vadd.f32 0.0, %v1592
      %1594 = vmatmul.bf16.gmra.mxu0 %v1480
      %v1595 = vpop.f32.mrf.mxu0
      %v1596 = vadd.f32 0.0, %v1595
      %v1597 = vpop.f32.mrf.mxu0
      %v1598 = vadd.f32 0.0, %v1597
      %1599 = vmatmul.bf16.gmra.mxu0 %v1483
      %v1600 = vpop.f32.mrf.mxu0
      %v1601 = vadd.f32 0.0, %v1600
      %v1602 = vpop.f32.mrf.mxu0
      %v1603 = vadd.f32 0.0, %v1602
      %1604 = vmatmul.bf16.gmra.mxu0 %v1486
      %v1605 = vpop.f32.mrf.mxu0
      %v1606 = vadd.f32 0.0, %v1605
      %v1607 = vpop.f32.mrf.mxu0
      %v1608 = vadd.f32 0.0, %v1607
      %1609 = vmatmul.bf16.gmra.mxu0 %v1489
      %v1610 = vpop.f32.mrf.mxu0
      %v1611 = vadd.f32 0.0, %v1610
      %v1612 = vpop.f32.mrf.mxu0
      %v1613 = vadd.f32 0.0, %v1612
      %1614 = vmatmul.bf16.gmra.mxu0 %v1492
      %v1615 = vpop.f32.mrf.mxu0
      %v1616 = vadd.f32 0.0, %v1615
      %v1617 = vpop.f32.mrf.mxu0
      %v1618 = vadd.f32 0.0, %v1617
      %1619 = vmatmul.bf16.gmra.mxu0 %v1495
      %v1620 = vpop.f32.mrf.mxu0
      %v1621 = vadd.f32 0.0, %v1620
      %v1622 = vpop.f32.mrf.mxu0
      %v1623 = vadd.f32 0.0, %v1622
      %1624 = vmatmul.bf16.gmra.mxu0 %v1498
      %v1625 = vpop.f32.mrf.mxu0
      %v1626 = vadd.f32 0.0, %v1625
      %v1627 = vpop.f32.mrf.mxu0
      %v1628 = vadd.f32 0.0, %v1627
      %1629 = vmatmul.bf16.gmra.mxu0 %v1501
      %v1630 = vpop.f32.mrf.mxu0
      %v1631 = vadd.f32 0.0, %v1630
      %v1632 = vpop.f32.mrf.mxu0
      %v1633 = vadd.f32 0.0, %v1632
      %1634 = vdwg.mxu0
      %v1635 = vadd.f32 %v941, %v1516
      %v1636 = vadd.f32 %v943, %v1518
      %v1637 = vadd.f32 %v946, %v1521
      %v1638 = vadd.f32 %v948, %v1523
      %v1639 = vadd.f32 %v951, %v1526
      %v1640 = vadd.f32 %v953, %v1528
      %v1641 = vadd.f32 %v956, %v1531
      %v1642 = vadd.f32 %v958, %v1533
      %v1643 = vadd.f32 %v961, %v1536
      %v1644 = vadd.f32 %v963, %v1538
      %v1645 = vadd.f32 %v966, %v1541
      %v1646 = vadd.f32 %v968, %v1543
      %v1647 = vadd.f32 %v971, %v1546
      %v1648 = vadd.f32 %v973, %v1548
      %v1649 = vadd.f32 %v976, %v1551
      %v1650 = vadd.f32 %v978, %v1553
      %v1651 = vadd.f32 %v981, %v1556
      %v1652 = vadd.f32 %v983, %v1558
      %v1653 = vadd.f32 %v986, %v1561
      %v1654 = vadd.f32 %v988, %v1563
      %v1655 = vadd.f32 %v991, %v1566
      %v1656 = vadd.f32 %v993, %v1568
      %v1657 = vadd.f32 %v996, %v1571
      %v1658 = vadd.f32 %v998, %v1573
      %v1659 = vadd.f32 %v1001, %v1576
      %v1660 = vadd.f32 %v1003, %v1578
      %v1661 = vadd.f32 %v1006, %v1581
      %v1662 = vadd.f32 %v1008, %v1583
      %v1663 = vadd.f32 %v1011, %v1586
      %v1664 = vadd.f32 %v1013, %v1588
      %v1665 = vadd.f32 %v1016, %v1591
      %v1666 = vadd.f32 %v1018, %v1593
      %v1667 = vadd.f32 %v1021, %v1596
      %v1668 = vadd.f32 %v1023, %v1598
      %v1669 = vadd.f32 %v1026, %v1601
      %v1670 = vadd.f32 %v1028, %v1603
      %v1671 = vadd.f32 %v1031, %v1606
      %v1672 = vadd.f32 %v1033, %v1608
      %v1673 = vadd.f32 %v1036, %v1611
      %v1674 = vadd.f32 %v1038, %v1613
      %v1675 = vadd.f32 %v1041, %v1616
      %v1676 = vadd.f32 %v1043, %v1618
      %v1677 = vadd.f32 %v1046, %v1621
      %v1678 = vadd.f32 %v1048, %v1623
      %v1679 = vadd.f32 %v1051, %v1626
      %v1680 = vadd.f32 %v1053, %v1628
      %v1681 = vadd.f32 %v1056, %v1631
      %v1682 = vadd.f32 %v1058, %v1633
      %v1683 = vld [vmem:[%s219 + $0xc] sm:$0x8]
      %v1684 = vld [vmem:[%s219 + $0x10] sm:$0xf]
      %v1685 = vld [vmem:[%s219 + $0x14] sm:$0xf]
      %v1686 = vld [vmem:[%s219 + $0x18] sm:$0xf]
      %v1687 = vld [vmem:[%s219 + $0x1c] sm:$0xf]
      %v1688 = vld [vmem:[%s219 + $0x20] sm:$0xf]
      %v1689 = vld [vmem:[%s219 + $0x24] sm:$0xf]
      %v1690 = vld [vmem:[%s219 + $0x28] sm:$0xf]
      %v1691 = vld [vmem:[%s219 + $0x2c] sm:$0xf]
      %v1692 = vld [vmem:[%s219 + $0x30] sm:$0xf]
      %v1693 = vld [vmem:[%s219 + $0x34] sm:$0xf]
      %v1694 = vld [vmem:[%s219 + $0x38] sm:$0xf]
      %v1695 = vld [vmem:[%s219 + $0x3c] sm:$0xf]
      %v1696 = vld [vmem:[%s219 + $0x40] sm:$0xf]
      %v1697 = vld [vmem:[%s219 + $0x44] sm:$0xf]
      %v1698 = vld [vmem:[%s219 + $0x48] sm:$0xf]
      %v1699 = vld [vmem:[%s219 + $0x4c] sm:$0xf]
      %v1700 = vld [vmem:[%s219 + $0x50] sm:$0xf]
      %v1701 = vld [vmem:[%s219 + $0x54] sm:$0xf]
      %v1702 = vld [vmem:[%s219 + $0x58] sm:$0xf]
      %v1703 = vld [vmem:[%s219 + $0x5c] sm:$0xf]
      %v1704 = vld [vmem:[%s219 + $0x60] sm:$0xf]
      %v1705 = vld [vmem:[%s219 + $0x64] sm:$0xf]
      %v1706 = vld [vmem:[%s219 + $0x68] sm:$0xf]
      %v1707 = vld [vmem:[%s219 + $0x6c] sm:$0xf]
      %v1708 = vld [vmem:[%s219 + $0x70] sm:$0xf]
      %v1709 = vld [vmem:[%s219 + $0x74] sm:$0xf]
      %v1710 = vld [vmem:[%s219 + $0x78] sm:$0xf]
      %v1711 = vld [vmem:[%s219 + $0x7c] sm:$0xf]
      %v1712 = vld [vmem:[%s219 + $0x80] sm:$0xf]
      %v1713 = vld [vmem:[%s219 + $0x84] sm:$0xf]
      %v1714 = vld [vmem:[%s219 + $0x88] sm:$0xf]
      %v1715 = vld [vmem:[%s219 + $0x8c] sm:$0xf]
      %v1716 = vld [vmem:[%s219 + $0x90] sm:$0xf]
      %v1717 = vld [vmem:[%s219 + $0x94] sm:$0xf]
      %v1718 = vld [vmem:[%s219 + $0x98] sm:$0xf]
      %v1719 = vld [vmem:[%s219 + $0x9c] sm:$0xf]
      %v1720 = vld [vmem:[%s219 + $0xa0] sm:$0xf]
      %v1721 = vld [vmem:[%s219 + $0xa4] sm:$0xf]
      %v1722 = vld [vmem:[%s219 + $0xa8] sm:$0xf]
      %v1723 = vld [vmem:[%s219 + $0xac] sm:$0xf]
      %v1724 = vld [vmem:[%s219 + $0xb0] sm:$0xf]
      %v1725 = vld [vmem:[%s219 + $0xb4] sm:$0xf]
      %v1726 = vld [vmem:[%s219 + $0xb8] sm:$0xf]
      %v1727 = vld [vmem:[%s219 + $0xbc] sm:$0xf]
      %v1728 = vld [vmem:[%s219 + $0xc0] sm:$0xf]
      %v1729 = vld [vmem:[%s219 + $0xc4] sm:$0xf]
      %v1730 = vld [vmem:[%s219 + $0xc8] sm:$0xf]
      %v1731 = vld [vmem:[%s219 + $0xcc] sm:$0xf]
      %s1732 = scalar_lea.vmem %s1, 12
      %v1733 = vld [vmem:[%s1732] sm:$0xf]
      %v1783 = vunpack.c.l.b16 %v1683
      %v1784 = vunpack.c.l.b16 %v1684
      %v1785 = vunpack.c.l.b16 %v1685
      %v1786 = vunpack.c.l.b16 %v1686
      %v1787 = vunpack.c.l.b16 %v1687
      %v1788 = vunpack.c.l.b16 %v1688
      %v1789 = vunpack.c.l.b16 %v1689
      %v1790 = vunpack.c.l.b16 %v1690
      %v1791 = vunpack.c.l.b16 %v1691
      %v1792 = vunpack.c.l.b16 %v1692
      %v1793 = vunpack.c.l.b16 %v1693
      %v1794 = vunpack.c.l.b16 %v1694
      %v1795 = vunpack.c.l.b16 %v1695
      %v1796 = vunpack.c.l.b16 %v1696
      %v1797 = vunpack.c.l.b16 %v1697
      %v1798 = vunpack.c.l.b16 %v1698
      %v1799 = vunpack.c.l.b16 %v1699
      %v1800 = vunpack.c.l.b16 %v1700
      %v1801 = vunpack.c.l.b16 %v1701
      %v1802 = vunpack.c.l.b16 %v1702
      %v1803 = vunpack.c.l.b16 %v1703
      %v1804 = vunpack.c.l.b16 %v1704
      %v1805 = vunpack.c.l.b16 %v1705
      %v1806 = vunpack.c.l.b16 %v1706
      %v1807 = vunpack.c.l.b16 %v1707
      %v1808 = vunpack.c.l.b16 %v1708
      %v1809 = vunpack.c.l.b16 %v1709
      %v1810 = vunpack.c.l.b16 %v1710
      %v1811 = vunpack.c.l.b16 %v1711
      %v1812 = vunpack.c.l.b16 %v1712
      %v1813 = vunpack.c.l.b16 %v1713
      %v1814 = vunpack.c.l.b16 %v1714
      %v1815 = vunpack.c.l.b16 %v1715
      %v1816 = vunpack.c.l.b16 %v1716
      %v1817 = vunpack.c.l.b16 %v1717
      %v1818 = vunpack.c.l.b16 %v1718
      %v1819 = vunpack.c.l.b16 %v1719
      %v1820 = vunpack.c.l.b16 %v1720
      %v1821 = vunpack.c.l.b16 %v1721
      %v1822 = vunpack.c.l.b16 %v1722
      %v1823 = vunpack.c.l.b16 %v1723
      %v1824 = vunpack.c.l.b16 %v1724
      %v1825 = vunpack.c.l.b16 %v1725
      %v1826 = vunpack.c.l.b16 %v1726
      %v1827 = vunpack.c.l.b16 %v1727
      %v1828 = vunpack.c.l.b16 %v1728
      %v1829 = vunpack.c.l.b16 %v1729
      %v1830 = vunpack.c.l.b16 %v1730
      %v1831 = vunpack.c.l.b16 %v1731
      %v1832 = vpack.c.b16 %v1784, %v1783
      %v1833 = vpack.c.b16 %v1786, %v1785
      %v1834 = vpack.c.b16 %v1788, %v1787
      %v1835 = vpack.c.b16 %v1790, %v1789
      %v1836 = vpack.c.b16 %v1792, %v1791
      %v1837 = vpack.c.b16 %v1794, %v1793
      %v1838 = vpack.c.b16 %v1796, %v1795
      %v1839 = vpack.c.b16 %v1798, %v1797
      %v1840 = vpack.c.b16 %v1800, %v1799
      %v1841 = vpack.c.b16 %v1802, %v1801
      %v1842 = vpack.c.b16 %v1804, %v1803
      %v1843 = vpack.c.b16 %v1806, %v1805
      %v1844 = vpack.c.b16 %v1808, %v1807
      %v1845 = vpack.c.b16 %v1810, %v1809
      %v1846 = vpack.c.b16 %v1812, %v1811
      %v1847 = vpack.c.b16 %v1814, %v1813
      %v1848 = vpack.c.b16 %v1816, %v1815
      %v1849 = vpack.c.b16 %v1818, %v1817
      %v1850 = vpack.c.b16 %v1820, %v1819
      %v1851 = vpack.c.b16 %v1822, %v1821
      %v1852 = vpack.c.b16 %v1824, %v1823
      %v1853 = vpack.c.b16 %v1826, %v1825
      %v1854 = vpack.c.b16 %v1828, %v1827
      %v1855 = vpack.c.b16 %v1830, %v1829
      %v1856 = vpack.c.b16 %v1831, %v1831
      %v1858 = vshrl.u32 %v1832, 16
      %v1860 = vrot.slane %v1858, 3
      %v1861 = vshll.u32 %v1832, 16
      %v1863 = vrot.slane %v1861, 4
      %v1864 = vor.u32 %v1860, %v1863
      %v1866 = vshrl.u32 %v1833, 16
      %v1868 = vrot.slane %v1866, 3
      %v1869 = vshll.u32 %v1833, 16
      %v1871 = vrot.slane %v1869, 4
      %v1872 = vor.u32 %v1868, %v1871
      %v1873 = vsel %vm631, %v1864, %v1872
      %v1875 = vshrl.u32 %v1834, 16
      %v1877 = vrot.slane %v1875, 3
      %v1878 = vshll.u32 %v1834, 16
      %v1880 = vrot.slane %v1878, 4
      %v1881 = vor.u32 %v1877, %v1880
      %v1882 = vsel %vm631, %v1872, %v1881
      %v1884 = vshrl.u32 %v1835, 16
      %v1886 = vrot.slane %v1884, 3
      %v1887 = vshll.u32 %v1835, 16
      %v1889 = vrot.slane %v1887, 4
      %v1890 = vor.u32 %v1886, %v1889
      %v1891 = vsel %vm631, %v1881, %v1890
      %v1893 = vshrl.u32 %v1836, 16
      %v1895 = vrot.slane %v1893, 3
      %v1896 = vshll.u32 %v1836, 16
      %v1898 = vrot.slane %v1896, 4
      %v1899 = vor.u32 %v1895, %v1898
      %v1900 = vsel %vm631, %v1890, %v1899
      %v1902 = vshrl.u32 %v1837, 16
      %v1904 = vrot.slane %v1902, 3
      %v1905 = vshll.u32 %v1837, 16
      %v1907 = vrot.slane %v1905, 4
      %v1908 = vor.u32 %v1904, %v1907
      %v1909 = vsel %vm631, %v1899, %v1908
      %v1911 = vshrl.u32 %v1838, 16
      %v1913 = vrot.slane %v1911, 3
      %v1914 = vshll.u32 %v1838, 16
      %v1916 = vrot.slane %v1914, 4
      %v1917 = vor.u32 %v1913, %v1916
      %v1918 = vsel %vm631, %v1908, %v1917
      %v1920 = vshrl.u32 %v1839, 16
      %v1922 = vrot.slane %v1920, 3
      %v1923 = vshll.u32 %v1839, 16
      %v1925 = vrot.slane %v1923, 4
      %v1926 = vor.u32 %v1922, %v1925
      %v1927 = vsel %vm631, %v1917, %v1926
      %v1929 = vshrl.u32 %v1840, 16
      %v1931 = vrot.slane %v1929, 3
      %v1932 = vshll.u32 %v1840, 16
      %v1934 = vrot.slane %v1932, 4
      %v1935 = vor.u32 %v1931, %v1934
      %v1936 = vsel %vm631, %v1926, %v1935
      %v1938 = vshrl.u32 %v1841, 16
      %v1940 = vrot.slane %v1938, 3
      %v1941 = vshll.u32 %v1841, 16
      %v1943 = vrot.slane %v1941, 4
      %v1944 = vor.u32 %v1940, %v1943
      %v1945 = vsel %vm631, %v1935, %v1944
      %v1947 = vshrl.u32 %v1842, 16
      %v1949 = vrot.slane %v1947, 3
      %v1950 = vshll.u32 %v1842, 16
      %v1952 = vrot.slane %v1950, 4
      %v1953 = vor.u32 %v1949, %v1952
      %v1954 = vsel %vm631, %v1944, %v1953
      %v1956 = vshrl.u32 %v1843, 16
      %v1958 = vrot.slane %v1956, 3
      %v1959 = vshll.u32 %v1843, 16
      %v1961 = vrot.slane %v1959, 4
      %v1962 = vor.u32 %v1958, %v1961
      %v1963 = vsel %vm631, %v1953, %v1962
      %v1965 = vshrl.u32 %v1844, 16
      %v1967 = vrot.slane %v1965, 3
      %v1968 = vshll.u32 %v1844, 16
      %v1970 = vrot.slane %v1968, 4
      %v1971 = vor.u32 %v1967, %v1970
      %v1972 = vsel %vm631, %v1962, %v1971
      %v1974 = vshrl.u32 %v1845, 16
      %v1976 = vrot.slane %v1974, 3
      %v1977 = vshll.u32 %v1845, 16
      %v1979 = vrot.slane %v1977, 4
      %v1980 = vor.u32 %v1976, %v1979
      %v1981 = vsel %vm631, %v1971, %v1980
      %v1983 = vshrl.u32 %v1846, 16
      %v1985 = vrot.slane %v1983, 3
      %v1986 = vshll.u32 %v1846, 16
      %v1988 = vrot.slane %v1986, 4
      %v1989 = vor.u32 %v1985, %v1988
      %v1990 = vsel %vm631, %v1980, %v1989
      %v1992 = vshrl.u32 %v1847, 16
      %v1994 = vrot.slane %v1992, 3
      %v1995 = vshll.u32 %v1847, 16
      %v1997 = vrot.slane %v1995, 4
      %v1998 = vor.u32 %v1994, %v1997
      %v1999 = vsel %vm631, %v1989, %v1998
      %v2001 = vshrl.u32 %v1848, 16
      %v2003 = vrot.slane %v2001, 3
      %v2004 = vshll.u32 %v1848, 16
      %v2006 = vrot.slane %v2004, 4
      %v2007 = vor.u32 %v2003, %v2006
      %v2008 = vsel %vm631, %v1998, %v2007
      %v2010 = vshrl.u32 %v1849, 16
      %v2012 = vrot.slane %v2010, 3
      %v2013 = vshll.u32 %v1849, 16
      %v2015 = vrot.slane %v2013, 4
      %v2016 = vor.u32 %v2012, %v2015
      %v2017 = vsel %vm631, %v2007, %v2016
      %v2019 = vshrl.u32 %v1850, 16
      %v2021 = vrot.slane %v2019, 3
      %v2022 = vshll.u32 %v1850, 16
      %v2024 = vrot.slane %v2022, 4
      %v2025 = vor.u32 %v2021, %v2024
      %v2026 = vsel %vm631, %v2016, %v2025
      %v2028 = vshrl.u32 %v1851, 16
      %v2030 = vrot.slane %v2028, 3
      %v2031 = vshll.u32 %v1851, 16
      %v2033 = vrot.slane %v2031, 4
      %v2034 = vor.u32 %v2030, %v2033
      %v2035 = vsel %vm631, %v2025, %v2034
      %v2037 = vshrl.u32 %v1852, 16
      %v2039 = vrot.slane %v2037, 3
      %v2040 = vshll.u32 %v1852, 16
      %v2042 = vrot.slane %v2040, 4
      %v2043 = vor.u32 %v2039, %v2042
      %v2044 = vsel %vm631, %v2034, %v2043
      %v2046 = vshrl.u32 %v1853, 16
      %v2048 = vrot.slane %v2046, 3
      %v2049 = vshll.u32 %v1853, 16
      %v2051 = vrot.slane %v2049, 4
      %v2052 = vor.u32 %v2048, %v2051
      %v2053 = vsel %vm631, %v2043, %v2052
      %v2055 = vshrl.u32 %v1854, 16
      %v2057 = vrot.slane %v2055, 3
      %v2058 = vshll.u32 %v1854, 16
      %v2060 = vrot.slane %v2058, 4
      %v2061 = vor.u32 %v2057, %v2060
      %v2062 = vsel %vm631, %v2052, %v2061
      %v2064 = vshrl.u32 %v1855, 16
      %v2066 = vrot.slane %v2064, 3
      %v2067 = vshll.u32 %v1855, 16
      %v2069 = vrot.slane %v2067, 4
      %v2070 = vor.u32 %v2066, %v2069
      %v2071 = vsel %vm631, %v2061, %v2070
      %v2073 = vshrl.u32 %v1856, 16
      %v2075 = vrot.slane %v2073, 3
      %v2076 = vshll.u32 %v1856, 16
      %v2078 = vrot.slane %v2076, 4
      %v2079 = vor.u32 %v2075, %v2078
      %v2080 = vsel %vm631, %v2070, %v2079
      %v2082 = vsel %vm398, %v1873, 0
      %v2085 = vsel %vm398, %v1882, 0
      %v2088 = vsel %vm398, %v1891, 0
      %v2091 = vsel %vm398, %v1900, 0
      %v2094 = vsel %vm398, %v1909, 0
      %v2097 = vsel %vm398, %v1918, 0
      %v2100 = vsel %vm398, %v1927, 0
      %v2103 = vsel %vm398, %v1936, 0
      %v2106 = vsel %vm398, %v1945, 0
      %v2109 = vsel %vm398, %v1954, 0
      %v2112 = vsel %vm398, %v1963, 0
      %v2115 = vsel %vm398, %v1972, 0
      %v2118 = vsel %vm398, %v1981, 0
      %v2121 = vsel %vm398, %v1990, 0
      %v2124 = vsel %vm398, %v1999, 0
      %v2127 = vsel %vm398, %v2008, 0
      %v2130 = vsel %vm398, %v2017, 0
      %v2133 = vsel %vm398, %v2026, 0
      %v2136 = vsel %vm398, %v2035, 0
      %v2139 = vsel %vm398, %v2044, 0
      %v2142 = vsel %vm398, %v2053, 0
      %v2145 = vsel %vm398, %v2062, 0
      %v2148 = vsel %vm398, %v2071, 0
      %v2151 = vsel %vm398, %v2080, 0
      %v2154 = vsel %vm471, %v1733, 0
      %2156 = vmatpush.bf16.msra.mxu0 0
      %2157 = vmatpush.bf16.msra.mxu0 0
      %2158 = vmatpush.bf16.msra.mxu0 0
      %2159 = vmatpush.bf16.msra.mxu0 0
      %2160 = vmatpush.bf16.msra.mxu0 0
      %2161 = vmatpush.bf16.msra.mxu0 0
      %2162 = vmatpush.bf16.msra.mxu0 0
      %2163 = vmatpush.bf16.msra.mxu0 %v2154
      %2164 = vmatmul.bf16.gmra.mxu0 %v2082
      %v2165 = vpop.f32.mrf.mxu0
      %v2166 = vadd.f32 0.0, %v2165
      %v2167 = vpop.f32.mrf.mxu0
      %v2168 = vadd.f32 0.0, %v2167
      %2169 = vmatmul.bf16.gmra.mxu0 %v2085
      %v2170 = vpop.f32.mrf.mxu0
      %v2171 = vadd.f32 0.0, %v2170
      %v2172 = vpop.f32.mrf.mxu0
      %v2173 = vadd.f32 0.0, %v2172
      %2174 = vmatmul.bf16.gmra.mxu0 %v2088
      %v2175 = vpop.f32.mrf.mxu0
      %v2176 = vadd.f32 0.0, %v2175
      %v2177 = vpop.f32.mrf.mxu0
      %v2178 = vadd.f32 0.0, %v2177
      %2179 = vmatmul.bf16.gmra.mxu0 %v2091
      %v2180 = vpop.f32.mrf.mxu0
      %v2181 = vadd.f32 0.0, %v2180
      %v2182 = vpop.f32.mrf.mxu0
      %v2183 = vadd.f32 0.0, %v2182
      %2184 = vmatmul.bf16.gmra.mxu0 %v2094
      %v2185 = vpop.f32.mrf.mxu0
      %v2186 = vadd.f32 0.0, %v2185
      %v2187 = vpop.f32.mrf.mxu0
      %v2188 = vadd.f32 0.0, %v2187
      %2189 = vmatmul.bf16.gmra.mxu0 %v2097
      %v2190 = vpop.f32.mrf.mxu0
      %v2191 = vadd.f32 0.0, %v2190
      %v2192 = vpop.f32.mrf.mxu0
      %v2193 = vadd.f32 0.0, %v2192
      %2194 = vmatmul.bf16.gmra.mxu0 %v2100
      %v2195 = vpop.f32.mrf.mxu0
      %v2196 = vadd.f32 0.0, %v2195
      %v2197 = vpop.f32.mrf.mxu0
      %v2198 = vadd.f32 0.0, %v2197
      %2199 = vmatmul.bf16.gmra.mxu0 %v2103
      %v2200 = vpop.f32.mrf.mxu0
      %v2201 = vadd.f32 0.0, %v2200
      %v2202 = vpop.f32.mrf.mxu0
      %v2203 = vadd.f32 0.0, %v2202
      %2204 = vmatmul.bf16.gmra.mxu0 %v2106
      %v2205 = vpop.f32.mrf.mxu0
      %v2206 = vadd.f32 0.0, %v2205
      %v2207 = vpop.f32.mrf.mxu0
      %v2208 = vadd.f32 0.0, %v2207
      %2209 = vmatmul.bf16.gmra.mxu0 %v2109
      %v2210 = vpop.f32.mrf.mxu0
      %v2211 = vadd.f32 0.0, %v2210
      %v2212 = vpop.f32.mrf.mxu0
      %v2213 = vadd.f32 0.0, %v2212
      %2214 = vmatmul.bf16.gmra.mxu0 %v2112
      %v2215 = vpop.f32.mrf.mxu0
      %v2216 = vadd.f32 0.0, %v2215
      %v2217 = vpop.f32.mrf.mxu0
      %v2218 = vadd.f32 0.0, %v2217
      %2219 = vmatmul.bf16.gmra.mxu0 %v2115
      %v2220 = vpop.f32.mrf.mxu0
      %v2221 = vadd.f32 0.0, %v2220
      %v2222 = vpop.f32.mrf.mxu0
      %v2223 = vadd.f32 0.0, %v2222
      %2224 = vmatmul.bf16.gmra.mxu0 %v2118
      %v2225 = vpop.f32.mrf.mxu0
      %v2226 = vadd.f32 0.0, %v2225
      %v2227 = vpop.f32.mrf.mxu0
      %v2228 = vadd.f32 0.0, %v2227
      %2229 = vmatmul.bf16.gmra.mxu0 %v2121
      %v2230 = vpop.f32.mrf.mxu0
      %v2231 = vadd.f32 0.0, %v2230
      %v2232 = vpop.f32.mrf.mxu0
      %v2233 = vadd.f32 0.0, %v2232
      %2234 = vmatmul.bf16.gmra.mxu0 %v2124
      %v2235 = vpop.f32.mrf.mxu0
      %v2236 = vadd.f32 0.0, %v2235
      %v2237 = vpop.f32.mrf.mxu0
      %v2238 = vadd.f32 0.0, %v2237
      %2239 = vmatmul.bf16.gmra.mxu0 %v2127
      %v2240 = vpop.f32.mrf.mxu0
      %v2241 = vadd.f32 0.0, %v2240
      %v2242 = vpop.f32.mrf.mxu0
      %v2243 = vadd.f32 0.0, %v2242
      %2244 = vmatmul.bf16.gmra.mxu0 %v2130
      %v2245 = vpop.f32.mrf.mxu0
      %v2246 = vadd.f32 0.0, %v2245
      %v2247 = vpop.f32.mrf.mxu0
      %v2248 = vadd.f32 0.0, %v2247
      %2249 = vmatmul.bf16.gmra.mxu0 %v2133
      %v2250 = vpop.f32.mrf.mxu0
      %v2251 = vadd.f32 0.0, %v2250
      %v2252 = vpop.f32.mrf.mxu0
      %v2253 = vadd.f32 0.0, %v2252
      %2254 = vmatmul.bf16.gmra.mxu0 %v2136
      %v2255 = vpop.f32.mrf.mxu0
      %v2256 = vadd.f32 0.0, %v2255
      %v2257 = vpop.f32.mrf.mxu0
      %v2258 = vadd.f32 0.0, %v2257
      %2259 = vmatmul.bf16.gmra.mxu0 %v2139
      %v2260 = vpop.f32.mrf.mxu0
      %v2261 = vadd.f32 0.0, %v2260
      %v2262 = vpop.f32.mrf.mxu0
      %v2263 = vadd.f32 0.0, %v2262
      %2264 = vmatmul.bf16.gmra.mxu0 %v2142
      %v2265 = vpop.f32.mrf.mxu0
      %v2266 = vadd.f32 0.0, %v2265
      %v2267 = vpop.f32.mrf.mxu0
      %v2268 = vadd.f32 0.0, %v2267
      %2269 = vmatmul.bf16.gmra.mxu0 %v2145
      %v2270 = vpop.f32.mrf.mxu0
      %v2271 = vadd.f32 0.0, %v2270
      %v2272 = vpop.f32.mrf.mxu0
      %v2273 = vadd.f32 0.0, %v2272
      %2274 = vmatmul.bf16.gmra.mxu0 %v2148
      %v2275 = vpop.f32.mrf.mxu0
      %v2276 = vadd.f32 0.0, %v2275
      %v2277 = vpop.f32.mrf.mxu0
      %v2278 = vadd.f32 0.0, %v2277
      %2279 = vmatmul.bf16.gmra.mxu0 %v2151
      %v2280 = vpop.f32.mrf.mxu0
      %v2281 = vadd.f32 0.0, %v2280
      %v2282 = vpop.f32.mrf.mxu0
      %v2283 = vadd.f32 0.0, %v2282
      %2284 = vdwg.mxu0
      %v2285 = vadd.f32 %v1635, %v2166
      %v2286 = vadd.f32 %v1636, %v2168
      %v2287 = vadd.f32 %v1637, %v2171
      %v2288 = vadd.f32 %v1638, %v2173
      %v2289 = vadd.f32 %v1639, %v2176
      %v2290 = vadd.f32 %v1640, %v2178
      %v2291 = vadd.f32 %v1641, %v2181
      %v2292 = vadd.f32 %v1642, %v2183
      %v2293 = vadd.f32 %v1643, %v2186
      %v2294 = vadd.f32 %v1644, %v2188
      %v2295 = vadd.f32 %v1645, %v2191
      %v2296 = vadd.f32 %v1646, %v2193
      %v2297 = vadd.f32 %v1647, %v2196
      %v2298 = vadd.f32 %v1648, %v2198
      %v2299 = vadd.f32 %v1649, %v2201
      %v2300 = vadd.f32 %v1650, %v2203
      %v2301 = vadd.f32 %v1651, %v2206
      %v2302 = vadd.f32 %v1652, %v2208
      %v2303 = vadd.f32 %v1653, %v2211
      %v2304 = vadd.f32 %v1654, %v2213
      %v2305 = vadd.f32 %v1655, %v2216
      %v2306 = vadd.f32 %v1656, %v2218
      %v2307 = vadd.f32 %v1657, %v2221
      %v2308 = vadd.f32 %v1658, %v2223
      %v2309 = vadd.f32 %v1659, %v2226
      %v2310 = vadd.f32 %v1660, %v2228
      %v2311 = vadd.f32 %v1661, %v2231
      %v2312 = vadd.f32 %v1662, %v2233
      %v2313 = vadd.f32 %v1663, %v2236
      %v2314 = vadd.f32 %v1664, %v2238
      %v2315 = vadd.f32 %v1665, %v2241
      %v2316 = vadd.f32 %v1666, %v2243
      %v2317 = vadd.f32 %v1667, %v2246
      %v2318 = vadd.f32 %v1668, %v2248
      %v2319 = vadd.f32 %v1669, %v2251
      %v2320 = vadd.f32 %v1670, %v2253
      %v2321 = vadd.f32 %v1671, %v2256
      %v2322 = vadd.f32 %v1672, %v2258
      %v2323 = vadd.f32 %v1673, %v2261
      %v2324 = vadd.f32 %v1674, %v2263
      %v2325 = vadd.f32 %v1675, %v2266
      %v2326 = vadd.f32 %v1676, %v2268
      %v2327 = vadd.f32 %v1677, %v2271
      %v2328 = vadd.f32 %v1678, %v2273
      %v2329 = vadd.f32 %v1679, %v2276
      %v2330 = vadd.f32 %v1680, %v2278
      %v2331 = vadd.f32 %v1681, %v2281
      %v2332 = vadd.f32 %v1682, %v2283
      %s2333 = scalar_lea.vmem %s1, 16
      %v2334 = vld [vmem:[%s2333] sm:$0xf]
      %v2335 = vpack.c.b16 %v1785, %v1784
      %v2336 = vpack.c.b16 %v1787, %v1786
      %v2337 = vpack.c.b16 %v1789, %v1788
      %v2338 = vpack.c.b16 %v1791, %v1790
      %v2339 = vpack.c.b16 %v1793, %v1792
      %v2340 = vpack.c.b16 %v1795, %v1794
      %v2341 = vpack.c.b16 %v1797, %v1796
      %v2342 = vpack.c.b16 %v1799, %v1798
      %v2343 = vpack.c.b16 %v1801, %v1800
      %v2344 = vpack.c.b16 %v1803, %v1802
      %v2345 = vpack.c.b16 %v1805, %v1804
      %v2346 = vpack.c.b16 %v1807, %v1806
      %v2347 = vpack.c.b16 %v1809, %v1808
      %v2348 = vpack.c.b16 %v1811, %v1810
      %v2349 = vpack.c.b16 %v1813, %v1812
      %v2350 = vpack.c.b16 %v1815, %v1814
      %v2351 = vpack.c.b16 %v1817, %v1816
      %v2352 = vpack.c.b16 %v1819, %v1818
      %v2353 = vpack.c.b16 %v1821, %v1820
      %v2354 = vpack.c.b16 %v1823, %v1822
      %v2355 = vpack.c.b16 %v1825, %v1824
      %v2356 = vpack.c.b16 %v1827, %v1826
      %v2357 = vpack.c.b16 %v1829, %v1828
      %v2358 = vpack.c.b16 %v1831, %v1830
      %v2360 = vsel %vm398, %v2335, 0
      %v2363 = vsel %vm398, %v2336, 0
      %v2366 = vsel %vm398, %v2337, 0
      %v2369 = vsel %vm398, %v2338, 0
      %v2372 = vsel %vm398, %v2339, 0
      %v2375 = vsel %vm398, %v2340, 0
      %v2378 = vsel %vm398, %v2341, 0
      %v2381 = vsel %vm398, %v2342, 0
      %v2384 = vsel %vm398, %v2343, 0
      %v2387 = vsel %vm398, %v2344, 0
      %v2390 = vsel %vm398, %v2345, 0
      %v2393 = vsel %vm398, %v2346, 0
      %v2396 = vsel %vm398, %v2347, 0
      %v2399 = vsel %vm398, %v2348, 0
      %v2402 = vsel %vm398, %v2349, 0
      %v2405 = vsel %vm398, %v2350, 0
      %v2408 = vsel %vm398, %v2351, 0
      %v2411 = vsel %vm398, %v2352, 0
      %v2414 = vsel %vm398, %v2353, 0
      %v2417 = vsel %vm398, %v2354, 0
      %v2420 = vsel %vm398, %v2355, 0
      %v2423 = vsel %vm398, %v2356, 0
      %v2426 = vsel %vm398, %v2357, 0
      %v2429 = vsel %vm398, %v2358, 0
      %v2432 = vsel %vm471, %v2334, 0
      %2434 = vmatpush.bf16.msra.mxu0 0
      %2435 = vmatpush.bf16.msra.mxu0 0
      %2436 = vmatpush.bf16.msra.mxu0 0
      %2437 = vmatpush.bf16.msra.mxu0 0
      %2438 = vmatpush.bf16.msra.mxu0 0
      %2439 = vmatpush.bf16.msra.mxu0 0
      %2440 = vmatpush.bf16.msra.mxu0 0
      %2441 = vmatpush.bf16.msra.mxu0 %v2432
      %2442 = vmatmul.bf16.gmra.mxu0 %v2360
      %v2443 = vpop.f32.mrf.mxu0
      %v2444 = vadd.f32 0.0, %v2443
      %v2445 = vpop.f32.mrf.mxu0
      %v2446 = vadd.f32 0.0, %v2445
      %2447 = vmatmul.bf16.gmra.mxu0 %v2363
      %v2448 = vpop.f32.mrf.mxu0
      %v2449 = vadd.f32 0.0, %v2448
      %v2450 = vpop.f32.mrf.mxu0
      %v2451 = vadd.f32 0.0, %v2450
      %2452 = vmatmul.bf16.gmra.mxu0 %v2366
      %v2453 = vpop.f32.mrf.mxu0
      %v2454 = vadd.f32 0.0, %v2453
      %v2455 = vpop.f32.mrf.mxu0
      %v2456 = vadd.f32 0.0, %v2455
      %2457 = vmatmul.bf16.gmra.mxu0 %v2369
      %v2458 = vpop.f32.mrf.mxu0
      %v2459 = vadd.f32 0.0, %v2458
      %v2460 = vpop.f32.mrf.mxu0
      %v2461 = vadd.f32 0.0, %v2460
      %2462 = vmatmul.bf16.gmra.mxu0 %v2372
      %v2463 = vpop.f32.mrf.mxu0
      %v2464 = vadd.f32 0.0, %v2463
      %v2465 = vpop.f32.mrf.mxu0
      %v2466 = vadd.f32 0.0, %v2465
      %2467 = vmatmul.bf16.gmra.mxu0 %v2375
      %v2468 = vpop.f32.mrf.mxu0
      %v2469 = vadd.f32 0.0, %v2468
      %v2470 = vpop.f32.mrf.mxu0
      %v2471 = vadd.f32 0.0, %v2470
      %2472 = vmatmul.bf16.gmra.mxu0 %v2378
      %v2473 = vpop.f32.mrf.mxu0
      %v2474 = vadd.f32 0.0, %v2473
      %v2475 = vpop.f32.mrf.mxu0
      %v2476 = vadd.f32 0.0, %v2475
      %2477 = vmatmul.bf16.gmra.mxu0 %v2381
      %v2478 = vpop.f32.mrf.mxu0
      %v2479 = vadd.f32 0.0, %v2478
      %v2480 = vpop.f32.mrf.mxu0
      %v2481 = vadd.f32 0.0, %v2480
      %2482 = vmatmul.bf16.gmra.mxu0 %v2384
      %v2483 = vpop.f32.mrf.mxu0
      %v2484 = vadd.f32 0.0, %v2483
      %v2485 = vpop.f32.mrf.mxu0
      %v2486 = vadd.f32 0.0, %v2485
      %2487 = vmatmul.bf16.gmra.mxu0 %v2387
      %v2488 = vpop.f32.mrf.mxu0
      %v2489 = vadd.f32 0.0, %v2488
      %v2490 = vpop.f32.mrf.mxu0
      %v2491 = vadd.f32 0.0, %v2490
      %2492 = vmatmul.bf16.gmra.mxu0 %v2390
      %v2493 = vpop.f32.mrf.mxu0
      %v2494 = vadd.f32 0.0, %v2493
      %v2495 = vpop.f32.mrf.mxu0
      %v2496 = vadd.f32 0.0, %v2495
      %2497 = vmatmul.bf16.gmra.mxu0 %v2393
      %v2498 = vpop.f32.mrf.mxu0
      %v2499 = vadd.f32 0.0, %v2498
      %v2500 = vpop.f32.mrf.mxu0
      %v2501 = vadd.f32 0.0, %v2500
      %2502 = vmatmul.bf16.gmra.mxu0 %v2396
      %v2503 = vpop.f32.mrf.mxu0
      %v2504 = vadd.f32 0.0, %v2503
      %v2505 = vpop.f32.mrf.mxu0
      %v2506 = vadd.f32 0.0, %v2505
      %2507 = vmatmul.bf16.gmra.mxu0 %v2399
      %v2508 = vpop.f32.mrf.mxu0
      %v2509 = vadd.f32 0.0, %v2508
      %v2510 = vpop.f32.mrf.mxu0
      %v2511 = vadd.f32 0.0, %v2510
      %2512 = vmatmul.bf16.gmra.mxu0 %v2402
      %v2513 = vpop.f32.mrf.mxu0
      %v2514 = vadd.f32 0.0, %v2513
      %v2515 = vpop.f32.mrf.mxu0
      %v2516 = vadd.f32 0.0, %v2515
      %2517 = vmatmul.bf16.gmra.mxu0 %v2405
      %v2518 = vpop.f32.mrf.mxu0
      %v2519 = vadd.f32 0.0, %v2518
      %v2520 = vpop.f32.mrf.mxu0
      %v2521 = vadd.f32 0.0, %v2520
      %2522 = vmatmul.bf16.gmra.mxu0 %v2408
      %v2523 = vpop.f32.mrf.mxu0
      %v2524 = vadd.f32 0.0, %v2523
      %v2525 = vpop.f32.mrf.mxu0
      %v2526 = vadd.f32 0.0, %v2525
      %2527 = vmatmul.bf16.gmra.mxu0 %v2411
      %v2528 = vpop.f32.mrf.mxu0
      %v2529 = vadd.f32 0.0, %v2528
      %v2530 = vpop.f32.mrf.mxu0
      %v2531 = vadd.f32 0.0, %v2530
      %2532 = vmatmul.bf16.gmra.mxu0 %v2414
      %v2533 = vpop.f32.mrf.mxu0
      %v2534 = vadd.f32 0.0, %v2533
      %v2535 = vpop.f32.mrf.mxu0
      %v2536 = vadd.f32 0.0, %v2535
      %2537 = vmatmul.bf16.gmra.mxu0 %v2417
      %v2538 = vpop.f32.mrf.mxu0
      %v2539 = vadd.f32 0.0, %v2538
      %v2540 = vpop.f32.mrf.mxu0
      %v2541 = vadd.f32 0.0, %v2540
      %2542 = vmatmul.bf16.gmra.mxu0 %v2420
      %v2543 = vpop.f32.mrf.mxu0
      %v2544 = vadd.f32 0.0, %v2543
      %v2545 = vpop.f32.mrf.mxu0
      %v2546 = vadd.f32 0.0, %v2545
      %2547 = vmatmul.bf16.gmra.mxu0 %v2423
      %v2548 = vpop.f32.mrf.mxu0
      %v2549 = vadd.f32 0.0, %v2548
      %v2550 = vpop.f32.mrf.mxu0
      %v2551 = vadd.f32 0.0, %v2550
      %2552 = vmatmul.bf16.gmra.mxu0 %v2426
      %v2553 = vpop.f32.mrf.mxu0
      %v2554 = vadd.f32 0.0, %v2553
      %v2555 = vpop.f32.mrf.mxu0
      %v2556 = vadd.f32 0.0, %v2555
      %2557 = vmatmul.bf16.gmra.mxu0 %v2429
      %v2558 = vpop.f32.mrf.mxu0
      %v2559 = vadd.f32 0.0, %v2558
      %v2560 = vpop.f32.mrf.mxu0
      %v2561 = vadd.f32 0.0, %v2560
      %2562 = vdwg.mxu0
      %v2563 = vadd.f32 %v2285, %v2444
      %v2564 = vadd.f32 %v2286, %v2446
      %v2565 = vadd.f32 %v2287, %v2449
      %v2566 = vadd.f32 %v2288, %v2451
      %v2567 = vadd.f32 %v2289, %v2454
      %v2568 = vadd.f32 %v2290, %v2456
      %v2569 = vadd.f32 %v2291, %v2459
      %v2570 = vadd.f32 %v2292, %v2461
      %v2571 = vadd.f32 %v2293, %v2464
      %v2572 = vadd.f32 %v2294, %v2466
      %v2573 = vadd.f32 %v2295, %v2469
      %v2574 = vadd.f32 %v2296, %v2471
      %v2575 = vadd.f32 %v2297, %v2474
      %v2576 = vadd.f32 %v2298, %v2476
      %v2577 = vadd.f32 %v2299, %v2479
      %v2578 = vadd.f32 %v2300, %v2481
      %v2579 = vadd.f32 %v2301, %v2484
      %v2580 = vadd.f32 %v2302, %v2486
      %v2581 = vadd.f32 %v2303, %v2489
      %v2582 = vadd.f32 %v2304, %v2491
      %v2583 = vadd.f32 %v2305, %v2494
      %v2584 = vadd.f32 %v2306, %v2496
      %v2585 = vadd.f32 %v2307, %v2499
      %v2586 = vadd.f32 %v2308, %v2501
      %v2587 = vadd.f32 %v2309, %v2504
      %v2588 = vadd.f32 %v2310, %v2506
      %v2589 = vadd.f32 %v2311, %v2509
      %v2590 = vadd.f32 %v2312, %v2511
      %v2591 = vadd.f32 %v2313, %v2514
      %v2592 = vadd.f32 %v2314, %v2516
      %v2593 = vadd.f32 %v2315, %v2519
      %v2594 = vadd.f32 %v2316, %v2521
      %v2595 = vadd.f32 %v2317, %v2524
      %v2596 = vadd.f32 %v2318, %v2526
      %v2597 = vadd.f32 %v2319, %v2529
      %v2598 = vadd.f32 %v2320, %v2531
      %v2599 = vadd.f32 %v2321, %v2534
      %v2600 = vadd.f32 %v2322, %v2536
      %v2601 = vadd.f32 %v2323, %v2539
      %v2602 = vadd.f32 %v2324, %v2541
      %v2603 = vadd.f32 %v2325, %v2544
      %v2604 = vadd.f32 %v2326, %v2546
      %v2605 = vadd.f32 %v2327, %v2549
      %v2606 = vadd.f32 %v2328, %v2551
      %v2607 = vadd.f32 %v2329, %v2554
      %v2608 = vadd.f32 %v2330, %v2556
      %v2609 = vadd.f32 %v2331, %v2559
      %v2610 = vadd.f32 %v2332, %v2561
      %v2611 = vld [vmem:[%s219 + $0x10] sm:$0xf]
      %v2612 = vld [vmem:[%s219 + $0x14] sm:$0xf]
      %v2613 = vld [vmem:[%s219 + $0x18] sm:$0xf]
      %v2614 = vld [vmem:[%s219 + $0x1c] sm:$0xf]
      %v2615 = vld [vmem:[%s219 + $0x20] sm:$0xf]
      %v2616 = vld [vmem:[%s219 + $0x24] sm:$0xf]
      %v2617 = vld [vmem:[%s219 + $0x28] sm:$0xf]
      %v2618 = vld [vmem:[%s219 + $0x2c] sm:$0xf]
      %v2619 = vld [vmem:[%s219 + $0x30] sm:$0xf]
      %v2620 = vld [vmem:[%s219 + $0x34] sm:$0xf]
      %v2621 = vld [vmem:[%s219 + $0x38] sm:$0xf]
      %v2622 = vld [vmem:[%s219 + $0x3c] sm:$0xf]
      %v2623 = vld [vmem:[%s219 + $0x40] sm:$0xf]
      %v2624 = vld [vmem:[%s219 + $0x44] sm:$0xf]
      %v2625 = vld [vmem:[%s219 + $0x48] sm:$0xf]
      %v2626 = vld [vmem:[%s219 + $0x4c] sm:$0xf]
      %v2627 = vld [vmem:[%s219 + $0x50] sm:$0xf]
      %v2628 = vld [vmem:[%s219 + $0x54] sm:$0xf]
      %v2629 = vld [vmem:[%s219 + $0x58] sm:$0xf]
      %v2630 = vld [vmem:[%s219 + $0x5c] sm:$0xf]
      %v2631 = vld [vmem:[%s219 + $0x60] sm:$0xf]
      %v2632 = vld [vmem:[%s219 + $0x64] sm:$0xf]
      %v2633 = vld [vmem:[%s219 + $0x68] sm:$0xf]
      %v2634 = vld [vmem:[%s219 + $0x6c] sm:$0xf]
      %v2635 = vld [vmem:[%s219 + $0x70] sm:$0xf]
      %v2636 = vld [vmem:[%s219 + $0x74] sm:$0xf]
      %v2637 = vld [vmem:[%s219 + $0x78] sm:$0xf]
      %v2638 = vld [vmem:[%s219 + $0x7c] sm:$0xf]
      %v2639 = vld [vmem:[%s219 + $0x80] sm:$0xf]
      %v2640 = vld [vmem:[%s219 + $0x84] sm:$0xf]
      %v2641 = vld [vmem:[%s219 + $0x88] sm:$0xf]
      %v2642 = vld [vmem:[%s219 + $0x8c] sm:$0xf]
      %v2643 = vld [vmem:[%s219 + $0x90] sm:$0xf]
      %v2644 = vld [vmem:[%s219 + $0x94] sm:$0xf]
      %v2645 = vld [vmem:[%s219 + $0x98] sm:$0xf]
      %v2646 = vld [vmem:[%s219 + $0x9c] sm:$0xf]
      %v2647 = vld [vmem:[%s219 + $0xa0] sm:$0xf]
      %v2648 = vld [vmem:[%s219 + $0xa4] sm:$0xf]
      %v2649 = vld [vmem:[%s219 + $0xa8] sm:$0xf]
      %v2650 = vld [vmem:[%s219 + $0xac] sm:$0xf]
      %v2651 = vld [vmem:[%s219 + $0xb0] sm:$0xf]
      %v2652 = vld [vmem:[%s219 + $0xb4] sm:$0xf]
      %v2653 = vld [vmem:[%s219 + $0xb8] sm:$0xf]
      %v2654 = vld [vmem:[%s219 + $0xbc] sm:$0xf]
      %v2655 = vld [vmem:[%s219 + $0xc0] sm:$0xf]
      %v2656 = vld [vmem:[%s219 + $0xc4] sm:$0xf]
      %v2657 = vld [vmem:[%s219 + $0xc8] sm:$0xf]
      %v2658 = vld [vmem:[%s219 + $0xcc] sm:$0xf]
      %v2659 = vld [vmem:[%s219 + $0xd0] sm:$0x1]
      %s2660 = scalar_lea.vmem %s1, 20
      %v2661 = vld [vmem:[%s2660] sm:$0xf]
      %v2711 = vunpack.c.l.b16 %v2611
      %v2712 = vunpack.c.l.b16 %v2612
      %v2713 = vunpack.c.l.b16 %v2613
      %v2714 = vunpack.c.l.b16 %v2614
      %v2715 = vunpack.c.l.b16 %v2615
      %v2716 = vunpack.c.l.b16 %v2616
      %v2717 = vunpack.c.l.b16 %v2617
      %v2718 = vunpack.c.l.b16 %v2618
      %v2719 = vunpack.c.l.b16 %v2619
      %v2720 = vunpack.c.l.b16 %v2620
      %v2721 = vunpack.c.l.b16 %v2621
      %v2722 = vunpack.c.l.b16 %v2622
      %v2723 = vunpack.c.l.b16 %v2623
      %v2724 = vunpack.c.l.b16 %v2624
      %v2725 = vunpack.c.l.b16 %v2625
      %v2726 = vunpack.c.l.b16 %v2626
      %v2727 = vunpack.c.l.b16 %v2627
      %v2728 = vunpack.c.l.b16 %v2628
      %v2729 = vunpack.c.l.b16 %v2629
      %v2730 = vunpack.c.l.b16 %v2630
      %v2731 = vunpack.c.l.b16 %v2631
      %v2732 = vunpack.c.l.b16 %v2632
      %v2733 = vunpack.c.l.b16 %v2633
      %v2734 = vunpack.c.l.b16 %v2634
      %v2735 = vunpack.c.l.b16 %v2635
      %v2736 = vunpack.c.l.b16 %v2636
      %v2737 = vunpack.c.l.b16 %v2637
      %v2738 = vunpack.c.l.b16 %v2638
      %v2739 = vunpack.c.l.b16 %v2639
      %v2740 = vunpack.c.l.b16 %v2640
      %v2741 = vunpack.c.l.b16 %v2641
      %v2742 = vunpack.c.l.b16 %v2642
      %v2743 = vunpack.c.l.b16 %v2643
      %v2744 = vunpack.c.l.b16 %v2644
      %v2745 = vunpack.c.l.b16 %v2645
      %v2746 = vunpack.c.l.b16 %v2646
      %v2747 = vunpack.c.l.b16 %v2647
      %v2748 = vunpack.c.l.b16 %v2648
      %v2749 = vunpack.c.l.b16 %v2649
      %v2750 = vunpack.c.l.b16 %v2650
      %v2751 = vunpack.c.l.b16 %v2651
      %v2752 = vunpack.c.l.b16 %v2652
      %v2753 = vunpack.c.l.b16 %v2653
      %v2754 = vunpack.c.l.b16 %v2654
      %v2755 = vunpack.c.l.b16 %v2655
      %v2756 = vunpack.c.l.b16 %v2656
      %v2757 = vunpack.c.l.b16 %v2657
      %v2758 = vunpack.c.l.b16 %v2658
      %v2759 = vunpack.c.l.b16 %v2659
      %v2760 = vpack.c.b16 %v2712, %v2711
      %v2761 = vpack.c.b16 %v2714, %v2713
      %v2762 = vpack.c.b16 %v2716, %v2715
      %v2763 = vpack.c.b16 %v2718, %v2717
      %v2764 = vpack.c.b16 %v2720, %v2719
      %v2765 = vpack.c.b16 %v2722, %v2721
      %v2766 = vpack.c.b16 %v2724, %v2723
      %v2767 = vpack.c.b16 %v2726, %v2725
      %v2768 = vpack.c.b16 %v2728, %v2727
      %v2769 = vpack.c.b16 %v2730, %v2729
      %v2770 = vpack.c.b16 %v2732, %v2731
      %v2771 = vpack.c.b16 %v2734, %v2733
      %v2772 = vpack.c.b16 %v2736, %v2735
      %v2773 = vpack.c.b16 %v2738, %v2737
      %v2774 = vpack.c.b16 %v2740, %v2739
      %v2775 = vpack.c.b16 %v2742, %v2741
      %v2776 = vpack.c.b16 %v2744, %v2743
      %v2777 = vpack.c.b16 %v2746, %v2745
      %v2778 = vpack.c.b16 %v2748, %v2747
      %v2779 = vpack.c.b16 %v2750, %v2749
      %v2780 = vpack.c.b16 %v2752, %v2751
      %v2781 = vpack.c.b16 %v2754, %v2753
      %v2782 = vpack.c.b16 %v2756, %v2755
      %v2783 = vpack.c.b16 %v2758, %v2757
      %v2784 = vpack.c.b16 %v2759, %v2759
      %v2786 = vshrl.u32 %v2760, 16
      %v2788 = vshll.u32 %v2760, 16
      %v2790 = vrot.slane %v2788, 1
      %v2791 = vor.u32 %v2786, %v2790
      %v2793 = vshll.u32 %v2761, 16
      %v2795 = vrot.slane %v2793, 1
      %v2796 = vsel %vm1234, %v2791, %v2795
      %v2797 = vshrl.u32 %v2761, 16
      %v2799 = vor.u32 %v2797, %v2795
      %v2801 = vshll.u32 %v2762, 16
      %v2803 = vrot.slane %v2801, 1
      %v2804 = vsel %vm1234, %v2799, %v2803
      %v2805 = vshrl.u32 %v2762, 16
      %v2807 = vor.u32 %v2805, %v2803
      %v2809 = vshll.u32 %v2763, 16
      %v2811 = vrot.slane %v2809, 1
      %v2812 = vsel %vm1234, %v2807, %v2811
      %v2813 = vshrl.u32 %v2763, 16
      %v2815 = vor.u32 %v2813, %v2811
      %v2817 = vshll.u32 %v2764, 16
      %v2819 = vrot.slane %v2817, 1
      %v2820 = vsel %vm1234, %v2815, %v2819
      %v2821 = vshrl.u32 %v2764, 16
      %v2823 = vor.u32 %v2821, %v2819
      %v2825 = vshll.u32 %v2765, 16
      %v2827 = vrot.slane %v2825, 1
      %v2828 = vsel %vm1234, %v2823, %v2827
      %v2829 = vshrl.u32 %v2765, 16
      %v2831 = vor.u32 %v2829, %v2827
      %v2833 = vshll.u32 %v2766, 16
      %v2835 = vrot.slane %v2833, 1
      %v2836 = vsel %vm1234, %v2831, %v2835
      %v2837 = vshrl.u32 %v2766, 16
      %v2839 = vor.u32 %v2837, %v2835
      %v2841 = vshll.u32 %v2767, 16
      %v2843 = vrot.slane %v2841, 1
      %v2844 = vsel %vm1234, %v2839, %v2843
      %v2845 = vshrl.u32 %v2767, 16
      %v2847 = vor.u32 %v2845, %v2843
      %v2849 = vshll.u32 %v2768, 16
      %v2851 = vrot.slane %v2849, 1
      %v2852 = vsel %vm1234, %v2847, %v2851
      %v2853 = vshrl.u32 %v2768, 16
      %v2855 = vor.u32 %v2853, %v2851
      %v2857 = vshll.u32 %v2769, 16
      %v2859 = vrot.slane %v2857, 1
      %v2860 = vsel %vm1234, %v2855, %v2859
      %v2861 = vshrl.u32 %v2769, 16
      %v2863 = vor.u32 %v2861, %v2859
      %v2865 = vshll.u32 %v2770, 16
      %v2867 = vrot.slane %v2865, 1
      %v2868 = vsel %vm1234, %v2863, %v2867
      %v2869 = vshrl.u32 %v2770, 16
      %v2871 = vor.u32 %v2869, %v2867
      %v2873 = vshll.u32 %v2771, 16
      %v2875 = vrot.slane %v2873, 1
      %v2876 = vsel %vm1234, %v2871, %v2875
      %v2877 = vshrl.u32 %v2771, 16
      %v2879 = vor.u32 %v2877, %v2875
      %v2881 = vshll.u32 %v2772, 16
      %v2883 = vrot.slane %v2881, 1
      %v2884 = vsel %vm1234, %v2879, %v2883
      %v2885 = vshrl.u32 %v2772, 16
      %v2887 = vor.u32 %v2885, %v2883
      %v2889 = vshll.u32 %v2773, 16
      %v2891 = vrot.slane %v2889, 1
      %v2892 = vsel %vm1234, %v2887, %v2891
      %v2893 = vshrl.u32 %v2773, 16
      %v2895 = vor.u32 %v2893, %v2891
      %v2897 = vshll.u32 %v2774, 16
      %v2899 = vrot.slane %v2897, 1
      %v2900 = vsel %vm1234, %v2895, %v2899
      %v2901 = vshrl.u32 %v2774, 16
      %v2903 = vor.u32 %v2901, %v2899
      %v2905 = vshll.u32 %v2775, 16
      %v2907 = vrot.slane %v2905, 1
      %v2908 = vsel %vm1234, %v2903, %v2907
      %v2909 = vshrl.u32 %v2775, 16
      %v2911 = vor.u32 %v2909, %v2907
      %v2913 = vshll.u32 %v2776, 16
      %v2915 = vrot.slane %v2913, 1
      %v2916 = vsel %vm1234, %v2911, %v2915
      %v2917 = vshrl.u32 %v2776, 16
      %v2919 = vor.u32 %v2917, %v2915
      %v2921 = vshll.u32 %v2777, 16
      %v2923 = vrot.slane %v2921, 1
      %v2924 = vsel %vm1234, %v2919, %v2923
      %v2925 = vshrl.u32 %v2777, 16
      %v2927 = vor.u32 %v2925, %v2923
      %v2929 = vshll.u32 %v2778, 16
      %v2931 = vrot.slane %v2929, 1
      %v2932 = vsel %vm1234, %v2927, %v2931
      %v2933 = vshrl.u32 %v2778, 16
      %v2935 = vor.u32 %v2933, %v2931
      %v2937 = vshll.u32 %v2779, 16
      %v2939 = vrot.slane %v2937, 1
      %v2940 = vsel %vm1234, %v2935, %v2939
      %v2941 = vshrl.u32 %v2779, 16
      %v2943 = vor.u32 %v2941, %v2939
      %v2945 = vshll.u32 %v2780, 16
      %v2947 = vrot.slane %v2945, 1
      %v2948 = vsel %vm1234, %v2943, %v2947
      %v2949 = vshrl.u32 %v2780, 16
      %v2951 = vor.u32 %v2949, %v2947
      %v2953 = vshll.u32 %v2781, 16
      %v2955 = vrot.slane %v2953, 1
      %v2956 = vsel %vm1234, %v2951, %v2955
      %v2957 = vshrl.u32 %v2781, 16
      %v2959 = vor.u32 %v2957, %v2955
      %v2961 = vshll.u32 %v2782, 16
      %v2963 = vrot.slane %v2961, 1
      %v2964 = vsel %vm1234, %v2959, %v2963
      %v2965 = vshrl.u32 %v2782, 16
      %v2967 = vor.u32 %v2965, %v2963
      %v2969 = vshll.u32 %v2783, 16
      %v2971 = vrot.slane %v2969, 1
      %v2972 = vsel %vm1234, %v2967, %v2971
      %v2973 = vshrl.u32 %v2783, 16
      %v2975 = vor.u32 %v2973, %v2971
      %v2977 = vshll.u32 %v2784, 16
      %v2979 = vrot.slane %v2977, 1
      %v2980 = vsel %vm1234, %v2975, %v2979
      %v2982 = vsel %vm398, %v2796, 0
      %v2985 = vsel %vm398, %v2804, 0
      %v2988 = vsel %vm398, %v2812, 0
      %v2991 = vsel %vm398, %v2820, 0
      %v2994 = vsel %vm398, %v2828, 0
      %v2997 = vsel %vm398, %v2836, 0
      %v3000 = vsel %vm398, %v2844, 0
      %v3003 = vsel %vm398, %v2852, 0
      %v3006 = vsel %vm398, %v2860, 0
      %v3009 = vsel %vm398, %v2868, 0
      %v3012 = vsel %vm398, %v2876, 0
      %v3015 = vsel %vm398, %v2884, 0
      %v3018 = vsel %vm398, %v2892, 0
      %v3021 = vsel %vm398, %v2900, 0
      %v3024 = vsel %vm398, %v2908, 0
      %v3027 = vsel %vm398, %v2916, 0
      %v3030 = vsel %vm398, %v2924, 0
      %v3033 = vsel %vm398, %v2932, 0
      %v3036 = vsel %vm398, %v2940, 0
      %v3039 = vsel %vm398, %v2948, 0
      %v3042 = vsel %vm398, %v2956, 0
      %v3045 = vsel %vm398, %v2964, 0
      %v3048 = vsel %vm398, %v2972, 0
      %v3051 = vsel %vm398, %v2980, 0
      %v3054 = vsel %vm471, %v2661, 0
      %3056 = vmatpush.bf16.msra.mxu0 0
      %3057 = vmatpush.bf16.msra.mxu0 0
      %3058 = vmatpush.bf16.msra.mxu0 0
      %3059 = vmatpush.bf16.msra.mxu0 0
      %3060 = vmatpush.bf16.msra.mxu0 0
      %3061 = vmatpush.bf16.msra.mxu0 0
      %3062 = vmatpush.bf16.msra.mxu0 0
      %3063 = vmatpush.bf16.msra.mxu0 %v3054
      %3064 = vmatmul.bf16.gmra.mxu0 %v2982
      %v3065 = vpop.f32.mrf.mxu0
      %v3066 = vadd.f32 0.0, %v3065
      %v3067 = vpop.f32.mrf.mxu0
      %v3068 = vadd.f32 0.0, %v3067
      %3069 = vmatmul.bf16.gmra.mxu0 %v2985
      %v3070 = vpop.f32.mrf.mxu0
      %v3071 = vadd.f32 0.0, %v3070
      %v3072 = vpop.f32.mrf.mxu0
      %v3073 = vadd.f32 0.0, %v3072
      %3074 = vmatmul.bf16.gmra.mxu0 %v2988
      %v3075 = vpop.f32.mrf.mxu0
      %v3076 = vadd.f32 0.0, %v3075
      %v3077 = vpop.f32.mrf.mxu0
      %v3078 = vadd.f32 0.0, %v3077
      %3079 = vmatmul.bf16.gmra.mxu0 %v2991
      %v3080 = vpop.f32.mrf.mxu0
      %v3081 = vadd.f32 0.0, %v3080
      %v3082 = vpop.f32.mrf.mxu0
      %v3083 = vadd.f32 0.0, %v3082
      %3084 = vmatmul.bf16.gmra.mxu0 %v2994
      %v3085 = vpop.f32.mrf.mxu0
      %v3086 = vadd.f32 0.0, %v3085
      %v3087 = vpop.f32.mrf.mxu0
      %v3088 = vadd.f32 0.0, %v3087
      %3089 = vmatmul.bf16.gmra.mxu0 %v2997
      %v3090 = vpop.f32.mrf.mxu0
      %v3091 = vadd.f32 0.0, %v3090
      %v3092 = vpop.f32.mrf.mxu0
      %v3093 = vadd.f32 0.0, %v3092
      %3094 = vmatmul.bf16.gmra.mxu0 %v3000
      %v3095 = vpop.f32.mrf.mxu0
      %v3096 = vadd.f32 0.0, %v3095
      %v3097 = vpop.f32.mrf.mxu0
      %v3098 = vadd.f32 0.0, %v3097
      %3099 = vmatmul.bf16.gmra.mxu0 %v3003
      %v3100 = vpop.f32.mrf.mxu0
      %v3101 = vadd.f32 0.0, %v3100
      %v3102 = vpop.f32.mrf.mxu0
      %v3103 = vadd.f32 0.0, %v3102
      %3104 = vmatmul.bf16.gmra.mxu0 %v3006
      %v3105 = vpop.f32.mrf.mxu0
      %v3106 = vadd.f32 0.0, %v3105
      %v3107 = vpop.f32.mrf.mxu0
      %v3108 = vadd.f32 0.0, %v3107
      %3109 = vmatmul.bf16.gmra.mxu0 %v3009
      %v3110 = vpop.f32.mrf.mxu0
      %v3111 = vadd.f32 0.0, %v3110
      %v3112 = vpop.f32.mrf.mxu0
      %v3113 = vadd.f32 0.0, %v3112
      %3114 = vmatmul.bf16.gmra.mxu0 %v3012
      %v3115 = vpop.f32.mrf.mxu0
      %v3116 = vadd.f32 0.0, %v3115
      %v3117 = vpop.f32.mrf.mxu0
      %v3118 = vadd.f32 0.0, %v3117
      %3119 = vmatmul.bf16.gmra.mxu0 %v3015
      %v3120 = vpop.f32.mrf.mxu0
      %v3121 = vadd.f32 0.0, %v3120
      %v3122 = vpop.f32.mrf.mxu0
      %v3123 = vadd.f32 0.0, %v3122
      %3124 = vmatmul.bf16.gmra.mxu0 %v3018
      %v3125 = vpop.f32.mrf.mxu0
      %v3126 = vadd.f32 0.0, %v3125
      %v3127 = vpop.f32.mrf.mxu0
      %v3128 = vadd.f32 0.0, %v3127
      %3129 = vmatmul.bf16.gmra.mxu0 %v3021
      %v3130 = vpop.f32.mrf.mxu0
      %v3131 = vadd.f32 0.0, %v3130
      %v3132 = vpop.f32.mrf.mxu0
      %v3133 = vadd.f32 0.0, %v3132
      %3134 = vmatmul.bf16.gmra.mxu0 %v3024
      %v3135 = vpop.f32.mrf.mxu0
      %v3136 = vadd.f32 0.0, %v3135
      %v3137 = vpop.f32.mrf.mxu0
      %v3138 = vadd.f32 0.0, %v3137
      %3139 = vmatmul.bf16.gmra.mxu0 %v3027
      %v3140 = vpop.f32.mrf.mxu0
      %v3141 = vadd.f32 0.0, %v3140
      %v3142 = vpop.f32.mrf.mxu0
      %v3143 = vadd.f32 0.0, %v3142
      %3144 = vmatmul.bf16.gmra.mxu0 %v3030
      %v3145 = vpop.f32.mrf.mxu0
      %v3146 = vadd.f32 0.0, %v3145
      %v3147 = vpop.f32.mrf.mxu0
      %v3148 = vadd.f32 0.0, %v3147
      %3149 = vmatmul.bf16.gmra.mxu0 %v3033
      %v3150 = vpop.f32.mrf.mxu0
      %v3151 = vadd.f32 0.0, %v3150
      %v3152 = vpop.f32.mrf.mxu0
      %v3153 = vadd.f32 0.0, %v3152
      %3154 = vmatmul.bf16.gmra.mxu0 %v3036
      %v3155 = vpop.f32.mrf.mxu0
      %v3156 = vadd.f32 0.0, %v3155
      %v3157 = vpop.f32.mrf.mxu0
      %v3158 = vadd.f32 0.0, %v3157
      %3159 = vmatmul.bf16.gmra.mxu0 %v3039
      %v3160 = vpop.f32.mrf.mxu0
      %v3161 = vadd.f32 0.0, %v3160
      %v3162 = vpop.f32.mrf.mxu0
      %v3163 = vadd.f32 0.0, %v3162
      %3164 = vmatmul.bf16.gmra.mxu0 %v3042
      %v3165 = vpop.f32.mrf.mxu0
      %v3166 = vadd.f32 0.0, %v3165
      %v3167 = vpop.f32.mrf.mxu0
      %v3168 = vadd.f32 0.0, %v3167
      %3169 = vmatmul.bf16.gmra.mxu0 %v3045
      %v3170 = vpop.f32.mrf.mxu0
      %v3171 = vadd.f32 0.0, %v3170
      %v3172 = vpop.f32.mrf.mxu0
      %v3173 = vadd.f32 0.0, %v3172
      %3174 = vmatmul.bf16.gmra.mxu0 %v3048
      %v3175 = vpop.f32.mrf.mxu0
      %v3176 = vadd.f32 0.0, %v3175
      %v3177 = vpop.f32.mrf.mxu0
      %v3178 = vadd.f32 0.0, %v3177
      %3179 = vmatmul.bf16.gmra.mxu0 %v3051
      %v3180 = vpop.f32.mrf.mxu0
      %v3181 = vadd.f32 0.0, %v3180
      %v3182 = vpop.f32.mrf.mxu0
      %v3183 = vadd.f32 0.0, %v3182
      %3184 = vdwg.mxu0
      %v3185 = vadd.f32 %v2563, %v3066
      %v3186 = vadd.f32 %v2564, %v3068
      %v3187 = vadd.f32 %v2565, %v3071
      %v3188 = vadd.f32 %v2566, %v3073
      %v3189 = vadd.f32 %v2567, %v3076
      %v3190 = vadd.f32 %v2568, %v3078
      %v3191 = vadd.f32 %v2569, %v3081
      %v3192 = vadd.f32 %v2570, %v3083
      %v3193 = vadd.f32 %v2571, %v3086
      %v3194 = vadd.f32 %v2572, %v3088
      %v3195 = vadd.f32 %v2573, %v3091
      %v3196 = vadd.f32 %v2574, %v3093
      %v3197 = vadd.f32 %v2575, %v3096
      %v3198 = vadd.f32 %v2576, %v3098
      %v3199 = vadd.f32 %v2577, %v3101
      %v3200 = vadd.f32 %v2578, %v3103
      %v3201 = vadd.f32 %v2579, %v3106
      %v3202 = vadd.f32 %v2580, %v3108
      %v3203 = vadd.f32 %v2581, %v3111
      %v3204 = vadd.f32 %v2582, %v3113
      %v3205 = vadd.f32 %v2583, %v3116
      %v3206 = vadd.f32 %v2584, %v3118
      %v3207 = vadd.f32 %v2585, %v3121
      %v3208 = vadd.f32 %v2586, %v3123
      %v3209 = vadd.f32 %v2587, %v3126
      %v3210 = vadd.f32 %v2588, %v3128
      %v3211 = vadd.f32 %v2589, %v3131
      %v3212 = vadd.f32 %v2590, %v3133
      %v3213 = vadd.f32 %v2591, %v3136
      %v3214 = vadd.f32 %v2592, %v3138
      %v3215 = vadd.f32 %v2593, %v3141
      %v3216 = vadd.f32 %v2594, %v3143
      %v3217 = vadd.f32 %v2595, %v3146
      %v3218 = vadd.f32 %v2596, %v3148
      %v3219 = vadd.f32 %v2597, %v3151
      %v3220 = vadd.f32 %v2598, %v3153
      %v3221 = vadd.f32 %v2599, %v3156
      %v3222 = vadd.f32 %v2600, %v3158
      %v3223 = vadd.f32 %v2601, %v3161
      %v3224 = vadd.f32 %v2602, %v3163
      %v3225 = vadd.f32 %v2603, %v3166
      %v3226 = vadd.f32 %v2604, %v3168
      %v3227 = vadd.f32 %v2605, %v3171
      %v3228 = vadd.f32 %v2606, %v3173
      %v3229 = vadd.f32 %v2607, %v3176
      %v3230 = vadd.f32 %v2608, %v3178
      %v3231 = vadd.f32 %v2609, %v3181
      %v3232 = vadd.f32 %v2610, %v3183
      %v3233 = vld [vmem:[%s219 + $0x18] sm:$0x8]
      %v3234 = vld [vmem:[%s219 + $0x1c] sm:$0xf]
      %v3235 = vld [vmem:[%s219 + $0x20] sm:$0xf]
      %v3236 = vld [vmem:[%s219 + $0x24] sm:$0xf]
      %v3237 = vld [vmem:[%s219 + $0x28] sm:$0xf]
      %v3238 = vld [vmem:[%s219 + $0x2c] sm:$0xf]
      %v3239 = vld [vmem:[%s219 + $0x30] sm:$0xf]
      %v3240 = vld [vmem:[%s219 + $0x34] sm:$0xf]
      %v3241 = vld [vmem:[%s219 + $0x38] sm:$0xf]
      %v3242 = vld [vmem:[%s219 + $0x3c] sm:$0xf]
      %v3243 = vld [vmem:[%s219 + $0x40] sm:$0xf]
      %v3244 = vld [vmem:[%s219 + $0x44] sm:$0xf]
      %v3245 = vld [vmem:[%s219 + $0x48] sm:$0xf]
      %v3246 = vld [vmem:[%s219 + $0x4c] sm:$0xf]
      %v3247 = vld [vmem:[%s219 + $0x50] sm:$0xf]
      %v3248 = vld [vmem:[%s219 + $0x54] sm:$0xf]
      %v3249 = vld [vmem:[%s219 + $0x58] sm:$0xf]
      %v3250 = vld [vmem:[%s219 + $0x5c] sm:$0xf]
      %v3251 = vld [vmem:[%s219 + $0x60] sm:$0xf]
      %v3252 = vld [vmem:[%s219 + $0x64] sm:$0xf]
      %v3253 = vld [vmem:[%s219 + $0x68] sm:$0xf]
      %v3254 = vld [vmem:[%s219 + $0x6c] sm:$0xf]
      %v3255 = vld [vmem:[%s219 + $0x70] sm:$0xf]
      %v3256 = vld [vmem:[%s219 + $0x74] sm:$0xf]
      %v3257 = vld [vmem:[%s219 + $0x78] sm:$0xf]
      %v3258 = vld [vmem:[%s219 + $0x7c] sm:$0xf]
      %v3259 = vld [vmem:[%s219 + $0x80] sm:$0xf]
      %v3260 = vld [vmem:[%s219 + $0x84] sm:$0xf]
      %v3261 = vld [vmem:[%s219 + $0x88] sm:$0xf]
      %v3262 = vld [vmem:[%s219 + $0x8c] sm:$0xf]
      %v3263 = vld [vmem:[%s219 + $0x90] sm:$0xf]
      %v3264 = vld [vmem:[%s219 + $0x94] sm:$0xf]
      %v3265 = vld [vmem:[%s219 + $0x98] sm:$0xf]
      %v3266 = vld [vmem:[%s219 + $0x9c] sm:$0xf]
      %v3267 = vld [vmem:[%s219 + $0xa0] sm:$0xf]
      %v3268 = vld [vmem:[%s219 + $0xa4] sm:$0xf]
      %v3269 = vld [vmem:[%s219 + $0xa8] sm:$0xf]
      %v3270 = vld [vmem:[%s219 + $0xac] sm:$0xf]
      %v3271 = vld [vmem:[%s219 + $0xb0] sm:$0xf]
      %v3272 = vld [vmem:[%s219 + $0xb4] sm:$0xf]
      %v3273 = vld [vmem:[%s219 + $0xb8] sm:$0xf]
      %v3274 = vld [vmem:[%s219 + $0xbc] sm:$0xf]
      %v3275 = vld [vmem:[%s219 + $0xc0] sm:$0xf]
      %v3276 = vld [vmem:[%s219 + $0xc4] sm:$0xf]
      %v3277 = vld [vmem:[%s219 + $0xc8] sm:$0xf]
      %v3278 = vld [vmem:[%s219 + $0xcc] sm:$0xf]
      %v3279 = vld [vmem:[%s219 + $0xd0] sm:$0xf]
      %v3280 = vld [vmem:[%s219 + $0xd4] sm:$0xf]
      %v3281 = vld [vmem:[%s219 + $0xd8] sm:$0xf]
      %s3282 = scalar_lea.vmem %s1, 24
      %v3283 = vld [vmem:[%s3282] sm:$0xf]
      %v3333 = vunpack.c.l.b16 %v3233
      %v3334 = vunpack.c.l.b16 %v3234
      %v3335 = vunpack.c.l.b16 %v3235
      %v3336 = vunpack.c.l.b16 %v3236
      %v3337 = vunpack.c.l.b16 %v3237
      %v3338 = vunpack.c.l.b16 %v3238
      %v3339 = vunpack.c.l.b16 %v3239
      %v3340 = vunpack.c.l.b16 %v3240
      %v3341 = vunpack.c.l.b16 %v3241
      %v3342 = vunpack.c.l.b16 %v3242
      %v3343 = vunpack.c.l.b16 %v3243
      %v3344 = vunpack.c.l.b16 %v3244
      %v3345 = vunpack.c.l.b16 %v3245
      %v3346 = vunpack.c.l.b16 %v3246
      %v3347 = vunpack.c.l.b16 %v3247
      %v3348 = vunpack.c.l.b16 %v3248
      %v3349 = vunpack.c.l.b16 %v3249
      %v3350 = vunpack.c.l.b16 %v3250
      %v3351 = vunpack.c.l.b16 %v3251
      %v3352 = vunpack.c.l.b16 %v3252
      %v3353 = vunpack.c.l.b16 %v3253
      %v3354 = vunpack.c.l.b16 %v3254
      %v3355 = vunpack.c.l.b16 %v3255
      %v3356 = vunpack.c.l.b16 %v3256
      %v3357 = vunpack.c.l.b16 %v3257
      %v3358 = vunpack.c.l.b16 %v3258
      %v3359 = vunpack.c.l.b16 %v3259
      %v3360 = vunpack.c.l.b16 %v3260
      %v3361 = vunpack.c.l.b16 %v3261
      %v3362 = vunpack.c.l.b16 %v3262
      %v3363 = vunpack.c.l.b16 %v3263
      %v3364 = vunpack.c.l.b16 %v3264
      %v3365 = vunpack.c.l.b16 %v3265
      %v3366 = vunpack.c.l.b16 %v3266
      %v3367 = vunpack.c.l.b16 %v3267
      %v3368 = vunpack.c.l.b16 %v3268
      %v3369 = vunpack.c.l.b16 %v3269
      %v3370 = vunpack.c.l.b16 %v3270
      %v3371 = vunpack.c.l.b16 %v3271
      %v3372 = vunpack.c.l.b16 %v3272
      %v3373 = vunpack.c.l.b16 %v3273
      %v3374 = vunpack.c.l.b16 %v3274
      %v3375 = vunpack.c.l.b16 %v3275
      %v3376 = vunpack.c.l.b16 %v3276
      %v3377 = vunpack.c.l.b16 %v3277
      %v3378 = vunpack.c.l.b16 %v3278
      %v3379 = vunpack.c.l.b16 %v3279
      %v3380 = vunpack.c.l.b16 %v3280
      %v3381 = vunpack.c.l.b16 %v3281
      %v3382 = vpack.c.b16 %v3334, %v3333
      %v3383 = vpack.c.b16 %v3336, %v3335
      %v3384 = vpack.c.b16 %v3338, %v3337
      %v3385 = vpack.c.b16 %v3340, %v3339
      %v3386 = vpack.c.b16 %v3342, %v3341
      %v3387 = vpack.c.b16 %v3344, %v3343
      %v3388 = vpack.c.b16 %v3346, %v3345
      %v3389 = vpack.c.b16 %v3348, %v3347
      %v3390 = vpack.c.b16 %v3350, %v3349
      %v3391 = vpack.c.b16 %v3352, %v3351
      %v3392 = vpack.c.b16 %v3354, %v3353
      %v3393 = vpack.c.b16 %v3356, %v3355
      %v3394 = vpack.c.b16 %v3358, %v3357
      %v3395 = vpack.c.b16 %v3360, %v3359
      %v3396 = vpack.c.b16 %v3362, %v3361
      %v3397 = vpack.c.b16 %v3364, %v3363
      %v3398 = vpack.c.b16 %v3366, %v3365
      %v3399 = vpack.c.b16 %v3368, %v3367
      %v3400 = vpack.c.b16 %v3370, %v3369
      %v3401 = vpack.c.b16 %v3372, %v3371
      %v3402 = vpack.c.b16 %v3374, %v3373
      %v3403 = vpack.c.b16 %v3376, %v3375
      %v3404 = vpack.c.b16 %v3378, %v3377
      %v3405 = vpack.c.b16 %v3380, %v3379
      %v3406 = vpack.c.b16 %v3381, %v3381
      %v3408 = vshrl.u32 %v3382, 16
      %v3410 = vrot.slane %v3408, 3
      %v3411 = vshll.u32 %v3382, 16
      %v3413 = vrot.slane %v3411, 4
      %v3414 = vor.u32 %v3410, %v3413
      %v3416 = vshrl.u32 %v3383, 16
      %v3418 = vrot.slane %v3416, 3
      %v3419 = vshll.u32 %v3383, 16
      %v3421 = vrot.slane %v3419, 4
      %v3422 = vor.u32 %v3418, %v3421
      %v3423 = vsel %vm631, %v3414, %v3422
      %v3425 = vshrl.u32 %v3384, 16
      %v3427 = vrot.slane %v3425, 3
      %v3428 = vshll.u32 %v3384, 16
      %v3430 = vrot.slane %v3428, 4
      %v3431 = vor.u32 %v3427, %v3430
      %v3432 = vsel %vm631, %v3422, %v3431
      %v3434 = vshrl.u32 %v3385, 16
      %v3436 = vrot.slane %v3434, 3
      %v3437 = vshll.u32 %v3385, 16
      %v3439 = vrot.slane %v3437, 4
      %v3440 = vor.u32 %v3436, %v3439
      %v3441 = vsel %vm631, %v3431, %v3440
      %v3443 = vshrl.u32 %v3386, 16
      %v3445 = vrot.slane %v3443, 3
      %v3446 = vshll.u32 %v3386, 16
      %v3448 = vrot.slane %v3446, 4
      %v3449 = vor.u32 %v3445, %v3448
      %v3450 = vsel %vm631, %v3440, %v3449
      %v3452 = vshrl.u32 %v3387, 16
      %v3454 = vrot.slane %v3452, 3
      %v3455 = vshll.u32 %v3387, 16
      %v3457 = vrot.slane %v3455, 4
      %v3458 = vor.u32 %v3454, %v3457
      %v3459 = vsel %vm631, %v3449, %v3458
      %v3461 = vshrl.u32 %v3388, 16
      %v3463 = vrot.slane %v3461, 3
      %v3464 = vshll.u32 %v3388, 16
      %v3466 = vrot.slane %v3464, 4
      %v3467 = vor.u32 %v3463, %v3466
      %v3468 = vsel %vm631, %v3458, %v3467
      %v3470 = vshrl.u32 %v3389, 16
      %v3472 = vrot.slane %v3470, 3
      %v3473 = vshll.u32 %v3389, 16
      %v3475 = vrot.slane %v3473, 4
      %v3476 = vor.u32 %v3472, %v3475
      %v3477 = vsel %vm631, %v3467, %v3476
      %v3479 = vshrl.u32 %v3390, 16
      %v3481 = vrot.slane %v3479, 3
      %v3482 = vshll.u32 %v3390, 16
      %v3484 = vrot.slane %v3482, 4
      %v3485 = vor.u32 %v3481, %v3484
      %v3486 = vsel %vm631, %v3476, %v3485
      %v3488 = vshrl.u32 %v3391, 16
      %v3490 = vrot.slane %v3488, 3
      %v3491 = vshll.u32 %v3391, 16
      %v3493 = vrot.slane %v3491, 4
      %v3494 = vor.u32 %v3490, %v3493
      %v3495 = vsel %vm631, %v3485, %v3494
      %v3497 = vshrl.u32 %v3392, 16
      %v3499 = vrot.slane %v3497, 3
      %v3500 = vshll.u32 %v3392, 16
      %v3502 = vrot.slane %v3500, 4
      %v3503 = vor.u32 %v3499, %v3502
      %v3504 = vsel %vm631, %v3494, %v3503
      %v3506 = vshrl.u32 %v3393, 16
      %v3508 = vrot.slane %v3506, 3
      %v3509 = vshll.u32 %v3393, 16
      %v3511 = vrot.slane %v3509, 4
      %v3512 = vor.u32 %v3508, %v3511
      %v3513 = vsel %vm631, %v3503, %v3512
      %v3515 = vshrl.u32 %v3394, 16
      %v3517 = vrot.slane %v3515, 3
      %v3518 = vshll.u32 %v3394, 16
      %v3520 = vrot.slane %v3518, 4
      %v3521 = vor.u32 %v3517, %v3520
      %v3522 = vsel %vm631, %v3512, %v3521
      %v3524 = vshrl.u32 %v3395, 16
      %v3526 = vrot.slane %v3524, 3
      %v3527 = vshll.u32 %v3395, 16
      %v3529 = vrot.slane %v3527, 4
      %v3530 = vor.u32 %v3526, %v3529
      %v3531 = vsel %vm631, %v3521, %v3530
      %v3533 = vshrl.u32 %v3396, 16
      %v3535 = vrot.slane %v3533, 3
      %v3536 = vshll.u32 %v3396, 16
      %v3538 = vrot.slane %v3536, 4
      %v3539 = vor.u32 %v3535, %v3538
      %v3540 = vsel %vm631, %v3530, %v3539
      %v3542 = vshrl.u32 %v3397, 16
      %v3544 = vrot.slane %v3542, 3
      %v3545 = vshll.u32 %v3397, 16
      %v3547 = vrot.slane %v3545, 4
      %v3548 = vor.u32 %v3544, %v3547
      %v3549 = vsel %vm631, %v3539, %v3548
      %v3551 = vshrl.u32 %v3398, 16
      %v3553 = vrot.slane %v3551, 3
      %v3554 = vshll.u32 %v3398, 16
      %v3556 = vrot.slane %v3554, 4
      %v3557 = vor.u32 %v3553, %v3556
      %v3558 = vsel %vm631, %v3548, %v3557
      %v3560 = vshrl.u32 %v3399, 16
      %v3562 = vrot.slane %v3560, 3
      %v3563 = vshll.u32 %v3399, 16
      %v3565 = vrot.slane %v3563, 4
      %v3566 = vor.u32 %v3562, %v3565
      %v3567 = vsel %vm631, %v3557, %v3566
      %v3569 = vshrl.u32 %v3400, 16
      %v3571 = vrot.slane %v3569, 3
      %v3572 = vshll.u32 %v3400, 16
      %v3574 = vrot.slane %v3572, 4
      %v3575 = vor.u32 %v3571, %v3574
      %v3576 = vsel %vm631, %v3566, %v3575
      %v3578 = vshrl.u32 %v3401, 16
      %v3580 = vrot.slane %v3578, 3
      %v3581 = vshll.u32 %v3401, 16
      %v3583 = vrot.slane %v3581, 4
      %v3584 = vor.u32 %v3580, %v3583
      %v3585 = vsel %vm631, %v3575, %v3584
      %v3587 = vshrl.u32 %v3402, 16
      %v3589 = vrot.slane %v3587, 3
      %v3590 = vshll.u32 %v3402, 16
      %v3592 = vrot.slane %v3590, 4
      %v3593 = vor.u32 %v3589, %v3592
      %v3594 = vsel %vm631, %v3584, %v3593
      %v3596 = vshrl.u32 %v3403, 16
      %v3598 = vrot.slane %v3596, 3
      %v3599 = vshll.u32 %v3403, 16
      %v3601 = vrot.slane %v3599, 4
      %v3602 = vor.u32 %v3598, %v3601
      %v3603 = vsel %vm631, %v3593, %v3602
      %v3605 = vshrl.u32 %v3404, 16
      %v3607 = vrot.slane %v3605, 3
      %v3608 = vshll.u32 %v3404, 16
      %v3610 = vrot.slane %v3608, 4
      %v3611 = vor.u32 %v3607, %v3610
      %v3612 = vsel %vm631, %v3602, %v3611
      %v3614 = vshrl.u32 %v3405, 16
      %v3616 = vrot.slane %v3614, 3
      %v3617 = vshll.u32 %v3405, 16
      %v3619 = vrot.slane %v3617, 4
      %v3620 = vor.u32 %v3616, %v3619
      %v3621 = vsel %vm631, %v3611, %v3620
      %v3623 = vshrl.u32 %v3406, 16
      %v3625 = vrot.slane %v3623, 3
      %v3626 = vshll.u32 %v3406, 16
      %v3628 = vrot.slane %v3626, 4
      %v3629 = vor.u32 %v3625, %v3628
      %v3630 = vsel %vm631, %v3620, %v3629
      %v3632 = vsel %vm398, %v3423, 0
      %v3635 = vsel %vm398, %v3432, 0
      %v3638 = vsel %vm398, %v3441, 0
      %v3641 = vsel %vm398, %v3450, 0
      %v3644 = vsel %vm398, %v3459, 0
      %v3647 = vsel %vm398, %v3468, 0
      %v3650 = vsel %vm398, %v3477, 0
      %v3653 = vsel %vm398, %v3486, 0
      %v3656 = vsel %vm398, %v3495, 0
      %v3659 = vsel %vm398, %v3504, 0
      %v3662 = vsel %vm398, %v3513, 0
      %v3665 = vsel %vm398, %v3522, 0
      %v3668 = vsel %vm398, %v3531, 0
      %v3671 = vsel %vm398, %v3540, 0
      %v3674 = vsel %vm398, %v3549, 0
      %v3677 = vsel %vm398, %v3558, 0
      %v3680 = vsel %vm398, %v3567, 0
      %v3683 = vsel %vm398, %v3576, 0
      %v3686 = vsel %vm398, %v3585, 0
      %v3689 = vsel %vm398, %v3594, 0
      %v3692 = vsel %vm398, %v3603, 0
      %v3695 = vsel %vm398, %v3612, 0
      %v3698 = vsel %vm398, %v3621, 0
      %v3701 = vsel %vm398, %v3630, 0
      %v3704 = vsel %vm471, %v3283, 0
      %3706 = vmatpush.bf16.msra.mxu0 0
      %3707 = vmatpush.bf16.msra.mxu0 0
      %3708 = vmatpush.bf16.msra.mxu0 0
      %3709 = vmatpush.bf16.msra.mxu0 0
      %3710 = vmatpush.bf16.msra.mxu0 0
      %3711 = vmatpush.bf16.msra.mxu0 0
      %3712 = vmatpush.bf16.msra.mxu0 0
      %3713 = vmatpush.bf16.msra.mxu0 %v3704
      %3714 = vmatmul.bf16.gmra.mxu0 %v3632
      %v3715 = vpop.f32.mrf.mxu0
      %v3716 = vadd.f32 0.0, %v3715
      %v3717 = vpop.f32.mrf.mxu0
      %v3718 = vadd.f32 0.0, %v3717
      %3719 = vmatmul.bf16.gmra.mxu0 %v3635
      %v3720 = vpop.f32.mrf.mxu0
      %v3721 = vadd.f32 0.0, %v3720
      %v3722 = vpop.f32.mrf.mxu0
      %v3723 = vadd.f32 0.0, %v3722
      %3724 = vmatmul.bf16.gmra.mxu0 %v3638
      %v3725 = vpop.f32.mrf.mxu0
      %v3726 = vadd.f32 0.0, %v3725
      %v3727 = vpop.f32.mrf.mxu0
      %v3728 = vadd.f32 0.0, %v3727
      %3729 = vmatmul.bf16.gmra.mxu0 %v3641
      %v3730 = vpop.f32.mrf.mxu0
      %v3731 = vadd.f32 0.0, %v3730
      %v3732 = vpop.f32.mrf.mxu0
      %v3733 = vadd.f32 0.0, %v3732
      %3734 = vmatmul.bf16.gmra.mxu0 %v3644
      %v3735 = vpop.f32.mrf.mxu0
      %v3736 = vadd.f32 0.0, %v3735
      %v3737 = vpop.f32.mrf.mxu0
      %v3738 = vadd.f32 0.0, %v3737
      %3739 = vmatmul.bf16.gmra.mxu0 %v3647
      %v3740 = vpop.f32.mrf.mxu0
      %v3741 = vadd.f32 0.0, %v3740
      %v3742 = vpop.f32.mrf.mxu0
      %v3743 = vadd.f32 0.0, %v3742
      %3744 = vmatmul.bf16.gmra.mxu0 %v3650
      %v3745 = vpop.f32.mrf.mxu0
      %v3746 = vadd.f32 0.0, %v3745
      %v3747 = vpop.f32.mrf.mxu0
      %v3748 = vadd.f32 0.0, %v3747
      %3749 = vmatmul.bf16.gmra.mxu0 %v3653
      %v3750 = vpop.f32.mrf.mxu0
      %v3751 = vadd.f32 0.0, %v3750
      %v3752 = vpop.f32.mrf.mxu0
      %v3753 = vadd.f32 0.0, %v3752
      %3754 = vmatmul.bf16.gmra.mxu0 %v3656
      %v3755 = vpop.f32.mrf.mxu0
      %v3756 = vadd.f32 0.0, %v3755
      %v3757 = vpop.f32.mrf.mxu0
      %v3758 = vadd.f32 0.0, %v3757
      %3759 = vmatmul.bf16.gmra.mxu0 %v3659
      %v3760 = vpop.f32.mrf.mxu0
      %v3761 = vadd.f32 0.0, %v3760
      %v3762 = vpop.f32.mrf.mxu0
      %v3763 = vadd.f32 0.0, %v3762
      %3764 = vmatmul.bf16.gmra.mxu0 %v3662
      %v3765 = vpop.f32.mrf.mxu0
      %v3766 = vadd.f32 0.0, %v3765
      %v3767 = vpop.f32.mrf.mxu0
      %v3768 = vadd.f32 0.0, %v3767
      %3769 = vmatmul.bf16.gmra.mxu0 %v3665
      %v3770 = vpop.f32.mrf.mxu0
      %v3771 = vadd.f32 0.0, %v3770
      %v3772 = vpop.f32.mrf.mxu0
      %v3773 = vadd.f32 0.0, %v3772
      %3774 = vmatmul.bf16.gmra.mxu0 %v3668
      %v3775 = vpop.f32.mrf.mxu0
      %v3776 = vadd.f32 0.0, %v3775
      %v3777 = vpop.f32.mrf.mxu0
      %v3778 = vadd.f32 0.0, %v3777
      %3779 = vmatmul.bf16.gmra.mxu0 %v3671
      %v3780 = vpop.f32.mrf.mxu0
      %v3781 = vadd.f32 0.0, %v3780
      %v3782 = vpop.f32.mrf.mxu0
      %v3783 = vadd.f32 0.0, %v3782
      %3784 = vmatmul.bf16.gmra.mxu0 %v3674
      %v3785 = vpop.f32.mrf.mxu0
      %v3786 = vadd.f32 0.0, %v3785
      %v3787 = vpop.f32.mrf.mxu0
      %v3788 = vadd.f32 0.0, %v3787
      %3789 = vmatmul.bf16.gmra.mxu0 %v3677
      %v3790 = vpop.f32.mrf.mxu0
      %v3791 = vadd.f32 0.0, %v3790
      %v3792 = vpop.f32.mrf.mxu0
      %v3793 = vadd.f32 0.0, %v3792
      %3794 = vmatmul.bf16.gmra.mxu0 %v3680
      %v3795 = vpop.f32.mrf.mxu0
      %v3796 = vadd.f32 0.0, %v3795
      %v3797 = vpop.f32.mrf.mxu0
      %v3798 = vadd.f32 0.0, %v3797
      %3799 = vmatmul.bf16.gmra.mxu0 %v3683
      %v3800 = vpop.f32.mrf.mxu0
      %v3801 = vadd.f32 0.0, %v3800
      %v3802 = vpop.f32.mrf.mxu0
      %v3803 = vadd.f32 0.0, %v3802
      %3804 = vmatmul.bf16.gmra.mxu0 %v3686
      %v3805 = vpop.f32.mrf.mxu0
      %v3806 = vadd.f32 0.0, %v3805
      %v3807 = vpop.f32.mrf.mxu0
      %v3808 = vadd.f32 0.0, %v3807
      %3809 = vmatmul.bf16.gmra.mxu0 %v3689
      %v3810 = vpop.f32.mrf.mxu0
      %v3811 = vadd.f32 0.0, %v3810
      %v3812 = vpop.f32.mrf.mxu0
      %v3813 = vadd.f32 0.0, %v3812
      %3814 = vmatmul.bf16.gmra.mxu0 %v3692
      %v3815 = vpop.f32.mrf.mxu0
      %v3816 = vadd.f32 0.0, %v3815
      %v3817 = vpop.f32.mrf.mxu0
      %v3818 = vadd.f32 0.0, %v3817
      %3819 = vmatmul.bf16.gmra.mxu0 %v3695
      %v3820 = vpop.f32.mrf.mxu0
      %v3821 = vadd.f32 0.0, %v3820
      %v3822 = vpop.f32.mrf.mxu0
      %v3823 = vadd.f32 0.0, %v3822
      %3824 = vmatmul.bf16.gmra.mxu0 %v3698
      %v3825 = vpop.f32.mrf.mxu0
      %v3826 = vadd.f32 0.0, %v3825
      %v3827 = vpop.f32.mrf.mxu0
      %v3828 = vadd.f32 0.0, %v3827
      %3829 = vmatmul.bf16.gmra.mxu0 %v3701
      %v3830 = vpop.f32.mrf.mxu0
      %v3831 = vadd.f32 0.0, %v3830
      %v3832 = vpop.f32.mrf.mxu0
      %v3833 = vadd.f32 0.0, %v3832
      %3834 = vdwg.mxu0
      %v3835 = vadd.f32 %v3185, %v3716
      %v3836 = vadd.f32 %v3186, %v3718
      %v3837 = vadd.f32 %v3187, %v3721
      %v3838 = vadd.f32 %v3188, %v3723
      %v3839 = vadd.f32 %v3189, %v3726
      %v3840 = vadd.f32 %v3190, %v3728
      %v3841 = vadd.f32 %v3191, %v3731
      %v3842 = vadd.f32 %v3192, %v3733
      %v3843 = vadd.f32 %v3193, %v3736
      %v3844 = vadd.f32 %v3194, %v3738
      %v3845 = vadd.f32 %v3195, %v3741
      %v3846 = vadd.f32 %v3196, %v3743
      %v3847 = vadd.f32 %v3197, %v3746
      %v3848 = vadd.f32 %v3198, %v3748
      %v3849 = vadd.f32 %v3199, %v3751
      %v3850 = vadd.f32 %v3200, %v3753
      %v3851 = vadd.f32 %v3201, %v3756
      %v3852 = vadd.f32 %v3202, %v3758
      %v3853 = vadd.f32 %v3203, %v3761
      %v3854 = vadd.f32 %v3204, %v3763
      %v3855 = vadd.f32 %v3205, %v3766
      %v3856 = vadd.f32 %v3206, %v3768
      %v3857 = vadd.f32 %v3207, %v3771
      %v3858 = vadd.f32 %v3208, %v3773
      %v3859 = vadd.f32 %v3209, %v3776
      %v3860 = vadd.f32 %v3210, %v3778
      %v3861 = vadd.f32 %v3211, %v3781
      %v3862 = vadd.f32 %v3212, %v3783
      %v3863 = vadd.f32 %v3213, %v3786
      %v3864 = vadd.f32 %v3214, %v3788
      %v3865 = vadd.f32 %v3215, %v3791
      %v3866 = vadd.f32 %v3216, %v3793
      %v3867 = vadd.f32 %v3217, %v3796
      %v3868 = vadd.f32 %v3218, %v3798
      %v3869 = vadd.f32 %v3219, %v3801
      %v3870 = vadd.f32 %v3220, %v3803
      %v3871 = vadd.f32 %v3221, %v3806
      %v3872 = vadd.f32 %v3222, %v3808
      %v3873 = vadd.f32 %v3223, %v3811
      %v3874 = vadd.f32 %v3224, %v3813
      %v3875 = vadd.f32 %v3225, %v3816
      %v3876 = vadd.f32 %v3226, %v3818
      %v3877 = vadd.f32 %v3227, %v3821
      %v3878 = vadd.f32 %v3228, %v3823
      %v3879 = vadd.f32 %v3229, %v3826
      %v3880 = vadd.f32 %v3230, %v3828
      %v3881 = vadd.f32 %v3231, %v3831
      %v3882 = vadd.f32 %v3232, %v3833
      %s3883 = scalar_lea.vmem %s1, 28
      %v3884 = vld [vmem:[%s3883] sm:$0xf]
      %v3885 = vpack.c.b16 %v3335, %v3334
      %v3886 = vpack.c.b16 %v3337, %v3336
      %v3887 = vpack.c.b16 %v3339, %v3338
      %v3888 = vpack.c.b16 %v3341, %v3340
      %v3889 = vpack.c.b16 %v3343, %v3342
      %v3890 = vpack.c.b16 %v3345, %v3344
      %v3891 = vpack.c.b16 %v3347, %v3346
      %v3892 = vpack.c.b16 %v3349, %v3348
      %v3893 = vpack.c.b16 %v3351, %v3350
      %v3894 = vpack.c.b16 %v3353, %v3352
      %v3895 = vpack.c.b16 %v3355, %v3354
      %v3896 = vpack.c.b16 %v3357, %v3356
      %v3897 = vpack.c.b16 %v3359, %v3358
      %v3898 = vpack.c.b16 %v3361, %v3360
      %v3899 = vpack.c.b16 %v3363, %v3362
      %v3900 = vpack.c.b16 %v3365, %v3364
      %v3901 = vpack.c.b16 %v3367, %v3366
      %v3902 = vpack.c.b16 %v3369, %v3368
      %v3903 = vpack.c.b16 %v3371, %v3370
      %v3904 = vpack.c.b16 %v3373, %v3372
      %v3905 = vpack.c.b16 %v3375, %v3374
      %v3906 = vpack.c.b16 %v3377, %v3376
      %v3907 = vpack.c.b16 %v3379, %v3378
      %v3908 = vpack.c.b16 %v3381, %v3380
      %v3910 = vsel %vm398, %v3885, 0
      %v3913 = vsel %vm398, %v3886, 0
      %v3916 = vsel %vm398, %v3887, 0
      %v3919 = vsel %vm398, %v3888, 0
      %v3922 = vsel %vm398, %v3889, 0
      %v3925 = vsel %vm398, %v3890, 0
      %v3928 = vsel %vm398, %v3891, 0
      %v3931 = vsel %vm398, %v3892, 0
      %v3934 = vsel %vm398, %v3893, 0
      %v3937 = vsel %vm398, %v3894, 0
      %v3940 = vsel %vm398, %v3895, 0
      %v3943 = vsel %vm398, %v3896, 0
      %v3946 = vsel %vm398, %v3897, 0
      %v3949 = vsel %vm398, %v3898, 0
      %v3952 = vsel %vm398, %v3899, 0
      %v3955 = vsel %vm398, %v3900, 0
      %v3958 = vsel %vm398, %v3901, 0
      %v3961 = vsel %vm398, %v3902, 0
      %v3964 = vsel %vm398, %v3903, 0
      %v3967 = vsel %vm398, %v3904, 0
      %v3970 = vsel %vm398, %v3905, 0
      %v3973 = vsel %vm398, %v3906, 0
      %v3976 = vsel %vm398, %v3907, 0
      %v3979 = vsel %vm398, %v3908, 0
      %v3982 = vsel %vm471, %v3884, 0
      %3984 = vmatpush.bf16.msra.mxu0 0
      %3985 = vmatpush.bf16.msra.mxu0 0
      %3986 = vmatpush.bf16.msra.mxu0 0
      %3987 = vmatpush.bf16.msra.mxu0 0
      %3988 = vmatpush.bf16.msra.mxu0 0
      %3989 = vmatpush.bf16.msra.mxu0 0
      %3990 = vmatpush.bf16.msra.mxu0 0
      %3991 = vmatpush.bf16.msra.mxu0 %v3982
      %3992 = vmatmul.bf16.gmra.mxu0 %v3910
      %v3993 = vpop.f32.mrf.mxu0
      %v3994 = vadd.f32 0.0, %v3993
      %v3995 = vpop.f32.mrf.mxu0
      %v3996 = vadd.f32 0.0, %v3995
      %3997 = vmatmul.bf16.gmra.mxu0 %v3913
      %v3998 = vpop.f32.mrf.mxu0
      %v3999 = vadd.f32 0.0, %v3998
      %v4000 = vpop.f32.mrf.mxu0
      %v4001 = vadd.f32 0.0, %v4000
      %4002 = vmatmul.bf16.gmra.mxu0 %v3916
      %v4003 = vpop.f32.mrf.mxu0
      %v4004 = vadd.f32 0.0, %v4003
      %v4005 = vpop.f32.mrf.mxu0
      %v4006 = vadd.f32 0.0, %v4005
      %4007 = vmatmul.bf16.gmra.mxu0 %v3919
      %v4008 = vpop.f32.mrf.mxu0
      %v4009 = vadd.f32 0.0, %v4008
      %v4010 = vpop.f32.mrf.mxu0
      %v4011 = vadd.f32 0.0, %v4010
      %4012 = vmatmul.bf16.gmra.mxu0 %v3922
      %v4013 = vpop.f32.mrf.mxu0
      %v4014 = vadd.f32 0.0, %v4013
      %v4015 = vpop.f32.mrf.mxu0
      %v4016 = vadd.f32 0.0, %v4015
      %4017 = vmatmul.bf16.gmra.mxu0 %v3925
      %v4018 = vpop.f32.mrf.mxu0
      %v4019 = vadd.f32 0.0, %v4018
      %v4020 = vpop.f32.mrf.mxu0
      %v4021 = vadd.f32 0.0, %v4020
      %4022 = vmatmul.bf16.gmra.mxu0 %v3928
      %v4023 = vpop.f32.mrf.mxu0
      %v4024 = vadd.f32 0.0, %v4023
      %v4025 = vpop.f32.mrf.mxu0
      %v4026 = vadd.f32 0.0, %v4025
      %4027 = vmatmul.bf16.gmra.mxu0 %v3931
      %v4028 = vpop.f32.mrf.mxu0
      %v4029 = vadd.f32 0.0, %v4028
      %v4030 = vpop.f32.mrf.mxu0
      %v4031 = vadd.f32 0.0, %v4030
      %4032 = vmatmul.bf16.gmra.mxu0 %v3934
      %v4033 = vpop.f32.mrf.mxu0
      %v4034 = vadd.f32 0.0, %v4033
      %v4035 = vpop.f32.mrf.mxu0
      %v4036 = vadd.f32 0.0, %v4035
      %4037 = vmatmul.bf16.gmra.mxu0 %v3937
      %v4038 = vpop.f32.mrf.mxu0
      %v4039 = vadd.f32 0.0, %v4038
      %v4040 = vpop.f32.mrf.mxu0
      %v4041 = vadd.f32 0.0, %v4040
      %4042 = vmatmul.bf16.gmra.mxu0 %v3940
      %v4043 = vpop.f32.mrf.mxu0
      %v4044 = vadd.f32 0.0, %v4043
      %v4045 = vpop.f32.mrf.mxu0
      %v4046 = vadd.f32 0.0, %v4045
      %4047 = vmatmul.bf16.gmra.mxu0 %v3943
      %v4048 = vpop.f32.mrf.mxu0
      %v4049 = vadd.f32 0.0, %v4048
      %v4050 = vpop.f32.mrf.mxu0
      %v4051 = vadd.f32 0.0, %v4050
      %4052 = vmatmul.bf16.gmra.mxu0 %v3946
      %v4053 = vpop.f32.mrf.mxu0
      %v4054 = vadd.f32 0.0, %v4053
      %v4055 = vpop.f32.mrf.mxu0
      %v4056 = vadd.f32 0.0, %v4055
      %4057 = vmatmul.bf16.gmra.mxu0 %v3949
      %v4058 = vpop.f32.mrf.mxu0
      %v4059 = vadd.f32 0.0, %v4058
      %v4060 = vpop.f32.mrf.mxu0
      %v4061 = vadd.f32 0.0, %v4060
      %4062 = vmatmul.bf16.gmra.mxu0 %v3952
      %v4063 = vpop.f32.mrf.mxu0
      %v4064 = vadd.f32 0.0, %v4063
      %v4065 = vpop.f32.mrf.mxu0
      %v4066 = vadd.f32 0.0, %v4065
      %4067 = vmatmul.bf16.gmra.mxu0 %v3955
      %v4068 = vpop.f32.mrf.mxu0
      %v4069 = vadd.f32 0.0, %v4068
      %v4070 = vpop.f32.mrf.mxu0
      %v4071 = vadd.f32 0.0, %v4070
      %4072 = vmatmul.bf16.gmra.mxu0 %v3958
      %v4073 = vpop.f32.mrf.mxu0
      %v4074 = vadd.f32 0.0, %v4073
      %v4075 = vpop.f32.mrf.mxu0
      %v4076 = vadd.f32 0.0, %v4075
      %4077 = vmatmul.bf16.gmra.mxu0 %v3961
      %v4078 = vpop.f32.mrf.mxu0
      %v4079 = vadd.f32 0.0, %v4078
      %v4080 = vpop.f32.mrf.mxu0
      %v4081 = vadd.f32 0.0, %v4080
      %4082 = vmatmul.bf16.gmra.mxu0 %v3964
      %v4083 = vpop.f32.mrf.mxu0
      %v4084 = vadd.f32 0.0, %v4083
      %v4085 = vpop.f32.mrf.mxu0
      %v4086 = vadd.f32 0.0, %v4085
      %4087 = vmatmul.bf16.gmra.mxu0 %v3967
      %v4088 = vpop.f32.mrf.mxu0
      %v4089 = vadd.f32 0.0, %v4088
      %v4090 = vpop.f32.mrf.mxu0
      %v4091 = vadd.f32 0.0, %v4090
      %4092 = vmatmul.bf16.gmra.mxu0 %v3970
      %v4093 = vpop.f32.mrf.mxu0
      %v4094 = vadd.f32 0.0, %v4093
      %v4095 = vpop.f32.mrf.mxu0
      %v4096 = vadd.f32 0.0, %v4095
      %4097 = vmatmul.bf16.gmra.mxu0 %v3973
      %v4098 = vpop.f32.mrf.mxu0
      %v4099 = vadd.f32 0.0, %v4098
      %v4100 = vpop.f32.mrf.mxu0
      %v4101 = vadd.f32 0.0, %v4100
      %4102 = vmatmul.bf16.gmra.mxu0 %v3976
      %v4103 = vpop.f32.mrf.mxu0
      %v4104 = vadd.f32 0.0, %v4103
      %v4105 = vpop.f32.mrf.mxu0
      %v4106 = vadd.f32 0.0, %v4105
      %4107 = vmatmul.bf16.gmra.mxu0 %v3979
      %v4108 = vpop.f32.mrf.mxu0
      %v4109 = vadd.f32 0.0, %v4108
      %v4110 = vpop.f32.mrf.mxu0
      %v4111 = vadd.f32 0.0, %v4110
      %4112 = vdwg.mxu0
      %v4113 = vadd.f32 %v3835, %v3994
      %v4114 = vadd.f32 %v3836, %v3996
      %v4115 = vadd.f32 %v3837, %v3999
      %v4116 = vadd.f32 %v3838, %v4001
      %v4117 = vadd.f32 %v3839, %v4004
      %v4118 = vadd.f32 %v3840, %v4006
      %v4119 = vadd.f32 %v3841, %v4009
      %v4120 = vadd.f32 %v3842, %v4011
      %v4121 = vadd.f32 %v3843, %v4014
      %v4122 = vadd.f32 %v3844, %v4016
      %v4123 = vadd.f32 %v3845, %v4019
      %v4124 = vadd.f32 %v3846, %v4021
      %v4125 = vadd.f32 %v3847, %v4024
      %v4126 = vadd.f32 %v3848, %v4026
      %v4127 = vadd.f32 %v3849, %v4029
      %v4128 = vadd.f32 %v3850, %v4031
      %v4129 = vadd.f32 %v3851, %v4034
      %v4130 = vadd.f32 %v3852, %v4036
      %v4131 = vadd.f32 %v3853, %v4039
      %v4132 = vadd.f32 %v3854, %v4041
      %v4133 = vadd.f32 %v3855, %v4044
      %v4134 = vadd.f32 %v3856, %v4046
      %v4135 = vadd.f32 %v3857, %v4049
      %v4136 = vadd.f32 %v3858, %v4051
      %v4137 = vadd.f32 %v3859, %v4054
      %v4138 = vadd.f32 %v3860, %v4056
      %v4139 = vadd.f32 %v3861, %v4059
      %v4140 = vadd.f32 %v3862, %v4061
      %v4141 = vadd.f32 %v3863, %v4064
      %v4142 = vadd.f32 %v3864, %v4066
      %v4143 = vadd.f32 %v3865, %v4069
      %v4144 = vadd.f32 %v3866, %v4071
      %v4145 = vadd.f32 %v3867, %v4074
      %v4146 = vadd.f32 %v3868, %v4076
      %v4147 = vadd.f32 %v3869, %v4079
      %v4148 = vadd.f32 %v3870, %v4081
      %v4149 = vadd.f32 %v3871, %v4084
      %v4150 = vadd.f32 %v3872, %v4086
      %v4151 = vadd.f32 %v3873, %v4089
      %v4152 = vadd.f32 %v3874, %v4091
      %v4153 = vadd.f32 %v3875, %v4094
      %v4154 = vadd.f32 %v3876, %v4096
      %v4155 = vadd.f32 %v3877, %v4099
      %v4156 = vadd.f32 %v3878, %v4101
      %v4157 = vadd.f32 %v3879, %v4104
      %v4158 = vadd.f32 %v3880, %v4106
      %v4159 = vadd.f32 %v3881, %v4109
      %v4160 = vadd.f32 %v3882, %v4111
      %v4161 = vld [vmem:[%s219 + $0x1c] sm:$0xf]
      %v4162 = vld [vmem:[%s219 + $0x20] sm:$0xf]
      %v4163 = vld [vmem:[%s219 + $0x24] sm:$0xf]
      %v4164 = vld [vmem:[%s219 + $0x28] sm:$0xf]
      %v4165 = vld [vmem:[%s219 + $0x2c] sm:$0xf]
      %v4166 = vld [vmem:[%s219 + $0x30] sm:$0xf]
      %v4167 = vld [vmem:[%s219 + $0x34] sm:$0xf]
      %v4168 = vld [vmem:[%s219 + $0x38] sm:$0xf]
      %v4169 = vld [vmem:[%s219 + $0x3c] sm:$0xf]
      %v4170 = vld [vmem:[%s219 + $0x40] sm:$0xf]
      %v4171 = vld [vmem:[%s219 + $0x44] sm:$0xf]
      %v4172 = vld [vmem:[%s219 + $0x48] sm:$0xf]
      %v4173 = vld [vmem:[%s219 + $0x4c] sm:$0xf]
      %v4174 = vld [vmem:[%s219 + $0x50] sm:$0xf]
      %v4175 = vld [vmem:[%s219 + $0x54] sm:$0xf]
      %v4176 = vld [vmem:[%s219 + $0x58] sm:$0xf]
      %v4177 = vld [vmem:[%s219 + $0x5c] sm:$0xf]
      %v4178 = vld [vmem:[%s219 + $0x60] sm:$0xf]
      %v4179 = vld [vmem:[%s219 + $0x64] sm:$0xf]
      %v4180 = vld [vmem:[%s219 + $0x68] sm:$0xf]
      %v4181 = vld [vmem:[%s219 + $0x6c] sm:$0xf]
      %v4182 = vld [vmem:[%s219 + $0x70] sm:$0xf]
      %v4183 = vld [vmem:[%s219 + $0x74] sm:$0xf]
      %v4184 = vld [vmem:[%s219 + $0x78] sm:$0xf]
      %v4185 = vld [vmem:[%s219 + $0x7c] sm:$0xf]
      %v4186 = vld [vmem:[%s219 + $0x80] sm:$0xf]
      %v4187 = vld [vmem:[%s219 + $0x84] sm:$0xf]
      %v4188 = vld [vmem:[%s219 + $0x88] sm:$0xf]
      %v4189 = vld [vmem:[%s219 + $0x8c] sm:$0xf]
      %v4190 = vld [vmem:[%s219 + $0x90] sm:$0xf]
      %v4191 = vld [vmem:[%s219 + $0x94] sm:$0xf]
      %v4192 = vld [vmem:[%s219 + $0x98] sm:$0xf]
      %v4193 = vld [vmem:[%s219 + $0x9c] sm:$0xf]
      %v4194 = vld [vmem:[%s219 + $0xa0] sm:$0xf]
      %v4195 = vld [vmem:[%s219 + $0xa4] sm:$0xf]
      %v4196 = vld [vmem:[%s219 + $0xa8] sm:$0xf]
      %v4197 = vld [vmem:[%s219 + $0xac] sm:$0xf]
      %v4198 = vld [vmem:[%s219 + $0xb0] sm:$0xf]
      %v4199 = vld [vmem:[%s219 + $0xb4] sm:$0xf]
      %v4200 = vld [vmem:[%s219 + $0xb8] sm:$0xf]
      %v4201 = vld [vmem:[%s219 + $0xbc] sm:$0xf]
      %v4202 = vld [vmem:[%s219 + $0xc0] sm:$0xf]
      %v4203 = vld [vmem:[%s219 + $0xc4] sm:$0xf]
      %v4204 = vld [vmem:[%s219 + $0xc8] sm:$0xf]
      %v4205 = vld [vmem:[%s219 + $0xcc] sm:$0xf]
      %v4206 = vld [vmem:[%s219 + $0xd0] sm:$0xf]
      %v4207 = vld [vmem:[%s219 + $0xd4] sm:$0xf]
      %v4208 = vld [vmem:[%s219 + $0xd8] sm:$0xf]
      %v4209 = vld [vmem:[%s219 + $0xdc] sm:$0x1]
      %s4210 = scalar_lea.vmem %s1, 32
      %v4211 = vld [vmem:[%s4210] sm:$0xf]
      %v4261 = vunpack.c.l.b16 %v4161
      %v4262 = vunpack.c.l.b16 %v4162
      %v4263 = vunpack.c.l.b16 %v4163
      %v4264 = vunpack.c.l.b16 %v4164
      %v4265 = vunpack.c.l.b16 %v4165
      %v4266 = vunpack.c.l.b16 %v4166
      %v4267 = vunpack.c.l.b16 %v4167
      %v4268 = vunpack.c.l.b16 %v4168
      %v4269 = vunpack.c.l.b16 %v4169
      %v4270 = vunpack.c.l.b16 %v4170
      %v4271 = vunpack.c.l.b16 %v4171
      %v4272 = vunpack.c.l.b16 %v4172
      %v4273 = vunpack.c.l.b16 %v4173
      %v4274 = vunpack.c.l.b16 %v4174
      %v4275 = vunpack.c.l.b16 %v4175
      %v4276 = vunpack.c.l.b16 %v4176
      %v4277 = vunpack.c.l.b16 %v4177
      %v4278 = vunpack.c.l.b16 %v4178
      %v4279 = vunpack.c.l.b16 %v4179
      %v4280 = vunpack.c.l.b16 %v4180
      %v4281 = vunpack.c.l.b16 %v4181
      %v4282 = vunpack.c.l.b16 %v4182
      %v4283 = vunpack.c.l.b16 %v4183
      %v4284 = vunpack.c.l.b16 %v4184
      %v4285 = vunpack.c.l.b16 %v4185
      %v4286 = vunpack.c.l.b16 %v4186
      %v4287 = vunpack.c.l.b16 %v4187
      %v4288 = vunpack.c.l.b16 %v4188
      %v4289 = vunpack.c.l.b16 %v4189
      %v4290 = vunpack.c.l.b16 %v4190
      %v4291 = vunpack.c.l.b16 %v4191
      %v4292 = vunpack.c.l.b16 %v4192
      %v4293 = vunpack.c.l.b16 %v4193
      %v4294 = vunpack.c.l.b16 %v4194
      %v4295 = vunpack.c.l.b16 %v4195
      %v4296 = vunpack.c.l.b16 %v4196
      %v4297 = vunpack.c.l.b16 %v4197
      %v4298 = vunpack.c.l.b16 %v4198
      %v4299 = vunpack.c.l.b16 %v4199
      %v4300 = vunpack.c.l.b16 %v4200
      %v4301 = vunpack.c.l.b16 %v4201
      %v4302 = vunpack.c.l.b16 %v4202
      %v4303 = vunpack.c.l.b16 %v4203
      %v4304 = vunpack.c.l.b16 %v4204
      %v4305 = vunpack.c.l.b16 %v4205
      %v4306 = vunpack.c.l.b16 %v4206
      %v4307 = vunpack.c.l.b16 %v4207
      %v4308 = vunpack.c.l.b16 %v4208
      %v4309 = vunpack.c.l.b16 %v4209
      %v4310 = vpack.c.b16 %v4262, %v4261
      %v4311 = vpack.c.b16 %v4264, %v4263
      %v4312 = vpack.c.b16 %v4266, %v4265
      %v4313 = vpack.c.b16 %v4268, %v4267
      %v4314 = vpack.c.b16 %v4270, %v4269
      %v4315 = vpack.c.b16 %v4272, %v4271
      %v4316 = vpack.c.b16 %v4274, %v4273
      %v4317 = vpack.c.b16 %v4276, %v4275
      %v4318 = vpack.c.b16 %v4278, %v4277
      %v4319 = vpack.c.b16 %v4280, %v4279
      %v4320 = vpack.c.b16 %v4282, %v4281
      %v4321 = vpack.c.b16 %v4284, %v4283
      %v4322 = vpack.c.b16 %v4286, %v4285
      %v4323 = vpack.c.b16 %v4288, %v4287
      %v4324 = vpack.c.b16 %v4290, %v4289
      %v4325 = vpack.c.b16 %v4292, %v4291
      %v4326 = vpack.c.b16 %v4294, %v4293
      %v4327 = vpack.c.b16 %v4296, %v4295
      %v4328 = vpack.c.b16 %v4298, %v4297
      %v4329 = vpack.c.b16 %v4300, %v4299
      %v4330 = vpack.c.b16 %v4302, %v4301
      %v4331 = vpack.c.b16 %v4304, %v4303
      %v4332 = vpack.c.b16 %v4306, %v4305
      %v4333 = vpack.c.b16 %v4308, %v4307
      %v4334 = vpack.c.b16 %v4309, %v4309
      %v4336 = vshrl.u32 %v4310, 16
      %v4338 = vshll.u32 %v4310, 16
      %v4340 = vrot.slane %v4338, 1
      %v4341 = vor.u32 %v4336, %v4340
      %v4343 = vshll.u32 %v4311, 16
      %v4345 = vrot.slane %v4343, 1
      %v4346 = vsel %vm1234, %v4341, %v4345
      %v4347 = vshrl.u32 %v4311, 16
      %v4349 = vor.u32 %v4347, %v4345
      %v4351 = vshll.u32 %v4312, 16
      %v4353 = vrot.slane %v4351, 1
      %v4354 = vsel %vm1234, %v4349, %v4353
      %v4355 = vshrl.u32 %v4312, 16
      %v4357 = vor.u32 %v4355, %v4353
      %v4359 = vshll.u32 %v4313, 16
      %v4361 = vrot.slane %v4359, 1
      %v4362 = vsel %vm1234, %v4357, %v4361
      %v4363 = vshrl.u32 %v4313, 16
      %v4365 = vor.u32 %v4363, %v4361
      %v4367 = vshll.u32 %v4314, 16
      %v4369 = vrot.slane %v4367, 1
      %v4370 = vsel %vm1234, %v4365, %v4369
      %v4371 = vshrl.u32 %v4314, 16
      %v4373 = vor.u32 %v4371, %v4369
      %v4375 = vshll.u32 %v4315, 16
      %v4377 = vrot.slane %v4375, 1
      %v4378 = vsel %vm1234, %v4373, %v4377
      %v4379 = vshrl.u32 %v4315, 16
      %v4381 = vor.u32 %v4379, %v4377
      %v4383 = vshll.u32 %v4316, 16
      %v4385 = vrot.slane %v4383, 1
      %v4386 = vsel %vm1234, %v4381, %v4385
      %v4387 = vshrl.u32 %v4316, 16
      %v4389 = vor.u32 %v4387, %v4385
      %v4391 = vshll.u32 %v4317, 16
      %v4393 = vrot.slane %v4391, 1
      %v4394 = vsel %vm1234, %v4389, %v4393
      %v4395 = vshrl.u32 %v4317, 16
      %v4397 = vor.u32 %v4395, %v4393
      %v4399 = vshll.u32 %v4318, 16
      %v4401 = vrot.slane %v4399, 1
      %v4402 = vsel %vm1234, %v4397, %v4401
      %v4403 = vshrl.u32 %v4318, 16
      %v4405 = vor.u32 %v4403, %v4401
      %v4407 = vshll.u32 %v4319, 16
      %v4409 = vrot.slane %v4407, 1
      %v4410 = vsel %vm1234, %v4405, %v4409
      %v4411 = vshrl.u32 %v4319, 16
      %v4413 = vor.u32 %v4411, %v4409
      %v4415 = vshll.u32 %v4320, 16
      %v4417 = vrot.slane %v4415, 1
      %v4418 = vsel %vm1234, %v4413, %v4417
      %v4419 = vshrl.u32 %v4320, 16
      %v4421 = vor.u32 %v4419, %v4417
      %v4423 = vshll.u32 %v4321, 16
      %v4425 = vrot.slane %v4423, 1
      %v4426 = vsel %vm1234, %v4421, %v4425
      %v4427 = vshrl.u32 %v4321, 16
      %v4429 = vor.u32 %v4427, %v4425
      %v4431 = vshll.u32 %v4322, 16
      %v4433 = vrot.slane %v4431, 1
      %v4434 = vsel %vm1234, %v4429, %v4433
      %v4435 = vshrl.u32 %v4322, 16
      %v4437 = vor.u32 %v4435, %v4433
      %v4439 = vshll.u32 %v4323, 16
      %v4441 = vrot.slane %v4439, 1
      %v4442 = vsel %vm1234, %v4437, %v4441
      %v4443 = vshrl.u32 %v4323, 16
      %v4445 = vor.u32 %v4443, %v4441
      %v4447 = vshll.u32 %v4324, 16
      %v4449 = vrot.slane %v4447, 1
      %v4450 = vsel %vm1234, %v4445, %v4449
      %v4451 = vshrl.u32 %v4324, 16
      %v4453 = vor.u32 %v4451, %v4449
      %v4455 = vshll.u32 %v4325, 16
      %v4457 = vrot.slane %v4455, 1
      %v4458 = vsel %vm1234, %v4453, %v4457
      %v4459 = vshrl.u32 %v4325, 16
      %v4461 = vor.u32 %v4459, %v4457
      %v4463 = vshll.u32 %v4326, 16
      %v4465 = vrot.slane %v4463, 1
      %v4466 = vsel %vm1234, %v4461, %v4465
      %v4467 = vshrl.u32 %v4326, 16
      %v4469 = vor.u32 %v4467, %v4465
      %v4471 = vshll.u32 %v4327, 16
      %v4473 = vrot.slane %v4471, 1
      %v4474 = vsel %vm1234, %v4469, %v4473
      %v4475 = vshrl.u32 %v4327, 16
      %v4477 = vor.u32 %v4475, %v4473
      %v4479 = vshll.u32 %v4328, 16
      %v4481 = vrot.slane %v4479, 1
      %v4482 = vsel %vm1234, %v4477, %v4481
      %v4483 = vshrl.u32 %v4328, 16
      %v4485 = vor.u32 %v4483, %v4481
      %v4487 = vshll.u32 %v4329, 16
      %v4489 = vrot.slane %v4487, 1
      %v4490 = vsel %vm1234, %v4485, %v4489
      %v4491 = vshrl.u32 %v4329, 16
      %v4493 = vor.u32 %v4491, %v4489
      %v4495 = vshll.u32 %v4330, 16
      %v4497 = vrot.slane %v4495, 1
      %v4498 = vsel %vm1234, %v4493, %v4497
      %v4499 = vshrl.u32 %v4330, 16
      %v4501 = vor.u32 %v4499, %v4497
      %v4503 = vshll.u32 %v4331, 16
      %v4505 = vrot.slane %v4503, 1
      %v4506 = vsel %vm1234, %v4501, %v4505
      %v4507 = vshrl.u32 %v4331, 16
      %v4509 = vor.u32 %v4507, %v4505
      %v4511 = vshll.u32 %v4332, 16
      %v4513 = vrot.slane %v4511, 1
      %v4514 = vsel %vm1234, %v4509, %v4513
      %v4515 = vshrl.u32 %v4332, 16
      %v4517 = vor.u32 %v4515, %v4513
      %v4519 = vshll.u32 %v4333, 16
      %v4521 = vrot.slane %v4519, 1
      %v4522 = vsel %vm1234, %v4517, %v4521
      %v4523 = vshrl.u32 %v4333, 16
      %v4525 = vor.u32 %v4523, %v4521
      %v4527 = vshll.u32 %v4334, 16
      %v4529 = vrot.slane %v4527, 1
      %v4530 = vsel %vm1234, %v4525, %v4529
      %v4532 = vsel %vm398, %v4346, 0
      %v4535 = vsel %vm398, %v4354, 0
      %v4538 = vsel %vm398, %v4362, 0
      %v4541 = vsel %vm398, %v4370, 0
      %v4544 = vsel %vm398, %v4378, 0
      %v4547 = vsel %vm398, %v4386, 0
      %v4550 = vsel %vm398, %v4394, 0
      %v4553 = vsel %vm398, %v4402, 0
      %v4556 = vsel %vm398, %v4410, 0
      %v4559 = vsel %vm398, %v4418, 0
      %v4562 = vsel %vm398, %v4426, 0
      %v4565 = vsel %vm398, %v4434, 0
      %v4568 = vsel %vm398, %v4442, 0
      %v4571 = vsel %vm398, %v4450, 0
      %v4574 = vsel %vm398, %v4458, 0
      %v4577 = vsel %vm398, %v4466, 0
      %v4580 = vsel %vm398, %v4474, 0
      %v4583 = vsel %vm398, %v4482, 0
      %v4586 = vsel %vm398, %v4490, 0
      %v4589 = vsel %vm398, %v4498, 0
      %v4592 = vsel %vm398, %v4506, 0
      %v4595 = vsel %vm398, %v4514, 0
      %v4598 = vsel %vm398, %v4522, 0
      %v4601 = vsel %vm398, %v4530, 0
      %v4604 = vsel %vm471, %v4211, 0
      %4606 = vmatpush.bf16.msra.mxu0 0
      %4607 = vmatpush.bf16.msra.mxu0 0
      %4608 = vmatpush.bf16.msra.mxu0 0
      %4609 = vmatpush.bf16.msra.mxu0 0
      %4610 = vmatpush.bf16.msra.mxu0 0
      %4611 = vmatpush.bf16.msra.mxu0 0
      %4612 = vmatpush.bf16.msra.mxu0 0
      %4613 = vmatpush.bf16.msra.mxu0 %v4604
      %4614 = vmatmul.bf16.gmra.mxu0 %v4532
      %v4615 = vpop.f32.mrf.mxu0
      %v4616 = vadd.f32 0.0, %v4615
      %v4617 = vpop.f32.mrf.mxu0
      %v4618 = vadd.f32 0.0, %v4617
      %4619 = vmatmul.bf16.gmra.mxu0 %v4535
      %v4620 = vpop.f32.mrf.mxu0
      %v4621 = vadd.f32 0.0, %v4620
      %v4622 = vpop.f32.mrf.mxu0
      %v4623 = vadd.f32 0.0, %v4622
      %4624 = vmatmul.bf16.gmra.mxu0 %v4538
      %v4625 = vpop.f32.mrf.mxu0
      %v4626 = vadd.f32 0.0, %v4625
      %v4627 = vpop.f32.mrf.mxu0
      %v4628 = vadd.f32 0.0, %v4627
      %4629 = vmatmul.bf16.gmra.mxu0 %v4541
      %v4630 = vpop.f32.mrf.mxu0
      %v4631 = vadd.f32 0.0, %v4630
      %v4632 = vpop.f32.mrf.mxu0
      %v4633 = vadd.f32 0.0, %v4632
      %4634 = vmatmul.bf16.gmra.mxu0 %v4544
      %v4635 = vpop.f32.mrf.mxu0
      %v4636 = vadd.f32 0.0, %v4635
      %v4637 = vpop.f32.mrf.mxu0
      %v4638 = vadd.f32 0.0, %v4637
      %4639 = vmatmul.bf16.gmra.mxu0 %v4547
      %v4640 = vpop.f32.mrf.mxu0
      %v4641 = vadd.f32 0.0, %v4640
      %v4642 = vpop.f32.mrf.mxu0
      %v4643 = vadd.f32 0.0, %v4642
      %4644 = vmatmul.bf16.gmra.mxu0 %v4550
      %v4645 = vpop.f32.mrf.mxu0
      %v4646 = vadd.f32 0.0, %v4645
      %v4647 = vpop.f32.mrf.mxu0
      %v4648 = vadd.f32 0.0, %v4647
      %4649 = vmatmul.bf16.gmra.mxu0 %v4553
      %v4650 = vpop.f32.mrf.mxu0
      %v4651 = vadd.f32 0.0, %v4650
      %v4652 = vpop.f32.mrf.mxu0
      %v4653 = vadd.f32 0.0, %v4652
      %4654 = vmatmul.bf16.gmra.mxu0 %v4556
      %v4655 = vpop.f32.mrf.mxu0
      %v4656 = vadd.f32 0.0, %v4655
      %v4657 = vpop.f32.mrf.mxu0
      %v4658 = vadd.f32 0.0, %v4657
      %4659 = vmatmul.bf16.gmra.mxu0 %v4559
      %v4660 = vpop.f32.mrf.mxu0
      %v4661 = vadd.f32 0.0, %v4660
      %v4662 = vpop.f32.mrf.mxu0
      %v4663 = vadd.f32 0.0, %v4662
      %4664 = vmatmul.bf16.gmra.mxu0 %v4562
      %v4665 = vpop.f32.mrf.mxu0
      %v4666 = vadd.f32 0.0, %v4665
      %v4667 = vpop.f32.mrf.mxu0
      %v4668 = vadd.f32 0.0, %v4667
      %4669 = vmatmul.bf16.gmra.mxu0 %v4565
      %v4670 = vpop.f32.mrf.mxu0
      %v4671 = vadd.f32 0.0, %v4670
      %v4672 = vpop.f32.mrf.mxu0
      %v4673 = vadd.f32 0.0, %v4672
      %4674 = vmatmul.bf16.gmra.mxu0 %v4568
      %v4675 = vpop.f32.mrf.mxu0
      %v4676 = vadd.f32 0.0, %v4675
      %v4677 = vpop.f32.mrf.mxu0
      %v4678 = vadd.f32 0.0, %v4677
      %4679 = vmatmul.bf16.gmra.mxu0 %v4571
      %v4680 = vpop.f32.mrf.mxu0
      %v4681 = vadd.f32 0.0, %v4680
      %v4682 = vpop.f32.mrf.mxu0
      %v4683 = vadd.f32 0.0, %v4682
      %4684 = vmatmul.bf16.gmra.mxu0 %v4574
      %v4685 = vpop.f32.mrf.mxu0
      %v4686 = vadd.f32 0.0, %v4685
      %v4687 = vpop.f32.mrf.mxu0
      %v4688 = vadd.f32 0.0, %v4687
      %4689 = vmatmul.bf16.gmra.mxu0 %v4577
      %v4690 = vpop.f32.mrf.mxu0
      %v4691 = vadd.f32 0.0, %v4690
      %v4692 = vpop.f32.mrf.mxu0
      %v4693 = vadd.f32 0.0, %v4692
      %4694 = vmatmul.bf16.gmra.mxu0 %v4580
      %v4695 = vpop.f32.mrf.mxu0
      %v4696 = vadd.f32 0.0, %v4695
      %v4697 = vpop.f32.mrf.mxu0
      %v4698 = vadd.f32 0.0, %v4697
      %4699 = vmatmul.bf16.gmra.mxu0 %v4583
      %v4700 = vpop.f32.mrf.mxu0
      %v4701 = vadd.f32 0.0, %v4700
      %v4702 = vpop.f32.mrf.mxu0
      %v4703 = vadd.f32 0.0, %v4702
      %4704 = vmatmul.bf16.gmra.mxu0 %v4586
      %v4705 = vpop.f32.mrf.mxu0
      %v4706 = vadd.f32 0.0, %v4705
      %v4707 = vpop.f32.mrf.mxu0
      %v4708 = vadd.f32 0.0, %v4707
      %4709 = vmatmul.bf16.gmra.mxu0 %v4589
      %v4710 = vpop.f32.mrf.mxu0
      %v4711 = vadd.f32 0.0, %v4710
      %v4712 = vpop.f32.mrf.mxu0
      %v4713 = vadd.f32 0.0, %v4712
      %4714 = vmatmul.bf16.gmra.mxu0 %v4592
      %v4715 = vpop.f32.mrf.mxu0
      %v4716 = vadd.f32 0.0, %v4715
      %v4717 = vpop.f32.mrf.mxu0
      %v4718 = vadd.f32 0.0, %v4717
      %4719 = vmatmul.bf16.gmra.mxu0 %v4595
      %v4720 = vpop.f32.mrf.mxu0
      %v4721 = vadd.f32 0.0, %v4720
      %v4722 = vpop.f32.mrf.mxu0
      %v4723 = vadd.f32 0.0, %v4722
      %4724 = vmatmul.bf16.gmra.mxu0 %v4598
      %v4725 = vpop.f32.mrf.mxu0
      %v4726 = vadd.f32 0.0, %v4725
      %v4727 = vpop.f32.mrf.mxu0
      %v4728 = vadd.f32 0.0, %v4727
      %4729 = vmatmul.bf16.gmra.mxu0 %v4601
      %v4730 = vpop.f32.mrf.mxu0
      %v4731 = vadd.f32 0.0, %v4730
      %v4732 = vpop.f32.mrf.mxu0
      %v4733 = vadd.f32 0.0, %v4732
      %4734 = vdwg.mxu0
      %v4735 = vadd.f32 %v4113, %v4616
      %v4736 = vadd.f32 %v4114, %v4618
      %v4737 = vadd.f32 %v4115, %v4621
      %v4738 = vadd.f32 %v4116, %v4623
      %v4739 = vadd.f32 %v4117, %v4626
      %v4740 = vadd.f32 %v4118, %v4628
      %v4741 = vadd.f32 %v4119, %v4631
      %v4742 = vadd.f32 %v4120, %v4633
      %v4743 = vadd.f32 %v4121, %v4636
      %v4744 = vadd.f32 %v4122, %v4638
      %v4745 = vadd.f32 %v4123, %v4641
      %v4746 = vadd.f32 %v4124, %v4643
      %v4747 = vadd.f32 %v4125, %v4646
      %v4748 = vadd.f32 %v4126, %v4648
      %v4749 = vadd.f32 %v4127, %v4651
      %v4750 = vadd.f32 %v4128, %v4653
      %v4751 = vadd.f32 %v4129, %v4656
      %v4752 = vadd.f32 %v4130, %v4658
      %v4753 = vadd.f32 %v4131, %v4661
      %v4754 = vadd.f32 %v4132, %v4663
      %v4755 = vadd.f32 %v4133, %v4666
      %v4756 = vadd.f32 %v4134, %v4668
      %v4757 = vadd.f32 %v4135, %v4671
      %v4758 = vadd.f32 %v4136, %v4673
      %v4759 = vadd.f32 %v4137, %v4676
      %v4760 = vadd.f32 %v4138, %v4678
      %v4761 = vadd.f32 %v4139, %v4681
      %v4762 = vadd.f32 %v4140, %v4683
      %v4763 = vadd.f32 %v4141, %v4686
      %v4764 = vadd.f32 %v4142, %v4688
      %v4765 = vadd.f32 %v4143, %v4691
      %v4766 = vadd.f32 %v4144, %v4693
      %v4767 = vadd.f32 %v4145, %v4696
      %v4768 = vadd.f32 %v4146, %v4698
      %v4769 = vadd.f32 %v4147, %v4701
      %v4770 = vadd.f32 %v4148, %v4703
      %v4771 = vadd.f32 %v4149, %v4706
      %v4772 = vadd.f32 %v4150, %v4708
      %v4773 = vadd.f32 %v4151, %v4711
      %v4774 = vadd.f32 %v4152, %v4713
      %v4775 = vadd.f32 %v4153, %v4716
      %v4776 = vadd.f32 %v4154, %v4718
      %v4777 = vadd.f32 %v4155, %v4721
      %v4778 = vadd.f32 %v4156, %v4723
      %v4779 = vadd.f32 %v4157, %v4726
      %v4780 = vadd.f32 %v4158, %v4728
      %v4781 = vadd.f32 %v4159, %v4731
      %v4782 = vadd.f32 %v4160, %v4733
      %v4783 = vld [vmem:[%s3] sm:$0x1]
      %v4784 = vperm.slane %v4783, 0
      %v4785 = vmul.f32 %v4735, %v4784
      %v4786 = vmul.f32 %v4736, %v4784
      %v4787 = vmul.f32 %v4737, %v4784
      %v4788 = vmul.f32 %v4738, %v4784
      %v4789 = vmul.f32 %v4739, %v4784
      %v4790 = vmul.f32 %v4740, %v4784
      %v4791 = vmul.f32 %v4741, %v4784
      %v4792 = vmul.f32 %v4742, %v4784
      %v4793 = vmul.f32 %v4743, %v4784
      %v4794 = vmul.f32 %v4744, %v4784
      %v4795 = vmul.f32 %v4745, %v4784
      %v4796 = vmul.f32 %v4746, %v4784
      %v4797 = vmul.f32 %v4747, %v4784
      %v4798 = vmul.f32 %v4748, %v4784
      %v4799 = vmul.f32 %v4749, %v4784
      %v4800 = vmul.f32 %v4750, %v4784
      %v4801 = vmul.f32 %v4751, %v4784
      %v4802 = vmul.f32 %v4752, %v4784
      %v4803 = vmul.f32 %v4753, %v4784
      %v4804 = vmul.f32 %v4754, %v4784
      %v4805 = vmul.f32 %v4755, %v4784
      %v4806 = vmul.f32 %v4756, %v4784
      %v4807 = vmul.f32 %v4757, %v4784
      %v4808 = vmul.f32 %v4758, %v4784
      %v4809 = vmul.f32 %v4759, %v4784
      %v4810 = vmul.f32 %v4760, %v4784
      %v4811 = vmul.f32 %v4761, %v4784
      %v4812 = vmul.f32 %v4762, %v4784
      %v4813 = vmul.f32 %v4763, %v4784
      %v4814 = vmul.f32 %v4764, %v4784
      %v4815 = vmul.f32 %v4765, %v4784
      %v4816 = vmul.f32 %v4766, %v4784
      %v4817 = vmul.f32 %v4767, %v4784
      %v4818 = vmul.f32 %v4768, %v4784
      %v4819 = vmul.f32 %v4769, %v4784
      %v4820 = vmul.f32 %v4770, %v4784
      %v4821 = vmul.f32 %v4771, %v4784
      %v4822 = vmul.f32 %v4772, %v4784
      %v4823 = vmul.f32 %v4773, %v4784
      %v4824 = vmul.f32 %v4774, %v4784
      %v4825 = vmul.f32 %v4775, %v4784
      %v4826 = vmul.f32 %v4776, %v4784
      %v4827 = vmul.f32 %v4777, %v4784
      %v4828 = vmul.f32 %v4778, %v4784
      %v4829 = vmul.f32 %v4779, %v4784
      %v4830 = vmul.f32 %v4780, %v4784
      %v4831 = vmul.f32 %v4781, %v4784
      %v4832 = vmul.f32 %v4782, %v4784
      %v4833 = vld [vmem:[%s3 + $0x1] sm:$0x1]
      %v4834 = vperm.slane %v4833, 0
      %v4835 = vadd.f32 %v4785, %v4834
      %v4836 = vadd.f32 %v4786, %v4834
      %v4837 = vadd.f32 %v4787, %v4834
      %v4838 = vadd.f32 %v4788, %v4834
      %v4839 = vadd.f32 %v4789, %v4834
      %v4840 = vadd.f32 %v4790, %v4834
      %v4841 = vadd.f32 %v4791, %v4834
      %v4842 = vadd.f32 %v4792, %v4834
      %v4843 = vadd.f32 %v4793, %v4834
      %v4844 = vadd.f32 %v4794, %v4834
      %v4845 = vadd.f32 %v4795, %v4834
      %v4846 = vadd.f32 %v4796, %v4834
      %v4847 = vadd.f32 %v4797, %v4834
      %v4848 = vadd.f32 %v4798, %v4834
      %v4849 = vadd.f32 %v4799, %v4834
      %v4850 = vadd.f32 %v4800, %v4834
      %v4851 = vadd.f32 %v4801, %v4834
      %v4852 = vadd.f32 %v4802, %v4834
      %v4853 = vadd.f32 %v4803, %v4834
      %v4854 = vadd.f32 %v4804, %v4834
      %v4855 = vadd.f32 %v4805, %v4834
      %v4856 = vadd.f32 %v4806, %v4834
      %v4857 = vadd.f32 %v4807, %v4834
      %v4858 = vadd.f32 %v4808, %v4834
      %v4859 = vadd.f32 %v4809, %v4834
      %v4860 = vadd.f32 %v4810, %v4834
      %v4861 = vadd.f32 %v4811, %v4834
      %v4862 = vadd.f32 %v4812, %v4834
      %v4863 = vadd.f32 %v4813, %v4834
      %v4864 = vadd.f32 %v4814, %v4834
      %v4865 = vadd.f32 %v4815, %v4834
      %v4866 = vadd.f32 %v4816, %v4834
      %v4867 = vadd.f32 %v4817, %v4834
      %v4868 = vadd.f32 %v4818, %v4834
      %v4869 = vadd.f32 %v4819, %v4834
      %v4870 = vadd.f32 %v4820, %v4834
      %v4871 = vadd.f32 %v4821, %v4834
      %v4872 = vadd.f32 %v4822, %v4834
      %v4873 = vadd.f32 %v4823, %v4834
      %v4874 = vadd.f32 %v4824, %v4834
      %v4875 = vadd.f32 %v4825, %v4834
      %v4876 = vadd.f32 %v4826, %v4834
      %v4877 = vadd.f32 %v4827, %v4834
      %v4878 = vadd.f32 %v4828, %v4834
      %v4879 = vadd.f32 %v4829, %v4834
      %v4880 = vadd.f32 %v4830, %v4834
      %v4881 = vadd.f32 %v4831, %v4834
      %v4882 = vadd.f32 %v4832, %v4834
      %v4883 = vfloor.f32 %v4835
      %v4884 = vfloor.f32 %v4836
      %v4885 = vfloor.f32 %v4837
      %v4886 = vfloor.f32 %v4838
      %v4887 = vfloor.f32 %v4839
      %v4888 = vfloor.f32 %v4840
      %v4889 = vfloor.f32 %v4841
      %v4890 = vfloor.f32 %v4842
      %v4891 = vfloor.f32 %v4843
      %v4892 = vfloor.f32 %v4844
      %v4893 = vfloor.f32 %v4845
      %v4894 = vfloor.f32 %v4846
      %v4895 = vfloor.f32 %v4847
      %v4896 = vfloor.f32 %v4848
      %v4897 = vfloor.f32 %v4849
      %v4898 = vfloor.f32 %v4850
      %v4899 = vfloor.f32 %v4851
      %v4900 = vfloor.f32 %v4852
      %v4901 = vfloor.f32 %v4853
      %v4902 = vfloor.f32 %v4854
      %v4903 = vfloor.f32 %v4855
      %v4904 = vfloor.f32 %v4856
      %v4905 = vfloor.f32 %v4857
      %v4906 = vfloor.f32 %v4858
      %v4907 = vfloor.f32 %v4859
      %v4908 = vfloor.f32 %v4860
      %v4909 = vfloor.f32 %v4861
      %v4910 = vfloor.f32 %v4862
      %v4911 = vfloor.f32 %v4863
      %v4912 = vfloor.f32 %v4864
      %v4913 = vfloor.f32 %v4865
      %v4914 = vfloor.f32 %v4866
      %v4915 = vfloor.f32 %v4867
      %v4916 = vfloor.f32 %v4868
      %v4917 = vfloor.f32 %v4869
      %v4918 = vfloor.f32 %v4870
      %v4919 = vfloor.f32 %v4871
      %v4920 = vfloor.f32 %v4872
      %v4921 = vfloor.f32 %v4873
      %v4922 = vfloor.f32 %v4874
      %v4923 = vfloor.f32 %v4875
      %v4924 = vfloor.f32 %v4876
      %v4925 = vfloor.f32 %v4877
      %v4926 = vfloor.f32 %v4878
      %v4927 = vfloor.f32 %v4879
      %v4928 = vfloor.f32 %v4880
      %v4929 = vfloor.f32 %v4881
      %v4930 = vfloor.f32 %v4882
      %v4931 = vmax.f32 %v4883, 0.0
      %v4932 = vmax.f32 %v4884, 0.0
      %v4933 = vmax.f32 %v4885, 0.0
      %v4934 = vmax.f32 %v4886, 0.0
      %v4935 = vmax.f32 %v4887, 0.0
      %v4936 = vmax.f32 %v4888, 0.0
      %v4937 = vmax.f32 %v4889, 0.0
      %v4938 = vmax.f32 %v4890, 0.0
      %v4939 = vmax.f32 %v4891, 0.0
      %v4940 = vmax.f32 %v4892, 0.0
      %v4941 = vmax.f32 %v4893, 0.0
      %v4942 = vmax.f32 %v4894, 0.0
      %v4943 = vmax.f32 %v4895, 0.0
      %v4944 = vmax.f32 %v4896, 0.0
      %v4945 = vmax.f32 %v4897, 0.0
      %v4946 = vmax.f32 %v4898, 0.0
      %v4947 = vmax.f32 %v4899, 0.0
      %v4948 = vmax.f32 %v4900, 0.0
      %v4949 = vmax.f32 %v4901, 0.0
      %v4950 = vmax.f32 %v4902, 0.0
      %v4951 = vmax.f32 %v4903, 0.0
      %v4952 = vmax.f32 %v4904, 0.0
      %v4953 = vmax.f32 %v4905, 0.0
      %v4954 = vmax.f32 %v4906, 0.0
      %v4955 = vmax.f32 %v4907, 0.0
      %v4956 = vmax.f32 %v4908, 0.0
      %v4957 = vmax.f32 %v4909, 0.0
      %v4958 = vmax.f32 %v4910, 0.0
      %v4959 = vmax.f32 %v4911, 0.0
      %v4960 = vmax.f32 %v4912, 0.0
      %v4961 = vmax.f32 %v4913, 0.0
      %v4962 = vmax.f32 %v4914, 0.0
      %v4963 = vmax.f32 %v4915, 0.0
      %v4964 = vmax.f32 %v4916, 0.0
      %v4965 = vmax.f32 %v4917, 0.0
      %v4966 = vmax.f32 %v4918, 0.0
      %v4967 = vmax.f32 %v4919, 0.0
      %v4968 = vmax.f32 %v4920, 0.0
      %v4969 = vmax.f32 %v4921, 0.0
      %v4970 = vmax.f32 %v4922, 0.0
      %v4971 = vmax.f32 %v4923, 0.0
      %v4972 = vmax.f32 %v4924, 0.0
      %v4973 = vmax.f32 %v4925, 0.0
      %v4974 = vmax.f32 %v4926, 0.0
      %v4975 = vmax.f32 %v4927, 0.0
      %v4976 = vmax.f32 %v4928, 0.0
      %v4977 = vmax.f32 %v4929, 0.0
      %v4978 = vmax.f32 %v4930, 0.0
      %v4979 = vmin.f32 %v4931, 32.0
      %v4980 = vmin.f32 %v4932, 32.0
      %v4981 = vmin.f32 %v4933, 32.0
      %v4982 = vmin.f32 %v4934, 32.0
      %v4983 = vmin.f32 %v4935, 32.0
      %v4984 = vmin.f32 %v4936, 32.0
      %v4985 = vmin.f32 %v4937, 32.0
      %v4986 = vmin.f32 %v4938, 32.0
      %v4987 = vmin.f32 %v4939, 32.0
      %v4988 = vmin.f32 %v4940, 32.0
      %v4989 = vmin.f32 %v4941, 32.0
      %v4990 = vmin.f32 %v4942, 32.0
      %v4991 = vmin.f32 %v4943, 32.0
      %v4992 = vmin.f32 %v4944, 32.0
      %v4993 = vmin.f32 %v4945, 32.0
      %v4994 = vmin.f32 %v4946, 32.0
      %v4995 = vmin.f32 %v4947, 32.0
      %v4996 = vmin.f32 %v4948, 32.0
      %v4997 = vmin.f32 %v4949, 32.0
      %v4998 = vmin.f32 %v4950, 32.0
      %v4999 = vmin.f32 %v4951, 32.0
      %v5000 = vmin.f32 %v4952, 32.0
      %v5001 = vmin.f32 %v4953, 32.0
      %v5002 = vmin.f32 %v4954, 32.0
      %v5003 = vmin.f32 %v4955, 32.0
      %v5004 = vmin.f32 %v4956, 32.0
      %v5005 = vmin.f32 %v4957, 32.0
      %v5006 = vmin.f32 %v4958, 32.0
      %v5007 = vmin.f32 %v4959, 32.0
      %v5008 = vmin.f32 %v4960, 32.0
      %v5009 = vmin.f32 %v4961, 32.0
      %v5010 = vmin.f32 %v4962, 32.0
      %v5011 = vmin.f32 %v4963, 32.0
      %v5012 = vmin.f32 %v4964, 32.0
      %v5013 = vmin.f32 %v4965, 32.0
      %v5014 = vmin.f32 %v4966, 32.0
      %v5015 = vmin.f32 %v4967, 32.0
      %v5016 = vmin.f32 %v4968, 32.0
      %v5017 = vmin.f32 %v4969, 32.0
      %v5018 = vmin.f32 %v4970, 32.0
      %v5019 = vmin.f32 %v4971, 32.0
      %v5020 = vmin.f32 %v4972, 32.0
      %v5021 = vmin.f32 %v4973, 32.0
      %v5022 = vmin.f32 %v4974, 32.0
      %v5023 = vmin.f32 %v4975, 32.0
      %v5024 = vmin.f32 %v4976, 32.0
      %v5025 = vmin.f32 %v4977, 32.0
      %v5026 = vmin.f32 %v4978, 32.0
      %v5027 = vld [vmem:[%s4] sm:$0xff]
      %v5028 = vld [vmem:[%s4 + $0x8] sm:$0xff]
      %v5029 = vld [vmem:[%s4 + $0x10] sm:$0xff]
      %v5030 = vld [vmem:[%s4 + $0x18] sm:$0xff]
      %v5031 = vld [vmem:[%s4 + $0x20] sm:$0xff]
      %v5032 = vld [vmem:[%s4 + $0x28] sm:$0xff]
      %v5033 = vld [vmem:[%s4 + $0x30] sm:$0xff]
      %v5034 = vld [vmem:[%s4 + $0x38] sm:$0xff]
      %v5035 = vld [vmem:[%s4 + $0x40] sm:$0xff]
      %v5036 = vld [vmem:[%s4 + $0x48] sm:$0xff]
      %v5037 = vld [vmem:[%s4 + $0x50] sm:$0xff]
      %v5038 = vld [vmem:[%s4 + $0x58] sm:$0xff]
      %v5039 = vld [vmem:[%s4 + $0x60] sm:$0xff]
      %v5040 = vld [vmem:[%s4 + $0x68] sm:$0xff]
      %v5041 = vld [vmem:[%s4 + $0x70] sm:$0xff]
      %v5042 = vld [vmem:[%s4 + $0x78] sm:$0xff]
      %v5043 = vld [vmem:[%s4 + $0x80] sm:$0xff]
      %v5044 = vld [vmem:[%s4 + $0x88] sm:$0xff]
      %v5045 = vld [vmem:[%s4 + $0x90] sm:$0xff]
      %v5046 = vld [vmem:[%s4 + $0x98] sm:$0xff]
      %v5047 = vld [vmem:[%s4 + $0xa0] sm:$0xff]
      %v5048 = vld [vmem:[%s4 + $0xa8] sm:$0xff]
      %v5049 = vld [vmem:[%s4 + $0xb0] sm:$0xff]
      %v5050 = vld [vmem:[%s4 + $0xb8] sm:$0xff]
      %v5051 = vld [vmem:[%s4 + $0xc0] sm:$0xff]
      %v5052 = vld [vmem:[%s4 + $0xc8] sm:$0xff]
      %v5053 = vld [vmem:[%s4 + $0xd0] sm:$0xff]
      %v5054 = vld [vmem:[%s4 + $0xd8] sm:$0xff]
      %v5055 = vld [vmem:[%s4 + $0xe0] sm:$0xff]
      %v5056 = vld [vmem:[%s4 + $0xe8] sm:$0xff]
      %v5057 = vld [vmem:[%s4 + $0xf0] sm:$0xff]
      %v5058 = vld [vmem:[%s4 + $0xf8] sm:$0xff]
      %v5059 = vld [vmem:[%s4 + $0x100] sm:$0xff]
      %v5060 = vld [vmem:[%s4 + $0x108] sm:$0xff]
      %v5061 = vld [vmem:[%s4 + $0x110] sm:$0xff]
      %v5062 = vld [vmem:[%s4 + $0x118] sm:$0xff]
      %v5063 = vld [vmem:[%s4 + $0x120] sm:$0xff]
      %v5064 = vld [vmem:[%s4 + $0x128] sm:$0xff]
      %v5065 = vld [vmem:[%s4 + $0x130] sm:$0xff]
      %v5066 = vld [vmem:[%s4 + $0x138] sm:$0xff]
      %v5067 = vld [vmem:[%s4 + $0x140] sm:$0xff]
      %v5068 = vld [vmem:[%s4 + $0x148] sm:$0xff]
      %v5069 = vld [vmem:[%s4 + $0x150] sm:$0xff]
      %v5070 = vld [vmem:[%s4 + $0x158] sm:$0xff]
      %v5071 = vld [vmem:[%s4 + $0x160] sm:$0xff]
      %v5072 = vld [vmem:[%s4 + $0x168] sm:$0xff]
      %v5073 = vld [vmem:[%s4 + $0x170] sm:$0xff]
      %v5074 = vld [vmem:[%s4 + $0x178] sm:$0xff]
      %5076 = vset.pattern.permute.xlu0 0
      %5077 = vperm.xlu0 %5076, %v5027
      %v5078 = vpop.permute.xlu0 %5077
      %5081 = vset.pattern.permute.xlu0 0
      %5082 = vperm.xlu0 %5081, %v5028
      %v5083 = vpop.permute.xlu0 %5082
      %5086 = vset.pattern.permute.xlu0 0
      %5087 = vperm.xlu0 %5086, %v5029
      %v5088 = vpop.permute.xlu0 %5087
      %5091 = vset.pattern.permute.xlu0 0
      %5092 = vperm.xlu0 %5091, %v5030
      %v5093 = vpop.permute.xlu0 %5092
      %5096 = vset.pattern.permute.xlu0 0
      %5097 = vperm.xlu0 %5096, %v5031
      %v5098 = vpop.permute.xlu0 %5097
      %5101 = vset.pattern.permute.xlu0 0
      %5102 = vperm.xlu0 %5101, %v5032
      %v5103 = vpop.permute.xlu0 %5102
      %5106 = vset.pattern.permute.xlu0 0
      %5107 = vperm.xlu0 %5106, %v5033
      %v5108 = vpop.permute.xlu0 %5107
      %5111 = vset.pattern.permute.xlu0 0
      %5112 = vperm.xlu0 %5111, %v5034
      %v5113 = vpop.permute.xlu0 %5112
      %5116 = vset.pattern.permute.xlu0 0
      %5117 = vperm.xlu0 %5116, %v5035
      %v5118 = vpop.permute.xlu0 %5117
      %5121 = vset.pattern.permute.xlu0 0
      %5122 = vperm.xlu0 %5121, %v5036
      %v5123 = vpop.permute.xlu0 %5122
      %5126 = vset.pattern.permute.xlu0 0
      %5127 = vperm.xlu0 %5126, %v5037
      %v5128 = vpop.permute.xlu0 %5127
      %5131 = vset.pattern.permute.xlu0 0
      %5132 = vperm.xlu0 %5131, %v5038
      %v5133 = vpop.permute.xlu0 %5132
      %5136 = vset.pattern.permute.xlu0 0
      %5137 = vperm.xlu0 %5136, %v5039
      %v5138 = vpop.permute.xlu0 %5137
      %5141 = vset.pattern.permute.xlu0 0
      %5142 = vperm.xlu0 %5141, %v5040
      %v5143 = vpop.permute.xlu0 %5142
      %5146 = vset.pattern.permute.xlu0 0
      %5147 = vperm.xlu0 %5146, %v5041
      %v5148 = vpop.permute.xlu0 %5147
      %5151 = vset.pattern.permute.xlu0 0
      %5152 = vperm.xlu0 %5151, %v5042
      %v5153 = vpop.permute.xlu0 %5152
      %5156 = vset.pattern.permute.xlu0 0
      %5157 = vperm.xlu0 %5156, %v5043
      %v5158 = vpop.permute.xlu0 %5157
      %5161 = vset.pattern.permute.xlu0 0
      %5162 = vperm.xlu0 %5161, %v5044
      %v5163 = vpop.permute.xlu0 %5162
      %5166 = vset.pattern.permute.xlu0 0
      %5167 = vperm.xlu0 %5166, %v5045
      %v5168 = vpop.permute.xlu0 %5167
      %5171 = vset.pattern.permute.xlu0 0
      %5172 = vperm.xlu0 %5171, %v5046
      %v5173 = vpop.permute.xlu0 %5172
      %5176 = vset.pattern.permute.xlu0 0
      %5177 = vperm.xlu0 %5176, %v5047
      %v5178 = vpop.permute.xlu0 %5177
      %5181 = vset.pattern.permute.xlu0 0
      %5182 = vperm.xlu0 %5181, %v5048
      %v5183 = vpop.permute.xlu0 %5182
      %5186 = vset.pattern.permute.xlu0 0
      %5187 = vperm.xlu0 %5186, %v5049
      %v5188 = vpop.permute.xlu0 %5187
      %5191 = vset.pattern.permute.xlu0 0
      %5192 = vperm.xlu0 %5191, %v5050
      %v5193 = vpop.permute.xlu0 %5192
      %5196 = vset.pattern.permute.xlu0 0
      %5197 = vperm.xlu0 %5196, %v5051
      %v5198 = vpop.permute.xlu0 %5197
      %5201 = vset.pattern.permute.xlu0 0
      %5202 = vperm.xlu0 %5201, %v5052
      %v5203 = vpop.permute.xlu0 %5202
      %5206 = vset.pattern.permute.xlu0 0
      %5207 = vperm.xlu0 %5206, %v5053
      %v5208 = vpop.permute.xlu0 %5207
      %5211 = vset.pattern.permute.xlu0 0
      %5212 = vperm.xlu0 %5211, %v5054
      %v5213 = vpop.permute.xlu0 %5212
      %5216 = vset.pattern.permute.xlu0 0
      %5217 = vperm.xlu0 %5216, %v5055
      %v5218 = vpop.permute.xlu0 %5217
      %5221 = vset.pattern.permute.xlu0 0
      %5222 = vperm.xlu0 %5221, %v5056
      %v5223 = vpop.permute.xlu0 %5222
      %5226 = vset.pattern.permute.xlu0 0
      %5227 = vperm.xlu0 %5226, %v5057
      %v5228 = vpop.permute.xlu0 %5227
      %5231 = vset.pattern.permute.xlu0 0
      %5232 = vperm.xlu0 %5231, %v5058
      %v5233 = vpop.permute.xlu0 %5232
      %5236 = vset.pattern.permute.xlu0 0
      %5237 = vperm.xlu0 %5236, %v5059
      %v5238 = vpop.permute.xlu0 %5237
      %5241 = vset.pattern.permute.xlu0 0
      %5242 = vperm.xlu0 %5241, %v5060
      %v5243 = vpop.permute.xlu0 %5242
      %5246 = vset.pattern.permute.xlu0 0
      %5247 = vperm.xlu0 %5246, %v5061
      %v5248 = vpop.permute.xlu0 %5247
      %5251 = vset.pattern.permute.xlu0 0
      %5252 = vperm.xlu0 %5251, %v5062
      %v5253 = vpop.permute.xlu0 %5252
      %5256 = vset.pattern.permute.xlu0 0
      %5257 = vperm.xlu0 %5256, %v5063
      %v5258 = vpop.permute.xlu0 %5257
      %5261 = vset.pattern.permute.xlu0 0
      %5262 = vperm.xlu0 %5261, %v5064
      %v5263 = vpop.permute.xlu0 %5262
      %5266 = vset.pattern.permute.xlu0 0
      %5267 = vperm.xlu0 %5266, %v5065
      %v5268 = vpop.permute.xlu0 %5267
      %5271 = vset.pattern.permute.xlu0 0
      %5272 = vperm.xlu0 %5271, %v5066
      %v5273 = vpop.permute.xlu0 %5272
      %5276 = vset.pattern.permute.xlu0 0
      %5277 = vperm.xlu0 %5276, %v5067
      %v5278 = vpop.permute.xlu0 %5277
      %5281 = vset.pattern.permute.xlu0 0
      %5282 = vperm.xlu0 %5281, %v5068
      %v5283 = vpop.permute.xlu0 %5282
      %5286 = vset.pattern.permute.xlu0 0
      %5287 = vperm.xlu0 %5286, %v5069
      %v5288 = vpop.permute.xlu0 %5287
      %5291 = vset.pattern.permute.xlu0 0
      %5292 = vperm.xlu0 %5291, %v5070
      %v5293 = vpop.permute.xlu0 %5292
      %5296 = vset.pattern.permute.xlu0 0
      %5297 = vperm.xlu0 %5296, %v5071
      %v5298 = vpop.permute.xlu0 %5297
      %5301 = vset.pattern.permute.xlu0 0
      %5302 = vperm.xlu0 %5301, %v5072
      %v5303 = vpop.permute.xlu0 %5302
      %5306 = vset.pattern.permute.xlu0 0
      %5307 = vperm.xlu0 %5306, %v5073
      %v5308 = vpop.permute.xlu0 %5307
      %5311 = vset.pattern.permute.xlu0 0
      %5312 = vperm.xlu0 %5311, %v5074
      %v5313 = vpop.permute.xlu0 %5312
      %v5315 = vmul.f32 %v4979, %v5078
      %v5316 = vmul.f32 %v4980, %v5083
      %v5317 = vmul.f32 %v4981, %v5088
      %v5318 = vmul.f32 %v4982, %v5093
      %v5319 = vmul.f32 %v4983, %v5098
      %v5320 = vmul.f32 %v4984, %v5103
      %v5321 = vmul.f32 %v4985, %v5108
      %v5322 = vmul.f32 %v4986, %v5113
      %v5323 = vmul.f32 %v4987, %v5118
      %v5324 = vmul.f32 %v4988, %v5123
      %v5325 = vmul.f32 %v4989, %v5128
      %v5326 = vmul.f32 %v4990, %v5133
      %v5327 = vmul.f32 %v4991, %v5138
      %v5328 = vmul.f32 %v4992, %v5143
      %v5329 = vmul.f32 %v4993, %v5148
      %v5330 = vmul.f32 %v4994, %v5153
      %v5331 = vmul.f32 %v4995, %v5158
      %v5332 = vmul.f32 %v4996, %v5163
      %v5333 = vmul.f32 %v4997, %v5168
      %v5334 = vmul.f32 %v4998, %v5173
      %v5335 = vmul.f32 %v4999, %v5178
      %v5336 = vmul.f32 %v5000, %v5183
      %v5337 = vmul.f32 %v5001, %v5188
      %v5338 = vmul.f32 %v5002, %v5193
      %v5339 = vmul.f32 %v5003, %v5198
      %v5340 = vmul.f32 %v5004, %v5203
      %v5341 = vmul.f32 %v5005, %v5208
      %v5342 = vmul.f32 %v5006, %v5213
      %v5343 = vmul.f32 %v5007, %v5218
      %v5344 = vmul.f32 %v5008, %v5223
      %v5345 = vmul.f32 %v5009, %v5228
      %v5346 = vmul.f32 %v5010, %v5233
      %v5347 = vmul.f32 %v5011, %v5238
      %v5348 = vmul.f32 %v5012, %v5243
      %v5349 = vmul.f32 %v5013, %v5248
      %v5350 = vmul.f32 %v5014, %v5253
      %v5351 = vmul.f32 %v5015, %v5258
      %v5352 = vmul.f32 %v5016, %v5263
      %v5353 = vmul.f32 %v5017, %v5268
      %v5354 = vmul.f32 %v5018, %v5273
      %v5355 = vmul.f32 %v5019, %v5278
      %v5356 = vmul.f32 %v5020, %v5283
      %v5357 = vmul.f32 %v5021, %v5288
      %v5358 = vmul.f32 %v5022, %v5293
      %v5359 = vmul.f32 %v5023, %v5298
      %v5360 = vmul.f32 %v5024, %v5303
      %v5361 = vmul.f32 %v5025, %v5308
      %v5362 = vmul.f32 %v5026, %v5313
      %vm5363 = vcmask 60416
      %5364 = vst.msk [vmem:[#allocation2] sm:$0xf] %vm5363, 0
      %5365 = vst.msk [vmem:[#allocation2 + $0x4] sm:$0xf] %vm5363, 0
      %5366 = vst.msk [vmem:[#allocation2 + $0x8] sm:$0xf] %vm5363, 0
      %5367 = vst.msk [vmem:[#allocation2 + $0xc] sm:$0xf] %vm5363, 0
      %5368 = vst.msk [vmem:[#allocation2 + $0xd0] sm:$0xf] %vm5363, 0
      %5369 = vst.msk [vmem:[#allocation2 + $0xd4] sm:$0xf] %vm5363, 0
      %5370 = vst.msk [vmem:[#allocation2 + $0xd8] sm:$0xf] %vm5363, 0
      %5371 = vst.msk [vmem:[#allocation2 + $0xdc] sm:$0xf] %vm5363, 0
      %v5372 = vpack.c.bf16 %v5315, %v5315
      %v5373 = vpack.c.bf16 %v5316, %v5316
      %v5374 = vpack.c.bf16 %v5317, %v5317
      %v5375 = vpack.c.bf16 %v5318, %v5318
      %v5376 = vpack.c.bf16 %v5319, %v5319
      %v5377 = vpack.c.bf16 %v5320, %v5320
      %v5378 = vpack.c.bf16 %v5321, %v5321
      %v5379 = vpack.c.bf16 %v5322, %v5322
      %v5380 = vpack.c.bf16 %v5323, %v5323
      %v5381 = vpack.c.bf16 %v5324, %v5324
      %v5382 = vpack.c.bf16 %v5325, %v5325
      %v5383 = vpack.c.bf16 %v5326, %v5326
      %v5384 = vpack.c.bf16 %v5327, %v5327
      %v5385 = vpack.c.bf16 %v5328, %v5328
      %v5386 = vpack.c.bf16 %v5329, %v5329
      %v5387 = vpack.c.bf16 %v5330, %v5330
      %v5388 = vpack.c.bf16 %v5331, %v5331
      %v5389 = vpack.c.bf16 %v5332, %v5332
      %v5390 = vpack.c.bf16 %v5333, %v5333
      %v5391 = vpack.c.bf16 %v5334, %v5334
      %v5392 = vpack.c.bf16 %v5335, %v5335
      %v5393 = vpack.c.bf16 %v5336, %v5336
      %v5394 = vpack.c.bf16 %v5337, %v5337
      %v5395 = vpack.c.bf16 %v5338, %v5338
      %v5396 = vpack.c.bf16 %v5339, %v5339
      %v5397 = vpack.c.bf16 %v5340, %v5340
      %v5398 = vpack.c.bf16 %v5341, %v5341
      %v5399 = vpack.c.bf16 %v5342, %v5342
      %v5400 = vpack.c.bf16 %v5343, %v5343
      %v5401 = vpack.c.bf16 %v5344, %v5344
      %v5402 = vpack.c.bf16 %v5345, %v5345
      %v5403 = vpack.c.bf16 %v5346, %v5346
      %v5404 = vpack.c.bf16 %v5347, %v5347
      %v5405 = vpack.c.bf16 %v5348, %v5348
      %v5406 = vpack.c.bf16 %v5349, %v5349
      %v5407 = vpack.c.bf16 %v5350, %v5350
      %v5408 = vpack.c.bf16 %v5351, %v5351
      %v5409 = vpack.c.bf16 %v5352, %v5352
      %v5410 = vpack.c.bf16 %v5353, %v5353
      %v5411 = vpack.c.bf16 %v5354, %v5354
      %v5412 = vpack.c.bf16 %v5355, %v5355
      %v5413 = vpack.c.bf16 %v5356, %v5356
      %v5414 = vpack.c.bf16 %v5357, %v5357
      %v5415 = vpack.c.bf16 %v5358, %v5358
      %v5416 = vpack.c.bf16 %v5359, %v5359
      %v5417 = vpack.c.bf16 %v5360, %v5360
      %v5418 = vpack.c.bf16 %v5361, %v5361
      %v5419 = vpack.c.bf16 %v5362, %v5362
      %5420 = vst.msk [vmem:[#allocation2 + $0x10] sm:$0xf] %vm5363, %v5372
      %5421 = vst.msk [vmem:[#allocation2 + $0x14] sm:$0xf] %vm5363, %v5373
      %5422 = vst.msk [vmem:[#allocation2 + $0x18] sm:$0xf] %vm5363, %v5374
      %5423 = vst.msk [vmem:[#allocation2 + $0x1c] sm:$0xf] %vm5363, %v5375
      %5424 = vst.msk [vmem:[#allocation2 + $0x20] sm:$0xf] %vm5363, %v5376
      %5425 = vst.msk [vmem:[#allocation2 + $0x24] sm:$0xf] %vm5363, %v5377
      %5426 = vst.msk [vmem:[#allocation2 + $0x28] sm:$0xf] %vm5363, %v5378
      %5427 = vst.msk [vmem:[#allocation2 + $0x2c] sm:$0xf] %vm5363, %v5379
      %5428 = vst.msk [vmem:[#allocation2 + $0x30] sm:$0xf] %vm5363, %v5380
      %5429 = vst.msk [vmem:[#allocation2 + $0x34] sm:$0xf] %vm5363, %v5381
      %5430 = vst.msk [vmem:[#allocation2 + $0x38] sm:$0xf] %vm5363, %v5382
      %5431 = vst.msk [vmem:[#allocation2 + $0x3c] sm:$0xf] %vm5363, %v5383
      %5432 = vst.msk [vmem:[#allocation2 + $0x40] sm:$0xf] %vm5363, %v5384
      %5433 = vst.msk [vmem:[#allocation2 + $0x44] sm:$0xf] %vm5363, %v5385
      %5434 = vst.msk [vmem:[#allocation2 + $0x48] sm:$0xf] %vm5363, %v5386
      %5435 = vst.msk [vmem:[#allocation2 + $0x4c] sm:$0xf] %vm5363, %v5387
      %5436 = vst.msk [vmem:[#allocation2 + $0x50] sm:$0xf] %vm5363, %v5388
      %5437 = vst.msk [vmem:[#allocation2 + $0x54] sm:$0xf] %vm5363, %v5389
      %5438 = vst.msk [vmem:[#allocation2 + $0x58] sm:$0xf] %vm5363, %v5390
      %5439 = vst.msk [vmem:[#allocation2 + $0x5c] sm:$0xf] %vm5363, %v5391
      %5440 = vst.msk [vmem:[#allocation2 + $0x60] sm:$0xf] %vm5363, %v5392
      %5441 = vst.msk [vmem:[#allocation2 + $0x64] sm:$0xf] %vm5363, %v5393
      %5442 = vst.msk [vmem:[#allocation2 + $0x68] sm:$0xf] %vm5363, %v5394
      %5443 = vst.msk [vmem:[#allocation2 + $0x6c] sm:$0xf] %vm5363, %v5395
      %5444 = vst.msk [vmem:[#allocation2 + $0x70] sm:$0xf] %vm5363, %v5396
      %5445 = vst.msk [vmem:[#allocation2 + $0x74] sm:$0xf] %vm5363, %v5397
      %5446 = vst.msk [vmem:[#allocation2 + $0x78] sm:$0xf] %vm5363, %v5398
      %5447 = vst.msk [vmem:[#allocation2 + $0x7c] sm:$0xf] %vm5363, %v5399
      %5448 = vst.msk [vmem:[#allocation2 + $0x80] sm:$0xf] %vm5363, %v5400
      %5449 = vst.msk [vmem:[#allocation2 + $0x84] sm:$0xf] %vm5363, %v5401
      %5450 = vst.msk [vmem:[#allocation2 + $0x88] sm:$0xf] %vm5363, %v5402
      %5451 = vst.msk [vmem:[#allocation2 + $0x8c] sm:$0xf] %vm5363, %v5403
      %5452 = vst.msk [vmem:[#allocation2 + $0x90] sm:$0xf] %vm5363, %v5404
      %5453 = vst.msk [vmem:[#allocation2 + $0x94] sm:$0xf] %vm5363, %v5405
      %5454 = vst.msk [vmem:[#allocation2 + $0x98] sm:$0xf] %vm5363, %v5406
      %5455 = vst.msk [vmem:[#allocation2 + $0x9c] sm:$0xf] %vm5363, %v5407
      %5456 = vst.msk [vmem:[#allocation2 + $0xa0] sm:$0xf] %vm5363, %v5408
      %5457 = vst.msk [vmem:[#allocation2 + $0xa4] sm:$0xf] %vm5363, %v5409
      %5458 = vst.msk [vmem:[#allocation2 + $0xa8] sm:$0xf] %vm5363, %v5410
      %5459 = vst.msk [vmem:[#allocation2 + $0xac] sm:$0xf] %vm5363, %v5411
      %5460 = vst.msk [vmem:[#allocation2 + $0xb0] sm:$0xf] %vm5363, %v5412
      %5461 = vst.msk [vmem:[#allocation2 + $0xb4] sm:$0xf] %vm5363, %v5413
      %5462 = vst.msk [vmem:[#allocation2 + $0xb8] sm:$0xf] %vm5363, %v5414
      %5463 = vst.msk [vmem:[#allocation2 + $0xbc] sm:$0xf] %vm5363, %v5415
      %5464 = vst.msk [vmem:[#allocation2 + $0xc0] sm:$0xf] %vm5363, %v5416
      %5465 = vst.msk [vmem:[#allocation2 + $0xc4] sm:$0xf] %vm5363, %v5417
      %5466 = vst.msk [vmem:[#allocation2 + $0xc8] sm:$0xf] %vm5363, %v5418
      %5467 = vst.msk [vmem:[#allocation2 + $0xcc] sm:$0xf] %vm5363, %v5419
      %v5468 = vld [vmem:[#allocation2] sm:$0x8]
      %v5469 = vld [vmem:[#allocation2 + $0x4] sm:$0xf]
      %v5470 = vld [vmem:[#allocation2 + $0x8] sm:$0xf]
      %v5471 = vld [vmem:[#allocation2 + $0xc] sm:$0xf]
      %v5472 = vld [vmem:[#allocation2 + $0x10] sm:$0xf]
      %v5473 = vld [vmem:[#allocation2 + $0x14] sm:$0xf]
      %v5474 = vld [vmem:[#allocation2 + $0x18] sm:$0xf]
      %v5475 = vld [vmem:[#allocation2 + $0x1c] sm:$0xf]
      %v5476 = vld [vmem:[#allocation2 + $0x20] sm:$0xf]
      %v5477 = vld [vmem:[#allocation2 + $0x24] sm:$0xf]
      %v5478 = vld [vmem:[#allocation2 + $0x28] sm:$0xf]
      %v5479 = vld [vmem:[#allocation2 + $0x2c] sm:$0xf]
      %v5480 = vld [vmem:[#allocation2 + $0x30] sm:$0xf]
      %v5481 = vld [vmem:[#allocation2 + $0x34] sm:$0xf]
      %v5482 = vld [vmem:[#allocation2 + $0x38] sm:$0xf]
      %v5483 = vld [vmem:[#allocation2 + $0x3c] sm:$0xf]
      %v5484 = vld [vmem:[#allocation2 + $0x40] sm:$0xf]
      %v5485 = vld [vmem:[#allocation2 + $0x44] sm:$0xf]
      %v5486 = vld [vmem:[#allocation2 + $0x48] sm:$0xf]
      %v5487 = vld [vmem:[#allocation2 + $0x4c] sm:$0xf]
      %v5488 = vld [vmem:[#allocation2 + $0x50] sm:$0xf]
      %v5489 = vld [vmem:[#allocation2 + $0x54] sm:$0xf]
      %v5490 = vld [vmem:[#allocation2 + $0x58] sm:$0xf]
      %v5491 = vld [vmem:[#allocation2 + $0x5c] sm:$0xf]
      %v5492 = vld [vmem:[#allocation2 + $0x60] sm:$0xf]
      %v5493 = vld [vmem:[#allocation2 + $0x64] sm:$0xf]
      %v5494 = vld [vmem:[#allocation2 + $0x68] sm:$0xf]
      %v5495 = vld [vmem:[#allocation2 + $0x6c] sm:$0xf]
      %v5496 = vld [vmem:[#allocation2 + $0x70] sm:$0xf]
      %v5497 = vld [vmem:[#allocation2 + $0x74] sm:$0xf]
      %v5498 = vld [vmem:[#allocation2 + $0x78] sm:$0xf]
      %v5499 = vld [vmem:[#allocation2 + $0x7c] sm:$0xf]
      %v5500 = vld [vmem:[#allocation2 + $0x80] sm:$0xf]
      %v5501 = vld [vmem:[#allocation2 + $0x84] sm:$0xf]
      %v5502 = vld [vmem:[#allocation2 + $0x88] sm:$0xf]
      %v5503 = vld [vmem:[#allocation2 + $0x8c] sm:$0xf]
      %v5504 = vld [vmem:[#allocation2 + $0x90] sm:$0xf]
      %v5505 = vld [vmem:[#allocation2 + $0x94] sm:$0xf]
      %v5506 = vld [vmem:[#allocation2 + $0x98] sm:$0xf]
      %v5507 = vld [vmem:[#allocation2 + $0x9c] sm:$0xf]
      %v5508 = vld [vmem:[#allocation2 + $0xa0] sm:$0xf]
      %v5509 = vld [vmem:[#allocation2 + $0xa4] sm:$0xf]
      %v5510 = vld [vmem:[#allocation2 + $0xa8] sm:$0xf]
      %v5511 = vld [vmem:[#allocation2 + $0xac] sm:$0xf]
      %v5512 = vld [vmem:[#allocation2 + $0xb0] sm:$0xf]
      %v5513 = vld [vmem:[#allocation2 + $0xb4] sm:$0xf]
      %v5514 = vld [vmem:[#allocation2 + $0xb8] sm:$0xf]
      %v5515 = vld [vmem:[#allocation2 + $0xbc] sm:$0xf]
      %v5516 = vld [vmem:[#allocation2 + $0xc0] sm:$0xf]
      %v5517 = vld [vmem:[%s2] sm:$0xf]
      %s5518 = scalar_lea.vmem %s2, 4
      %v5519 = vld [vmem:[%s5518] sm:$0xf]
      %v5568 = vunpack.c.l.b16 %v5469
      %v5569 = vunpack.c.l.b16 %v5470
      %v5570 = vunpack.c.l.b16 %v5471
      %v5571 = vunpack.c.l.b16 %v5472
      %v5572 = vunpack.c.l.b16 %v5473
      %v5573 = vunpack.c.l.b16 %v5474
      %v5574 = vunpack.c.l.b16 %v5475
      %v5575 = vunpack.c.l.b16 %v5476
      %v5576 = vunpack.c.l.b16 %v5477
      %v5577 = vunpack.c.l.b16 %v5478
      %v5578 = vunpack.c.l.b16 %v5479
      %v5579 = vunpack.c.l.b16 %v5480
      %v5580 = vunpack.c.l.b16 %v5481
      %v5581 = vunpack.c.l.b16 %v5482
      %v5582 = vunpack.c.l.b16 %v5483
      %v5583 = vunpack.c.l.b16 %v5484
      %v5584 = vunpack.c.l.b16 %v5485
      %v5585 = vunpack.c.l.b16 %v5486
      %v5586 = vunpack.c.l.b16 %v5487
      %v5587 = vunpack.c.l.b16 %v5488
      %v5588 = vunpack.c.l.b16 %v5489
      %v5589 = vunpack.c.l.b16 %v5490
      %v5590 = vunpack.c.l.b16 %v5491
      %v5591 = vunpack.c.l.b16 %v5492
      %v5592 = vunpack.c.l.b16 %v5493
      %v5593 = vunpack.c.l.b16 %v5494
      %v5594 = vunpack.c.l.b16 %v5495
      %v5595 = vunpack.c.l.b16 %v5496
      %v5596 = vunpack.c.l.b16 %v5497
      %v5597 = vunpack.c.l.b16 %v5498
      %v5598 = vunpack.c.l.b16 %v5499
      %v5599 = vunpack.c.l.b16 %v5500
      %v5600 = vunpack.c.l.b16 %v5501
      %v5601 = vunpack.c.l.b16 %v5502
      %v5602 = vunpack.c.l.b16 %v5503
      %v5603 = vunpack.c.l.b16 %v5504
      %v5604 = vunpack.c.l.b16 %v5505
      %v5605 = vunpack.c.l.b16 %v5506
      %v5606 = vunpack.c.l.b16 %v5507
      %v5607 = vunpack.c.l.b16 %v5508
      %v5608 = vunpack.c.l.b16 %v5509
      %v5609 = vunpack.c.l.b16 %v5510
      %v5610 = vunpack.c.l.b16 %v5511
      %v5611 = vunpack.c.l.b16 %v5512
      %v5612 = vunpack.c.l.b16 %v5513
      %v5613 = vunpack.c.l.b16 %v5514
      %v5614 = vunpack.c.l.b16 %v5515
      %v5615 = vunpack.c.l.b16 %v5516
      %v5616 = vpack.c.b16 %v5569, %v5568
      %v5617 = vpack.c.b16 %v5571, %v5570
      %v5618 = vpack.c.b16 %v5573, %v5572
      %v5619 = vpack.c.b16 %v5575, %v5574
      %v5620 = vpack.c.b16 %v5577, %v5576
      %v5621 = vpack.c.b16 %v5579, %v5578
      %v5622 = vpack.c.b16 %v5581, %v5580
      %v5623 = vpack.c.b16 %v5583, %v5582
      %v5624 = vpack.c.b16 %v5585, %v5584
      %v5625 = vpack.c.b16 %v5587, %v5586
      %v5626 = vpack.c.b16 %v5589, %v5588
      %v5627 = vpack.c.b16 %v5591, %v5590
      %v5628 = vpack.c.b16 %v5593, %v5592
      %v5629 = vpack.c.b16 %v5595, %v5594
      %v5630 = vpack.c.b16 %v5597, %v5596
      %v5631 = vpack.c.b16 %v5599, %v5598
      %v5632 = vpack.c.b16 %v5601, %v5600
      %v5633 = vpack.c.b16 %v5603, %v5602
      %v5634 = vpack.c.b16 %v5605, %v5604
      %v5635 = vpack.c.b16 %v5607, %v5606
      %v5636 = vpack.c.b16 %v5609, %v5608
      %v5637 = vpack.c.b16 %v5611, %v5610
      %v5638 = vpack.c.b16 %v5613, %v5612
      %v5639 = vpack.c.b16 %v5615, %v5614
      %v5641 = vsel %vm398, %v5616, 0
      %v5644 = vsel %vm398, %v5617, 0
      %v5647 = vsel %vm398, %v5618, 0
      %v5650 = vsel %vm398, %v5619, 0
      %v5653 = vsel %vm398, %v5620, 0
      %v5656 = vsel %vm398, %v5621, 0
      %v5659 = vsel %vm398, %v5622, 0
      %v5662 = vsel %vm398, %v5623, 0
      %v5665 = vsel %vm398, %v5624, 0
      %v5668 = vsel %vm398, %v5625, 0
      %v5671 = vsel %vm398, %v5626, 0
      %v5674 = vsel %vm398, %v5627, 0
      %v5677 = vsel %vm398, %v5628, 0
      %v5680 = vsel %vm398, %v5629, 0
      %v5683 = vsel %vm398, %v5630, 0
      %v5686 = vsel %vm398, %v5631, 0
      %v5689 = vsel %vm398, %v5632, 0
      %v5692 = vsel %vm398, %v5633, 0
      %v5695 = vsel %vm398, %v5634, 0
      %v5698 = vsel %vm398, %v5635, 0
      %v5701 = vsel %vm398, %v5636, 0
      %v5704 = vsel %vm398, %v5637, 0
      %v5707 = vsel %vm398, %v5638, 0
      %v5710 = vsel %vm398, %v5639, 0
      %v5713 = vsel %vm471, %v5519, 0
      %5715 = vmatpush.bf16.msra.mxu0 0
      %5716 = vmatpush.bf16.msra.mxu0 0
      %5717 = vmatpush.bf16.msra.mxu0 0
      %5718 = vmatpush.bf16.msra.mxu0 0
      %5719 = vmatpush.bf16.msra.mxu0 0
      %5720 = vmatpush.bf16.msra.mxu0 0
      %5721 = vmatpush.bf16.msra.mxu0 0
      %5722 = vmatpush.bf16.msra.mxu0 %v5713
      %5723 = vmatmul.bf16.gmra.mxu0 %v5641
      %v5724 = vpop.f32.mrf.mxu0
      %v5725 = vadd.f32 0.0, %v5724
      %v5726 = vpop.f32.mrf.mxu0
      %v5727 = vadd.f32 0.0, %v5726
      %5728 = vmatmul.bf16.gmra.mxu0 %v5644
      %v5729 = vpop.f32.mrf.mxu0
      %v5730 = vadd.f32 0.0, %v5729
      %v5731 = vpop.f32.mrf.mxu0
      %v5732 = vadd.f32 0.0, %v5731
      %5733 = vmatmul.bf16.gmra.mxu0 %v5647
      %v5734 = vpop.f32.mrf.mxu0
      %v5735 = vadd.f32 0.0, %v5734
      %v5736 = vpop.f32.mrf.mxu0
      %v5737 = vadd.f32 0.0, %v5736
      %5738 = vmatmul.bf16.gmra.mxu0 %v5650
      %v5739 = vpop.f32.mrf.mxu0
      %v5740 = vadd.f32 0.0, %v5739
      %v5741 = vpop.f32.mrf.mxu0
      %v5742 = vadd.f32 0.0, %v5741
      %5743 = vmatmul.bf16.gmra.mxu0 %v5653
      %v5744 = vpop.f32.mrf.mxu0
      %v5745 = vadd.f32 0.0, %v5744
      %v5746 = vpop.f32.mrf.mxu0
      %v5747 = vadd.f32 0.0, %v5746
      %5748 = vmatmul.bf16.gmra.mxu0 %v5656
      %v5749 = vpop.f32.mrf.mxu0
      %v5750 = vadd.f32 0.0, %v5749
      %v5751 = vpop.f32.mrf.mxu0
      %v5752 = vadd.f32 0.0, %v5751
      %5753 = vmatmul.bf16.gmra.mxu0 %v5659
      %v5754 = vpop.f32.mrf.mxu0
      %v5755 = vadd.f32 0.0, %v5754
      %v5756 = vpop.f32.mrf.mxu0
      %v5757 = vadd.f32 0.0, %v5756
      %5758 = vmatmul.bf16.gmra.mxu0 %v5662
      %v5759 = vpop.f32.mrf.mxu0
      %v5760 = vadd.f32 0.0, %v5759
      %v5761 = vpop.f32.mrf.mxu0
      %v5762 = vadd.f32 0.0, %v5761
      %5763 = vmatmul.bf16.gmra.mxu0 %v5665
      %v5764 = vpop.f32.mrf.mxu0
      %v5765 = vadd.f32 0.0, %v5764
      %v5766 = vpop.f32.mrf.mxu0
      %v5767 = vadd.f32 0.0, %v5766
      %5768 = vmatmul.bf16.gmra.mxu0 %v5668
      %v5769 = vpop.f32.mrf.mxu0
      %v5770 = vadd.f32 0.0, %v5769
      %v5771 = vpop.f32.mrf.mxu0
      %v5772 = vadd.f32 0.0, %v5771
      %5773 = vmatmul.bf16.gmra.mxu0 %v5671
      %v5774 = vpop.f32.mrf.mxu0
      %v5775 = vadd.f32 0.0, %v5774
      %v5776 = vpop.f32.mrf.mxu0
      %v5777 = vadd.f32 0.0, %v5776
      %5778 = vmatmul.bf16.gmra.mxu0 %v5674
      %v5779 = vpop.f32.mrf.mxu0
      %v5780 = vadd.f32 0.0, %v5779
      %v5781 = vpop.f32.mrf.mxu0
      %v5782 = vadd.f32 0.0, %v5781
      %5783 = vmatmul.bf16.gmra.mxu0 %v5677
      %v5784 = vpop.f32.mrf.mxu0
      %v5785 = vadd.f32 0.0, %v5784
      %v5786 = vpop.f32.mrf.mxu0
      %v5787 = vadd.f32 0.0, %v5786
      %5788 = vmatmul.bf16.gmra.mxu0 %v5680
      %v5789 = vpop.f32.mrf.mxu0
      %v5790 = vadd.f32 0.0, %v5789
      %v5791 = vpop.f32.mrf.mxu0
      %v5792 = vadd.f32 0.0, %v5791
      %5793 = vmatmul.bf16.gmra.mxu0 %v5683
      %v5794 = vpop.f32.mrf.mxu0
      %v5795 = vadd.f32 0.0, %v5794
      %v5796 = vpop.f32.mrf.mxu0
      %v5797 = vadd.f32 0.0, %v5796
      %5798 = vmatmul.bf16.gmra.mxu0 %v5686
      %v5799 = vpop.f32.mrf.mxu0
      %v5800 = vadd.f32 0.0, %v5799
      %v5801 = vpop.f32.mrf.mxu0
      %v5802 = vadd.f32 0.0, %v5801
      %5803 = vmatmul.bf16.gmra.mxu0 %v5689
      %v5804 = vpop.f32.mrf.mxu0
      %v5805 = vadd.f32 0.0, %v5804
      %v5806 = vpop.f32.mrf.mxu0
      %v5807 = vadd.f32 0.0, %v5806
      %5808 = vmatmul.bf16.gmra.mxu0 %v5692
      %v5809 = vpop.f32.mrf.mxu0
      %v5810 = vadd.f32 0.0, %v5809
      %v5811 = vpop.f32.mrf.mxu0
      %v5812 = vadd.f32 0.0, %v5811
      %5813 = vmatmul.bf16.gmra.mxu0 %v5695
      %v5814 = vpop.f32.mrf.mxu0
      %v5815 = vadd.f32 0.0, %v5814
      %v5816 = vpop.f32.mrf.mxu0
      %v5817 = vadd.f32 0.0, %v5816
      %5818 = vmatmul.bf16.gmra.mxu0 %v5698
      %v5819 = vpop.f32.mrf.mxu0
      %v5820 = vadd.f32 0.0, %v5819
      %v5821 = vpop.f32.mrf.mxu0
      %v5822 = vadd.f32 0.0, %v5821
      %5823 = vmatmul.bf16.gmra.mxu0 %v5701
      %v5824 = vpop.f32.mrf.mxu0
      %v5825 = vadd.f32 0.0, %v5824
      %v5826 = vpop.f32.mrf.mxu0
      %v5827 = vadd.f32 0.0, %v5826
      %5828 = vmatmul.bf16.gmra.mxu0 %v5704
      %v5829 = vpop.f32.mrf.mxu0
      %v5830 = vadd.f32 0.0, %v5829
      %v5831 = vpop.f32.mrf.mxu0
      %v5832 = vadd.f32 0.0, %v5831
      %5833 = vmatmul.bf16.gmra.mxu0 %v5707
      %v5834 = vpop.f32.mrf.mxu0
      %v5835 = vadd.f32 0.0, %v5834
      %v5836 = vpop.f32.mrf.mxu0
      %v5837 = vadd.f32 0.0, %v5836
      %5838 = vmatmul.bf16.gmra.mxu0 %v5710
      %v5839 = vpop.f32.mrf.mxu0
      %v5840 = vadd.f32 0.0, %v5839
      %v5841 = vpop.f32.mrf.mxu0
      %v5842 = vadd.f32 0.0, %v5841
      %5843 = vdwg.mxu0
      %v5845 = vunpack.c.l.b16 %v5468
      %v5846 = vpack.c.b16 %v5568, %v5845
      %v5847 = vpack.c.b16 %v5570, %v5569
      %v5848 = vpack.c.b16 %v5572, %v5571
      %v5849 = vpack.c.b16 %v5574, %v5573
      %v5850 = vpack.c.b16 %v5576, %v5575
      %v5851 = vpack.c.b16 %v5578, %v5577
      %v5852 = vpack.c.b16 %v5580, %v5579
      %v5853 = vpack.c.b16 %v5582, %v5581
      %v5854 = vpack.c.b16 %v5584, %v5583
      %v5855 = vpack.c.b16 %v5586, %v5585
      %v5856 = vpack.c.b16 %v5588, %v5587
      %v5857 = vpack.c.b16 %v5590, %v5589
      %v5858 = vpack.c.b16 %v5592, %v5591
      %v5859 = vpack.c.b16 %v5594, %v5593
      %v5860 = vpack.c.b16 %v5596, %v5595
      %v5861 = vpack.c.b16 %v5598, %v5597
      %v5862 = vpack.c.b16 %v5600, %v5599
      %v5863 = vpack.c.b16 %v5602, %v5601
      %v5864 = vpack.c.b16 %v5604, %v5603
      %v5865 = vpack.c.b16 %v5606, %v5605
      %v5866 = vpack.c.b16 %v5608, %v5607
      %v5867 = vpack.c.b16 %v5610, %v5609
      %v5868 = vpack.c.b16 %v5612, %v5611
      %v5869 = vpack.c.b16 %v5614, %v5613
      %v5870 = vpack.c.b16 %v5615, %v5615
      %v5872 = vshrl.u32 %v5846, 16
      %v5874 = vrot.slane %v5872, 3
      %v5875 = vshll.u32 %v5846, 16
      %v5877 = vrot.slane %v5875, 4
      %v5878 = vor.u32 %v5874, %v5877
      %v5880 = vshrl.u32 %v5847, 16
      %v5882 = vrot.slane %v5880, 3
      %v5883 = vshll.u32 %v5847, 16
      %v5885 = vrot.slane %v5883, 4
      %v5886 = vor.u32 %v5882, %v5885
      %v5887 = vsel %vm631, %v5878, %v5886
      %v5889 = vshrl.u32 %v5848, 16
      %v5891 = vrot.slane %v5889, 3
      %v5892 = vshll.u32 %v5848, 16
      %v5894 = vrot.slane %v5892, 4
      %v5895 = vor.u32 %v5891, %v5894
      %v5896 = vsel %vm631, %v5886, %v5895
      %v5898 = vshrl.u32 %v5849, 16
      %v5900 = vrot.slane %v5898, 3
      %v5901 = vshll.u32 %v5849, 16
      %v5903 = vrot.slane %v5901, 4
      %v5904 = vor.u32 %v5900, %v5903
      %v5905 = vsel %vm631, %v5895, %v5904
      %v5907 = vshrl.u32 %v5850, 16
      %v5909 = vrot.slane %v5907, 3
      %v5910 = vshll.u32 %v5850, 16
      %v5912 = vrot.slane %v5910, 4
      %v5913 = vor.u32 %v5909, %v5912
      %v5914 = vsel %vm631, %v5904, %v5913
      %v5916 = vshrl.u32 %v5851, 16
      %v5918 = vrot.slane %v5916, 3
      %v5919 = vshll.u32 %v5851, 16
      %v5921 = vrot.slane %v5919, 4
      %v5922 = vor.u32 %v5918, %v5921
      %v5923 = vsel %vm631, %v5913, %v5922
      %v5925 = vshrl.u32 %v5852, 16
      %v5927 = vrot.slane %v5925, 3
      %v5928 = vshll.u32 %v5852, 16
      %v5930 = vrot.slane %v5928, 4
      %v5931 = vor.u32 %v5927, %v5930
      %v5932 = vsel %vm631, %v5922, %v5931
      %v5934 = vshrl.u32 %v5853, 16
      %v5936 = vrot.slane %v5934, 3
      %v5937 = vshll.u32 %v5853, 16
      %v5939 = vrot.slane %v5937, 4
      %v5940 = vor.u32 %v5936, %v5939
      %v5941 = vsel %vm631, %v5931, %v5940
      %v5943 = vshrl.u32 %v5854, 16
      %v5945 = vrot.slane %v5943, 3
      %v5946 = vshll.u32 %v5854, 16
      %v5948 = vrot.slane %v5946, 4
      %v5949 = vor.u32 %v5945, %v5948
      %v5950 = vsel %vm631, %v5940, %v5949
      %v5952 = vshrl.u32 %v5855, 16
      %v5954 = vrot.slane %v5952, 3
      %v5955 = vshll.u32 %v5855, 16
      %v5957 = vrot.slane %v5955, 4
      %v5958 = vor.u32 %v5954, %v5957
      %v5959 = vsel %vm631, %v5949, %v5958
      %v5961 = vshrl.u32 %v5856, 16
      %v5963 = vrot.slane %v5961, 3
      %v5964 = vshll.u32 %v5856, 16
      %v5966 = vrot.slane %v5964, 4
      %v5967 = vor.u32 %v5963, %v5966
      %v5968 = vsel %vm631, %v5958, %v5967
      %v5970 = vshrl.u32 %v5857, 16
      %v5972 = vrot.slane %v5970, 3
      %v5973 = vshll.u32 %v5857, 16
      %v5975 = vrot.slane %v5973, 4
      %v5976 = vor.u32 %v5972, %v5975
      %v5977 = vsel %vm631, %v5967, %v5976
      %v5979 = vshrl.u32 %v5858, 16
      %v5981 = vrot.slane %v5979, 3
      %v5982 = vshll.u32 %v5858, 16
      %v5984 = vrot.slane %v5982, 4
      %v5985 = vor.u32 %v5981, %v5984
      %v5986 = vsel %vm631, %v5976, %v5985
      %v5988 = vshrl.u32 %v5859, 16
      %v5990 = vrot.slane %v5988, 3
      %v5991 = vshll.u32 %v5859, 16
      %v5993 = vrot.slane %v5991, 4
      %v5994 = vor.u32 %v5990, %v5993
      %v5995 = vsel %vm631, %v5985, %v5994
      %v5997 = vshrl.u32 %v5860, 16
      %v5999 = vrot.slane %v5997, 3
      %v6000 = vshll.u32 %v5860, 16
      %v6002 = vrot.slane %v6000, 4
      %v6003 = vor.u32 %v5999, %v6002
      %v6004 = vsel %vm631, %v5994, %v6003
      %v6006 = vshrl.u32 %v5861, 16
      %v6008 = vrot.slane %v6006, 3
      %v6009 = vshll.u32 %v5861, 16
      %v6011 = vrot.slane %v6009, 4
      %v6012 = vor.u32 %v6008, %v6011
      %v6013 = vsel %vm631, %v6003, %v6012
      %v6015 = vshrl.u32 %v5862, 16
      %v6017 = vrot.slane %v6015, 3
      %v6018 = vshll.u32 %v5862, 16
      %v6020 = vrot.slane %v6018, 4
      %v6021 = vor.u32 %v6017, %v6020
      %v6022 = vsel %vm631, %v6012, %v6021
      %v6024 = vshrl.u32 %v5863, 16
      %v6026 = vrot.slane %v6024, 3
      %v6027 = vshll.u32 %v5863, 16
      %v6029 = vrot.slane %v6027, 4
      %v6030 = vor.u32 %v6026, %v6029
      %v6031 = vsel %vm631, %v6021, %v6030
      %v6033 = vshrl.u32 %v5864, 16
      %v6035 = vrot.slane %v6033, 3
      %v6036 = vshll.u32 %v5864, 16
      %v6038 = vrot.slane %v6036, 4
      %v6039 = vor.u32 %v6035, %v6038
      %v6040 = vsel %vm631, %v6030, %v6039
      %v6042 = vshrl.u32 %v5865, 16
      %v6044 = vrot.slane %v6042, 3
      %v6045 = vshll.u32 %v5865, 16
      %v6047 = vrot.slane %v6045, 4
      %v6048 = vor.u32 %v6044, %v6047
      %v6049 = vsel %vm631, %v6039, %v6048
      %v6051 = vshrl.u32 %v5866, 16
      %v6053 = vrot.slane %v6051, 3
      %v6054 = vshll.u32 %v5866, 16
      %v6056 = vrot.slane %v6054, 4
      %v6057 = vor.u32 %v6053, %v6056
      %v6058 = vsel %vm631, %v6048, %v6057
      %v6060 = vshrl.u32 %v5867, 16
      %v6062 = vrot.slane %v6060, 3
      %v6063 = vshll.u32 %v5867, 16
      %v6065 = vrot.slane %v6063, 4
      %v6066 = vor.u32 %v6062, %v6065
      %v6067 = vsel %vm631, %v6057, %v6066
      %v6069 = vshrl.u32 %v5868, 16
      %v6071 = vrot.slane %v6069, 3
      %v6072 = vshll.u32 %v5868, 16
      %v6074 = vrot.slane %v6072, 4
      %v6075 = vor.u32 %v6071, %v6074
      %v6076 = vsel %vm631, %v6066, %v6075
      %v6078 = vshrl.u32 %v5869, 16
      %v6080 = vrot.slane %v6078, 3
      %v6081 = vshll.u32 %v5869, 16
      %v6083 = vrot.slane %v6081, 4
      %v6084 = vor.u32 %v6080, %v6083
      %v6085 = vsel %vm631, %v6075, %v6084
      %v6087 = vshrl.u32 %v5870, 16
      %v6089 = vrot.slane %v6087, 3
      %v6090 = vshll.u32 %v5870, 16
      %v6092 = vrot.slane %v6090, 4
      %v6093 = vor.u32 %v6089, %v6092
      %v6094 = vsel %vm631, %v6084, %v6093
      %v6096 = vsel %vm398, %v5887, 0
      %v6099 = vsel %vm398, %v5896, 0
      %v6102 = vsel %vm398, %v5905, 0
      %v6105 = vsel %vm398, %v5914, 0
      %v6108 = vsel %vm398, %v5923, 0
      %v6111 = vsel %vm398, %v5932, 0
      %v6114 = vsel %vm398, %v5941, 0
      %v6117 = vsel %vm398, %v5950, 0
      %v6120 = vsel %vm398, %v5959, 0
      %v6123 = vsel %vm398, %v5968, 0
      %v6126 = vsel %vm398, %v5977, 0
      %v6129 = vsel %vm398, %v5986, 0
      %v6132 = vsel %vm398, %v5995, 0
      %v6135 = vsel %vm398, %v6004, 0
      %v6138 = vsel %vm398, %v6013, 0
      %v6141 = vsel %vm398, %v6022, 0
      %v6144 = vsel %vm398, %v6031, 0
      %v6147 = vsel %vm398, %v6040, 0
      %v6150 = vsel %vm398, %v6049, 0
      %v6153 = vsel %vm398, %v6058, 0
      %v6156 = vsel %vm398, %v6067, 0
      %v6159 = vsel %vm398, %v6076, 0
      %v6162 = vsel %vm398, %v6085, 0
      %v6165 = vsel %vm398, %v6094, 0
      %v6168 = vsel %vm471, %v5517, 0
      %6170 = vmatpush.bf16.msra.mxu0 0
      %6171 = vmatpush.bf16.msra.mxu0 0
      %6172 = vmatpush.bf16.msra.mxu0 0
      %6173 = vmatpush.bf16.msra.mxu0 0
      %6174 = vmatpush.bf16.msra.mxu0 0
      %6175 = vmatpush.bf16.msra.mxu0 0
      %6176 = vmatpush.bf16.msra.mxu0 0
      %6177 = vmatpush.bf16.msra.mxu0 %v6168
      %6178 = vmatmul.bf16.gmra.mxu0 %v6096
      %v6179 = vpop.f32.mrf.mxu0
      %v6180 = vadd.f32 %v5725, %v6179
      %v6181 = vpop.f32.mrf.mxu0
      %v6182 = vadd.f32 %v5727, %v6181
      %6183 = vmatmul.bf16.gmra.mxu0 %v6099
      %v6184 = vpop.f32.mrf.mxu0
      %v6185 = vadd.f32 %v5730, %v6184
      %v6186 = vpop.f32.mrf.mxu0
      %v6187 = vadd.f32 %v5732, %v6186
      %6188 = vmatmul.bf16.gmra.mxu0 %v6102
      %v6189 = vpop.f32.mrf.mxu0
      %v6190 = vadd.f32 %v5735, %v6189
      %v6191 = vpop.f32.mrf.mxu0
      %v6192 = vadd.f32 %v5737, %v6191
      %6193 = vmatmul.bf16.gmra.mxu0 %v6105
      %v6194 = vpop.f32.mrf.mxu0
      %v6195 = vadd.f32 %v5740, %v6194
      %v6196 = vpop.f32.mrf.mxu0
      %v6197 = vadd.f32 %v5742, %v6196
      %6198 = vmatmul.bf16.gmra.mxu0 %v6108
      %v6199 = vpop.f32.mrf.mxu0
      %v6200 = vadd.f32 %v5745, %v6199
      %v6201 = vpop.f32.mrf.mxu0
      %v6202 = vadd.f32 %v5747, %v6201
      %6203 = vmatmul.bf16.gmra.mxu0 %v6111
      %v6204 = vpop.f32.mrf.mxu0
      %v6205 = vadd.f32 %v5750, %v6204
      %v6206 = vpop.f32.mrf.mxu0
      %v6207 = vadd.f32 %v5752, %v6206
      %6208 = vmatmul.bf16.gmra.mxu0 %v6114
      %v6209 = vpop.f32.mrf.mxu0
      %v6210 = vadd.f32 %v5755, %v6209
      %v6211 = vpop.f32.mrf.mxu0
      %v6212 = vadd.f32 %v5757, %v6211
      %6213 = vmatmul.bf16.gmra.mxu0 %v6117
      %v6214 = vpop.f32.mrf.mxu0
      %v6215 = vadd.f32 %v5760, %v6214
      %v6216 = vpop.f32.mrf.mxu0
      %v6217 = vadd.f32 %v5762, %v6216
      %6218 = vmatmul.bf16.gmra.mxu0 %v6120
      %v6219 = vpop.f32.mrf.mxu0
      %v6220 = vadd.f32 %v5765, %v6219
      %v6221 = vpop.f32.mrf.mxu0
      %v6222 = vadd.f32 %v5767, %v6221
      %6223 = vmatmul.bf16.gmra.mxu0 %v6123
      %v6224 = vpop.f32.mrf.mxu0
      %v6225 = vadd.f32 %v5770, %v6224
      %v6226 = vpop.f32.mrf.mxu0
      %v6227 = vadd.f32 %v5772, %v6226
      %6228 = vmatmul.bf16.gmra.mxu0 %v6126
      %v6229 = vpop.f32.mrf.mxu0
      %v6230 = vadd.f32 %v5775, %v6229
      %v6231 = vpop.f32.mrf.mxu0
      %v6232 = vadd.f32 %v5777, %v6231
      %6233 = vmatmul.bf16.gmra.mxu0 %v6129
      %v6234 = vpop.f32.mrf.mxu0
      %v6235 = vadd.f32 %v5780, %v6234
      %v6236 = vpop.f32.mrf.mxu0
      %v6237 = vadd.f32 %v5782, %v6236
      %6238 = vmatmul.bf16.gmra.mxu0 %v6132
      %v6239 = vpop.f32.mrf.mxu0
      %v6240 = vadd.f32 %v5785, %v6239
      %v6241 = vpop.f32.mrf.mxu0
      %v6242 = vadd.f32 %v5787, %v6241
      %6243 = vmatmul.bf16.gmra.mxu0 %v6135
      %v6244 = vpop.f32.mrf.mxu0
      %v6245 = vadd.f32 %v5790, %v6244
      %v6246 = vpop.f32.mrf.mxu0
      %v6247 = vadd.f32 %v5792, %v6246
      %6248 = vmatmul.bf16.gmra.mxu0 %v6138
      %v6249 = vpop.f32.mrf.mxu0
      %v6250 = vadd.f32 %v5795, %v6249
      %v6251 = vpop.f32.mrf.mxu0
      %v6252 = vadd.f32 %v5797, %v6251
      %6253 = vmatmul.bf16.gmra.mxu0 %v6141
      %v6254 = vpop.f32.mrf.mxu0
      %v6255 = vadd.f32 %v5800, %v6254
      %v6256 = vpop.f32.mrf.mxu0
      %v6257 = vadd.f32 %v5802, %v6256
      %6258 = vmatmul.bf16.gmra.mxu0 %v6144
      %v6259 = vpop.f32.mrf.mxu0
      %v6260 = vadd.f32 %v5805, %v6259
      %v6261 = vpop.f32.mrf.mxu0
      %v6262 = vadd.f32 %v5807, %v6261
      %6263 = vmatmul.bf16.gmra.mxu0 %v6147
      %v6264 = vpop.f32.mrf.mxu0
      %v6265 = vadd.f32 %v5810, %v6264
      %v6266 = vpop.f32.mrf.mxu0
      %v6267 = vadd.f32 %v5812, %v6266
      %6268 = vmatmul.bf16.gmra.mxu0 %v6150
      %v6269 = vpop.f32.mrf.mxu0
      %v6270 = vadd.f32 %v5815, %v6269
      %v6271 = vpop.f32.mrf.mxu0
      %v6272 = vadd.f32 %v5817, %v6271
      %6273 = vmatmul.bf16.gmra.mxu0 %v6153
      %v6274 = vpop.f32.mrf.mxu0
      %v6275 = vadd.f32 %v5820, %v6274
      %v6276 = vpop.f32.mrf.mxu0
      %v6277 = vadd.f32 %v5822, %v6276
      %6278 = vmatmul.bf16.gmra.mxu0 %v6156
      %v6279 = vpop.f32.mrf.mxu0
      %v6280 = vadd.f32 %v5825, %v6279
      %v6281 = vpop.f32.mrf.mxu0
      %v6282 = vadd.f32 %v5827, %v6281
      %6283 = vmatmul.bf16.gmra.mxu0 %v6159
      %v6284 = vpop.f32.mrf.mxu0
      %v6285 = vadd.f32 %v5830, %v6284
      %v6286 = vpop.f32.mrf.mxu0
      %v6287 = vadd.f32 %v5832, %v6286
      %6288 = vmatmul.bf16.gmra.mxu0 %v6162
      %v6289 = vpop.f32.mrf.mxu0
      %v6290 = vadd.f32 %v5835, %v6289
      %v6291 = vpop.f32.mrf.mxu0
      %v6292 = vadd.f32 %v5837, %v6291
      %6293 = vmatmul.bf16.gmra.mxu0 %v6165
      %v6294 = vpop.f32.mrf.mxu0
      %v6295 = vadd.f32 %v5840, %v6294
      %v6296 = vpop.f32.mrf.mxu0
      %v6297 = vadd.f32 %v5842, %v6296
      %6298 = vdwg.mxu0
      %v6299 = vld [vmem:[#allocation2 + $0x4] sm:$0xf]
      %v6300 = vld [vmem:[#allocation2 + $0x8] sm:$0xf]
      %v6301 = vld [vmem:[#allocation2 + $0xc] sm:$0xf]
      %v6302 = vld [vmem:[#allocation2 + $0x10] sm:$0xf]
      %v6303 = vld [vmem:[#allocation2 + $0x14] sm:$0xf]
      %v6304 = vld [vmem:[#allocation2 + $0x18] sm:$0xf]
      %v6305 = vld [vmem:[#allocation2 + $0x1c] sm:$0xf]
      %v6306 = vld [vmem:[#allocation2 + $0x20] sm:$0xf]
      %v6307 = vld [vmem:[#allocation2 + $0x24] sm:$0xf]
      %v6308 = vld [vmem:[#allocation2 + $0x28] sm:$0xf]
      %v6309 = vld [vmem:[#allocation2 + $0x2c] sm:$0xf]
      %v6310 = vld [vmem:[#allocation2 + $0x30] sm:$0xf]
      %v6311 = vld [vmem:[#allocation2 + $0x34] sm:$0xf]
      %v6312 = vld [vmem:[#allocation2 + $0x38] sm:$0xf]
      %v6313 = vld [vmem:[#allocation2 + $0x3c] sm:$0xf]
      %v6314 = vld [vmem:[#allocation2 + $0x40] sm:$0xf]
      %v6315 = vld [vmem:[#allocation2 + $0x44] sm:$0xf]
      %v6316 = vld [vmem:[#allocation2 + $0x48] sm:$0xf]
      %v6317 = vld [vmem:[#allocation2 + $0x4c] sm:$0xf]
      %v6318 = vld [vmem:[#allocation2 + $0x50] sm:$0xf]
      %v6319 = vld [vmem:[#allocation2 + $0x54] sm:$0xf]
      %v6320 = vld [vmem:[#allocation2 + $0x58] sm:$0xf]
      %v6321 = vld [vmem:[#allocation2 + $0x5c] sm:$0xf]
      %v6322 = vld [vmem:[#allocation2 + $0x60] sm:$0xf]
      %v6323 = vld [vmem:[#allocation2 + $0x64] sm:$0xf]
      %v6324 = vld [vmem:[#allocation2 + $0x68] sm:$0xf]
      %v6325 = vld [vmem:[#allocation2 + $0x6c] sm:$0xf]
      %v6326 = vld [vmem:[#allocation2 + $0x70] sm:$0xf]
      %v6327 = vld [vmem:[#allocation2 + $0x74] sm:$0xf]
      %v6328 = vld [vmem:[#allocation2 + $0x78] sm:$0xf]
      %v6329 = vld [vmem:[#allocation2 + $0x7c] sm:$0xf]
      %v6330 = vld [vmem:[#allocation2 + $0x80] sm:$0xf]
      %v6331 = vld [vmem:[#allocation2 + $0x84] sm:$0xf]
      %v6332 = vld [vmem:[#allocation2 + $0x88] sm:$0xf]
      %v6333 = vld [vmem:[#allocation2 + $0x8c] sm:$0xf]
      %v6334 = vld [vmem:[#allocation2 + $0x90] sm:$0xf]
      %v6335 = vld [vmem:[#allocation2 + $0x94] sm:$0xf]
      %v6336 = vld [vmem:[#allocation2 + $0x98] sm:$0xf]
      %v6337 = vld [vmem:[#allocation2 + $0x9c] sm:$0xf]
      %v6338 = vld [vmem:[#allocation2 + $0xa0] sm:$0xf]
      %v6339 = vld [vmem:[#allocation2 + $0xa4] sm:$0xf]
      %v6340 = vld [vmem:[#allocation2 + $0xa8] sm:$0xf]
      %v6341 = vld [vmem:[#allocation2 + $0xac] sm:$0xf]
      %v6342 = vld [vmem:[#allocation2 + $0xb0] sm:$0xf]
      %v6343 = vld [vmem:[#allocation2 + $0xb4] sm:$0xf]
      %v6344 = vld [vmem:[#allocation2 + $0xb8] sm:$0xf]
      %v6345 = vld [vmem:[#allocation2 + $0xbc] sm:$0xf]
      %v6346 = vld [vmem:[#allocation2 + $0xc0] sm:$0xf]
      %v6347 = vld [vmem:[#allocation2 + $0xc4] sm:$0x1]
      %s6348 = scalar_lea.vmem %s2, 8
      %v6349 = vld [vmem:[%s6348] sm:$0xf]
      %v6399 = vunpack.c.l.b16 %v6299
      %v6400 = vunpack.c.l.b16 %v6300
      %v6401 = vunpack.c.l.b16 %v6301
      %v6402 = vunpack.c.l.b16 %v6302
      %v6403 = vunpack.c.l.b16 %v6303
      %v6404 = vunpack.c.l.b16 %v6304
      %v6405 = vunpack.c.l.b16 %v6305
      %v6406 = vunpack.c.l.b16 %v6306
      %v6407 = vunpack.c.l.b16 %v6307
      %v6408 = vunpack.c.l.b16 %v6308
      %v6409 = vunpack.c.l.b16 %v6309
      %v6410 = vunpack.c.l.b16 %v6310
      %v6411 = vunpack.c.l.b16 %v6311
      %v6412 = vunpack.c.l.b16 %v6312
      %v6413 = vunpack.c.l.b16 %v6313
      %v6414 = vunpack.c.l.b16 %v6314
      %v6415 = vunpack.c.l.b16 %v6315
      %v6416 = vunpack.c.l.b16 %v6316
      %v6417 = vunpack.c.l.b16 %v6317
      %v6418 = vunpack.c.l.b16 %v6318
      %v6419 = vunpack.c.l.b16 %v6319
      %v6420 = vunpack.c.l.b16 %v6320
      %v6421 = vunpack.c.l.b16 %v6321
      %v6422 = vunpack.c.l.b16 %v6322
      %v6423 = vunpack.c.l.b16 %v6323
      %v6424 = vunpack.c.l.b16 %v6324
      %v6425 = vunpack.c.l.b16 %v6325
      %v6426 = vunpack.c.l.b16 %v6326
      %v6427 = vunpack.c.l.b16 %v6327
      %v6428 = vunpack.c.l.b16 %v6328
      %v6429 = vunpack.c.l.b16 %v6329
      %v6430 = vunpack.c.l.b16 %v6330
      %v6431 = vunpack.c.l.b16 %v6331
      %v6432 = vunpack.c.l.b16 %v6332
      %v6433 = vunpack.c.l.b16 %v6333
      %v6434 = vunpack.c.l.b16 %v6334
      %v6435 = vunpack.c.l.b16 %v6335
      %v6436 = vunpack.c.l.b16 %v6336
      %v6437 = vunpack.c.l.b16 %v6337
      %v6438 = vunpack.c.l.b16 %v6338
      %v6439 = vunpack.c.l.b16 %v6339
      %v6440 = vunpack.c.l.b16 %v6340
      %v6441 = vunpack.c.l.b16 %v6341
      %v6442 = vunpack.c.l.b16 %v6342
      %v6443 = vunpack.c.l.b16 %v6343
      %v6444 = vunpack.c.l.b16 %v6344
      %v6445 = vunpack.c.l.b16 %v6345
      %v6446 = vunpack.c.l.b16 %v6346
      %v6447 = vunpack.c.l.b16 %v6347
      %v6448 = vpack.c.b16 %v6400, %v6399
      %v6449 = vpack.c.b16 %v6402, %v6401
      %v6450 = vpack.c.b16 %v6404, %v6403
      %v6451 = vpack.c.b16 %v6406, %v6405
      %v6452 = vpack.c.b16 %v6408, %v6407
      %v6453 = vpack.c.b16 %v6410, %v6409
      %v6454 = vpack.c.b16 %v6412, %v6411
      %v6455 = vpack.c.b16 %v6414, %v6413
      %v6456 = vpack.c.b16 %v6416, %v6415
      %v6457 = vpack.c.b16 %v6418, %v6417
      %v6458 = vpack.c.b16 %v6420, %v6419
      %v6459 = vpack.c.b16 %v6422, %v6421
      %v6460 = vpack.c.b16 %v6424, %v6423
      %v6461 = vpack.c.b16 %v6426, %v6425
      %v6462 = vpack.c.b16 %v6428, %v6427
      %v6463 = vpack.c.b16 %v6430, %v6429
      %v6464 = vpack.c.b16 %v6432, %v6431
      %v6465 = vpack.c.b16 %v6434, %v6433
      %v6466 = vpack.c.b16 %v6436, %v6435
      %v6467 = vpack.c.b16 %v6438, %v6437
      %v6468 = vpack.c.b16 %v6440, %v6439
      %v6469 = vpack.c.b16 %v6442, %v6441
      %v6470 = vpack.c.b16 %v6444, %v6443
      %v6471 = vpack.c.b16 %v6446, %v6445
      %v6472 = vpack.c.b16 %v6447, %v6447
      %v6474 = vshrl.u32 %v6448, 16
      %v6476 = vshll.u32 %v6448, 16
      %v6478 = vrot.slane %v6476, 1
      %v6479 = vor.u32 %v6474, %v6478
      %v6481 = vshll.u32 %v6449, 16
      %v6483 = vrot.slane %v6481, 1
      %v6484 = vsel %vm1234, %v6479, %v6483
      %v6485 = vshrl.u32 %v6449, 16
      %v6487 = vor.u32 %v6485, %v6483
      %v6489 = vshll.u32 %v6450, 16
      %v6491 = vrot.slane %v6489, 1
      %v6492 = vsel %vm1234, %v6487, %v6491
      %v6493 = vshrl.u32 %v6450, 16
      %v6495 = vor.u32 %v6493, %v6491
      %v6497 = vshll.u32 %v6451, 16
      %v6499 = vrot.slane %v6497, 1
      %v6500 = vsel %vm1234, %v6495, %v6499
      %v6501 = vshrl.u32 %v6451, 16
      %v6503 = vor.u32 %v6501, %v6499
      %v6505 = vshll.u32 %v6452, 16
      %v6507 = vrot.slane %v6505, 1
      %v6508 = vsel %vm1234, %v6503, %v6507
      %v6509 = vshrl.u32 %v6452, 16
      %v6511 = vor.u32 %v6509, %v6507
      %v6513 = vshll.u32 %v6453, 16
      %v6515 = vrot.slane %v6513, 1
      %v6516 = vsel %vm1234, %v6511, %v6515
      %v6517 = vshrl.u32 %v6453, 16
      %v6519 = vor.u32 %v6517, %v6515
      %v6521 = vshll.u32 %v6454, 16
      %v6523 = vrot.slane %v6521, 1
      %v6524 = vsel %vm1234, %v6519, %v6523
      %v6525 = vshrl.u32 %v6454, 16
      %v6527 = vor.u32 %v6525, %v6523
      %v6529 = vshll.u32 %v6455, 16
      %v6531 = vrot.slane %v6529, 1
      %v6532 = vsel %vm1234, %v6527, %v6531
      %v6533 = vshrl.u32 %v6455, 16
      %v6535 = vor.u32 %v6533, %v6531
      %v6537 = vshll.u32 %v6456, 16
      %v6539 = vrot.slane %v6537, 1
      %v6540 = vsel %vm1234, %v6535, %v6539
      %v6541 = vshrl.u32 %v6456, 16
      %v6543 = vor.u32 %v6541, %v6539
      %v6545 = vshll.u32 %v6457, 16
      %v6547 = vrot.slane %v6545, 1
      %v6548 = vsel %vm1234, %v6543, %v6547
      %v6549 = vshrl.u32 %v6457, 16
      %v6551 = vor.u32 %v6549, %v6547
      %v6553 = vshll.u32 %v6458, 16
      %v6555 = vrot.slane %v6553, 1
      %v6556 = vsel %vm1234, %v6551, %v6555
      %v6557 = vshrl.u32 %v6458, 16
      %v6559 = vor.u32 %v6557, %v6555
      %v6561 = vshll.u32 %v6459, 16
      %v6563 = vrot.slane %v6561, 1
      %v6564 = vsel %vm1234, %v6559, %v6563
      %v6565 = vshrl.u32 %v6459, 16
      %v6567 = vor.u32 %v6565, %v6563
      %v6569 = vshll.u32 %v6460, 16
      %v6571 = vrot.slane %v6569, 1
      %v6572 = vsel %vm1234, %v6567, %v6571
      %v6573 = vshrl.u32 %v6460, 16
      %v6575 = vor.u32 %v6573, %v6571
      %v6577 = vshll.u32 %v6461, 16
      %v6579 = vrot.slane %v6577, 1
      %v6580 = vsel %vm1234, %v6575, %v6579
      %v6581 = vshrl.u32 %v6461, 16
      %v6583 = vor.u32 %v6581, %v6579
      %v6585 = vshll.u32 %v6462, 16
      %v6587 = vrot.slane %v6585, 1
      %v6588 = vsel %vm1234, %v6583, %v6587
      %v6589 = vshrl.u32 %v6462, 16
      %v6591 = vor.u32 %v6589, %v6587
      %v6593 = vshll.u32 %v6463, 16
      %v6595 = vrot.slane %v6593, 1
      %v6596 = vsel %vm1234, %v6591, %v6595
      %v6597 = vshrl.u32 %v6463, 16
      %v6599 = vor.u32 %v6597, %v6595
      %v6601 = vshll.u32 %v6464, 16
      %v6603 = vrot.slane %v6601, 1
      %v6604 = vsel %vm1234, %v6599, %v6603
      %v6605 = vshrl.u32 %v6464, 16
      %v6607 = vor.u32 %v6605, %v6603
      %v6609 = vshll.u32 %v6465, 16
      %v6611 = vrot.slane %v6609, 1
      %v6612 = vsel %vm1234, %v6607, %v6611
      %v6613 = vshrl.u32 %v6465, 16
      %v6615 = vor.u32 %v6613, %v6611
      %v6617 = vshll.u32 %v6466, 16
      %v6619 = vrot.slane %v6617, 1
      %v6620 = vsel %vm1234, %v6615, %v6619
      %v6621 = vshrl.u32 %v6466, 16
      %v6623 = vor.u32 %v6621, %v6619
      %v6625 = vshll.u32 %v6467, 16
      %v6627 = vrot.slane %v6625, 1
      %v6628 = vsel %vm1234, %v6623, %v6627
      %v6629 = vshrl.u32 %v6467, 16
      %v6631 = vor.u32 %v6629, %v6627
      %v6633 = vshll.u32 %v6468, 16
      %v6635 = vrot.slane %v6633, 1
      %v6636 = vsel %vm1234, %v6631, %v6635
      %v6637 = vshrl.u32 %v6468, 16
      %v6639 = vor.u32 %v6637, %v6635
      %v6641 = vshll.u32 %v6469, 16
      %v6643 = vrot.slane %v6641, 1
      %v6644 = vsel %vm1234, %v6639, %v6643
      %v6645 = vshrl.u32 %v6469, 16
      %v6647 = vor.u32 %v6645, %v6643
      %v6649 = vshll.u32 %v6470, 16
      %v6651 = vrot.slane %v6649, 1
      %v6652 = vsel %vm1234, %v6647, %v6651
      %v6653 = vshrl.u32 %v6470, 16
      %v6655 = vor.u32 %v6653, %v6651
      %v6657 = vshll.u32 %v6471, 16
      %v6659 = vrot.slane %v6657, 1
      %v6660 = vsel %vm1234, %v6655, %v6659
      %v6661 = vshrl.u32 %v6471, 16
      %v6663 = vor.u32 %v6661, %v6659
      %v6665 = vshll.u32 %v6472, 16
      %v6667 = vrot.slane %v6665, 1
      %v6668 = vsel %vm1234, %v6663, %v6667
      %v6670 = vsel %vm398, %v6484, 0
      %v6673 = vsel %vm398, %v6492, 0
      %v6676 = vsel %vm398, %v6500, 0
      %v6679 = vsel %vm398, %v6508, 0
      %v6682 = vsel %vm398, %v6516, 0
      %v6685 = vsel %vm398, %v6524, 0
      %v6688 = vsel %vm398, %v6532, 0
      %v6691 = vsel %vm398, %v6540, 0
      %v6694 = vsel %vm398, %v6548, 0
      %v6697 = vsel %vm398, %v6556, 0
      %v6700 = vsel %vm398, %v6564, 0
      %v6703 = vsel %vm398, %v6572, 0
      %v6706 = vsel %vm398, %v6580, 0
      %v6709 = vsel %vm398, %v6588, 0
      %v6712 = vsel %vm398, %v6596, 0
      %v6715 = vsel %vm398, %v6604, 0
      %v6718 = vsel %vm398, %v6612, 0
      %v6721 = vsel %vm398, %v6620, 0
      %v6724 = vsel %vm398, %v6628, 0
      %v6727 = vsel %vm398, %v6636, 0
      %v6730 = vsel %vm398, %v6644, 0
      %v6733 = vsel %vm398, %v6652, 0
      %v6736 = vsel %vm398, %v6660, 0
      %v6739 = vsel %vm398, %v6668, 0
      %v6742 = vsel %vm471, %v6349, 0
      %6744 = vmatpush.bf16.msra.mxu0 0
      %6745 = vmatpush.bf16.msra.mxu0 0
      %6746 = vmatpush.bf16.msra.mxu0 0
      %6747 = vmatpush.bf16.msra.mxu0 0
      %6748 = vmatpush.bf16.msra.mxu0 0
      %6749 = vmatpush.bf16.msra.mxu0 0
      %6750 = vmatpush.bf16.msra.mxu0 0
      %6751 = vmatpush.bf16.msra.mxu0 %v6742
      %6752 = vmatmul.bf16.gmra.mxu0 %v6670
      %v6753 = vpop.f32.mrf.mxu0
      %v6754 = vadd.f32 0.0, %v6753
      %v6755 = vpop.f32.mrf.mxu0
      %v6756 = vadd.f32 0.0, %v6755
      %6757 = vmatmul.bf16.gmra.mxu0 %v6673
      %v6758 = vpop.f32.mrf.mxu0
      %v6759 = vadd.f32 0.0, %v6758
      %v6760 = vpop.f32.mrf.mxu0
      %v6761 = vadd.f32 0.0, %v6760
      %6762 = vmatmul.bf16.gmra.mxu0 %v6676
      %v6763 = vpop.f32.mrf.mxu0
      %v6764 = vadd.f32 0.0, %v6763
      %v6765 = vpop.f32.mrf.mxu0
      %v6766 = vadd.f32 0.0, %v6765
      %6767 = vmatmul.bf16.gmra.mxu0 %v6679
      %v6768 = vpop.f32.mrf.mxu0
      %v6769 = vadd.f32 0.0, %v6768
      %v6770 = vpop.f32.mrf.mxu0
      %v6771 = vadd.f32 0.0, %v6770
      %6772 = vmatmul.bf16.gmra.mxu0 %v6682
      %v6773 = vpop.f32.mrf.mxu0
      %v6774 = vadd.f32 0.0, %v6773
      %v6775 = vpop.f32.mrf.mxu0
      %v6776 = vadd.f32 0.0, %v6775
      %6777 = vmatmul.bf16.gmra.mxu0 %v6685
      %v6778 = vpop.f32.mrf.mxu0
      %v6779 = vadd.f32 0.0, %v6778
      %v6780 = vpop.f32.mrf.mxu0
      %v6781 = vadd.f32 0.0, %v6780
      %6782 = vmatmul.bf16.gmra.mxu0 %v6688
      %v6783 = vpop.f32.mrf.mxu0
      %v6784 = vadd.f32 0.0, %v6783
      %v6785 = vpop.f32.mrf.mxu0
      %v6786 = vadd.f32 0.0, %v6785
      %6787 = vmatmul.bf16.gmra.mxu0 %v6691
      %v6788 = vpop.f32.mrf.mxu0
      %v6789 = vadd.f32 0.0, %v6788
      %v6790 = vpop.f32.mrf.mxu0
      %v6791 = vadd.f32 0.0, %v6790
      %6792 = vmatmul.bf16.gmra.mxu0 %v6694
      %v6793 = vpop.f32.mrf.mxu0
      %v6794 = vadd.f32 0.0, %v6793
      %v6795 = vpop.f32.mrf.mxu0
      %v6796 = vadd.f32 0.0, %v6795
      %6797 = vmatmul.bf16.gmra.mxu0 %v6697
      %v6798 = vpop.f32.mrf.mxu0
      %v6799 = vadd.f32 0.0, %v6798
      %v6800 = vpop.f32.mrf.mxu0
      %v6801 = vadd.f32 0.0, %v6800
      %6802 = vmatmul.bf16.gmra.mxu0 %v6700
      %v6803 = vpop.f32.mrf.mxu0
      %v6804 = vadd.f32 0.0, %v6803
      %v6805 = vpop.f32.mrf.mxu0
      %v6806 = vadd.f32 0.0, %v6805
      %6807 = vmatmul.bf16.gmra.mxu0 %v6703
      %v6808 = vpop.f32.mrf.mxu0
      %v6809 = vadd.f32 0.0, %v6808
      %v6810 = vpop.f32.mrf.mxu0
      %v6811 = vadd.f32 0.0, %v6810
      %6812 = vmatmul.bf16.gmra.mxu0 %v6706
      %v6813 = vpop.f32.mrf.mxu0
      %v6814 = vadd.f32 0.0, %v6813
      %v6815 = vpop.f32.mrf.mxu0
      %v6816 = vadd.f32 0.0, %v6815
      %6817 = vmatmul.bf16.gmra.mxu0 %v6709
      %v6818 = vpop.f32.mrf.mxu0
      %v6819 = vadd.f32 0.0, %v6818
      %v6820 = vpop.f32.mrf.mxu0
      %v6821 = vadd.f32 0.0, %v6820
      %6822 = vmatmul.bf16.gmra.mxu0 %v6712
      %v6823 = vpop.f32.mrf.mxu0
      %v6824 = vadd.f32 0.0, %v6823
      %v6825 = vpop.f32.mrf.mxu0
      %v6826 = vadd.f32 0.0, %v6825
      %6827 = vmatmul.bf16.gmra.mxu0 %v6715
      %v6828 = vpop.f32.mrf.mxu0
      %v6829 = vadd.f32 0.0, %v6828
      %v6830 = vpop.f32.mrf.mxu0
      %v6831 = vadd.f32 0.0, %v6830
      %6832 = vmatmul.bf16.gmra.mxu0 %v6718
      %v6833 = vpop.f32.mrf.mxu0
      %v6834 = vadd.f32 0.0, %v6833
      %v6835 = vpop.f32.mrf.mxu0
      %v6836 = vadd.f32 0.0, %v6835
      %6837 = vmatmul.bf16.gmra.mxu0 %v6721
      %v6838 = vpop.f32.mrf.mxu0
      %v6839 = vadd.f32 0.0, %v6838
      %v6840 = vpop.f32.mrf.mxu0
      %v6841 = vadd.f32 0.0, %v6840
      %6842 = vmatmul.bf16.gmra.mxu0 %v6724
      %v6843 = vpop.f32.mrf.mxu0
      %v6844 = vadd.f32 0.0, %v6843
      %v6845 = vpop.f32.mrf.mxu0
      %v6846 = vadd.f32 0.0, %v6845
      %6847 = vmatmul.bf16.gmra.mxu0 %v6727
      %v6848 = vpop.f32.mrf.mxu0
      %v6849 = vadd.f32 0.0, %v6848
      %v6850 = vpop.f32.mrf.mxu0
      %v6851 = vadd.f32 0.0, %v6850
      %6852 = vmatmul.bf16.gmra.mxu0 %v6730
      %v6853 = vpop.f32.mrf.mxu0
      %v6854 = vadd.f32 0.0, %v6853
      %v6855 = vpop.f32.mrf.mxu0
      %v6856 = vadd.f32 0.0, %v6855
      %6857 = vmatmul.bf16.gmra.mxu0 %v6733
      %v6858 = vpop.f32.mrf.mxu0
      %v6859 = vadd.f32 0.0, %v6858
      %v6860 = vpop.f32.mrf.mxu0
      %v6861 = vadd.f32 0.0, %v6860
      %6862 = vmatmul.bf16.gmra.mxu0 %v6736
      %v6863 = vpop.f32.mrf.mxu0
      %v6864 = vadd.f32 0.0, %v6863
      %v6865 = vpop.f32.mrf.mxu0
      %v6866 = vadd.f32 0.0, %v6865
      %6867 = vmatmul.bf16.gmra.mxu0 %v6739
      %v6868 = vpop.f32.mrf.mxu0
      %v6869 = vadd.f32 0.0, %v6868
      %v6870 = vpop.f32.mrf.mxu0
      %v6871 = vadd.f32 0.0, %v6870
      %6872 = vdwg.mxu0
      %v6873 = vadd.f32 %v6180, %v6754
      %v6874 = vadd.f32 %v6182, %v6756
      %v6875 = vadd.f32 %v6185, %v6759
      %v6876 = vadd.f32 %v6187, %v6761
      %v6877 = vadd.f32 %v6190, %v6764
      %v6878 = vadd.f32 %v6192, %v6766
      %v6879 = vadd.f32 %v6195, %v6769
      %v6880 = vadd.f32 %v6197, %v6771
      %v6881 = vadd.f32 %v6200, %v6774
      %v6882 = vadd.f32 %v6202, %v6776
      %v6883 = vadd.f32 %v6205, %v6779
      %v6884 = vadd.f32 %v6207, %v6781
      %v6885 = vadd.f32 %v6210, %v6784
      %v6886 = vadd.f32 %v6212, %v6786
      %v6887 = vadd.f32 %v6215, %v6789
      %v6888 = vadd.f32 %v6217, %v6791
      %v6889 = vadd.f32 %v6220, %v6794
      %v6890 = vadd.f32 %v6222, %v6796
      %v6891 = vadd.f32 %v6225, %v6799
      %v6892 = vadd.f32 %v6227, %v6801
      %v6893 = vadd.f32 %v6230, %v6804
      %v6894 = vadd.f32 %v6232, %v6806
      %v6895 = vadd.f32 %v6235, %v6809
      %v6896 = vadd.f32 %v6237, %v6811
      %v6897 = vadd.f32 %v6240, %v6814
      %v6898 = vadd.f32 %v6242, %v6816
      %v6899 = vadd.f32 %v6245, %v6819
      %v6900 = vadd.f32 %v6247, %v6821
      %v6901 = vadd.f32 %v6250, %v6824
      %v6902 = vadd.f32 %v6252, %v6826
      %v6903 = vadd.f32 %v6255, %v6829
      %v6904 = vadd.f32 %v6257, %v6831
      %v6905 = vadd.f32 %v6260, %v6834
      %v6906 = vadd.f32 %v6262, %v6836
      %v6907 = vadd.f32 %v6265, %v6839
      %v6908 = vadd.f32 %v6267, %v6841
      %v6909 = vadd.f32 %v6270, %v6844
      %v6910 = vadd.f32 %v6272, %v6846
      %v6911 = vadd.f32 %v6275, %v6849
      %v6912 = vadd.f32 %v6277, %v6851
      %v6913 = vadd.f32 %v6280, %v6854
      %v6914 = vadd.f32 %v6282, %v6856
      %v6915 = vadd.f32 %v6285, %v6859
      %v6916 = vadd.f32 %v6287, %v6861
      %v6917 = vadd.f32 %v6290, %v6864
      %v6918 = vadd.f32 %v6292, %v6866
      %v6919 = vadd.f32 %v6295, %v6869
      %v6920 = vadd.f32 %v6297, %v6871
      %v6921 = vld [vmem:[#allocation2 + $0xc] sm:$0x8]
      %v6922 = vld [vmem:[#allocation2 + $0x10] sm:$0xf]
      %v6923 = vld [vmem:[#allocation2 + $0x14] sm:$0xf]
      %v6924 = vld [vmem:[#allocation2 + $0x18] sm:$0xf]
      %v6925 = vld [vmem:[#allocation2 + $0x1c] sm:$0xf]
      %v6926 = vld [vmem:[#allocation2 + $0x20] sm:$0xf]
      %v6927 = vld [vmem:[#allocation2 + $0x24] sm:$0xf]
      %v6928 = vld [vmem:[#allocation2 + $0x28] sm:$0xf]
      %v6929 = vld [vmem:[#allocation2 + $0x2c] sm:$0xf]
      %v6930 = vld [vmem:[#allocation2 + $0x30] sm:$0xf]
      %v6931 = vld [vmem:[#allocation2 + $0x34] sm:$0xf]
      %v6932 = vld [vmem:[#allocation2 + $0x38] sm:$0xf]
      %v6933 = vld [vmem:[#allocation2 + $0x3c] sm:$0xf]
      %v6934 = vld [vmem:[#allocation2 + $0x40] sm:$0xf]
      %v6935 = vld [vmem:[#allocation2 + $0x44] sm:$0xf]
      %v6936 = vld [vmem:[#allocation2 + $0x48] sm:$0xf]
      %v6937 = vld [vmem:[#allocation2 + $0x4c] sm:$0xf]
      %v6938 = vld [vmem:[#allocation2 + $0x50] sm:$0xf]
      %v6939 = vld [vmem:[#allocation2 + $0x54] sm:$0xf]
      %v6940 = vld [vmem:[#allocation2 + $0x58] sm:$0xf]
      %v6941 = vld [vmem:[#allocation2 + $0x5c] sm:$0xf]
      %v6942 = vld [vmem:[#allocation2 + $0x60] sm:$0xf]
      %v6943 = vld [vmem:[#allocation2 + $0x64] sm:$0xf]
      %v6944 = vld [vmem:[#allocation2 + $0x68] sm:$0xf]
      %v6945 = vld [vmem:[#allocation2 + $0x6c] sm:$0xf]
      %v6946 = vld [vmem:[#allocation2 + $0x70] sm:$0xf]
      %v6947 = vld [vmem:[#allocation2 + $0x74] sm:$0xf]
      %v6948 = vld [vmem:[#allocation2 + $0x78] sm:$0xf]
      %v6949 = vld [vmem:[#allocation2 + $0x7c] sm:$0xf]
      %v6950 = vld [vmem:[#allocation2 + $0x80] sm:$0xf]
      %v6951 = vld [vmem:[#allocation2 + $0x84] sm:$0xf]
      %v6952 = vld [vmem:[#allocation2 + $0x88] sm:$0xf]
      %v6953 = vld [vmem:[#allocation2 + $0x8c] sm:$0xf]
      %v6954 = vld [vmem:[#allocation2 + $0x90] sm:$0xf]
      %v6955 = vld [vmem:[#allocation2 + $0x94] sm:$0xf]
      %v6956 = vld [vmem:[#allocation2 + $0x98] sm:$0xf]
      %v6957 = vld [vmem:[#allocation2 + $0x9c] sm:$0xf]
      %v6958 = vld [vmem:[#allocation2 + $0xa0] sm:$0xf]
      %v6959 = vld [vmem:[#allocation2 + $0xa4] sm:$0xf]
      %v6960 = vld [vmem:[#allocation2 + $0xa8] sm:$0xf]
      %v6961 = vld [vmem:[#allocation2 + $0xac] sm:$0xf]
      %v6962 = vld [vmem:[#allocation2 + $0xb0] sm:$0xf]
      %v6963 = vld [vmem:[#allocation2 + $0xb4] sm:$0xf]
      %v6964 = vld [vmem:[#allocation2 + $0xb8] sm:$0xf]
      %v6965 = vld [vmem:[#allocation2 + $0xbc] sm:$0xf]
      %v6966 = vld [vmem:[#allocation2 + $0xc0] sm:$0xf]
      %v6967 = vld [vmem:[#allocation2 + $0xc4] sm:$0xf]
      %v6968 = vld [vmem:[#allocation2 + $0xc8] sm:$0xf]
      %v6969 = vld [vmem:[#allocation2 + $0xcc] sm:$0xf]
      %s6970 = scalar_lea.vmem %s2, 12
      %v6971 = vld [vmem:[%s6970] sm:$0xf]
      %v7021 = vunpack.c.l.b16 %v6921
      %v7022 = vunpack.c.l.b16 %v6922
      %v7023 = vunpack.c.l.b16 %v6923
      %v7024 = vunpack.c.l.b16 %v6924
      %v7025 = vunpack.c.l.b16 %v6925
      %v7026 = vunpack.c.l.b16 %v6926
      %v7027 = vunpack.c.l.b16 %v6927
      %v7028 = vunpack.c.l.b16 %v6928
      %v7029 = vunpack.c.l.b16 %v6929
      %v7030 = vunpack.c.l.b16 %v6930
      %v7031 = vunpack.c.l.b16 %v6931
      %v7032 = vunpack.c.l.b16 %v6932
      %v7033 = vunpack.c.l.b16 %v6933
      %v7034 = vunpack.c.l.b16 %v6934
      %v7035 = vunpack.c.l.b16 %v6935
      %v7036 = vunpack.c.l.b16 %v6936
      %v7037 = vunpack.c.l.b16 %v6937
      %v7038 = vunpack.c.l.b16 %v6938
      %v7039 = vunpack.c.l.b16 %v6939
      %v7040 = vunpack.c.l.b16 %v6940
      %v7041 = vunpack.c.l.b16 %v6941
      %v7042 = vunpack.c.l.b16 %v6942
      %v7043 = vunpack.c.l.b16 %v6943
      %v7044 = vunpack.c.l.b16 %v6944
      %v7045 = vunpack.c.l.b16 %v6945
      %v7046 = vunpack.c.l.b16 %v6946
      %v7047 = vunpack.c.l.b16 %v6947
      %v7048 = vunpack.c.l.b16 %v6948
      %v7049 = vunpack.c.l.b16 %v6949
      %v7050 = vunpack.c.l.b16 %v6950
      %v7051 = vunpack.c.l.b16 %v6951
      %v7052 = vunpack.c.l.b16 %v6952
      %v7053 = vunpack.c.l.b16 %v6953
      %v7054 = vunpack.c.l.b16 %v6954
      %v7055 = vunpack.c.l.b16 %v6955
      %v7056 = vunpack.c.l.b16 %v6956
      %v7057 = vunpack.c.l.b16 %v6957
      %v7058 = vunpack.c.l.b16 %v6958
      %v7059 = vunpack.c.l.b16 %v6959
      %v7060 = vunpack.c.l.b16 %v6960
      %v7061 = vunpack.c.l.b16 %v6961
      %v7062 = vunpack.c.l.b16 %v6962
      %v7063 = vunpack.c.l.b16 %v6963
      %v7064 = vunpack.c.l.b16 %v6964
      %v7065 = vunpack.c.l.b16 %v6965
      %v7066 = vunpack.c.l.b16 %v6966
      %v7067 = vunpack.c.l.b16 %v6967
      %v7068 = vunpack.c.l.b16 %v6968
      %v7069 = vunpack.c.l.b16 %v6969
      %v7070 = vpack.c.b16 %v7022, %v7021
      %v7071 = vpack.c.b16 %v7024, %v7023
      %v7072 = vpack.c.b16 %v7026, %v7025
      %v7073 = vpack.c.b16 %v7028, %v7027
      %v7074 = vpack.c.b16 %v7030, %v7029
      %v7075 = vpack.c.b16 %v7032, %v7031
      %v7076 = vpack.c.b16 %v7034, %v7033
      %v7077 = vpack.c.b16 %v7036, %v7035
      %v7078 = vpack.c.b16 %v7038, %v7037
      %v7079 = vpack.c.b16 %v7040, %v7039
      %v7080 = vpack.c.b16 %v7042, %v7041
      %v7081 = vpack.c.b16 %v7044, %v7043
      %v7082 = vpack.c.b16 %v7046, %v7045
      %v7083 = vpack.c.b16 %v7048, %v7047
      %v7084 = vpack.c.b16 %v7050, %v7049
      %v7085 = vpack.c.b16 %v7052, %v7051
      %v7086 = vpack.c.b16 %v7054, %v7053
      %v7087 = vpack.c.b16 %v7056, %v7055
      %v7088 = vpack.c.b16 %v7058, %v7057
      %v7089 = vpack.c.b16 %v7060, %v7059
      %v7090 = vpack.c.b16 %v7062, %v7061
      %v7091 = vpack.c.b16 %v7064, %v7063
      %v7092 = vpack.c.b16 %v7066, %v7065
      %v7093 = vpack.c.b16 %v7068, %v7067
      %v7094 = vpack.c.b16 %v7069, %v7069
      %v7096 = vshrl.u32 %v7070, 16
      %v7098 = vrot.slane %v7096, 3
      %v7099 = vshll.u32 %v7070, 16
      %v7101 = vrot.slane %v7099, 4
      %v7102 = vor.u32 %v7098, %v7101
      %v7104 = vshrl.u32 %v7071, 16
      %v7106 = vrot.slane %v7104, 3
      %v7107 = vshll.u32 %v7071, 16
      %v7109 = vrot.slane %v7107, 4
      %v7110 = vor.u32 %v7106, %v7109
      %v7111 = vsel %vm631, %v7102, %v7110
      %v7113 = vshrl.u32 %v7072, 16
      %v7115 = vrot.slane %v7113, 3
      %v7116 = vshll.u32 %v7072, 16
      %v7118 = vrot.slane %v7116, 4
      %v7119 = vor.u32 %v7115, %v7118
      %v7120 = vsel %vm631, %v7110, %v7119
      %v7122 = vshrl.u32 %v7073, 16
      %v7124 = vrot.slane %v7122, 3
      %v7125 = vshll.u32 %v7073, 16
      %v7127 = vrot.slane %v7125, 4
      %v7128 = vor.u32 %v7124, %v7127
      %v7129 = vsel %vm631, %v7119, %v7128
      %v7131 = vshrl.u32 %v7074, 16
      %v7133 = vrot.slane %v7131, 3
      %v7134 = vshll.u32 %v7074, 16
      %v7136 = vrot.slane %v7134, 4
      %v7137 = vor.u32 %v7133, %v7136
      %v7138 = vsel %vm631, %v7128, %v7137
      %v7140 = vshrl.u32 %v7075, 16
      %v7142 = vrot.slane %v7140, 3
      %v7143 = vshll.u32 %v7075, 16
      %v7145 = vrot.slane %v7143, 4
      %v7146 = vor.u32 %v7142, %v7145
      %v7147 = vsel %vm631, %v7137, %v7146
      %v7149 = vshrl.u32 %v7076, 16
      %v7151 = vrot.slane %v7149, 3
      %v7152 = vshll.u32 %v7076, 16
      %v7154 = vrot.slane %v7152, 4
      %v7155 = vor.u32 %v7151, %v7154
      %v7156 = vsel %vm631, %v7146, %v7155
      %v7158 = vshrl.u32 %v7077, 16
      %v7160 = vrot.slane %v7158, 3
      %v7161 = vshll.u32 %v7077, 16
      %v7163 = vrot.slane %v7161, 4
      %v7164 = vor.u32 %v7160, %v7163
      %v7165 = vsel %vm631, %v7155, %v7164
      %v7167 = vshrl.u32 %v7078, 16
      %v7169 = vrot.slane %v7167, 3
      %v7170 = vshll.u32 %v7078, 16
      %v7172 = vrot.slane %v7170, 4
      %v7173 = vor.u32 %v7169, %v7172
      %v7174 = vsel %vm631, %v7164, %v7173
      %v7176 = vshrl.u32 %v7079, 16
      %v7178 = vrot.slane %v7176, 3
      %v7179 = vshll.u32 %v7079, 16
      %v7181 = vrot.slane %v7179, 4
      %v7182 = vor.u32 %v7178, %v7181
      %v7183 = vsel %vm631, %v7173, %v7182
      %v7185 = vshrl.u32 %v7080, 16
      %v7187 = vrot.slane %v7185, 3
      %v7188 = vshll.u32 %v7080, 16
      %v7190 = vrot.slane %v7188, 4
      %v7191 = vor.u32 %v7187, %v7190
      %v7192 = vsel %vm631, %v7182, %v7191
      %v7194 = vshrl.u32 %v7081, 16
      %v7196 = vrot.slane %v7194, 3
      %v7197 = vshll.u32 %v7081, 16
      %v7199 = vrot.slane %v7197, 4
      %v7200 = vor.u32 %v7196, %v7199
      %v7201 = vsel %vm631, %v7191, %v7200
      %v7203 = vshrl.u32 %v7082, 16
      %v7205 = vrot.slane %v7203, 3
      %v7206 = vshll.u32 %v7082, 16
      %v7208 = vrot.slane %v7206, 4
      %v7209 = vor.u32 %v7205, %v7208
      %v7210 = vsel %vm631, %v7200, %v7209
      %v7212 = vshrl.u32 %v7083, 16
      %v7214 = vrot.slane %v7212, 3
      %v7215 = vshll.u32 %v7083, 16
      %v7217 = vrot.slane %v7215, 4
      %v7218 = vor.u32 %v7214, %v7217
      %v7219 = vsel %vm631, %v7209, %v7218
      %v7221 = vshrl.u32 %v7084, 16
      %v7223 = vrot.slane %v7221, 3
      %v7224 = vshll.u32 %v7084, 16
      %v7226 = vrot.slane %v7224, 4
      %v7227 = vor.u32 %v7223, %v7226
      %v7228 = vsel %vm631, %v7218, %v7227
      %v7230 = vshrl.u32 %v7085, 16
      %v7232 = vrot.slane %v7230, 3
      %v7233 = vshll.u32 %v7085, 16
      %v7235 = vrot.slane %v7233, 4
      %v7236 = vor.u32 %v7232, %v7235
      %v7237 = vsel %vm631, %v7227, %v7236
      %v7239 = vshrl.u32 %v7086, 16
      %v7241 = vrot.slane %v7239, 3
      %v7242 = vshll.u32 %v7086, 16
      %v7244 = vrot.slane %v7242, 4
      %v7245 = vor.u32 %v7241, %v7244
      %v7246 = vsel %vm631, %v7236, %v7245
      %v7248 = vshrl.u32 %v7087, 16
      %v7250 = vrot.slane %v7248, 3
      %v7251 = vshll.u32 %v7087, 16
      %v7253 = vrot.slane %v7251, 4
      %v7254 = vor.u32 %v7250, %v7253
      %v7255 = vsel %vm631, %v7245, %v7254
      %v7257 = vshrl.u32 %v7088, 16
      %v7259 = vrot.slane %v7257, 3
      %v7260 = vshll.u32 %v7088, 16
      %v7262 = vrot.slane %v7260, 4
      %v7263 = vor.u32 %v7259, %v7262
      %v7264 = vsel %vm631, %v7254, %v7263
      %v7266 = vshrl.u32 %v7089, 16
      %v7268 = vrot.slane %v7266, 3
      %v7269 = vshll.u32 %v7089, 16
      %v7271 = vrot.slane %v7269, 4
      %v7272 = vor.u32 %v7268, %v7271
      %v7273 = vsel %vm631, %v7263, %v7272
      %v7275 = vshrl.u32 %v7090, 16
      %v7277 = vrot.slane %v7275, 3
      %v7278 = vshll.u32 %v7090, 16
      %v7280 = vrot.slane %v7278, 4
      %v7281 = vor.u32 %v7277, %v7280
      %v7282 = vsel %vm631, %v7272, %v7281
      %v7284 = vshrl.u32 %v7091, 16
      %v7286 = vrot.slane %v7284, 3
      %v7287 = vshll.u32 %v7091, 16
      %v7289 = vrot.slane %v7287, 4
      %v7290 = vor.u32 %v7286, %v7289
      %v7291 = vsel %vm631, %v7281, %v7290
      %v7293 = vshrl.u32 %v7092, 16
      %v7295 = vrot.slane %v7293, 3
      %v7296 = vshll.u32 %v7092, 16
      %v7298 = vrot.slane %v7296, 4
      %v7299 = vor.u32 %v7295, %v7298
      %v7300 = vsel %vm631, %v7290, %v7299
      %v7302 = vshrl.u32 %v7093, 16
      %v7304 = vrot.slane %v7302, 3
      %v7305 = vshll.u32 %v7093, 16
      %v7307 = vrot.slane %v7305, 4
      %v7308 = vor.u32 %v7304, %v7307
      %v7309 = vsel %vm631, %v7299, %v7308
      %v7311 = vshrl.u32 %v7094, 16
      %v7313 = vrot.slane %v7311, 3
      %v7314 = vshll.u32 %v7094, 16
      %v7316 = vrot.slane %v7314, 4
      %v7317 = vor.u32 %v7313, %v7316
      %v7318 = vsel %vm631, %v7308, %v7317
      %v7320 = vsel %vm398, %v7111, 0
      %v7323 = vsel %vm398, %v7120, 0
      %v7326 = vsel %vm398, %v7129, 0
      %v7329 = vsel %vm398, %v7138, 0
      %v7332 = vsel %vm398, %v7147, 0
      %v7335 = vsel %vm398, %v7156, 0
      %v7338 = vsel %vm398, %v7165, 0
      %v7341 = vsel %vm398, %v7174, 0
      %v7344 = vsel %vm398, %v7183, 0
      %v7347 = vsel %vm398, %v7192, 0
      %v7350 = vsel %vm398, %v7201, 0
      %v7353 = vsel %vm398, %v7210, 0
      %v7356 = vsel %vm398, %v7219, 0
      %v7359 = vsel %vm398, %v7228, 0
      %v7362 = vsel %vm398, %v7237, 0
      %v7365 = vsel %vm398, %v7246, 0
      %v7368 = vsel %vm398, %v7255, 0
      %v7371 = vsel %vm398, %v7264, 0
      %v7374 = vsel %vm398, %v7273, 0
      %v7377 = vsel %vm398, %v7282, 0
      %v7380 = vsel %vm398, %v7291, 0
      %v7383 = vsel %vm398, %v7300, 0
      %v7386 = vsel %vm398, %v7309, 0
      %v7389 = vsel %vm398, %v7318, 0
      %v7392 = vsel %vm471, %v6971, 0
      %7394 = vmatpush.bf16.msra.mxu0 0
      %7395 = vmatpush.bf16.msra.mxu0 0
      %7396 = vmatpush.bf16.msra.mxu0 0
      %7397 = vmatpush.bf16.msra.mxu0 0
      %7398 = vmatpush.bf16.msra.mxu0 0
      %7399 = vmatpush.bf16.msra.mxu0 0
      %7400 = vmatpush.bf16.msra.mxu0 0
      %7401 = vmatpush.bf16.msra.mxu0 %v7392
      %7402 = vmatmul.bf16.gmra.mxu0 %v7320
      %v7403 = vpop.f32.mrf.mxu0
      %v7404 = vadd.f32 0.0, %v7403
      %v7405 = vpop.f32.mrf.mxu0
      %v7406 = vadd.f32 0.0, %v7405
      %7407 = vmatmul.bf16.gmra.mxu0 %v7323
      %v7408 = vpop.f32.mrf.mxu0
      %v7409 = vadd.f32 0.0, %v7408
      %v7410 = vpop.f32.mrf.mxu0
      %v7411 = vadd.f32 0.0, %v7410
      %7412 = vmatmul.bf16.gmra.mxu0 %v7326
      %v7413 = vpop.f32.mrf.mxu0
      %v7414 = vadd.f32 0.0, %v7413
      %v7415 = vpop.f32.mrf.mxu0
      %v7416 = vadd.f32 0.0, %v7415
      %7417 = vmatmul.bf16.gmra.mxu0 %v7329
      %v7418 = vpop.f32.mrf.mxu0
      %v7419 = vadd.f32 0.0, %v7418
      %v7420 = vpop.f32.mrf.mxu0
      %v7421 = vadd.f32 0.0, %v7420
      %7422 = vmatmul.bf16.gmra.mxu0 %v7332
      %v7423 = vpop.f32.mrf.mxu0
      %v7424 = vadd.f32 0.0, %v7423
      %v7425 = vpop.f32.mrf.mxu0
      %v7426 = vadd.f32 0.0, %v7425
      %7427 = vmatmul.bf16.gmra.mxu0 %v7335
      %v7428 = vpop.f32.mrf.mxu0
      %v7429 = vadd.f32 0.0, %v7428
      %v7430 = vpop.f32.mrf.mxu0
      %v7431 = vadd.f32 0.0, %v7430
      %7432 = vmatmul.bf16.gmra.mxu0 %v7338
      %v7433 = vpop.f32.mrf.mxu0
      %v7434 = vadd.f32 0.0, %v7433
      %v7435 = vpop.f32.mrf.mxu0
      %v7436 = vadd.f32 0.0, %v7435
      %7437 = vmatmul.bf16.gmra.mxu0 %v7341
      %v7438 = vpop.f32.mrf.mxu0
      %v7439 = vadd.f32 0.0, %v7438
      %v7440 = vpop.f32.mrf.mxu0
      %v7441 = vadd.f32 0.0, %v7440
      %7442 = vmatmul.bf16.gmra.mxu0 %v7344
      %v7443 = vpop.f32.mrf.mxu0
      %v7444 = vadd.f32 0.0, %v7443
      %v7445 = vpop.f32.mrf.mxu0
      %v7446 = vadd.f32 0.0, %v7445
      %7447 = vmatmul.bf16.gmra.mxu0 %v7347
      %v7448 = vpop.f32.mrf.mxu0
      %v7449 = vadd.f32 0.0, %v7448
      %v7450 = vpop.f32.mrf.mxu0
      %v7451 = vadd.f32 0.0, %v7450
      %7452 = vmatmul.bf16.gmra.mxu0 %v7350
      %v7453 = vpop.f32.mrf.mxu0
      %v7454 = vadd.f32 0.0, %v7453
      %v7455 = vpop.f32.mrf.mxu0
      %v7456 = vadd.f32 0.0, %v7455
      %7457 = vmatmul.bf16.gmra.mxu0 %v7353
      %v7458 = vpop.f32.mrf.mxu0
      %v7459 = vadd.f32 0.0, %v7458
      %v7460 = vpop.f32.mrf.mxu0
      %v7461 = vadd.f32 0.0, %v7460
      %7462 = vmatmul.bf16.gmra.mxu0 %v7356
      %v7463 = vpop.f32.mrf.mxu0
      %v7464 = vadd.f32 0.0, %v7463
      %v7465 = vpop.f32.mrf.mxu0
      %v7466 = vadd.f32 0.0, %v7465
      %7467 = vmatmul.bf16.gmra.mxu0 %v7359
      %v7468 = vpop.f32.mrf.mxu0
      %v7469 = vadd.f32 0.0, %v7468
      %v7470 = vpop.f32.mrf.mxu0
      %v7471 = vadd.f32 0.0, %v7470
      %7472 = vmatmul.bf16.gmra.mxu0 %v7362
      %v7473 = vpop.f32.mrf.mxu0
      %v7474 = vadd.f32 0.0, %v7473
      %v7475 = vpop.f32.mrf.mxu0
      %v7476 = vadd.f32 0.0, %v7475
      %7477 = vmatmul.bf16.gmra.mxu0 %v7365
      %v7478 = vpop.f32.mrf.mxu0
      %v7479 = vadd.f32 0.0, %v7478
      %v7480 = vpop.f32.mrf.mxu0
      %v7481 = vadd.f32 0.0, %v7480
      %7482 = vmatmul.bf16.gmra.mxu0 %v7368
      %v7483 = vpop.f32.mrf.mxu0
      %v7484 = vadd.f32 0.0, %v7483
      %v7485 = vpop.f32.mrf.mxu0
      %v7486 = vadd.f32 0.0, %v7485
      %7487 = vmatmul.bf16.gmra.mxu0 %v7371
      %v7488 = vpop.f32.mrf.mxu0
      %v7489 = vadd.f32 0.0, %v7488
      %v7490 = vpop.f32.mrf.mxu0
      %v7491 = vadd.f32 0.0, %v7490
      %7492 = vmatmul.bf16.gmra.mxu0 %v7374
      %v7493 = vpop.f32.mrf.mxu0
      %v7494 = vadd.f32 0.0, %v7493
      %v7495 = vpop.f32.mrf.mxu0
      %v7496 = vadd.f32 0.0, %v7495
      %7497 = vmatmul.bf16.gmra.mxu0 %v7377
      %v7498 = vpop.f32.mrf.mxu0
      %v7499 = vadd.f32 0.0, %v7498
      %v7500 = vpop.f32.mrf.mxu0
      %v7501 = vadd.f32 0.0, %v7500
      %7502 = vmatmul.bf16.gmra.mxu0 %v7380
      %v7503 = vpop.f32.mrf.mxu0
      %v7504 = vadd.f32 0.0, %v7503
      %v7505 = vpop.f32.mrf.mxu0
      %v7506 = vadd.f32 0.0, %v7505
      %7507 = vmatmul.bf16.gmra.mxu0 %v7383
      %v7508 = vpop.f32.mrf.mxu0
      %v7509 = vadd.f32 0.0, %v7508
      %v7510 = vpop.f32.mrf.mxu0
      %v7511 = vadd.f32 0.0, %v7510
      %7512 = vmatmul.bf16.gmra.mxu0 %v7386
      %v7513 = vpop.f32.mrf.mxu0
      %v7514 = vadd.f32 0.0, %v7513
      %v7515 = vpop.f32.mrf.mxu0
      %v7516 = vadd.f32 0.0, %v7515
      %7517 = vmatmul.bf16.gmra.mxu0 %v7389
      %v7518 = vpop.f32.mrf.mxu0
      %v7519 = vadd.f32 0.0, %v7518
      %v7520 = vpop.f32.mrf.mxu0
      %v7521 = vadd.f32 0.0, %v7520
      %7522 = vdwg.mxu0
      %v7523 = vadd.f32 %v6873, %v7404
      %v7524 = vadd.f32 %v6874, %v7406
      %v7525 = vadd.f32 %v6875, %v7409
      %v7526 = vadd.f32 %v6876, %v7411
      %v7527 = vadd.f32 %v6877, %v7414
      %v7528 = vadd.f32 %v6878, %v7416
      %v7529 = vadd.f32 %v6879, %v7419
      %v7530 = vadd.f32 %v6880, %v7421
      %v7531 = vadd.f32 %v6881, %v7424
      %v7532 = vadd.f32 %v6882, %v7426
      %v7533 = vadd.f32 %v6883, %v7429
      %v7534 = vadd.f32 %v6884, %v7431
      %v7535 = vadd.f32 %v6885, %v7434
      %v7536 = vadd.f32 %v6886, %v7436
      %v7537 = vadd.f32 %v6887, %v7439
      %v7538 = vadd.f32 %v6888, %v7441
      %v7539 = vadd.f32 %v6889, %v7444
      %v7540 = vadd.f32 %v6890, %v7446
      %v7541 = vadd.f32 %v6891, %v7449
      %v7542 = vadd.f32 %v6892, %v7451
      %v7543 = vadd.f32 %v6893, %v7454
      %v7544 = vadd.f32 %v6894, %v7456
      %v7545 = vadd.f32 %v6895, %v7459
      %v7546 = vadd.f32 %v6896, %v7461
      %v7547 = vadd.f32 %v6897, %v7464
      %v7548 = vadd.f32 %v6898, %v7466
      %v7549 = vadd.f32 %v6899, %v7469
      %v7550 = vadd.f32 %v6900, %v7471
      %v7551 = vadd.f32 %v6901, %v7474
      %v7552 = vadd.f32 %v6902, %v7476
      %v7553 = vadd.f32 %v6903, %v7479
      %v7554 = vadd.f32 %v6904, %v7481
      %v7555 = vadd.f32 %v6905, %v7484
      %v7556 = vadd.f32 %v6906, %v7486
      %v7557 = vadd.f32 %v6907, %v7489
      %v7558 = vadd.f32 %v6908, %v7491
      %v7559 = vadd.f32 %v6909, %v7494
      %v7560 = vadd.f32 %v6910, %v7496
      %v7561 = vadd.f32 %v6911, %v7499
      %v7562 = vadd.f32 %v6912, %v7501
      %v7563 = vadd.f32 %v6913, %v7504
      %v7564 = vadd.f32 %v6914, %v7506
      %v7565 = vadd.f32 %v6915, %v7509
      %v7566 = vadd.f32 %v6916, %v7511
      %v7567 = vadd.f32 %v6917, %v7514
      %v7568 = vadd.f32 %v6918, %v7516
      %v7569 = vadd.f32 %v6919, %v7519
      %v7570 = vadd.f32 %v6920, %v7521
      %s7571 = scalar_lea.vmem %s2, 16
      %v7572 = vld [vmem:[%s7571] sm:$0xf]
      %v7573 = vpack.c.b16 %v7023, %v7022
      %v7574 = vpack.c.b16 %v7025, %v7024
      %v7575 = vpack.c.b16 %v7027, %v7026
      %v7576 = vpack.c.b16 %v7029, %v7028
      %v7577 = vpack.c.b16 %v7031, %v7030
      %v7578 = vpack.c.b16 %v7033, %v7032
      %v7579 = vpack.c.b16 %v7035, %v7034
      %v7580 = vpack.c.b16 %v7037, %v7036
      %v7581 = vpack.c.b16 %v7039, %v7038
      %v7582 = vpack.c.b16 %v7041, %v7040
      %v7583 = vpack.c.b16 %v7043, %v7042
      %v7584 = vpack.c.b16 %v7045, %v7044
      %v7585 = vpack.c.b16 %v7047, %v7046
      %v7586 = vpack.c.b16 %v7049, %v7048
      %v7587 = vpack.c.b16 %v7051, %v7050
      %v7588 = vpack.c.b16 %v7053, %v7052
      %v7589 = vpack.c.b16 %v7055, %v7054
      %v7590 = vpack.c.b16 %v7057, %v7056
      %v7591 = vpack.c.b16 %v7059, %v7058
      %v7592 = vpack.c.b16 %v7061, %v7060
      %v7593 = vpack.c.b16 %v7063, %v7062
      %v7594 = vpack.c.b16 %v7065, %v7064
      %v7595 = vpack.c.b16 %v7067, %v7066
      %v7596 = vpack.c.b16 %v7069, %v7068
      %v7598 = vsel %vm398, %v7573, 0
      %v7601 = vsel %vm398, %v7574, 0
      %v7604 = vsel %vm398, %v7575, 0
      %v7607 = vsel %vm398, %v7576, 0
      %v7610 = vsel %vm398, %v7577, 0
      %v7613 = vsel %vm398, %v7578, 0
      %v7616 = vsel %vm398, %v7579, 0
      %v7619 = vsel %vm398, %v7580, 0
      %v7622 = vsel %vm398, %v7581, 0
      %v7625 = vsel %vm398, %v7582, 0
      %v7628 = vsel %vm398, %v7583, 0
      %v7631 = vsel %vm398, %v7584, 0
      %v7634 = vsel %vm398, %v7585, 0
      %v7637 = vsel %vm398, %v7586, 0
      %v7640 = vsel %vm398, %v7587, 0
      %v7643 = vsel %vm398, %v7588, 0
      %v7646 = vsel %vm398, %v7589, 0
      %v7649 = vsel %vm398, %v7590, 0
      %v7652 = vsel %vm398, %v7591, 0
      %v7655 = vsel %vm398, %v7592, 0
      %v7658 = vsel %vm398, %v7593, 0
      %v7661 = vsel %vm398, %v7594, 0
      %v7664 = vsel %vm398, %v7595, 0
      %v7667 = vsel %vm398, %v7596, 0
      %v7670 = vsel %vm471, %v7572, 0
      %7672 = vmatpush.bf16.msra.mxu0 0
      %7673 = vmatpush.bf16.msra.mxu0 0
      %7674 = vmatpush.bf16.msra.mxu0 0
      %7675 = vmatpush.bf16.msra.mxu0 0
      %7676 = vmatpush.bf16.msra.mxu0 0
      %7677 = vmatpush.bf16.msra.mxu0 0
      %7678 = vmatpush.bf16.msra.mxu0 0
      %7679 = vmatpush.bf16.msra.mxu0 %v7670
      %7680 = vmatmul.bf16.gmra.mxu0 %v7598
      %v7681 = vpop.f32.mrf.mxu0
      %v7682 = vadd.f32 0.0, %v7681
      %v7683 = vpop.f32.mrf.mxu0
      %v7684 = vadd.f32 0.0, %v7683
      %7685 = vmatmul.bf16.gmra.mxu0 %v7601
      %v7686 = vpop.f32.mrf.mxu0
      %v7687 = vadd.f32 0.0, %v7686
      %v7688 = vpop.f32.mrf.mxu0
      %v7689 = vadd.f32 0.0, %v7688
      %7690 = vmatmul.bf16.gmra.mxu0 %v7604
      %v7691 = vpop.f32.mrf.mxu0
      %v7692 = vadd.f32 0.0, %v7691
      %v7693 = vpop.f32.mrf.mxu0
      %v7694 = vadd.f32 0.0, %v7693
      %7695 = vmatmul.bf16.gmra.mxu0 %v7607
      %v7696 = vpop.f32.mrf.mxu0
      %v7697 = vadd.f32 0.0, %v7696
      %v7698 = vpop.f32.mrf.mxu0
      %v7699 = vadd.f32 0.0, %v7698
      %7700 = vmatmul.bf16.gmra.mxu0 %v7610
      %v7701 = vpop.f32.mrf.mxu0
      %v7702 = vadd.f32 0.0, %v7701
      %v7703 = vpop.f32.mrf.mxu0
      %v7704 = vadd.f32 0.0, %v7703
      %7705 = vmatmul.bf16.gmra.mxu0 %v7613
      %v7706 = vpop.f32.mrf.mxu0
      %v7707 = vadd.f32 0.0, %v7706
      %v7708 = vpop.f32.mrf.mxu0
      %v7709 = vadd.f32 0.0, %v7708
      %7710 = vmatmul.bf16.gmra.mxu0 %v7616
      %v7711 = vpop.f32.mrf.mxu0
      %v7712 = vadd.f32 0.0, %v7711
      %v7713 = vpop.f32.mrf.mxu0
      %v7714 = vadd.f32 0.0, %v7713
      %7715 = vmatmul.bf16.gmra.mxu0 %v7619
      %v7716 = vpop.f32.mrf.mxu0
      %v7717 = vadd.f32 0.0, %v7716
      %v7718 = vpop.f32.mrf.mxu0
      %v7719 = vadd.f32 0.0, %v7718
      %7720 = vmatmul.bf16.gmra.mxu0 %v7622
      %v7721 = vpop.f32.mrf.mxu0
      %v7722 = vadd.f32 0.0, %v7721
      %v7723 = vpop.f32.mrf.mxu0
      %v7724 = vadd.f32 0.0, %v7723
      %7725 = vmatmul.bf16.gmra.mxu0 %v7625
      %v7726 = vpop.f32.mrf.mxu0
      %v7727 = vadd.f32 0.0, %v7726
      %v7728 = vpop.f32.mrf.mxu0
      %v7729 = vadd.f32 0.0, %v7728
      %7730 = vmatmul.bf16.gmra.mxu0 %v7628
      %v7731 = vpop.f32.mrf.mxu0
      %v7732 = vadd.f32 0.0, %v7731
      %v7733 = vpop.f32.mrf.mxu0
      %v7734 = vadd.f32 0.0, %v7733
      %7735 = vmatmul.bf16.gmra.mxu0 %v7631
      %v7736 = vpop.f32.mrf.mxu0
      %v7737 = vadd.f32 0.0, %v7736
      %v7738 = vpop.f32.mrf.mxu0
      %v7739 = vadd.f32 0.0, %v7738
      %7740 = vmatmul.bf16.gmra.mxu0 %v7634
      %v7741 = vpop.f32.mrf.mxu0
      %v7742 = vadd.f32 0.0, %v7741
      %v7743 = vpop.f32.mrf.mxu0
      %v7744 = vadd.f32 0.0, %v7743
      %7745 = vmatmul.bf16.gmra.mxu0 %v7637
      %v7746 = vpop.f32.mrf.mxu0
      %v7747 = vadd.f32 0.0, %v7746
      %v7748 = vpop.f32.mrf.mxu0
      %v7749 = vadd.f32 0.0, %v7748
      %7750 = vmatmul.bf16.gmra.mxu0 %v7640
      %v7751 = vpop.f32.mrf.mxu0
      %v7752 = vadd.f32 0.0, %v7751
      %v7753 = vpop.f32.mrf.mxu0
      %v7754 = vadd.f32 0.0, %v7753
      %7755 = vmatmul.bf16.gmra.mxu0 %v7643
      %v7756 = vpop.f32.mrf.mxu0
      %v7757 = vadd.f32 0.0, %v7756
      %v7758 = vpop.f32.mrf.mxu0
      %v7759 = vadd.f32 0.0, %v7758
      %7760 = vmatmul.bf16.gmra.mxu0 %v7646
      %v7761 = vpop.f32.mrf.mxu0
      %v7762 = vadd.f32 0.0, %v7761
      %v7763 = vpop.f32.mrf.mxu0
      %v7764 = vadd.f32 0.0, %v7763
      %7765 = vmatmul.bf16.gmra.mxu0 %v7649
      %v7766 = vpop.f32.mrf.mxu0
      %v7767 = vadd.f32 0.0, %v7766
      %v7768 = vpop.f32.mrf.mxu0
      %v7769 = vadd.f32 0.0, %v7768
      %7770 = vmatmul.bf16.gmra.mxu0 %v7652
      %v7771 = vpop.f32.mrf.mxu0
      %v7772 = vadd.f32 0.0, %v7771
      %v7773 = vpop.f32.mrf.mxu0
      %v7774 = vadd.f32 0.0, %v7773
      %7775 = vmatmul.bf16.gmra.mxu0 %v7655
      %v7776 = vpop.f32.mrf.mxu0
      %v7777 = vadd.f32 0.0, %v7776
      %v7778 = vpop.f32.mrf.mxu0
      %v7779 = vadd.f32 0.0, %v7778
      %7780 = vmatmul.bf16.gmra.mxu0 %v7658
      %v7781 = vpop.f32.mrf.mxu0
      %v7782 = vadd.f32 0.0, %v7781
      %v7783 = vpop.f32.mrf.mxu0
      %v7784 = vadd.f32 0.0, %v7783
      %7785 = vmatmul.bf16.gmra.mxu0 %v7661
      %v7786 = vpop.f32.mrf.mxu0
      %v7787 = vadd.f32 0.0, %v7786
      %v7788 = vpop.f32.mrf.mxu0
      %v7789 = vadd.f32 0.0, %v7788
      %7790 = vmatmul.bf16.gmra.mxu0 %v7664
      %v7791 = vpop.f32.mrf.mxu0
      %v7792 = vadd.f32 0.0, %v7791
      %v7793 = vpop.f32.mrf.mxu0
      %v7794 = vadd.f32 0.0, %v7793
      %7795 = vmatmul.bf16.gmra.mxu0 %v7667
      %v7796 = vpop.f32.mrf.mxu0
      %v7797 = vadd.f32 0.0, %v7796
      %v7798 = vpop.f32.mrf.mxu0
      %v7799 = vadd.f32 0.0, %v7798
      %7800 = vdwg.mxu0
      %v7801 = vadd.f32 %v7523, %v7682
      %v7802 = vadd.f32 %v7524, %v7684
      %v7803 = vadd.f32 %v7525, %v7687
      %v7804 = vadd.f32 %v7526, %v7689
      %v7805 = vadd.f32 %v7527, %v7692
      %v7806 = vadd.f32 %v7528, %v7694
      %v7807 = vadd.f32 %v7529, %v7697
      %v7808 = vadd.f32 %v7530, %v7699
      %v7809 = vadd.f32 %v7531, %v7702
      %v7810 = vadd.f32 %v7532, %v7704
      %v7811 = vadd.f32 %v7533, %v7707
      %v7812 = vadd.f32 %v7534, %v7709
      %v7813 = vadd.f32 %v7535, %v7712
      %v7814 = vadd.f32 %v7536, %v7714
      %v7815 = vadd.f32 %v7537, %v7717
      %v7816 = vadd.f32 %v7538, %v7719
      %v7817 = vadd.f32 %v7539, %v7722
      %v7818 = vadd.f32 %v7540, %v7724
      %v7819 = vadd.f32 %v7541, %v7727
      %v7820 = vadd.f32 %v7542, %v7729
      %v7821 = vadd.f32 %v7543, %v7732
      %v7822 = vadd.f32 %v7544, %v7734
      %v7823 = vadd.f32 %v7545, %v7737
      %v7824 = vadd.f32 %v7546, %v7739
      %v7825 = vadd.f32 %v7547, %v7742
      %v7826 = vadd.f32 %v7548, %v7744
      %v7827 = vadd.f32 %v7549, %v7747
      %v7828 = vadd.f32 %v7550, %v7749
      %v7829 = vadd.f32 %v7551, %v7752
      %v7830 = vadd.f32 %v7552, %v7754
      %v7831 = vadd.f32 %v7553, %v7757
      %v7832 = vadd.f32 %v7554, %v7759
      %v7833 = vadd.f32 %v7555, %v7762
      %v7834 = vadd.f32 %v7556, %v7764
      %v7835 = vadd.f32 %v7557, %v7767
      %v7836 = vadd.f32 %v7558, %v7769
      %v7837 = vadd.f32 %v7559, %v7772
      %v7838 = vadd.f32 %v7560, %v7774
      %v7839 = vadd.f32 %v7561, %v7777
      %v7840 = vadd.f32 %v7562, %v7779
      %v7841 = vadd.f32 %v7563, %v7782
      %v7842 = vadd.f32 %v7564, %v7784
      %v7843 = vadd.f32 %v7565, %v7787
      %v7844 = vadd.f32 %v7566, %v7789
      %v7845 = vadd.f32 %v7567, %v7792
      %v7846 = vadd.f32 %v7568, %v7794
      %v7847 = vadd.f32 %v7569, %v7797
      %v7848 = vadd.f32 %v7570, %v7799
      %v7849 = vld [vmem:[#allocation2 + $0x10] sm:$0xf]
      %v7850 = vld [vmem:[#allocation2 + $0x14] sm:$0xf]
      %v7851 = vld [vmem:[#allocation2 + $0x18] sm:$0xf]
      %v7852 = vld [vmem:[#allocation2 + $0x1c] sm:$0xf]
      %v7853 = vld [vmem:[#allocation2 + $0x20] sm:$0xf]
      %v7854 = vld [vmem:[#allocation2 + $0x24] sm:$0xf]
      %v7855 = vld [vmem:[#allocation2 + $0x28] sm:$0xf]
      %v7856 = vld [vmem:[#allocation2 + $0x2c] sm:$0xf]
      %v7857 = vld [vmem:[#allocation2 + $0x30] sm:$0xf]
      %v7858 = vld [vmem:[#allocation2 + $0x34] sm:$0xf]
      %v7859 = vld [vmem:[#allocation2 + $0x38] sm:$0xf]
      %v7860 = vld [vmem:[#allocation2 + $0x3c] sm:$0xf]
      %v7861 = vld [vmem:[#allocation2 + $0x40] sm:$0xf]
      %v7862 = vld [vmem:[#allocation2 + $0x44] sm:$0xf]
      %v7863 = vld [vmem:[#allocation2 + $0x48] sm:$0xf]
      %v7864 = vld [vmem:[#allocation2 + $0x4c] sm:$0xf]
      %v7865 = vld [vmem:[#allocation2 + $0x50] sm:$0xf]
      %v7866 = vld [vmem:[#allocation2 + $0x54] sm:$0xf]
      %v7867 = vld [vmem:[#allocation2 + $0x58] sm:$0xf]
      %v7868 = vld [vmem:[#allocation2 + $0x5c] sm:$0xf]
      %v7869 = vld [vmem:[#allocation2 + $0x60] sm:$0xf]
      %v7870 = vld [vmem:[#allocation2 + $0x64] sm:$0xf]
      %v7871 = vld [vmem:[#allocation2 + $0x68] sm:$0xf]
      %v7872 = vld [vmem:[#allocation2 + $0x6c] sm:$0xf]
      %v7873 = vld [vmem:[#allocation2 + $0x70] sm:$0xf]
      %v7874 = vld [vmem:[#allocation2 + $0x74] sm:$0xf]
      %v7875 = vld [vmem:[#allocation2 + $0x78] sm:$0xf]
      %v7876 = vld [vmem:[#allocation2 + $0x7c] sm:$0xf]
      %v7877 = vld [vmem:[#allocation2 + $0x80] sm:$0xf]
      %v7878 = vld [vmem:[#allocation2 + $0x84] sm:$0xf]
      %v7879 = vld [vmem:[#allocation2 + $0x88] sm:$0xf]
      %v7880 = vld [vmem:[#allocation2 + $0x8c] sm:$0xf]
      %v7881 = vld [vmem:[#allocation2 + $0x90] sm:$0xf]
      %v7882 = vld [vmem:[#allocation2 + $0x94] sm:$0xf]
      %v7883 = vld [vmem:[#allocation2 + $0x98] sm:$0xf]
      %v7884 = vld [vmem:[#allocation2 + $0x9c] sm:$0xf]
      %v7885 = vld [vmem:[#allocation2 + $0xa0] sm:$0xf]
      %v7886 = vld [vmem:[#allocation2 + $0xa4] sm:$0xf]
      %v7887 = vld [vmem:[#allocation2 + $0xa8] sm:$0xf]
      %v7888 = vld [vmem:[#allocation2 + $0xac] sm:$0xf]
      %v7889 = vld [vmem:[#allocation2 + $0xb0] sm:$0xf]
      %v7890 = vld [vmem:[#allocation2 + $0xb4] sm:$0xf]
      %v7891 = vld [vmem:[#allocation2 + $0xb8] sm:$0xf]
      %v7892 = vld [vmem:[#allocation2 + $0xbc] sm:$0xf]
      %v7893 = vld [vmem:[#allocation2 + $0xc0] sm:$0xf]
      %v7894 = vld [vmem:[#allocation2 + $0xc4] sm:$0xf]
      %v7895 = vld [vmem:[#allocation2 + $0xc8] sm:$0xf]
      %v7896 = vld [vmem:[#allocation2 + $0xcc] sm:$0xf]
      %v7897 = vld [vmem:[#allocation2 + $0xd0] sm:$0x1]
      %s7898 = scalar_lea.vmem %s2, 20
      %v7899 = vld [vmem:[%s7898] sm:$0xf]
      %v7949 = vunpack.c.l.b16 %v7849
      %v7950 = vunpack.c.l.b16 %v7850
      %v7951 = vunpack.c.l.b16 %v7851
      %v7952 = vunpack.c.l.b16 %v7852
      %v7953 = vunpack.c.l.b16 %v7853
      %v7954 = vunpack.c.l.b16 %v7854
      %v7955 = vunpack.c.l.b16 %v7855
      %v7956 = vunpack.c.l.b16 %v7856
      %v7957 = vunpack.c.l.b16 %v7857
      %v7958 = vunpack.c.l.b16 %v7858
      %v7959 = vunpack.c.l.b16 %v7859
      %v7960 = vunpack.c.l.b16 %v7860
      %v7961 = vunpack.c.l.b16 %v7861
      %v7962 = vunpack.c.l.b16 %v7862
      %v7963 = vunpack.c.l.b16 %v7863
      %v7964 = vunpack.c.l.b16 %v7864
      %v7965 = vunpack.c.l.b16 %v7865
      %v7966 = vunpack.c.l.b16 %v7866
      %v7967 = vunpack.c.l.b16 %v7867
      %v7968 = vunpack.c.l.b16 %v7868
      %v7969 = vunpack.c.l.b16 %v7869
      %v7970 = vunpack.c.l.b16 %v7870
      %v7971 = vunpack.c.l.b16 %v7871
      %v7972 = vunpack.c.l.b16 %v7872
      %v7973 = vunpack.c.l.b16 %v7873
      %v7974 = vunpack.c.l.b16 %v7874
      %v7975 = vunpack.c.l.b16 %v7875
      %v7976 = vunpack.c.l.b16 %v7876
      %v7977 = vunpack.c.l.b16 %v7877
      %v7978 = vunpack.c.l.b16 %v7878
      %v7979 = vunpack.c.l.b16 %v7879
      %v7980 = vunpack.c.l.b16 %v7880
      %v7981 = vunpack.c.l.b16 %v7881
      %v7982 = vunpack.c.l.b16 %v7882
      %v7983 = vunpack.c.l.b16 %v7883
      %v7984 = vunpack.c.l.b16 %v7884
      %v7985 = vunpack.c.l.b16 %v7885
      %v7986 = vunpack.c.l.b16 %v7886
      %v7987 = vunpack.c.l.b16 %v7887
      %v7988 = vunpack.c.l.b16 %v7888
      %v7989 = vunpack.c.l.b16 %v7889
      %v7990 = vunpack.c.l.b16 %v7890
      %v7991 = vunpack.c.l.b16 %v7891
      %v7992 = vunpack.c.l.b16 %v7892
      %v7993 = vunpack.c.l.b16 %v7893
      %v7994 = vunpack.c.l.b16 %v7894
      %v7995 = vunpack.c.l.b16 %v7895
      %v7996 = vunpack.c.l.b16 %v7896
      %v7997 = vunpack.c.l.b16 %v7897
      %v7998 = vpack.c.b16 %v7950, %v7949
      %v7999 = vpack.c.b16 %v7952, %v7951
      %v8000 = vpack.c.b16 %v7954, %v7953
      %v8001 = vpack.c.b16 %v7956, %v7955
      %v8002 = vpack.c.b16 %v7958, %v7957
      %v8003 = vpack.c.b16 %v7960, %v7959
      %v8004 = vpack.c.b16 %v7962, %v7961
      %v8005 = vpack.c.b16 %v7964, %v7963
      %v8006 = vpack.c.b16 %v7966, %v7965
      %v8007 = vpack.c.b16 %v7968, %v7967
      %v8008 = vpack.c.b16 %v7970, %v7969
      %v8009 = vpack.c.b16 %v7972, %v7971
      %v8010 = vpack.c.b16 %v7974, %v7973
      %v8011 = vpack.c.b16 %v7976, %v7975
      %v8012 = vpack.c.b16 %v7978, %v7977
      %v8013 = vpack.c.b16 %v7980, %v7979
      %v8014 = vpack.c.b16 %v7982, %v7981
      %v8015 = vpack.c.b16 %v7984, %v7983
      %v8016 = vpack.c.b16 %v7986, %v7985
      %v8017 = vpack.c.b16 %v7988, %v7987
      %v8018 = vpack.c.b16 %v7990, %v7989
      %v8019 = vpack.c.b16 %v7992, %v7991
      %v8020 = vpack.c.b16 %v7994, %v7993
      %v8021 = vpack.c.b16 %v7996, %v7995
      %v8022 = vpack.c.b16 %v7997, %v7997
      %v8024 = vshrl.u32 %v7998, 16
      %v8026 = vshll.u32 %v7998, 16
      %v8028 = vrot.slane %v8026, 1
      %v8029 = vor.u32 %v8024, %v8028
      %v8031 = vshll.u32 %v7999, 16
      %v8033 = vrot.slane %v8031, 1
      %v8034 = vsel %vm1234, %v8029, %v8033
      %v8035 = vshrl.u32 %v7999, 16
      %v8037 = vor.u32 %v8035, %v8033
      %v8039 = vshll.u32 %v8000, 16
      %v8041 = vrot.slane %v8039, 1
      %v8042 = vsel %vm1234, %v8037, %v8041
      %v8043 = vshrl.u32 %v8000, 16
      %v8045 = vor.u32 %v8043, %v8041
      %v8047 = vshll.u32 %v8001, 16
      %v8049 = vrot.slane %v8047, 1
      %v8050 = vsel %vm1234, %v8045, %v8049
      %v8051 = vshrl.u32 %v8001, 16
      %v8053 = vor.u32 %v8051, %v8049
      %v8055 = vshll.u32 %v8002, 16
      %v8057 = vrot.slane %v8055, 1
      %v8058 = vsel %vm1234, %v8053, %v8057
      %v8059 = vshrl.u32 %v8002, 16
      %v8061 = vor.u32 %v8059, %v8057
      %v8063 = vshll.u32 %v8003, 16
      %v8065 = vrot.slane %v8063, 1
      %v8066 = vsel %vm1234, %v8061, %v8065
      %v8067 = vshrl.u32 %v8003, 16
      %v8069 = vor.u32 %v8067, %v8065
      %v8071 = vshll.u32 %v8004, 16
      %v8073 = vrot.slane %v8071, 1
      %v8074 = vsel %vm1234, %v8069, %v8073
      %v8075 = vshrl.u32 %v8004, 16
      %v8077 = vor.u32 %v8075, %v8073
      %v8079 = vshll.u32 %v8005, 16
      %v8081 = vrot.slane %v8079, 1
      %v8082 = vsel %vm1234, %v8077, %v8081
      %v8083 = vshrl.u32 %v8005, 16
      %v8085 = vor.u32 %v8083, %v8081
      %v8087 = vshll.u32 %v8006, 16
      %v8089 = vrot.slane %v8087, 1
      %v8090 = vsel %vm1234, %v8085, %v8089
      %v8091 = vshrl.u32 %v8006, 16
      %v8093 = vor.u32 %v8091, %v8089
      %v8095 = vshll.u32 %v8007, 16
      %v8097 = vrot.slane %v8095, 1
      %v8098 = vsel %vm1234, %v8093, %v8097
      %v8099 = vshrl.u32 %v8007, 16
      %v8101 = vor.u32 %v8099, %v8097
      %v8103 = vshll.u32 %v8008, 16
      %v8105 = vrot.slane %v8103, 1
      %v8106 = vsel %vm1234, %v8101, %v8105
      %v8107 = vshrl.u32 %v8008, 16
      %v8109 = vor.u32 %v8107, %v8105
      %v8111 = vshll.u32 %v8009, 16
      %v8113 = vrot.slane %v8111, 1
      %v8114 = vsel %vm1234, %v8109, %v8113
      %v8115 = vshrl.u32 %v8009, 16
      %v8117 = vor.u32 %v8115, %v8113
      %v8119 = vshll.u32 %v8010, 16
      %v8121 = vrot.slane %v8119, 1
      %v8122 = vsel %vm1234, %v8117, %v8121
      %v8123 = vshrl.u32 %v8010, 16
      %v8125 = vor.u32 %v8123, %v8121
      %v8127 = vshll.u32 %v8011, 16
      %v8129 = vrot.slane %v8127, 1
      %v8130 = vsel %vm1234, %v8125, %v8129
      %v8131 = vshrl.u32 %v8011, 16
      %v8133 = vor.u32 %v8131, %v8129
      %v8135 = vshll.u32 %v8012, 16
      %v8137 = vrot.slane %v8135, 1
      %v8138 = vsel %vm1234, %v8133, %v8137
      %v8139 = vshrl.u32 %v8012, 16
      %v8141 = vor.u32 %v8139, %v8137
      %v8143 = vshll.u32 %v8013, 16
      %v8145 = vrot.slane %v8143, 1
      %v8146 = vsel %vm1234, %v8141, %v8145
      %v8147 = vshrl.u32 %v8013, 16
      %v8149 = vor.u32 %v8147, %v8145
      %v8151 = vshll.u32 %v8014, 16
      %v8153 = vrot.slane %v8151, 1
      %v8154 = vsel %vm1234, %v8149, %v8153
      %v8155 = vshrl.u32 %v8014, 16
      %v8157 = vor.u32 %v8155, %v8153
      %v8159 = vshll.u32 %v8015, 16
      %v8161 = vrot.slane %v8159, 1
      %v8162 = vsel %vm1234, %v8157, %v8161
      %v8163 = vshrl.u32 %v8015, 16
      %v8165 = vor.u32 %v8163, %v8161
      %v8167 = vshll.u32 %v8016, 16
      %v8169 = vrot.slane %v8167, 1
      %v8170 = vsel %vm1234, %v8165, %v8169
      %v8171 = vshrl.u32 %v8016, 16
      %v8173 = vor.u32 %v8171, %v8169
      %v8175 = vshll.u32 %v8017, 16
      %v8177 = vrot.slane %v8175, 1
      %v8178 = vsel %vm1234, %v8173, %v8177
      %v8179 = vshrl.u32 %v8017, 16
      %v8181 = vor.u32 %v8179, %v8177
      %v8183 = vshll.u32 %v8018, 16
      %v8185 = vrot.slane %v8183, 1
      %v8186 = vsel %vm1234, %v8181, %v8185
      %v8187 = vshrl.u32 %v8018, 16
      %v8189 = vor.u32 %v8187, %v8185
      %v8191 = vshll.u32 %v8019, 16
      %v8193 = vrot.slane %v8191, 1
      %v8194 = vsel %vm1234, %v8189, %v8193
      %v8195 = vshrl.u32 %v8019, 16
      %v8197 = vor.u32 %v8195, %v8193
      %v8199 = vshll.u32 %v8020, 16
      %v8201 = vrot.slane %v8199, 1
      %v8202 = vsel %vm1234, %v8197, %v8201
      %v8203 = vshrl.u32 %v8020, 16
      %v8205 = vor.u32 %v8203, %v8201
      %v8207 = vshll.u32 %v8021, 16
      %v8209 = vrot.slane %v8207, 1
      %v8210 = vsel %vm1234, %v8205, %v8209
      %v8211 = vshrl.u32 %v8021, 16
      %v8213 = vor.u32 %v8211, %v8209
      %v8215 = vshll.u32 %v8022, 16
      %v8217 = vrot.slane %v8215, 1
      %v8218 = vsel %vm1234, %v8213, %v8217
      %v8220 = vsel %vm398, %v8034, 0
      %v8223 = vsel %vm398, %v8042, 0
      %v8226 = vsel %vm398, %v8050, 0
      %v8229 = vsel %vm398, %v8058, 0
      %v8232 = vsel %vm398, %v8066, 0
      %v8235 = vsel %vm398, %v8074, 0
      %v8238 = vsel %vm398, %v8082, 0
      %v8241 = vsel %vm398, %v8090, 0
      %v8244 = vsel %vm398, %v8098, 0
      %v8247 = vsel %vm398, %v8106, 0
      %v8250 = vsel %vm398, %v8114, 0
      %v8253 = vsel %vm398, %v8122, 0
      %v8256 = vsel %vm398, %v8130, 0
      %v8259 = vsel %vm398, %v8138, 0
      %v8262 = vsel %vm398, %v8146, 0
      %v8265 = vsel %vm398, %v8154, 0
      %v8268 = vsel %vm398, %v8162, 0
      %v8271 = vsel %vm398, %v8170, 0
      %v8274 = vsel %vm398, %v8178, 0
      %v8277 = vsel %vm398, %v8186, 0
      %v8280 = vsel %vm398, %v8194, 0
      %v8283 = vsel %vm398, %v8202, 0
      %v8286 = vsel %vm398, %v8210, 0
      %v8289 = vsel %vm398, %v8218, 0
      %v8292 = vsel %vm471, %v7899, 0
      %8294 = vmatpush.bf16.msra.mxu0 0
      %8295 = vmatpush.bf16.msra.mxu0 0
      %8296 = vmatpush.bf16.msra.mxu0 0
      %8297 = vmatpush.bf16.msra.mxu0 0
      %8298 = vmatpush.bf16.msra.mxu0 0
      %8299 = vmatpush.bf16.msra.mxu0 0
      %8300 = vmatpush.bf16.msra.mxu0 0
      %8301 = vmatpush.bf16.msra.mxu0 %v8292
      %8302 = vmatmul.bf16.gmra.mxu0 %v8220
      %v8303 = vpop.f32.mrf.mxu0
      %v8304 = vadd.f32 0.0, %v8303
      %v8305 = vpop.f32.mrf.mxu0
      %v8306 = vadd.f32 0.0, %v8305
      %8307 = vmatmul.bf16.gmra.mxu0 %v8223
      %v8308 = vpop.f32.mrf.mxu0
      %v8309 = vadd.f32 0.0, %v8308
      %v8310 = vpop.f32.mrf.mxu0
      %v8311 = vadd.f32 0.0, %v8310
      %8312 = vmatmul.bf16.gmra.mxu0 %v8226
      %v8313 = vpop.f32.mrf.mxu0
      %v8314 = vadd.f32 0.0, %v8313
      %v8315 = vpop.f32.mrf.mxu0
      %v8316 = vadd.f32 0.0, %v8315
      %8317 = vmatmul.bf16.gmra.mxu0 %v8229
      %v8318 = vpop.f32.mrf.mxu0
      %v8319 = vadd.f32 0.0, %v8318
      %v8320 = vpop.f32.mrf.mxu0
      %v8321 = vadd.f32 0.0, %v8320
      %8322 = vmatmul.bf16.gmra.mxu0 %v8232
      %v8323 = vpop.f32.mrf.mxu0
      %v8324 = vadd.f32 0.0, %v8323
      %v8325 = vpop.f32.mrf.mxu0
      %v8326 = vadd.f32 0.0, %v8325
      %8327 = vmatmul.bf16.gmra.mxu0 %v8235
      %v8328 = vpop.f32.mrf.mxu0
      %v8329 = vadd.f32 0.0, %v8328
      %v8330 = vpop.f32.mrf.mxu0
      %v8331 = vadd.f32 0.0, %v8330
      %8332 = vmatmul.bf16.gmra.mxu0 %v8238
      %v8333 = vpop.f32.mrf.mxu0
      %v8334 = vadd.f32 0.0, %v8333
      %v8335 = vpop.f32.mrf.mxu0
      %v8336 = vadd.f32 0.0, %v8335
      %8337 = vmatmul.bf16.gmra.mxu0 %v8241
      %v8338 = vpop.f32.mrf.mxu0
      %v8339 = vadd.f32 0.0, %v8338
      %v8340 = vpop.f32.mrf.mxu0
      %v8341 = vadd.f32 0.0, %v8340
      %8342 = vmatmul.bf16.gmra.mxu0 %v8244
      %v8343 = vpop.f32.mrf.mxu0
      %v8344 = vadd.f32 0.0, %v8343
      %v8345 = vpop.f32.mrf.mxu0
      %v8346 = vadd.f32 0.0, %v8345
      %8347 = vmatmul.bf16.gmra.mxu0 %v8247
      %v8348 = vpop.f32.mrf.mxu0
      %v8349 = vadd.f32 0.0, %v8348
      %v8350 = vpop.f32.mrf.mxu0
      %v8351 = vadd.f32 0.0, %v8350
      %8352 = vmatmul.bf16.gmra.mxu0 %v8250
      %v8353 = vpop.f32.mrf.mxu0
      %v8354 = vadd.f32 0.0, %v8353
      %v8355 = vpop.f32.mrf.mxu0
      %v8356 = vadd.f32 0.0, %v8355
      %8357 = vmatmul.bf16.gmra.mxu0 %v8253
      %v8358 = vpop.f32.mrf.mxu0
      %v8359 = vadd.f32 0.0, %v8358
      %v8360 = vpop.f32.mrf.mxu0
      %v8361 = vadd.f32 0.0, %v8360
      %8362 = vmatmul.bf16.gmra.mxu0 %v8256
      %v8363 = vpop.f32.mrf.mxu0
      %v8364 = vadd.f32 0.0, %v8363
      %v8365 = vpop.f32.mrf.mxu0
      %v8366 = vadd.f32 0.0, %v8365
      %8367 = vmatmul.bf16.gmra.mxu0 %v8259
      %v8368 = vpop.f32.mrf.mxu0
      %v8369 = vadd.f32 0.0, %v8368
      %v8370 = vpop.f32.mrf.mxu0
      %v8371 = vadd.f32 0.0, %v8370
      %8372 = vmatmul.bf16.gmra.mxu0 %v8262
      %v8373 = vpop.f32.mrf.mxu0
      %v8374 = vadd.f32 0.0, %v8373
      %v8375 = vpop.f32.mrf.mxu0
      %v8376 = vadd.f32 0.0, %v8375
      %8377 = vmatmul.bf16.gmra.mxu0 %v8265
      %v8378 = vpop.f32.mrf.mxu0
      %v8379 = vadd.f32 0.0, %v8378
      %v8380 = vpop.f32.mrf.mxu0
      %v8381 = vadd.f32 0.0, %v8380
      %8382 = vmatmul.bf16.gmra.mxu0 %v8268
      %v8383 = vpop.f32.mrf.mxu0
      %v8384 = vadd.f32 0.0, %v8383
      %v8385 = vpop.f32.mrf.mxu0
      %v8386 = vadd.f32 0.0, %v8385
      %8387 = vmatmul.bf16.gmra.mxu0 %v8271
      %v8388 = vpop.f32.mrf.mxu0
      %v8389 = vadd.f32 0.0, %v8388
      %v8390 = vpop.f32.mrf.mxu0
      %v8391 = vadd.f32 0.0, %v8390
      %8392 = vmatmul.bf16.gmra.mxu0 %v8274
      %v8393 = vpop.f32.mrf.mxu0
      %v8394 = vadd.f32 0.0, %v8393
      %v8395 = vpop.f32.mrf.mxu0
      %v8396 = vadd.f32 0.0, %v8395
      %8397 = vmatmul.bf16.gmra.mxu0 %v8277
      %v8398 = vpop.f32.mrf.mxu0
      %v8399 = vadd.f32 0.0, %v8398
      %v8400 = vpop.f32.mrf.mxu0
      %v8401 = vadd.f32 0.0, %v8400
      %8402 = vmatmul.bf16.gmra.mxu0 %v8280
      %v8403 = vpop.f32.mrf.mxu0
      %v8404 = vadd.f32 0.0, %v8403
      %v8405 = vpop.f32.mrf.mxu0
      %v8406 = vadd.f32 0.0, %v8405
      %8407 = vmatmul.bf16.gmra.mxu0 %v8283
      %v8408 = vpop.f32.mrf.mxu0
      %v8409 = vadd.f32 0.0, %v8408
      %v8410 = vpop.f32.mrf.mxu0
      %v8411 = vadd.f32 0.0, %v8410
      %8412 = vmatmul.bf16.gmra.mxu0 %v8286
      %v8413 = vpop.f32.mrf.mxu0
      %v8414 = vadd.f32 0.0, %v8413
      %v8415 = vpop.f32.mrf.mxu0
      %v8416 = vadd.f32 0.0, %v8415
      %8417 = vmatmul.bf16.gmra.mxu0 %v8289
      %v8418 = vpop.f32.mrf.mxu0
      %v8419 = vadd.f32 0.0, %v8418
      %v8420 = vpop.f32.mrf.mxu0
      %v8421 = vadd.f32 0.0, %v8420
      %8422 = vdwg.mxu0
      %v8423 = vadd.f32 %v7801, %v8304
      %v8424 = vadd.f32 %v7802, %v8306
      %v8425 = vadd.f32 %v7803, %v8309
      %v8426 = vadd.f32 %v7804, %v8311
      %v8427 = vadd.f32 %v7805, %v8314
      %v8428 = vadd.f32 %v7806, %v8316
      %v8429 = vadd.f32 %v7807, %v8319
      %v8430 = vadd.f32 %v7808, %v8321
      %v8431 = vadd.f32 %v7809, %v8324
      %v8432 = vadd.f32 %v7810, %v8326
      %v8433 = vadd.f32 %v7811, %v8329
      %v8434 = vadd.f32 %v7812, %v8331
      %v8435 = vadd.f32 %v7813, %v8334
      %v8436 = vadd.f32 %v7814, %v8336
      %v8437 = vadd.f32 %v7815, %v8339
      %v8438 = vadd.f32 %v7816, %v8341
      %v8439 = vadd.f32 %v7817, %v8344
      %v8440 = vadd.f32 %v7818, %v8346
      %v8441 = vadd.f32 %v7819, %v8349
      %v8442 = vadd.f32 %v7820, %v8351
      %v8443 = vadd.f32 %v7821, %v8354
      %v8444 = vadd.f32 %v7822, %v8356
      %v8445 = vadd.f32 %v7823, %v8359
      %v8446 = vadd.f32 %v7824, %v8361
      %v8447 = vadd.f32 %v7825, %v8364
      %v8448 = vadd.f32 %v7826, %v8366
      %v8449 = vadd.f32 %v7827, %v8369
      %v8450 = vadd.f32 %v7828, %v8371
      %v8451 = vadd.f32 %v7829, %v8374
      %v8452 = vadd.f32 %v7830, %v8376
      %v8453 = vadd.f32 %v7831, %v8379
      %v8454 = vadd.f32 %v7832, %v8381
      %v8455 = vadd.f32 %v7833, %v8384
      %v8456 = vadd.f32 %v7834, %v8386
      %v8457 = vadd.f32 %v7835, %v8389
      %v8458 = vadd.f32 %v7836, %v8391
      %v8459 = vadd.f32 %v7837, %v8394
      %v8460 = vadd.f32 %v7838, %v8396
      %v8461 = vadd.f32 %v7839, %v8399
      %v8462 = vadd.f32 %v7840, %v8401
      %v8463 = vadd.f32 %v7841, %v8404
      %v8464 = vadd.f32 %v7842, %v8406
      %v8465 = vadd.f32 %v7843, %v8409
      %v8466 = vadd.f32 %v7844, %v8411
      %v8467 = vadd.f32 %v7845, %v8414
      %v8468 = vadd.f32 %v7846, %v8416
      %v8469 = vadd.f32 %v7847, %v8419
      %v8470 = vadd.f32 %v7848, %v8421
      %v8471 = vld [vmem:[#allocation2 + $0x18] sm:$0x8]
      %v8472 = vld [vmem:[#allocation2 + $0x1c] sm:$0xf]
      %v8473 = vld [vmem:[#allocation2 + $0x20] sm:$0xf]
      %v8474 = vld [vmem:[#allocation2 + $0x24] sm:$0xf]
      %v8475 = vld [vmem:[#allocation2 + $0x28] sm:$0xf]
      %v8476 = vld [vmem:[#allocation2 + $0x2c] sm:$0xf]
      %v8477 = vld [vmem:[#allocation2 + $0x30] sm:$0xf]
      %v8478 = vld [vmem:[#allocation2 + $0x34] sm:$0xf]
      %v8479 = vld [vmem:[#allocation2 + $0x38] sm:$0xf]
      %v8480 = vld [vmem:[#allocation2 + $0x3c] sm:$0xf]
      %v8481 = vld [vmem:[#allocation2 + $0x40] sm:$0xf]
      %v8482 = vld [vmem:[#allocation2 + $0x44] sm:$0xf]
      %v8483 = vld [vmem:[#allocation2 + $0x48] sm:$0xf]
      %v8484 = vld [vmem:[#allocation2 + $0x4c] sm:$0xf]
      %v8485 = vld [vmem:[#allocation2 + $0x50] sm:$0xf]
      %v8486 = vld [vmem:[#allocation2 + $0x54] sm:$0xf]
      %v8487 = vld [vmem:[#allocation2 + $0x58] sm:$0xf]
      %v8488 = vld [vmem:[#allocation2 + $0x5c] sm:$0xf]
      %v8489 = vld [vmem:[#allocation2 + $0x60] sm:$0xf]
      %v8490 = vld [vmem:[#allocation2 + $0x64] sm:$0xf]
      %v8491 = vld [vmem:[#allocation2 + $0x68] sm:$0xf]
      %v8492 = vld [vmem:[#allocation2 + $0x6c] sm:$0xf]
      %v8493 = vld [vmem:[#allocation2 + $0x70] sm:$0xf]
      %v8494 = vld [vmem:[#allocation2 + $0x74] sm:$0xf]
      %v8495 = vld [vmem:[#allocation2 + $0x78] sm:$0xf]
      %v8496 = vld [vmem:[#allocation2 + $0x7c] sm:$0xf]
      %v8497 = vld [vmem:[#allocation2 + $0x80] sm:$0xf]
      %v8498 = vld [vmem:[#allocation2 + $0x84] sm:$0xf]
      %v8499 = vld [vmem:[#allocation2 + $0x88] sm:$0xf]
      %v8500 = vld [vmem:[#allocation2 + $0x8c] sm:$0xf]
      %v8501 = vld [vmem:[#allocation2 + $0x90] sm:$0xf]
      %v8502 = vld [vmem:[#allocation2 + $0x94] sm:$0xf]
      %v8503 = vld [vmem:[#allocation2 + $0x98] sm:$0xf]
      %v8504 = vld [vmem:[#allocation2 + $0x9c] sm:$0xf]
      %v8505 = vld [vmem:[#allocation2 + $0xa0] sm:$0xf]
      %v8506 = vld [vmem:[#allocation2 + $0xa4] sm:$0xf]
      %v8507 = vld [vmem:[#allocation2 + $0xa8] sm:$0xf]
      %v8508 = vld [vmem:[#allocation2 + $0xac] sm:$0xf]
      %v8509 = vld [vmem:[#allocation2 + $0xb0] sm:$0xf]
      %v8510 = vld [vmem:[#allocation2 + $0xb4] sm:$0xf]
      %v8511 = vld [vmem:[#allocation2 + $0xb8] sm:$0xf]
      %v8512 = vld [vmem:[#allocation2 + $0xbc] sm:$0xf]
      %v8513 = vld [vmem:[#allocation2 + $0xc0] sm:$0xf]
      %v8514 = vld [vmem:[#allocation2 + $0xc4] sm:$0xf]
      %v8515 = vld [vmem:[#allocation2 + $0xc8] sm:$0xf]
      %v8516 = vld [vmem:[#allocation2 + $0xcc] sm:$0xf]
      %v8517 = vld [vmem:[#allocation2 + $0xd0] sm:$0xf]
      %v8518 = vld [vmem:[#allocation2 + $0xd4] sm:$0xf]
      %v8519 = vld [vmem:[#allocation2 + $0xd8] sm:$0xf]
      %s8520 = scalar_lea.vmem %s2, 24
      %v8521 = vld [vmem:[%s8520] sm:$0xf]
      %v8571 = vunpack.c.l.b16 %v8471
      %v8572 = vunpack.c.l.b16 %v8472
      %v8573 = vunpack.c.l.b16 %v8473
      %v8574 = vunpack.c.l.b16 %v8474
      %v8575 = vunpack.c.l.b16 %v8475
      %v8576 = vunpack.c.l.b16 %v8476
      %v8577 = vunpack.c.l.b16 %v8477
      %v8578 = vunpack.c.l.b16 %v8478
      %v8579 = vunpack.c.l.b16 %v8479
      %v8580 = vunpack.c.l.b16 %v8480
      %v8581 = vunpack.c.l.b16 %v8481
      %v8582 = vunpack.c.l.b16 %v8482
      %v8583 = vunpack.c.l.b16 %v8483
      %v8584 = vunpack.c.l.b16 %v8484
      %v8585 = vunpack.c.l.b16 %v8485
      %v8586 = vunpack.c.l.b16 %v8486
      %v8587 = vunpack.c.l.b16 %v8487
      %v8588 = vunpack.c.l.b16 %v8488
      %v8589 = vunpack.c.l.b16 %v8489
      %v8590 = vunpack.c.l.b16 %v8490
      %v8591 = vunpack.c.l.b16 %v8491
      %v8592 = vunpack.c.l.b16 %v8492
      %v8593 = vunpack.c.l.b16 %v8493
      %v8594 = vunpack.c.l.b16 %v8494
      %v8595 = vunpack.c.l.b16 %v8495
      %v8596 = vunpack.c.l.b16 %v8496
      %v8597 = vunpack.c.l.b16 %v8497
      %v8598 = vunpack.c.l.b16 %v8498
      %v8599 = vunpack.c.l.b16 %v8499
      %v8600 = vunpack.c.l.b16 %v8500
      %v8601 = vunpack.c.l.b16 %v8501
      %v8602 = vunpack.c.l.b16 %v8502
      %v8603 = vunpack.c.l.b16 %v8503
      %v8604 = vunpack.c.l.b16 %v8504
      %v8605 = vunpack.c.l.b16 %v8505
      %v8606 = vunpack.c.l.b16 %v8506
      %v8607 = vunpack.c.l.b16 %v8507
      %v8608 = vunpack.c.l.b16 %v8508
      %v8609 = vunpack.c.l.b16 %v8509
      %v8610 = vunpack.c.l.b16 %v8510
      %v8611 = vunpack.c.l.b16 %v8511
      %v8612 = vunpack.c.l.b16 %v8512
      %v8613 = vunpack.c.l.b16 %v8513
      %v8614 = vunpack.c.l.b16 %v8514
      %v8615 = vunpack.c.l.b16 %v8515
      %v8616 = vunpack.c.l.b16 %v8516
      %v8617 = vunpack.c.l.b16 %v8517
      %v8618 = vunpack.c.l.b16 %v8518
      %v8619 = vunpack.c.l.b16 %v8519
      %v8620 = vpack.c.b16 %v8572, %v8571
      %v8621 = vpack.c.b16 %v8574, %v8573
      %v8622 = vpack.c.b16 %v8576, %v8575
      %v8623 = vpack.c.b16 %v8578, %v8577
      %v8624 = vpack.c.b16 %v8580, %v8579
      %v8625 = vpack.c.b16 %v8582, %v8581
      %v8626 = vpack.c.b16 %v8584, %v8583
      %v8627 = vpack.c.b16 %v8586, %v8585
      %v8628 = vpack.c.b16 %v8588, %v8587
      %v8629 = vpack.c.b16 %v8590, %v8589
      %v8630 = vpack.c.b16 %v8592, %v8591
      %v8631 = vpack.c.b16 %v8594, %v8593
      %v8632 = vpack.c.b16 %v8596, %v8595
      %v8633 = vpack.c.b16 %v8598, %v8597
      %v8634 = vpack.c.b16 %v8600, %v8599
      %v8635 = vpack.c.b16 %v8602, %v8601
      %v8636 = vpack.c.b16 %v8604, %v8603
      %v8637 = vpack.c.b16 %v8606, %v8605
      %v8638 = vpack.c.b16 %v8608, %v8607
      %v8639 = vpack.c.b16 %v8610, %v8609
      %v8640 = vpack.c.b16 %v8612, %v8611
      %v8641 = vpack.c.b16 %v8614, %v8613
      %v8642 = vpack.c.b16 %v8616, %v8615
      %v8643 = vpack.c.b16 %v8618, %v8617
      %v8644 = vpack.c.b16 %v8619, %v8619
      %v8646 = vshrl.u32 %v8620, 16
      %v8648 = vrot.slane %v8646, 3
      %v8649 = vshll.u32 %v8620, 16
      %v8651 = vrot.slane %v8649, 4
      %v8652 = vor.u32 %v8648, %v8651
      %v8654 = vshrl.u32 %v8621, 16
      %v8656 = vrot.slane %v8654, 3
      %v8657 = vshll.u32 %v8621, 16
      %v8659 = vrot.slane %v8657, 4
      %v8660 = vor.u32 %v8656, %v8659
      %v8661 = vsel %vm631, %v8652, %v8660
      %v8663 = vshrl.u32 %v8622, 16
      %v8665 = vrot.slane %v8663, 3
      %v8666 = vshll.u32 %v8622, 16
      %v8668 = vrot.slane %v8666, 4
      %v8669 = vor.u32 %v8665, %v8668
      %v8670 = vsel %vm631, %v8660, %v8669
      %v8672 = vshrl.u32 %v8623, 16
      %v8674 = vrot.slane %v8672, 3
      %v8675 = vshll.u32 %v8623, 16
      %v8677 = vrot.slane %v8675, 4
      %v8678 = vor.u32 %v8674, %v8677
      %v8679 = vsel %vm631, %v8669, %v8678
      %v8681 = vshrl.u32 %v8624, 16
      %v8683 = vrot.slane %v8681, 3
      %v8684 = vshll.u32 %v8624, 16
      %v8686 = vrot.slane %v8684, 4
      %v8687 = vor.u32 %v8683, %v8686
      %v8688 = vsel %vm631, %v8678, %v8687
      %v8690 = vshrl.u32 %v8625, 16
      %v8692 = vrot.slane %v8690, 3
      %v8693 = vshll.u32 %v8625, 16
      %v8695 = vrot.slane %v8693, 4
      %v8696 = vor.u32 %v8692, %v8695
      %v8697 = vsel %vm631, %v8687, %v8696
      %v8699 = vshrl.u32 %v8626, 16
      %v8701 = vrot.slane %v8699, 3
      %v8702 = vshll.u32 %v8626, 16
      %v8704 = vrot.slane %v8702, 4
      %v8705 = vor.u32 %v8701, %v8704
      %v8706 = vsel %vm631, %v8696, %v8705
      %v8708 = vshrl.u32 %v8627, 16
      %v8710 = vrot.slane %v8708, 3
      %v8711 = vshll.u32 %v8627, 16
      %v8713 = vrot.slane %v8711, 4
      %v8714 = vor.u32 %v8710, %v8713
      %v8715 = vsel %vm631, %v8705, %v8714
      %v8717 = vshrl.u32 %v8628, 16
      %v8719 = vrot.slane %v8717, 3
      %v8720 = vshll.u32 %v8628, 16
      %v8722 = vrot.slane %v8720, 4
      %v8723 = vor.u32 %v8719, %v8722
      %v8724 = vsel %vm631, %v8714, %v8723
      %v8726 = vshrl.u32 %v8629, 16
      %v8728 = vrot.slane %v8726, 3
      %v8729 = vshll.u32 %v8629, 16
      %v8731 = vrot.slane %v8729, 4
      %v8732 = vor.u32 %v8728, %v8731
      %v8733 = vsel %vm631, %v8723, %v8732
      %v8735 = vshrl.u32 %v8630, 16
      %v8737 = vrot.slane %v8735, 3
      %v8738 = vshll.u32 %v8630, 16
      %v8740 = vrot.slane %v8738, 4
      %v8741 = vor.u32 %v8737, %v8740
      %v8742 = vsel %vm631, %v8732, %v8741
      %v8744 = vshrl.u32 %v8631, 16
      %v8746 = vrot.slane %v8744, 3
      %v8747 = vshll.u32 %v8631, 16
      %v8749 = vrot.slane %v8747, 4
      %v8750 = vor.u32 %v8746, %v8749
      %v8751 = vsel %vm631, %v8741, %v8750
      %v8753 = vshrl.u32 %v8632, 16
      %v8755 = vrot.slane %v8753, 3
      %v8756 = vshll.u32 %v8632, 16
      %v8758 = vrot.slane %v8756, 4
      %v8759 = vor.u32 %v8755, %v8758
      %v8760 = vsel %vm631, %v8750, %v8759
      %v8762 = vshrl.u32 %v8633, 16
      %v8764 = vrot.slane %v8762, 3
      %v8765 = vshll.u32 %v8633, 16
      %v8767 = vrot.slane %v8765, 4
      %v8768 = vor.u32 %v8764, %v8767
      %v8769 = vsel %vm631, %v8759, %v8768
      %v8771 = vshrl.u32 %v8634, 16
      %v8773 = vrot.slane %v8771, 3
      %v8774 = vshll.u32 %v8634, 16
      %v8776 = vrot.slane %v8774, 4
      %v8777 = vor.u32 %v8773, %v8776
      %v8778 = vsel %vm631, %v8768, %v8777
      %v8780 = vshrl.u32 %v8635, 16
      %v8782 = vrot.slane %v8780, 3
      %v8783 = vshll.u32 %v8635, 16
      %v8785 = vrot.slane %v8783, 4
      %v8786 = vor.u32 %v8782, %v8785
      %v8787 = vsel %vm631, %v8777, %v8786
      %v8789 = vshrl.u32 %v8636, 16
      %v8791 = vrot.slane %v8789, 3
      %v8792 = vshll.u32 %v8636, 16
      %v8794 = vrot.slane %v8792, 4
      %v8795 = vor.u32 %v8791, %v8794
      %v8796 = vsel %vm631, %v8786, %v8795
      %v8798 = vshrl.u32 %v8637, 16
      %v8800 = vrot.slane %v8798, 3
      %v8801 = vshll.u32 %v8637, 16
      %v8803 = vrot.slane %v8801, 4
      %v8804 = vor.u32 %v8800, %v8803
      %v8805 = vsel %vm631, %v8795, %v8804
      %v8807 = vshrl.u32 %v8638, 16
      %v8809 = vrot.slane %v8807, 3
      %v8810 = vshll.u32 %v8638, 16
      %v8812 = vrot.slane %v8810, 4
      %v8813 = vor.u32 %v8809, %v8812
      %v8814 = vsel %vm631, %v8804, %v8813
      %v8816 = vshrl.u32 %v8639, 16
      %v8818 = vrot.slane %v8816, 3
      %v8819 = vshll.u32 %v8639, 16
      %v8821 = vrot.slane %v8819, 4
      %v8822 = vor.u32 %v8818, %v8821
      %v8823 = vsel %vm631, %v8813, %v8822
      %v8825 = vshrl.u32 %v8640, 16
      %v8827 = vrot.slane %v8825, 3
      %v8828 = vshll.u32 %v8640, 16
      %v8830 = vrot.slane %v8828, 4
      %v8831 = vor.u32 %v8827, %v8830
      %v8832 = vsel %vm631, %v8822, %v8831
      %v8834 = vshrl.u32 %v8641, 16
      %v8836 = vrot.slane %v8834, 3
      %v8837 = vshll.u32 %v8641, 16
      %v8839 = vrot.slane %v8837, 4
      %v8840 = vor.u32 %v8836, %v8839
      %v8841 = vsel %vm631, %v8831, %v8840
      %v8843 = vshrl.u32 %v8642, 16
      %v8845 = vrot.slane %v8843, 3
      %v8846 = vshll.u32 %v8642, 16
      %v8848 = vrot.slane %v8846, 4
      %v8849 = vor.u32 %v8845, %v8848
      %v8850 = vsel %vm631, %v8840, %v8849
      %v8852 = vshrl.u32 %v8643, 16
      %v8854 = vrot.slane %v8852, 3
      %v8855 = vshll.u32 %v8643, 16
      %v8857 = vrot.slane %v8855, 4
      %v8858 = vor.u32 %v8854, %v8857
      %v8859 = vsel %vm631, %v8849, %v8858
      %v8861 = vshrl.u32 %v8644, 16
      %v8863 = vrot.slane %v8861, 3
      %v8864 = vshll.u32 %v8644, 16
      %v8866 = vrot.slane %v8864, 4
      %v8867 = vor.u32 %v8863, %v8866
      %v8868 = vsel %vm631, %v8858, %v8867
      %v8870 = vsel %vm398, %v8661, 0
      %v8873 = vsel %vm398, %v8670, 0
      %v8876 = vsel %vm398, %v8679, 0
      %v8879 = vsel %vm398, %v8688, 0
      %v8882 = vsel %vm398, %v8697, 0
      %v8885 = vsel %vm398, %v8706, 0
      %v8888 = vsel %vm398, %v8715, 0
      %v8891 = vsel %vm398, %v8724, 0
      %v8894 = vsel %vm398, %v8733, 0
      %v8897 = vsel %vm398, %v8742, 0
      %v8900 = vsel %vm398, %v8751, 0
      %v8903 = vsel %vm398, %v8760, 0
      %v8906 = vsel %vm398, %v8769, 0
      %v8909 = vsel %vm398, %v8778, 0
      %v8912 = vsel %vm398, %v8787, 0
      %v8915 = vsel %vm398, %v8796, 0
      %v8918 = vsel %vm398, %v8805, 0
      %v8921 = vsel %vm398, %v8814, 0
      %v8924 = vsel %vm398, %v8823, 0
      %v8927 = vsel %vm398, %v8832, 0
      %v8930 = vsel %vm398, %v8841, 0
      %v8933 = vsel %vm398, %v8850, 0
      %v8936 = vsel %vm398, %v8859, 0
      %v8939 = vsel %vm398, %v8868, 0
      %v8942 = vsel %vm471, %v8521, 0
      %8944 = vmatpush.bf16.msra.mxu0 0
      %8945 = vmatpush.bf16.msra.mxu0 0
      %8946 = vmatpush.bf16.msra.mxu0 0
      %8947 = vmatpush.bf16.msra.mxu0 0
      %8948 = vmatpush.bf16.msra.mxu0 0
      %8949 = vmatpush.bf16.msra.mxu0 0
      %8950 = vmatpush.bf16.msra.mxu0 0
      %8951 = vmatpush.bf16.msra.mxu0 %v8942
      %8952 = vmatmul.bf16.gmra.mxu0 %v8870
      %v8953 = vpop.f32.mrf.mxu0
      %v8954 = vadd.f32 0.0, %v8953
      %v8955 = vpop.f32.mrf.mxu0
      %v8956 = vadd.f32 0.0, %v8955
      %8957 = vmatmul.bf16.gmra.mxu0 %v8873
      %v8958 = vpop.f32.mrf.mxu0
      %v8959 = vadd.f32 0.0, %v8958
      %v8960 = vpop.f32.mrf.mxu0
      %v8961 = vadd.f32 0.0, %v8960
      %8962 = vmatmul.bf16.gmra.mxu0 %v8876
      %v8963 = vpop.f32.mrf.mxu0
      %v8964 = vadd.f32 0.0, %v8963
      %v8965 = vpop.f32.mrf.mxu0
      %v8966 = vadd.f32 0.0, %v8965
      %8967 = vmatmul.bf16.gmra.mxu0 %v8879
      %v8968 = vpop.f32.mrf.mxu0
      %v8969 = vadd.f32 0.0, %v8968
      %v8970 = vpop.f32.mrf.mxu0
      %v8971 = vadd.f32 0.0, %v8970
      %8972 = vmatmul.bf16.gmra.mxu0 %v8882
      %v8973 = vpop.f32.mrf.mxu0
      %v8974 = vadd.f32 0.0, %v8973
      %v8975 = vpop.f32.mrf.mxu0
      %v8976 = vadd.f32 0.0, %v8975
      %8977 = vmatmul.bf16.gmra.mxu0 %v8885
      %v8978 = vpop.f32.mrf.mxu0
      %v8979 = vadd.f32 0.0, %v8978
      %v8980 = vpop.f32.mrf.mxu0
      %v8981 = vadd.f32 0.0, %v8980
      %8982 = vmatmul.bf16.gmra.mxu0 %v8888
      %v8983 = vpop.f32.mrf.mxu0
      %v8984 = vadd.f32 0.0, %v8983
      %v8985 = vpop.f32.mrf.mxu0
      %v8986 = vadd.f32 0.0, %v8985
      %8987 = vmatmul.bf16.gmra.mxu0 %v8891
      %v8988 = vpop.f32.mrf.mxu0
      %v8989 = vadd.f32 0.0, %v8988
      %v8990 = vpop.f32.mrf.mxu0
      %v8991 = vadd.f32 0.0, %v8990
      %8992 = vmatmul.bf16.gmra.mxu0 %v8894
      %v8993 = vpop.f32.mrf.mxu0
      %v8994 = vadd.f32 0.0, %v8993
      %v8995 = vpop.f32.mrf.mxu0
      %v8996 = vadd.f32 0.0, %v8995
      %8997 = vmatmul.bf16.gmra.mxu0 %v8897
      %v8998 = vpop.f32.mrf.mxu0
      %v8999 = vadd.f32 0.0, %v8998
      %v9000 = vpop.f32.mrf.mxu0
      %v9001 = vadd.f32 0.0, %v9000
      %9002 = vmatmul.bf16.gmra.mxu0 %v8900
      %v9003 = vpop.f32.mrf.mxu0
      %v9004 = vadd.f32 0.0, %v9003
      %v9005 = vpop.f32.mrf.mxu0
      %v9006 = vadd.f32 0.0, %v9005
      %9007 = vmatmul.bf16.gmra.mxu0 %v8903
      %v9008 = vpop.f32.mrf.mxu0
      %v9009 = vadd.f32 0.0, %v9008
      %v9010 = vpop.f32.mrf.mxu0
      %v9011 = vadd.f32 0.0, %v9010
      %9012 = vmatmul.bf16.gmra.mxu0 %v8906
      %v9013 = vpop.f32.mrf.mxu0
      %v9014 = vadd.f32 0.0, %v9013
      %v9015 = vpop.f32.mrf.mxu0
      %v9016 = vadd.f32 0.0, %v9015
      %9017 = vmatmul.bf16.gmra.mxu0 %v8909
      %v9018 = vpop.f32.mrf.mxu0
      %v9019 = vadd.f32 0.0, %v9018
      %v9020 = vpop.f32.mrf.mxu0
      %v9021 = vadd.f32 0.0, %v9020
      %9022 = vmatmul.bf16.gmra.mxu0 %v8912
      %v9023 = vpop.f32.mrf.mxu0
      %v9024 = vadd.f32 0.0, %v9023
      %v9025 = vpop.f32.mrf.mxu0
      %v9026 = vadd.f32 0.0, %v9025
      %9027 = vmatmul.bf16.gmra.mxu0 %v8915
      %v9028 = vpop.f32.mrf.mxu0
      %v9029 = vadd.f32 0.0, %v9028
      %v9030 = vpop.f32.mrf.mxu0
      %v9031 = vadd.f32 0.0, %v9030
      %9032 = vmatmul.bf16.gmra.mxu0 %v8918
      %v9033 = vpop.f32.mrf.mxu0
      %v9034 = vadd.f32 0.0, %v9033
      %v9035 = vpop.f32.mrf.mxu0
      %v9036 = vadd.f32 0.0, %v9035
      %9037 = vmatmul.bf16.gmra.mxu0 %v8921
      %v9038 = vpop.f32.mrf.mxu0
      %v9039 = vadd.f32 0.0, %v9038
      %v9040 = vpop.f32.mrf.mxu0
      %v9041 = vadd.f32 0.0, %v9040
      %9042 = vmatmul.bf16.gmra.mxu0 %v8924
      %v9043 = vpop.f32.mrf.mxu0
      %v9044 = vadd.f32 0.0, %v9043
      %v9045 = vpop.f32.mrf.mxu0
      %v9046 = vadd.f32 0.0, %v9045
      %9047 = vmatmul.bf16.gmra.mxu0 %v8927
      %v9048 = vpop.f32.mrf.mxu0
      %v9049 = vadd.f32 0.0, %v9048
      %v9050 = vpop.f32.mrf.mxu0
      %v9051 = vadd.f32 0.0, %v9050
      %9052 = vmatmul.bf16.gmra.mxu0 %v8930
      %v9053 = vpop.f32.mrf.mxu0
      %v9054 = vadd.f32 0.0, %v9053
      %v9055 = vpop.f32.mrf.mxu0
      %v9056 = vadd.f32 0.0, %v9055
      %9057 = vmatmul.bf16.gmra.mxu0 %v8933
      %v9058 = vpop.f32.mrf.mxu0
      %v9059 = vadd.f32 0.0, %v9058
      %v9060 = vpop.f32.mrf.mxu0
      %v9061 = vadd.f32 0.0, %v9060
      %9062 = vmatmul.bf16.gmra.mxu0 %v8936
      %v9063 = vpop.f32.mrf.mxu0
      %v9064 = vadd.f32 0.0, %v9063
      %v9065 = vpop.f32.mrf.mxu0
      %v9066 = vadd.f32 0.0, %v9065
      %9067 = vmatmul.bf16.gmra.mxu0 %v8939
      %v9068 = vpop.f32.mrf.mxu0
      %v9069 = vadd.f32 0.0, %v9068
      %v9070 = vpop.f32.mrf.mxu0
      %v9071 = vadd.f32 0.0, %v9070
      %9072 = vdwg.mxu0
      %v9073 = vadd.f32 %v8423, %v8954
      %v9074 = vadd.f32 %v8424, %v8956
      %v9075 = vadd.f32 %v8425, %v8959
      %v9076 = vadd.f32 %v8426, %v8961
      %v9077 = vadd.f32 %v8427, %v8964
      %v9078 = vadd.f32 %v8428, %v8966
      %v9079 = vadd.f32 %v8429, %v8969
      %v9080 = vadd.f32 %v8430, %v8971
      %v9081 = vadd.f32 %v8431, %v8974
      %v9082 = vadd.f32 %v8432, %v8976
      %v9083 = vadd.f32 %v8433, %v8979
      %v9084 = vadd.f32 %v8434, %v8981
      %v9085 = vadd.f32 %v8435, %v8984
      %v9086 = vadd.f32 %v8436, %v8986
      %v9087 = vadd.f32 %v8437, %v8989
      %v9088 = vadd.f32 %v8438, %v8991
      %v9089 = vadd.f32 %v8439, %v8994
      %v9090 = vadd.f32 %v8440, %v8996
      %v9091 = vadd.f32 %v8441, %v8999
      %v9092 = vadd.f32 %v8442, %v9001
      %v9093 = vadd.f32 %v8443, %v9004
      %v9094 = vadd.f32 %v8444, %v9006
      %v9095 = vadd.f32 %v8445, %v9009
      %v9096 = vadd.f32 %v8446, %v9011
      %v9097 = vadd.f32 %v8447, %v9014
      %v9098 = vadd.f32 %v8448, %v9016
      %v9099 = vadd.f32 %v8449, %v9019
      %v9100 = vadd.f32 %v8450, %v9021
      %v9101 = vadd.f32 %v8451, %v9024
      %v9102 = vadd.f32 %v8452, %v9026
      %v9103 = vadd.f32 %v8453, %v9029
      %v9104 = vadd.f32 %v8454, %v9031
      %v9105 = vadd.f32 %v8455, %v9034
      %v9106 = vadd.f32 %v8456, %v9036
      %v9107 = vadd.f32 %v8457, %v9039
      %v9108 = vadd.f32 %v8458, %v9041
      %v9109 = vadd.f32 %v8459, %v9044
      %v9110 = vadd.f32 %v8460, %v9046
      %v9111 = vadd.f32 %v8461, %v9049
      %v9112 = vadd.f32 %v8462, %v9051
      %v9113 = vadd.f32 %v8463, %v9054
      %v9114 = vadd.f32 %v8464, %v9056
      %v9115 = vadd.f32 %v8465, %v9059
      %v9116 = vadd.f32 %v8466, %v9061
      %v9117 = vadd.f32 %v8467, %v9064
      %v9118 = vadd.f32 %v8468, %v9066
      %v9119 = vadd.f32 %v8469, %v9069
      %v9120 = vadd.f32 %v8470, %v9071
      %s9121 = scalar_lea.vmem %s2, 28
      %v9122 = vld [vmem:[%s9121] sm:$0xf]
      %v9123 = vpack.c.b16 %v8573, %v8572
      %v9124 = vpack.c.b16 %v8575, %v8574
      %v9125 = vpack.c.b16 %v8577, %v8576
      %v9126 = vpack.c.b16 %v8579, %v8578
      %v9127 = vpack.c.b16 %v8581, %v8580
      %v9128 = vpack.c.b16 %v8583, %v8582
      %v9129 = vpack.c.b16 %v8585, %v8584
      %v9130 = vpack.c.b16 %v8587, %v8586
      %v9131 = vpack.c.b16 %v8589, %v8588
      %v9132 = vpack.c.b16 %v8591, %v8590
      %v9133 = vpack.c.b16 %v8593, %v8592
      %v9134 = vpack.c.b16 %v8595, %v8594
      %v9135 = vpack.c.b16 %v8597, %v8596
      %v9136 = vpack.c.b16 %v8599, %v8598
      %v9137 = vpack.c.b16 %v8601, %v8600
      %v9138 = vpack.c.b16 %v8603, %v8602
      %v9139 = vpack.c.b16 %v8605, %v8604
      %v9140 = vpack.c.b16 %v8607, %v8606
      %v9141 = vpack.c.b16 %v8609, %v8608
      %v9142 = vpack.c.b16 %v8611, %v8610
      %v9143 = vpack.c.b16 %v8613, %v8612
      %v9144 = vpack.c.b16 %v8615, %v8614
      %v9145 = vpack.c.b16 %v8617, %v8616
      %v9146 = vpack.c.b16 %v8619, %v8618
      %v9148 = vsel %vm398, %v9123, 0
      %v9151 = vsel %vm398, %v9124, 0
      %v9154 = vsel %vm398, %v9125, 0
      %v9157 = vsel %vm398, %v9126, 0
      %v9160 = vsel %vm398, %v9127, 0
      %v9163 = vsel %vm398, %v9128, 0
      %v9166 = vsel %vm398, %v9129, 0
      %v9169 = vsel %vm398, %v9130, 0
      %v9172 = vsel %vm398, %v9131, 0
      %v9175 = vsel %vm398, %v9132, 0
      %v9178 = vsel %vm398, %v9133, 0
      %v9181 = vsel %vm398, %v9134, 0
      %v9184 = vsel %vm398, %v9135, 0
      %v9187 = vsel %vm398, %v9136, 0
      %v9190 = vsel %vm398, %v9137, 0
      %v9193 = vsel %vm398, %v9138, 0
      %v9196 = vsel %vm398, %v9139, 0
      %v9199 = vsel %vm398, %v9140, 0
      %v9202 = vsel %vm398, %v9141, 0
      %v9205 = vsel %vm398, %v9142, 0
      %v9208 = vsel %vm398, %v9143, 0
      %v9211 = vsel %vm398, %v9144, 0
      %v9214 = vsel %vm398, %v9145, 0
      %v9217 = vsel %vm398, %v9146, 0
      %v9220 = vsel %vm471, %v9122, 0
      %9222 = vmatpush.bf16.msra.mxu0 0
      %9223 = vmatpush.bf16.msra.mxu0 0
      %9224 = vmatpush.bf16.msra.mxu0 0
      %9225 = vmatpush.bf16.msra.mxu0 0
      %9226 = vmatpush.bf16.msra.mxu0 0
      %9227 = vmatpush.bf16.msra.mxu0 0
      %9228 = vmatpush.bf16.msra.mxu0 0
      %9229 = vmatpush.bf16.msra.mxu0 %v9220
      %9230 = vmatmul.bf16.gmra.mxu0 %v9148
      %v9231 = vpop.f32.mrf.mxu0
      %v9232 = vadd.f32 0.0, %v9231
      %v9233 = vpop.f32.mrf.mxu0
      %v9234 = vadd.f32 0.0, %v9233
      %9235 = vmatmul.bf16.gmra.mxu0 %v9151
      %v9236 = vpop.f32.mrf.mxu0
      %v9237 = vadd.f32 0.0, %v9236
      %v9238 = vpop.f32.mrf.mxu0
      %v9239 = vadd.f32 0.0, %v9238
      %9240 = vmatmul.bf16.gmra.mxu0 %v9154
      %v9241 = vpop.f32.mrf.mxu0
      %v9242 = vadd.f32 0.0, %v9241
      %v9243 = vpop.f32.mrf.mxu0
      %v9244 = vadd.f32 0.0, %v9243
      %9245 = vmatmul.bf16.gmra.mxu0 %v9157
      %v9246 = vpop.f32.mrf.mxu0
      %v9247 = vadd.f32 0.0, %v9246
      %v9248 = vpop.f32.mrf.mxu0
      %v9249 = vadd.f32 0.0, %v9248
      %9250 = vmatmul.bf16.gmra.mxu0 %v9160
      %v9251 = vpop.f32.mrf.mxu0
      %v9252 = vadd.f32 0.0, %v9251
      %v9253 = vpop.f32.mrf.mxu0
      %v9254 = vadd.f32 0.0, %v9253
      %9255 = vmatmul.bf16.gmra.mxu0 %v9163
      %v9256 = vpop.f32.mrf.mxu0
      %v9257 = vadd.f32 0.0, %v9256
      %v9258 = vpop.f32.mrf.mxu0
      %v9259 = vadd.f32 0.0, %v9258
      %9260 = vmatmul.bf16.gmra.mxu0 %v9166
      %v9261 = vpop.f32.mrf.mxu0
      %v9262 = vadd.f32 0.0, %v9261
      %v9263 = vpop.f32.mrf.mxu0
      %v9264 = vadd.f32 0.0, %v9263
      %9265 = vmatmul.bf16.gmra.mxu0 %v9169
      %v9266 = vpop.f32.mrf.mxu0
      %v9267 = vadd.f32 0.0, %v9266
      %v9268 = vpop.f32.mrf.mxu0
      %v9269 = vadd.f32 0.0, %v9268
      %9270 = vmatmul.bf16.gmra.mxu0 %v9172
      %v9271 = vpop.f32.mrf.mxu0
      %v9272 = vadd.f32 0.0, %v9271
      %v9273 = vpop.f32.mrf.mxu0
      %v9274 = vadd.f32 0.0, %v9273
      %9275 = vmatmul.bf16.gmra.mxu0 %v9175
      %v9276 = vpop.f32.mrf.mxu0
      %v9277 = vadd.f32 0.0, %v9276
      %v9278 = vpop.f32.mrf.mxu0
      %v9279 = vadd.f32 0.0, %v9278
      %9280 = vmatmul.bf16.gmra.mxu0 %v9178
      %v9281 = vpop.f32.mrf.mxu0
      %v9282 = vadd.f32 0.0, %v9281
      %v9283 = vpop.f32.mrf.mxu0
      %v9284 = vadd.f32 0.0, %v9283
      %9285 = vmatmul.bf16.gmra.mxu0 %v9181
      %v9286 = vpop.f32.mrf.mxu0
      %v9287 = vadd.f32 0.0, %v9286
      %v9288 = vpop.f32.mrf.mxu0
      %v9289 = vadd.f32 0.0, %v9288
      %9290 = vmatmul.bf16.gmra.mxu0 %v9184
      %v9291 = vpop.f32.mrf.mxu0
      %v9292 = vadd.f32 0.0, %v9291
      %v9293 = vpop.f32.mrf.mxu0
      %v9294 = vadd.f32 0.0, %v9293
      %9295 = vmatmul.bf16.gmra.mxu0 %v9187
      %v9296 = vpop.f32.mrf.mxu0
      %v9297 = vadd.f32 0.0, %v9296
      %v9298 = vpop.f32.mrf.mxu0
      %v9299 = vadd.f32 0.0, %v9298
      %9300 = vmatmul.bf16.gmra.mxu0 %v9190
      %v9301 = vpop.f32.mrf.mxu0
      %v9302 = vadd.f32 0.0, %v9301
      %v9303 = vpop.f32.mrf.mxu0
      %v9304 = vadd.f32 0.0, %v9303
      %9305 = vmatmul.bf16.gmra.mxu0 %v9193
      %v9306 = vpop.f32.mrf.mxu0
      %v9307 = vadd.f32 0.0, %v9306
      %v9308 = vpop.f32.mrf.mxu0
      %v9309 = vadd.f32 0.0, %v9308
      %9310 = vmatmul.bf16.gmra.mxu0 %v9196
      %v9311 = vpop.f32.mrf.mxu0
      %v9312 = vadd.f32 0.0, %v9311
      %v9313 = vpop.f32.mrf.mxu0
      %v9314 = vadd.f32 0.0, %v9313
      %9315 = vmatmul.bf16.gmra.mxu0 %v9199
      %v9316 = vpop.f32.mrf.mxu0
      %v9317 = vadd.f32 0.0, %v9316
      %v9318 = vpop.f32.mrf.mxu0
      %v9319 = vadd.f32 0.0, %v9318
      %9320 = vmatmul.bf16.gmra.mxu0 %v9202
      %v9321 = vpop.f32.mrf.mxu0
      %v9322 = vadd.f32 0.0, %v9321
      %v9323 = vpop.f32.mrf.mxu0
      %v9324 = vadd.f32 0.0, %v9323
      %9325 = vmatmul.bf16.gmra.mxu0 %v9205
      %v9326 = vpop.f32.mrf.mxu0
      %v9327 = vadd.f32 0.0, %v9326
      %v9328 = vpop.f32.mrf.mxu0
      %v9329 = vadd.f32 0.0, %v9328
      %9330 = vmatmul.bf16.gmra.mxu0 %v9208
      %v9331 = vpop.f32.mrf.mxu0
      %v9332 = vadd.f32 0.0, %v9331
      %v9333 = vpop.f32.mrf.mxu0
      %v9334 = vadd.f32 0.0, %v9333
      %9335 = vmatmul.bf16.gmra.mxu0 %v9211
      %v9336 = vpop.f32.mrf.mxu0
      %v9337 = vadd.f32 0.0, %v9336
      %v9338 = vpop.f32.mrf.mxu0
      %v9339 = vadd.f32 0.0, %v9338
      %9340 = vmatmul.bf16.gmra.mxu0 %v9214
      %v9341 = vpop.f32.mrf.mxu0
      %v9342 = vadd.f32 0.0, %v9341
      %v9343 = vpop.f32.mrf.mxu0
      %v9344 = vadd.f32 0.0, %v9343
      %9345 = vmatmul.bf16.gmra.mxu0 %v9217
      %v9346 = vpop.f32.mrf.mxu0
      %v9347 = vadd.f32 0.0, %v9346
      %v9348 = vpop.f32.mrf.mxu0
      %v9349 = vadd.f32 0.0, %v9348
      %9350 = vdwg.mxu0
      %v9351 = vadd.f32 %v9073, %v9232
      %v9352 = vadd.f32 %v9074, %v9234
      %v9353 = vadd.f32 %v9075, %v9237
      %v9354 = vadd.f32 %v9076, %v9239
      %v9355 = vadd.f32 %v9077, %v9242
      %v9356 = vadd.f32 %v9078, %v9244
      %v9357 = vadd.f32 %v9079, %v9247
      %v9358 = vadd.f32 %v9080, %v9249
      %v9359 = vadd.f32 %v9081, %v9252
      %v9360 = vadd.f32 %v9082, %v9254
      %v9361 = vadd.f32 %v9083, %v9257
      %v9362 = vadd.f32 %v9084, %v9259
      %v9363 = vadd.f32 %v9085, %v9262
      %v9364 = vadd.f32 %v9086, %v9264
      %v9365 = vadd.f32 %v9087, %v9267
      %v9366 = vadd.f32 %v9088, %v9269
      %v9367 = vadd.f32 %v9089, %v9272
      %v9368 = vadd.f32 %v9090, %v9274
      %v9369 = vadd.f32 %v9091, %v9277
      %v9370 = vadd.f32 %v9092, %v9279
      %v9371 = vadd.f32 %v9093, %v9282
      %v9372 = vadd.f32 %v9094, %v9284
      %v9373 = vadd.f32 %v9095, %v9287
      %v9374 = vadd.f32 %v9096, %v9289
      %v9375 = vadd.f32 %v9097, %v9292
      %v9376 = vadd.f32 %v9098, %v9294
      %v9377 = vadd.f32 %v9099, %v9297
      %v9378 = vadd.f32 %v9100, %v9299
      %v9379 = vadd.f32 %v9101, %v9302
      %v9380 = vadd.f32 %v9102, %v9304
      %v9381 = vadd.f32 %v9103, %v9307
      %v9382 = vadd.f32 %v9104, %v9309
      %v9383 = vadd.f32 %v9105, %v9312
      %v9384 = vadd.f32 %v9106, %v9314
      %v9385 = vadd.f32 %v9107, %v9317
      %v9386 = vadd.f32 %v9108, %v9319
      %v9387 = vadd.f32 %v9109, %v9322
      %v9388 = vadd.f32 %v9110, %v9324
      %v9389 = vadd.f32 %v9111, %v9327
      %v9390 = vadd.f32 %v9112, %v9329
      %v9391 = vadd.f32 %v9113, %v9332
      %v9392 = vadd.f32 %v9114, %v9334
      %v9393 = vadd.f32 %v9115, %v9337
      %v9394 = vadd.f32 %v9116, %v9339
      %v9395 = vadd.f32 %v9117, %v9342
      %v9396 = vadd.f32 %v9118, %v9344
      %v9397 = vadd.f32 %v9119, %v9347
      %v9398 = vadd.f32 %v9120, %v9349
      %v9399 = vld [vmem:[#allocation2 + $0x1c] sm:$0xf]
      %v9400 = vld [vmem:[#allocation2 + $0x20] sm:$0xf]
      %v9401 = vld [vmem:[#allocation2 + $0x24] sm:$0xf]
      %v9402 = vld [vmem:[#allocation2 + $0x28] sm:$0xf]
      %v9403 = vld [vmem:[#allocation2 + $0x2c] sm:$0xf]
      %v9404 = vld [vmem:[#allocation2 + $0x30] sm:$0xf]
      %v9405 = vld [vmem:[#allocation2 + $0x34] sm:$0xf]
      %v9406 = vld [vmem:[#allocation2 + $0x38] sm:$0xf]
      %v9407 = vld [vmem:[#allocation2 + $0x3c] sm:$0xf]
      %v9408 = vld [vmem:[#allocation2 + $0x40] sm:$0xf]
      %v9409 = vld [vmem:[#allocation2 + $0x44] sm:$0xf]
      %v9410 = vld [vmem:[#allocation2 + $0x48] sm:$0xf]
      %v9411 = vld [vmem:[#allocation2 + $0x4c] sm:$0xf]
      %v9412 = vld [vmem:[#allocation2 + $0x50] sm:$0xf]
      %v9413 = vld [vmem:[#allocation2 + $0x54] sm:$0xf]
      %v9414 = vld [vmem:[#allocation2 + $0x58] sm:$0xf]
      %v9415 = vld [vmem:[#allocation2 + $0x5c] sm:$0xf]
      %v9416 = vld [vmem:[#allocation2 + $0x60] sm:$0xf]
      %v9417 = vld [vmem:[#allocation2 + $0x64] sm:$0xf]
      %v9418 = vld [vmem:[#allocation2 + $0x68] sm:$0xf]
      %v9419 = vld [vmem:[#allocation2 + $0x6c] sm:$0xf]
      %v9420 = vld [vmem:[#allocation2 + $0x70] sm:$0xf]
      %v9421 = vld [vmem:[#allocation2 + $0x74] sm:$0xf]
      %v9422 = vld [vmem:[#allocation2 + $0x78] sm:$0xf]
      %v9423 = vld [vmem:[#allocation2 + $0x7c] sm:$0xf]
      %v9424 = vld [vmem:[#allocation2 + $0x80] sm:$0xf]
      %v9425 = vld [vmem:[#allocation2 + $0x84] sm:$0xf]
      %v9426 = vld [vmem:[#allocation2 + $0x88] sm:$0xf]
      %v9427 = vld [vmem:[#allocation2 + $0x8c] sm:$0xf]
      %v9428 = vld [vmem:[#allocation2 + $0x90] sm:$0xf]
      %v9429 = vld [vmem:[#allocation2 + $0x94] sm:$0xf]
      %v9430 = vld [vmem:[#allocation2 + $0x98] sm:$0xf]
      %v9431 = vld [vmem:[#allocation2 + $0x9c] sm:$0xf]
      %v9432 = vld [vmem:[#allocation2 + $0xa0] sm:$0xf]
      %v9433 = vld [vmem:[#allocation2 + $0xa4] sm:$0xf]
      %v9434 = vld [vmem:[#allocation2 + $0xa8] sm:$0xf]
      %v9435 = vld [vmem:[#allocation2 + $0xac] sm:$0xf]
      %v9436 = vld [vmem:[#allocation2 + $0xb0] sm:$0xf]
      %v9437 = vld [vmem:[#allocation2 + $0xb4] sm:$0xf]
      %v9438 = vld [vmem:[#allocation2 + $0xb8] sm:$0xf]
      %v9439 = vld [vmem:[#allocation2 + $0xbc] sm:$0xf]
      %v9440 = vld [vmem:[#allocation2 + $0xc0] sm:$0xf]
      %v9441 = vld [vmem:[#allocation2 + $0xc4] sm:$0xf]
      %v9442 = vld [vmem:[#allocation2 + $0xc8] sm:$0xf]
      %v9443 = vld [vmem:[#allocation2 + $0xcc] sm:$0xf]
      %v9444 = vld [vmem:[#allocation2 + $0xd0] sm:$0xf]
      %v9445 = vld [vmem:[#allocation2 + $0xd4] sm:$0xf]
      %v9446 = vld [vmem:[#allocation2 + $0xd8] sm:$0xf]
      %v9447 = vld [vmem:[#allocation2 + $0xdc] sm:$0x1]
      %s9448 = scalar_lea.vmem %s2, 32
      %v9449 = vld [vmem:[%s9448] sm:$0xf]
      %v9499 = vunpack.c.l.b16 %v9399
      %v9500 = vunpack.c.l.b16 %v9400
      %v9501 = vunpack.c.l.b16 %v9401
      %v9502 = vunpack.c.l.b16 %v9402
      %v9503 = vunpack.c.l.b16 %v9403
      %v9504 = vunpack.c.l.b16 %v9404
      %v9505 = vunpack.c.l.b16 %v9405
      %v9506 = vunpack.c.l.b16 %v9406
      %v9507 = vunpack.c.l.b16 %v9407
      %v9508 = vunpack.c.l.b16 %v9408
      %v9509 = vunpack.c.l.b16 %v9409
      %v9510 = vunpack.c.l.b16 %v9410
      %v9511 = vunpack.c.l.b16 %v9411
      %v9512 = vunpack.c.l.b16 %v9412
      %v9513 = vunpack.c.l.b16 %v9413
      %v9514 = vunpack.c.l.b16 %v9414
      %v9515 = vunpack.c.l.b16 %v9415
      %v9516 = vunpack.c.l.b16 %v9416
      %v9517 = vunpack.c.l.b16 %v9417
      %v9518 = vunpack.c.l.b16 %v9418
      %v9519 = vunpack.c.l.b16 %v9419
      %v9520 = vunpack.c.l.b16 %v9420
      %v9521 = vunpack.c.l.b16 %v9421
      %v9522 = vunpack.c.l.b16 %v9422
      %v9523 = vunpack.c.l.b16 %v9423
      %v9524 = vunpack.c.l.b16 %v9424
      %v9525 = vunpack.c.l.b16 %v9425
      %v9526 = vunpack.c.l.b16 %v9426
      %v9527 = vunpack.c.l.b16 %v9427
      %v9528 = vunpack.c.l.b16 %v9428
      %v9529 = vunpack.c.l.b16 %v9429
      %v9530 = vunpack.c.l.b16 %v9430
      %v9531 = vunpack.c.l.b16 %v9431
      %v9532 = vunpack.c.l.b16 %v9432
      %v9533 = vunpack.c.l.b16 %v9433
      %v9534 = vunpack.c.l.b16 %v9434
      %v9535 = vunpack.c.l.b16 %v9435
      %v9536 = vunpack.c.l.b16 %v9436
      %v9537 = vunpack.c.l.b16 %v9437
      %v9538 = vunpack.c.l.b16 %v9438
      %v9539 = vunpack.c.l.b16 %v9439
      %v9540 = vunpack.c.l.b16 %v9440
      %v9541 = vunpack.c.l.b16 %v9441
      %v9542 = vunpack.c.l.b16 %v9442
      %v9543 = vunpack.c.l.b16 %v9443
      %v9544 = vunpack.c.l.b16 %v9444
      %v9545 = vunpack.c.l.b16 %v9445
      %v9546 = vunpack.c.l.b16 %v9446
      %v9547 = vunpack.c.l.b16 %v9447
      %v9548 = vpack.c.b16 %v9500, %v9499
      %v9549 = vpack.c.b16 %v9502, %v9501
      %v9550 = vpack.c.b16 %v9504, %v9503
      %v9551 = vpack.c.b16 %v9506, %v9505
      %v9552 = vpack.c.b16 %v9508, %v9507
      %v9553 = vpack.c.b16 %v9510, %v9509
      %v9554 = vpack.c.b16 %v9512, %v9511
      %v9555 = vpack.c.b16 %v9514, %v9513
      %v9556 = vpack.c.b16 %v9516, %v9515
      %v9557 = vpack.c.b16 %v9518, %v9517
      %v9558 = vpack.c.b16 %v9520, %v9519
      %v9559 = vpack.c.b16 %v9522, %v9521
      %v9560 = vpack.c.b16 %v9524, %v9523
      %v9561 = vpack.c.b16 %v9526, %v9525
      %v9562 = vpack.c.b16 %v9528, %v9527
      %v9563 = vpack.c.b16 %v9530, %v9529
      %v9564 = vpack.c.b16 %v9532, %v9531
      %v9565 = vpack.c.b16 %v9534, %v9533
      %v9566 = vpack.c.b16 %v9536, %v9535
      %v9567 = vpack.c.b16 %v9538, %v9537
      %v9568 = vpack.c.b16 %v9540, %v9539
      %v9569 = vpack.c.b16 %v9542, %v9541
      %v9570 = vpack.c.b16 %v9544, %v9543
      %v9571 = vpack.c.b16 %v9546, %v9545
      %v9572 = vpack.c.b16 %v9547, %v9547
      %v9574 = vshrl.u32 %v9548, 16
      %v9576 = vshll.u32 %v9548, 16
      %v9578 = vrot.slane %v9576, 1
      %v9579 = vor.u32 %v9574, %v9578
      %v9581 = vshll.u32 %v9549, 16
      %v9583 = vrot.slane %v9581, 1
      %v9584 = vsel %vm1234, %v9579, %v9583
      %v9585 = vshrl.u32 %v9549, 16
      %v9587 = vor.u32 %v9585, %v9583
      %v9589 = vshll.u32 %v9550, 16
      %v9591 = vrot.slane %v9589, 1
      %v9592 = vsel %vm1234, %v9587, %v9591
      %v9593 = vshrl.u32 %v9550, 16
      %v9595 = vor.u32 %v9593, %v9591
      %v9597 = vshll.u32 %v9551, 16
      %v9599 = vrot.slane %v9597, 1
      %v9600 = vsel %vm1234, %v9595, %v9599
      %v9601 = vshrl.u32 %v9551, 16
      %v9603 = vor.u32 %v9601, %v9599
      %v9605 = vshll.u32 %v9552, 16
      %v9607 = vrot.slane %v9605, 1
      %v9608 = vsel %vm1234, %v9603, %v9607
      %v9609 = vshrl.u32 %v9552, 16
      %v9611 = vor.u32 %v9609, %v9607
      %v9613 = vshll.u32 %v9553, 16
      %v9615 = vrot.slane %v9613, 1
      %v9616 = vsel %vm1234, %v9611, %v9615
      %v9617 = vshrl.u32 %v9553, 16
      %v9619 = vor.u32 %v9617, %v9615
      %v9621 = vshll.u32 %v9554, 16
      %v9623 = vrot.slane %v9621, 1
      %v9624 = vsel %vm1234, %v9619, %v9623
      %v9625 = vshrl.u32 %v9554, 16
      %v9627 = vor.u32 %v9625, %v9623
      %v9629 = vshll.u32 %v9555, 16
      %v9631 = vrot.slane %v9629, 1
      %v9632 = vsel %vm1234, %v9627, %v9631
      %v9633 = vshrl.u32 %v9555, 16
      %v9635 = vor.u32 %v9633, %v9631
      %v9637 = vshll.u32 %v9556, 16
      %v9639 = vrot.slane %v9637, 1
      %v9640 = vsel %vm1234, %v9635, %v9639
      %v9641 = vshrl.u32 %v9556, 16
      %v9643 = vor.u32 %v9641, %v9639
      %v9645 = vshll.u32 %v9557, 16
      %v9647 = vrot.slane %v9645, 1
      %v9648 = vsel %vm1234, %v9643, %v9647
      %v9649 = vshrl.u32 %v9557, 16
      %v9651 = vor.u32 %v9649, %v9647
      %v9653 = vshll.u32 %v9558, 16
      %v9655 = vrot.slane %v9653, 1
      %v9656 = vsel %vm1234, %v9651, %v9655
      %v9657 = vshrl.u32 %v9558, 16
      %v9659 = vor.u32 %v9657, %v9655
      %v9661 = vshll.u32 %v9559, 16
      %v9663 = vrot.slane %v9661, 1
      %v9664 = vsel %vm1234, %v9659, %v9663
      %v9665 = vshrl.u32 %v9559, 16
      %v9667 = vor.u32 %v9665, %v9663
      %v9669 = vshll.u32 %v9560, 16
      %v9671 = vrot.slane %v9669, 1
      %v9672 = vsel %vm1234, %v9667, %v9671
      %v9673 = vshrl.u32 %v9560, 16
      %v9675 = vor.u32 %v9673, %v9671
      %v9677 = vshll.u32 %v9561, 16
      %v9679 = vrot.slane %v9677, 1
      %v9680 = vsel %vm1234, %v9675, %v9679
      %v9681 = vshrl.u32 %v9561, 16
      %v9683 = vor.u32 %v9681, %v9679
      %v9685 = vshll.u32 %v9562, 16
      %v9687 = vrot.slane %v9685, 1
      %v9688 = vsel %vm1234, %v9683, %v9687
      %v9689 = vshrl.u32 %v9562, 16
      %v9691 = vor.u32 %v9689, %v9687
      %v9693 = vshll.u32 %v9563, 16
      %v9695 = vrot.slane %v9693, 1
      %v9696 = vsel %vm1234, %v9691, %v9695
      %v9697 = vshrl.u32 %v9563, 16
      %v9699 = vor.u32 %v9697, %v9695
      %v9701 = vshll.u32 %v9564, 16
      %v9703 = vrot.slane %v9701, 1
      %v9704 = vsel %vm1234, %v9699, %v9703
      %v9705 = vshrl.u32 %v9564, 16
      %v9707 = vor.u32 %v9705, %v9703
      %v9709 = vshll.u32 %v9565, 16
      %v9711 = vrot.slane %v9709, 1
      %v9712 = vsel %vm1234, %v9707, %v9711
      %v9713 = vshrl.u32 %v9565, 16
      %v9715 = vor.u32 %v9713, %v9711
      %v9717 = vshll.u32 %v9566, 16
      %v9719 = vrot.slane %v9717, 1
      %v9720 = vsel %vm1234, %v9715, %v9719
      %v9721 = vshrl.u32 %v9566, 16
      %v9723 = vor.u32 %v9721, %v9719
      %v9725 = vshll.u32 %v9567, 16
      %v9727 = vrot.slane %v9725, 1
      %v9728 = vsel %vm1234, %v9723, %v9727
      %v9729 = vshrl.u32 %v9567, 16
      %v9731 = vor.u32 %v9729, %v9727
      %v9733 = vshll.u32 %v9568, 16
      %v9735 = vrot.slane %v9733, 1
      %v9736 = vsel %vm1234, %v9731, %v9735
      %v9737 = vshrl.u32 %v9568, 16
      %v9739 = vor.u32 %v9737, %v9735
      %v9741 = vshll.u32 %v9569, 16
      %v9743 = vrot.slane %v9741, 1
      %v9744 = vsel %vm1234, %v9739, %v9743
      %v9745 = vshrl.u32 %v9569, 16
      %v9747 = vor.u32 %v9745, %v9743
      %v9749 = vshll.u32 %v9570, 16
      %v9751 = vrot.slane %v9749, 1
      %v9752 = vsel %vm1234, %v9747, %v9751
      %v9753 = vshrl.u32 %v9570, 16
      %v9755 = vor.u32 %v9753, %v9751
      %v9757 = vshll.u32 %v9571, 16
      %v9759 = vrot.slane %v9757, 1
      %v9760 = vsel %vm1234, %v9755, %v9759
      %v9761 = vshrl.u32 %v9571, 16
      %v9763 = vor.u32 %v9761, %v9759
      %v9765 = vshll.u32 %v9572, 16
      %v9767 = vrot.slane %v9765, 1
      %v9768 = vsel %vm1234, %v9763, %v9767
      %v9770 = vsel %vm398, %v9584, 0
      %v9773 = vsel %vm398, %v9592, 0
      %v9776 = vsel %vm398, %v9600, 0
      %v9779 = vsel %vm398, %v9608, 0
      %v9782 = vsel %vm398, %v9616, 0
      %v9785 = vsel %vm398, %v9624, 0
      %v9788 = vsel %vm398, %v9632, 0
      %v9791 = vsel %vm398, %v9640, 0
      %v9794 = vsel %vm398, %v9648, 0
      %v9797 = vsel %vm398, %v9656, 0
      %v9800 = vsel %vm398, %v9664, 0
      %v9803 = vsel %vm398, %v9672, 0
      %v9806 = vsel %vm398, %v9680, 0
      %v9809 = vsel %vm398, %v9688, 0
      %v9812 = vsel %vm398, %v9696, 0
      %v9815 = vsel %vm398, %v9704, 0
      %v9818 = vsel %vm398, %v9712, 0
      %v9821 = vsel %vm398, %v9720, 0
      %v9824 = vsel %vm398, %v9728, 0
      %v9827 = vsel %vm398, %v9736, 0
      %v9830 = vsel %vm398, %v9744, 0
      %v9833 = vsel %vm398, %v9752, 0
      %v9836 = vsel %vm398, %v9760, 0
      %v9839 = vsel %vm398, %v9768, 0
      %v9842 = vsel %vm471, %v9449, 0
      %9844 = vmatpush.bf16.msra.mxu0 0
      %9845 = vmatpush.bf16.msra.mxu0 0
      %9846 = vmatpush.bf16.msra.mxu0 0
      %9847 = vmatpush.bf16.msra.mxu0 0
      %9848 = vmatpush.bf16.msra.mxu0 0
      %9849 = vmatpush.bf16.msra.mxu0 0
      %9850 = vmatpush.bf16.msra.mxu0 0
      %9851 = vmatpush.bf16.msra.mxu0 %v9842
      %9852 = vmatmul.bf16.gmra.mxu0 %v9770
      %v9853 = vpop.f32.mrf.mxu0
      %v9854 = vadd.f32 0.0, %v9853
      %v9855 = vpop.f32.mrf.mxu0
      %v9856 = vadd.f32 0.0, %v9855
      %9857 = vmatmul.bf16.gmra.mxu0 %v9773
      %v9858 = vpop.f32.mrf.mxu0
      %v9859 = vadd.f32 0.0, %v9858
      %v9860 = vpop.f32.mrf.mxu0
      %v9861 = vadd.f32 0.0, %v9860
      %9862 = vmatmul.bf16.gmra.mxu0 %v9776
      %v9863 = vpop.f32.mrf.mxu0
      %v9864 = vadd.f32 0.0, %v9863
      %v9865 = vpop.f32.mrf.mxu0
      %v9866 = vadd.f32 0.0, %v9865
      %9867 = vmatmul.bf16.gmra.mxu0 %v9779
      %v9868 = vpop.f32.mrf.mxu0
      %v9869 = vadd.f32 0.0, %v9868
      %v9870 = vpop.f32.mrf.mxu0
      %v9871 = vadd.f32 0.0, %v9870
      %9872 = vmatmul.bf16.gmra.mxu0 %v9782
      %v9873 = vpop.f32.mrf.mxu0
      %v9874 = vadd.f32 0.0, %v9873
      %v9875 = vpop.f32.mrf.mxu0
      %v9876 = vadd.f32 0.0, %v9875
      %9877 = vmatmul.bf16.gmra.mxu0 %v9785
      %v9878 = vpop.f32.mrf.mxu0
      %v9879 = vadd.f32 0.0, %v9878
      %v9880 = vpop.f32.mrf.mxu0
      %v9881 = vadd.f32 0.0, %v9880
      %9882 = vmatmul.bf16.gmra.mxu0 %v9788
      %v9883 = vpop.f32.mrf.mxu0
      %v9884 = vadd.f32 0.0, %v9883
      %v9885 = vpop.f32.mrf.mxu0
      %v9886 = vadd.f32 0.0, %v9885
      %9887 = vmatmul.bf16.gmra.mxu0 %v9791
      %v9888 = vpop.f32.mrf.mxu0
      %v9889 = vadd.f32 0.0, %v9888
      %v9890 = vpop.f32.mrf.mxu0
      %v9891 = vadd.f32 0.0, %v9890
      %9892 = vmatmul.bf16.gmra.mxu0 %v9794
      %v9893 = vpop.f32.mrf.mxu0
      %v9894 = vadd.f32 0.0, %v9893
      %v9895 = vpop.f32.mrf.mxu0
      %v9896 = vadd.f32 0.0, %v9895
      %9897 = vmatmul.bf16.gmra.mxu0 %v9797
      %v9898 = vpop.f32.mrf.mxu0
      %v9899 = vadd.f32 0.0, %v9898
      %v9900 = vpop.f32.mrf.mxu0
      %v9901 = vadd.f32 0.0, %v9900
      %9902 = vmatmul.bf16.gmra.mxu0 %v9800
      %v9903 = vpop.f32.mrf.mxu0
      %v9904 = vadd.f32 0.0, %v9903
      %v9905 = vpop.f32.mrf.mxu0
      %v9906 = vadd.f32 0.0, %v9905
      %9907 = vmatmul.bf16.gmra.mxu0 %v9803
      %v9908 = vpop.f32.mrf.mxu0
      %v9909 = vadd.f32 0.0, %v9908
      %v9910 = vpop.f32.mrf.mxu0
      %v9911 = vadd.f32 0.0, %v9910
      %9912 = vmatmul.bf16.gmra.mxu0 %v9806
      %v9913 = vpop.f32.mrf.mxu0
      %v9914 = vadd.f32 0.0, %v9913
      %v9915 = vpop.f32.mrf.mxu0
      %v9916 = vadd.f32 0.0, %v9915
      %9917 = vmatmul.bf16.gmra.mxu0 %v9809
      %v9918 = vpop.f32.mrf.mxu0
      %v9919 = vadd.f32 0.0, %v9918
      %v9920 = vpop.f32.mrf.mxu0
      %v9921 = vadd.f32 0.0, %v9920
      %9922 = vmatmul.bf16.gmra.mxu0 %v9812
      %v9923 = vpop.f32.mrf.mxu0
      %v9924 = vadd.f32 0.0, %v9923
      %v9925 = vpop.f32.mrf.mxu0
      %v9926 = vadd.f32 0.0, %v9925
      %9927 = vmatmul.bf16.gmra.mxu0 %v9815
      %v9928 = vpop.f32.mrf.mxu0
      %v9929 = vadd.f32 0.0, %v9928
      %v9930 = vpop.f32.mrf.mxu0
      %v9931 = vadd.f32 0.0, %v9930
      %9932 = vmatmul.bf16.gmra.mxu0 %v9818
      %v9933 = vpop.f32.mrf.mxu0
      %v9934 = vadd.f32 0.0, %v9933
      %v9935 = vpop.f32.mrf.mxu0
      %v9936 = vadd.f32 0.0, %v9935
      %9937 = vmatmul.bf16.gmra.mxu0 %v9821
      %v9938 = vpop.f32.mrf.mxu0
      %v9939 = vadd.f32 0.0, %v9938
      %v9940 = vpop.f32.mrf.mxu0
      %v9941 = vadd.f32 0.0, %v9940
      %9942 = vmatmul.bf16.gmra.mxu0 %v9824
      %v9943 = vpop.f32.mrf.mxu0
      %v9944 = vadd.f32 0.0, %v9943
      %v9945 = vpop.f32.mrf.mxu0
      %v9946 = vadd.f32 0.0, %v9945
      %9947 = vmatmul.bf16.gmra.mxu0 %v9827
      %v9948 = vpop.f32.mrf.mxu0
      %v9949 = vadd.f32 0.0, %v9948
      %v9950 = vpop.f32.mrf.mxu0
      %v9951 = vadd.f32 0.0, %v9950
      %9952 = vmatmul.bf16.gmra.mxu0 %v9830
      %v9953 = vpop.f32.mrf.mxu0
      %v9954 = vadd.f32 0.0, %v9953
      %v9955 = vpop.f32.mrf.mxu0
      %v9956 = vadd.f32 0.0, %v9955
      %9957 = vmatmul.bf16.gmra.mxu0 %v9833
      %v9958 = vpop.f32.mrf.mxu0
      %v9959 = vadd.f32 0.0, %v9958
      %v9960 = vpop.f32.mrf.mxu0
      %v9961 = vadd.f32 0.0, %v9960
      %9962 = vmatmul.bf16.gmra.mxu0 %v9836
      %v9963 = vpop.f32.mrf.mxu0
      %v9964 = vadd.f32 0.0, %v9963
      %v9965 = vpop.f32.mrf.mxu0
      %v9966 = vadd.f32 0.0, %v9965
      %9967 = vmatmul.bf16.gmra.mxu0 %v9839
      %v9968 = vpop.f32.mrf.mxu0
      %v9969 = vadd.f32 0.0, %v9968
      %v9970 = vpop.f32.mrf.mxu0
      %v9971 = vadd.f32 0.0, %v9970
      %9972 = vdwg.mxu0
      %v9973 = vadd.f32 %v9351, %v9854
      %v9974 = vadd.f32 %v9352, %v9856
      %v9975 = vadd.f32 %v9353, %v9859
      %v9976 = vadd.f32 %v9354, %v9861
      %v9977 = vadd.f32 %v9355, %v9864
      %v9978 = vadd.f32 %v9356, %v9866
      %v9979 = vadd.f32 %v9357, %v9869
      %v9980 = vadd.f32 %v9358, %v9871
      %v9981 = vadd.f32 %v9359, %v9874
      %v9982 = vadd.f32 %v9360, %v9876
      %v9983 = vadd.f32 %v9361, %v9879
      %v9984 = vadd.f32 %v9362, %v9881
      %v9985 = vadd.f32 %v9363, %v9884
      %v9986 = vadd.f32 %v9364, %v9886
      %v9987 = vadd.f32 %v9365, %v9889
      %v9988 = vadd.f32 %v9366, %v9891
      %v9989 = vadd.f32 %v9367, %v9894
      %v9990 = vadd.f32 %v9368, %v9896
      %v9991 = vadd.f32 %v9369, %v9899
      %v9992 = vadd.f32 %v9370, %v9901
      %v9993 = vadd.f32 %v9371, %v9904
      %v9994 = vadd.f32 %v9372, %v9906
      %v9995 = vadd.f32 %v9373, %v9909
      %v9996 = vadd.f32 %v9374, %v9911
      %v9997 = vadd.f32 %v9375, %v9914
      %v9998 = vadd.f32 %v9376, %v9916
      %v9999 = vadd.f32 %v9377, %v9919
      %v10000 = vadd.f32 %v9378, %v9921
      %v10001 = vadd.f32 %v9379, %v9924
      %v10002 = vadd.f32 %v9380, %v9926
      %v10003 = vadd.f32 %v9381, %v9929
      %v10004 = vadd.f32 %v9382, %v9931
      %v10005 = vadd.f32 %v9383, %v9934
      %v10006 = vadd.f32 %v9384, %v9936
      %v10007 = vadd.f32 %v9385, %v9939
      %v10008 = vadd.f32 %v9386, %v9941
      %v10009 = vadd.f32 %v9387, %v9944
      %v10010 = vadd.f32 %v9388, %v9946
      %v10011 = vadd.f32 %v9389, %v9949
      %v10012 = vadd.f32 %v9390, %v9951
      %v10013 = vadd.f32 %v9391, %v9954
      %v10014 = vadd.f32 %v9392, %v9956
      %v10015 = vadd.f32 %v9393, %v9959
      %v10016 = vadd.f32 %v9394, %v9961
      %v10017 = vadd.f32 %v9395, %v9964
      %v10018 = vadd.f32 %v9396, %v9966
      %v10019 = vadd.f32 %v9397, %v9969
      %v10020 = vadd.f32 %v9398, %v9971
      %v10021 = vld [vmem:[%s219 + $0x10] sm:$0xf]
      %v10022 = vld [vmem:[%s219 + $0x14] sm:$0xf]
      %v10023 = vld [vmem:[%s219 + $0x18] sm:$0xf]
      %v10024 = vld [vmem:[%s219 + $0x1c] sm:$0xf]
      %v10025 = vld [vmem:[%s219 + $0x20] sm:$0xf]
      %v10026 = vld [vmem:[%s219 + $0x24] sm:$0xf]
      %v10027 = vld [vmem:[%s219 + $0x28] sm:$0xf]
      %v10028 = vld [vmem:[%s219 + $0x2c] sm:$0xf]
      %v10029 = vld [vmem:[%s219 + $0x30] sm:$0xf]
      %v10030 = vld [vmem:[%s219 + $0x34] sm:$0xf]
      %v10031 = vld [vmem:[%s219 + $0x38] sm:$0xf]
      %v10032 = vld [vmem:[%s219 + $0x3c] sm:$0xf]
      %v10033 = vld [vmem:[%s219 + $0x40] sm:$0xf]
      %v10034 = vld [vmem:[%s219 + $0x44] sm:$0xf]
      %v10035 = vld [vmem:[%s219 + $0x48] sm:$0xf]
      %v10036 = vld [vmem:[%s219 + $0x4c] sm:$0xf]
      %v10037 = vld [vmem:[%s219 + $0x50] sm:$0xf]
      %v10038 = vld [vmem:[%s219 + $0x54] sm:$0xf]
      %v10039 = vld [vmem:[%s219 + $0x58] sm:$0xf]
      %v10040 = vld [vmem:[%s219 + $0x5c] sm:$0xf]
      %v10041 = vld [vmem:[%s219 + $0x60] sm:$0xf]
      %v10042 = vld [vmem:[%s219 + $0x64] sm:$0xf]
      %v10043 = vld [vmem:[%s219 + $0x68] sm:$0xf]
      %v10044 = vld [vmem:[%s219 + $0x6c] sm:$0xf]
      %v10045 = vld [vmem:[%s219 + $0x70] sm:$0xf]
      %v10046 = vld [vmem:[%s219 + $0x74] sm:$0xf]
      %v10047 = vld [vmem:[%s219 + $0x78] sm:$0xf]
      %v10048 = vld [vmem:[%s219 + $0x7c] sm:$0xf]
      %v10049 = vld [vmem:[%s219 + $0x80] sm:$0xf]
      %v10050 = vld [vmem:[%s219 + $0x84] sm:$0xf]
      %v10051 = vld [vmem:[%s219 + $0x88] sm:$0xf]
      %v10052 = vld [vmem:[%s219 + $0x8c] sm:$0xf]
      %v10053 = vld [vmem:[%s219 + $0x90] sm:$0xf]
      %v10054 = vld [vmem:[%s219 + $0x94] sm:$0xf]
      %v10055 = vld [vmem:[%s219 + $0x98] sm:$0xf]
      %v10056 = vld [vmem:[%s219 + $0x9c] sm:$0xf]
      %v10057 = vld [vmem:[%s219 + $0xa0] sm:$0xf]
      %v10058 = vld [vmem:[%s219 + $0xa4] sm:$0xf]
      %v10059 = vld [vmem:[%s219 + $0xa8] sm:$0xf]
      %v10060 = vld [vmem:[%s219 + $0xac] sm:$0xf]
      %v10061 = vld [vmem:[%s219 + $0xb0] sm:$0xf]
      %v10062 = vld [vmem:[%s219 + $0xb4] sm:$0xf]
      %v10063 = vld [vmem:[%s219 + $0xb8] sm:$0xf]
      %v10064 = vld [vmem:[%s219 + $0xbc] sm:$0xf]
      %v10065 = vld [vmem:[%s219 + $0xc0] sm:$0xf]
      %v10066 = vld [vmem:[%s219 + $0xc4] sm:$0xf]
      %v10067 = vld [vmem:[%s219 + $0xc8] sm:$0xf]
      %v10068 = vld [vmem:[%s219 + $0xcc] sm:$0xf]
      %v10069 = vunpack.c.l.bf16 %v10021
      %v10070 = vunpack.c.l.bf16 %v10022
      %v10071 = vunpack.c.l.bf16 %v10023
      %v10072 = vunpack.c.l.bf16 %v10024
      %v10073 = vunpack.c.l.bf16 %v10025
      %v10074 = vunpack.c.l.bf16 %v10026
      %v10075 = vunpack.c.l.bf16 %v10027
      %v10076 = vunpack.c.l.bf16 %v10028
      %v10077 = vunpack.c.l.bf16 %v10029
      %v10078 = vunpack.c.l.bf16 %v10030
      %v10079 = vunpack.c.l.bf16 %v10031
      %v10080 = vunpack.c.l.bf16 %v10032
      %v10081 = vunpack.c.l.bf16 %v10033
      %v10082 = vunpack.c.l.bf16 %v10034
      %v10083 = vunpack.c.l.bf16 %v10035
      %v10084 = vunpack.c.l.bf16 %v10036
      %v10085 = vunpack.c.l.bf16 %v10037
      %v10086 = vunpack.c.l.bf16 %v10038
      %v10087 = vunpack.c.l.bf16 %v10039
      %v10088 = vunpack.c.l.bf16 %v10040
      %v10089 = vunpack.c.l.bf16 %v10041
      %v10090 = vunpack.c.l.bf16 %v10042
      %v10091 = vunpack.c.l.bf16 %v10043
      %v10092 = vunpack.c.l.bf16 %v10044
      %v10093 = vunpack.c.l.bf16 %v10045
      %v10094 = vunpack.c.l.bf16 %v10046
      %v10095 = vunpack.c.l.bf16 %v10047
      %v10096 = vunpack.c.l.bf16 %v10048
      %v10097 = vunpack.c.l.bf16 %v10049
      %v10098 = vunpack.c.l.bf16 %v10050
      %v10099 = vunpack.c.l.bf16 %v10051
      %v10100 = vunpack.c.l.bf16 %v10052
      %v10101 = vunpack.c.l.bf16 %v10053
      %v10102 = vunpack.c.l.bf16 %v10054
      %v10103 = vunpack.c.l.bf16 %v10055
      %v10104 = vunpack.c.l.bf16 %v10056
      %v10105 = vunpack.c.l.bf16 %v10057
      %v10106 = vunpack.c.l.bf16 %v10058
      %v10107 = vunpack.c.l.bf16 %v10059
      %v10108 = vunpack.c.l.bf16 %v10060
      %v10109 = vunpack.c.l.bf16 %v10061
      %v10110 = vunpack.c.l.bf16 %v10062
      %v10111 = vunpack.c.l.bf16 %v10063
      %v10112 = vunpack.c.l.bf16 %v10064
      %v10113 = vunpack.c.l.bf16 %v10065
      %v10114 = vunpack.c.l.bf16 %v10066
      %v10115 = vunpack.c.l.bf16 %v10067
      %v10116 = vunpack.c.l.bf16 %v10068
      %v10117 = vld [vmem:[%s3 + $0x2] sm:$0x1]
      %v10118 = vperm.slane %v10117, 0
      %v10119 = vmul.f32 %v9973, %v10118
      %v10120 = vmul.f32 %v9974, %v10118
      %v10121 = vmul.f32 %v9975, %v10118
      %v10122 = vmul.f32 %v9976, %v10118
      %v10123 = vmul.f32 %v9977, %v10118
      %v10124 = vmul.f32 %v9978, %v10118
      %v10125 = vmul.f32 %v9979, %v10118
      %v10126 = vmul.f32 %v9980, %v10118
      %v10127 = vmul.f32 %v9981, %v10118
      %v10128 = vmul.f32 %v9982, %v10118
      %v10129 = vmul.f32 %v9983, %v10118
      %v10130 = vmul.f32 %v9984, %v10118
      %v10131 = vmul.f32 %v9985, %v10118
      %v10132 = vmul.f32 %v9986, %v10118
      %v10133 = vmul.f32 %v9987, %v10118
      %v10134 = vmul.f32 %v9988, %v10118
      %v10135 = vmul.f32 %v9989, %v10118
      %v10136 = vmul.f32 %v9990, %v10118
      %v10137 = vmul.f32 %v9991, %v10118
      %v10138 = vmul.f32 %v9992, %v10118
      %v10139 = vmul.f32 %v9993, %v10118
      %v10140 = vmul.f32 %v9994, %v10118
      %v10141 = vmul.f32 %v9995, %v10118
      %v10142 = vmul.f32 %v9996, %v10118
      %v10143 = vmul.f32 %v9997, %v10118
      %v10144 = vmul.f32 %v9998, %v10118
      %v10145 = vmul.f32 %v9999, %v10118
      %v10146 = vmul.f32 %v10000, %v10118
      %v10147 = vmul.f32 %v10001, %v10118
      %v10148 = vmul.f32 %v10002, %v10118
      %v10149 = vmul.f32 %v10003, %v10118
      %v10150 = vmul.f32 %v10004, %v10118
      %v10151 = vmul.f32 %v10005, %v10118
      %v10152 = vmul.f32 %v10006, %v10118
      %v10153 = vmul.f32 %v10007, %v10118
      %v10154 = vmul.f32 %v10008, %v10118
      %v10155 = vmul.f32 %v10009, %v10118
      %v10156 = vmul.f32 %v10010, %v10118
      %v10157 = vmul.f32 %v10011, %v10118
      %v10158 = vmul.f32 %v10012, %v10118
      %v10159 = vmul.f32 %v10013, %v10118
      %v10160 = vmul.f32 %v10014, %v10118
      %v10161 = vmul.f32 %v10015, %v10118
      %v10162 = vmul.f32 %v10016, %v10118
      %v10163 = vmul.f32 %v10017, %v10118
      %v10164 = vmul.f32 %v10018, %v10118
      %v10165 = vmul.f32 %v10019, %v10118
      %v10166 = vmul.f32 %v10020, %v10118
      %v10167 = vld [vmem:[%s3 + $0x3] sm:$0x1]
      %v10168 = vperm.slane %v10167, 0
      %v10169 = vmul.f32 %v10069, %v10168
      %v10170 = vmul.f32 %v10070, %v10168
      %v10171 = vmul.f32 %v10071, %v10168
      %v10172 = vmul.f32 %v10072, %v10168
      %v10173 = vmul.f32 %v10073, %v10168
      %v10174 = vmul.f32 %v10074, %v10168
      %v10175 = vmul.f32 %v10075, %v10168
      %v10176 = vmul.f32 %v10076, %v10168
      %v10177 = vmul.f32 %v10077, %v10168
      %v10178 = vmul.f32 %v10078, %v10168
      %v10179 = vmul.f32 %v10079, %v10168
      %v10180 = vmul.f32 %v10080, %v10168
      %v10181 = vmul.f32 %v10081, %v10168
      %v10182 = vmul.f32 %v10082, %v10168
      %v10183 = vmul.f32 %v10083, %v10168
      %v10184 = vmul.f32 %v10084, %v10168
      %v10185 = vmul.f32 %v10085, %v10168
      %v10186 = vmul.f32 %v10086, %v10168
      %v10187 = vmul.f32 %v10087, %v10168
      %v10188 = vmul.f32 %v10088, %v10168
      %v10189 = vmul.f32 %v10089, %v10168
      %v10190 = vmul.f32 %v10090, %v10168
      %v10191 = vmul.f32 %v10091, %v10168
      %v10192 = vmul.f32 %v10092, %v10168
      %v10193 = vmul.f32 %v10093, %v10168
      %v10194 = vmul.f32 %v10094, %v10168
      %v10195 = vmul.f32 %v10095, %v10168
      %v10196 = vmul.f32 %v10096, %v10168
      %v10197 = vmul.f32 %v10097, %v10168
      %v10198 = vmul.f32 %v10098, %v10168
      %v10199 = vmul.f32 %v10099, %v10168
      %v10200 = vmul.f32 %v10100, %v10168
      %v10201 = vmul.f32 %v10101, %v10168
      %v10202 = vmul.f32 %v10102, %v10168
      %v10203 = vmul.f32 %v10103, %v10168
      %v10204 = vmul.f32 %v10104, %v10168
      %v10205 = vmul.f32 %v10105, %v10168
      %v10206 = vmul.f32 %v10106, %v10168
      %v10207 = vmul.f32 %v10107, %v10168
      %v10208 = vmul.f32 %v10108, %v10168
      %v10209 = vmul.f32 %v10109, %v10168
      %v10210 = vmul.f32 %v10110, %v10168
      %v10211 = vmul.f32 %v10111, %v10168
      %v10212 = vmul.f32 %v10112, %v10168
      %v10213 = vmul.f32 %v10113, %v10168
      %v10214 = vmul.f32 %v10114, %v10168
      %v10215 = vmul.f32 %v10115, %v10168
      %v10216 = vmul.f32 %v10116, %v10168
      %v10217 = vadd.f32 %v10119, %v10169
      %v10218 = vadd.f32 %v10120, %v10170
      %v10219 = vadd.f32 %v10121, %v10171
      %v10220 = vadd.f32 %v10122, %v10172
      %v10221 = vadd.f32 %v10123, %v10173
      %v10222 = vadd.f32 %v10124, %v10174
      %v10223 = vadd.f32 %v10125, %v10175
      %v10224 = vadd.f32 %v10126, %v10176
      %v10225 = vadd.f32 %v10127, %v10177
      %v10226 = vadd.f32 %v10128, %v10178
      %v10227 = vadd.f32 %v10129, %v10179
      %v10228 = vadd.f32 %v10130, %v10180
      %v10229 = vadd.f32 %v10131, %v10181
      %v10230 = vadd.f32 %v10132, %v10182
      %v10231 = vadd.f32 %v10133, %v10183
      %v10232 = vadd.f32 %v10134, %v10184
      %v10233 = vadd.f32 %v10135, %v10185
      %v10234 = vadd.f32 %v10136, %v10186
      %v10235 = vadd.f32 %v10137, %v10187
      %v10236 = vadd.f32 %v10138, %v10188
      %v10237 = vadd.f32 %v10139, %v10189
      %v10238 = vadd.f32 %v10140, %v10190
      %v10239 = vadd.f32 %v10141, %v10191
      %v10240 = vadd.f32 %v10142, %v10192
      %v10241 = vadd.f32 %v10143, %v10193
      %v10242 = vadd.f32 %v10144, %v10194
      %v10243 = vadd.f32 %v10145, %v10195
      %v10244 = vadd.f32 %v10146, %v10196
      %v10245 = vadd.f32 %v10147, %v10197
      %v10246 = vadd.f32 %v10148, %v10198
      %v10247 = vadd.f32 %v10149, %v10199
      %v10248 = vadd.f32 %v10150, %v10200
      %v10249 = vadd.f32 %v10151, %v10201
      %v10250 = vadd.f32 %v10152, %v10202
      %v10251 = vadd.f32 %v10153, %v10203
      %v10252 = vadd.f32 %v10154, %v10204
      %v10253 = vadd.f32 %v10155, %v10205
      %v10254 = vadd.f32 %v10156, %v10206
      %v10255 = vadd.f32 %v10157, %v10207
      %v10256 = vadd.f32 %v10158, %v10208
      %v10257 = vadd.f32 %v10159, %v10209
      %v10258 = vadd.f32 %v10160, %v10210
      %v10259 = vadd.f32 %v10161, %v10211
      %v10260 = vadd.f32 %v10162, %v10212
      %v10261 = vadd.f32 %v10163, %v10213
      %v10262 = vadd.f32 %v10164, %v10214
      %v10263 = vadd.f32 %v10165, %v10215
      %v10264 = vadd.f32 %v10166, %v10216
      %v10265 = vld [vmem:[%s3 + $0x4] sm:$0x1]
      %v10266 = vperm.slane %v10265, 0
      %v10267 = vadd.f32 %v10217, %v10266
      %v10268 = vadd.f32 %v10218, %v10266
      %v10269 = vadd.f32 %v10219, %v10266
      %v10270 = vadd.f32 %v10220, %v10266
      %v10271 = vadd.f32 %v10221, %v10266
      %v10272 = vadd.f32 %v10222, %v10266
      %v10273 = vadd.f32 %v10223, %v10266
      %v10274 = vadd.f32 %v10224, %v10266
      %v10275 = vadd.f32 %v10225, %v10266
      %v10276 = vadd.f32 %v10226, %v10266
      %v10277 = vadd.f32 %v10227, %v10266
      %v10278 = vadd.f32 %v10228, %v10266
      %v10279 = vadd.f32 %v10229, %v10266
      %v10280 = vadd.f32 %v10230, %v10266
      %v10281 = vadd.f32 %v10231, %v10266
      %v10282 = vadd.f32 %v10232, %v10266
      %v10283 = vadd.f32 %v10233, %v10266
      %v10284 = vadd.f32 %v10234, %v10266
      %v10285 = vadd.f32 %v10235, %v10266
      %v10286 = vadd.f32 %v10236, %v10266
      %v10287 = vadd.f32 %v10237, %v10266
      %v10288 = vadd.f32 %v10238, %v10266
      %v10289 = vadd.f32 %v10239, %v10266
      %v10290 = vadd.f32 %v10240, %v10266
      %v10291 = vadd.f32 %v10241, %v10266
      %v10292 = vadd.f32 %v10242, %v10266
      %v10293 = vadd.f32 %v10243, %v10266
      %v10294 = vadd.f32 %v10244, %v10266
      %v10295 = vadd.f32 %v10245, %v10266
      %v10296 = vadd.f32 %v10246, %v10266
      %v10297 = vadd.f32 %v10247, %v10266
      %v10298 = vadd.f32 %v10248, %v10266
      %v10299 = vadd.f32 %v10249, %v10266
      %v10300 = vadd.f32 %v10250, %v10266
      %v10301 = vadd.f32 %v10251, %v10266
      %v10302 = vadd.f32 %v10252, %v10266
      %v10303 = vadd.f32 %v10253, %v10266
      %v10304 = vadd.f32 %v10254, %v10266
      %v10305 = vadd.f32 %v10255, %v10266
      %v10306 = vadd.f32 %v10256, %v10266
      %v10307 = vadd.f32 %v10257, %v10266
      %v10308 = vadd.f32 %v10258, %v10266
      %v10309 = vadd.f32 %v10259, %v10266
      %v10310 = vadd.f32 %v10260, %v10266
      %v10311 = vadd.f32 %v10261, %v10266
      %v10312 = vadd.f32 %v10262, %v10266
      %v10313 = vadd.f32 %v10263, %v10266
      %v10314 = vadd.f32 %v10264, %v10266
      %v10315 = vfloor.f32 %v10267
      %v10316 = vfloor.f32 %v10268
      %v10317 = vfloor.f32 %v10269
      %v10318 = vfloor.f32 %v10270
      %v10319 = vfloor.f32 %v10271
      %v10320 = vfloor.f32 %v10272
      %v10321 = vfloor.f32 %v10273
      %v10322 = vfloor.f32 %v10274
      %v10323 = vfloor.f32 %v10275
      %v10324 = vfloor.f32 %v10276
      %v10325 = vfloor.f32 %v10277
      %v10326 = vfloor.f32 %v10278
      %v10327 = vfloor.f32 %v10279
      %v10328 = vfloor.f32 %v10280
      %v10329 = vfloor.f32 %v10281
      %v10330 = vfloor.f32 %v10282
      %v10331 = vfloor.f32 %v10283
      %v10332 = vfloor.f32 %v10284
      %v10333 = vfloor.f32 %v10285
      %v10334 = vfloor.f32 %v10286
      %v10335 = vfloor.f32 %v10287
      %v10336 = vfloor.f32 %v10288
      %v10337 = vfloor.f32 %v10289
      %v10338 = vfloor.f32 %v10290
      %v10339 = vfloor.f32 %v10291
      %v10340 = vfloor.f32 %v10292
      %v10341 = vfloor.f32 %v10293
      %v10342 = vfloor.f32 %v10294
      %v10343 = vfloor.f32 %v10295
      %v10344 = vfloor.f32 %v10296
      %v10345 = vfloor.f32 %v10297
      %v10346 = vfloor.f32 %v10298
      %v10347 = vfloor.f32 %v10299
      %v10348 = vfloor.f32 %v10300
      %v10349 = vfloor.f32 %v10301
      %v10350 = vfloor.f32 %v10302
      %v10351 = vfloor.f32 %v10303
      %v10352 = vfloor.f32 %v10304
      %v10353 = vfloor.f32 %v10305
      %v10354 = vfloor.f32 %v10306
      %v10355 = vfloor.f32 %v10307
      %v10356 = vfloor.f32 %v10308
      %v10357 = vfloor.f32 %v10309
      %v10358 = vfloor.f32 %v10310
      %v10359 = vfloor.f32 %v10311
      %v10360 = vfloor.f32 %v10312
      %v10361 = vfloor.f32 %v10313
      %v10362 = vfloor.f32 %v10314
      %v10363 = vmax.f32 %v10315, 0.0
      %v10364 = vmax.f32 %v10316, 0.0
      %v10365 = vmax.f32 %v10317, 0.0
      %v10366 = vmax.f32 %v10318, 0.0
      %v10367 = vmax.f32 %v10319, 0.0
      %v10368 = vmax.f32 %v10320, 0.0
      %v10369 = vmax.f32 %v10321, 0.0
      %v10370 = vmax.f32 %v10322, 0.0
      %v10371 = vmax.f32 %v10323, 0.0
      %v10372 = vmax.f32 %v10324, 0.0
      %v10373 = vmax.f32 %v10325, 0.0
      %v10374 = vmax.f32 %v10326, 0.0
      %v10375 = vmax.f32 %v10327, 0.0
      %v10376 = vmax.f32 %v10328, 0.0
      %v10377 = vmax.f32 %v10329, 0.0
      %v10378 = vmax.f32 %v10330, 0.0
      %v10379 = vmax.f32 %v10331, 0.0
      %v10380 = vmax.f32 %v10332, 0.0
      %v10381 = vmax.f32 %v10333, 0.0
      %v10382 = vmax.f32 %v10334, 0.0
      %v10383 = vmax.f32 %v10335, 0.0
      %v10384 = vmax.f32 %v10336, 0.0
      %v10385 = vmax.f32 %v10337, 0.0
      %v10386 = vmax.f32 %v10338, 0.0
      %v10387 = vmax.f32 %v10339, 0.0
      %v10388 = vmax.f32 %v10340, 0.0
      %v10389 = vmax.f32 %v10341, 0.0
      %v10390 = vmax.f32 %v10342, 0.0
      %v10391 = vmax.f32 %v10343, 0.0
      %v10392 = vmax.f32 %v10344, 0.0
      %v10393 = vmax.f32 %v10345, 0.0
      %v10394 = vmax.f32 %v10346, 0.0
      %v10395 = vmax.f32 %v10347, 0.0
      %v10396 = vmax.f32 %v10348, 0.0
      %v10397 = vmax.f32 %v10349, 0.0
      %v10398 = vmax.f32 %v10350, 0.0
      %v10399 = vmax.f32 %v10351, 0.0
      %v10400 = vmax.f32 %v10352, 0.0
      %v10401 = vmax.f32 %v10353, 0.0
      %v10402 = vmax.f32 %v10354, 0.0
      %v10403 = vmax.f32 %v10355, 0.0
      %v10404 = vmax.f32 %v10356, 0.0
      %v10405 = vmax.f32 %v10357, 0.0
      %v10406 = vmax.f32 %v10358, 0.0
      %v10407 = vmax.f32 %v10359, 0.0
      %v10408 = vmax.f32 %v10360, 0.0
      %v10409 = vmax.f32 %v10361, 0.0
      %v10410 = vmax.f32 %v10362, 0.0
      %v10411 = vmin.f32 %v10363, 32.0
      %v10412 = vmin.f32 %v10364, 32.0
      %v10413 = vmin.f32 %v10365, 32.0
      %v10414 = vmin.f32 %v10366, 32.0
      %v10415 = vmin.f32 %v10367, 32.0
      %v10416 = vmin.f32 %v10368, 32.0
      %v10417 = vmin.f32 %v10369, 32.0
      %v10418 = vmin.f32 %v10370, 32.0
      %v10419 = vmin.f32 %v10371, 32.0
      %v10420 = vmin.f32 %v10372, 32.0
      %v10421 = vmin.f32 %v10373, 32.0
      %v10422 = vmin.f32 %v10374, 32.0
      %v10423 = vmin.f32 %v10375, 32.0
      %v10424 = vmin.f32 %v10376, 32.0
      %v10425 = vmin.f32 %v10377, 32.0
      %v10426 = vmin.f32 %v10378, 32.0
      %v10427 = vmin.f32 %v10379, 32.0
      %v10428 = vmin.f32 %v10380, 32.0
      %v10429 = vmin.f32 %v10381, 32.0
      %v10430 = vmin.f32 %v10382, 32.0
      %v10431 = vmin.f32 %v10383, 32.0
      %v10432 = vmin.f32 %v10384, 32.0
      %v10433 = vmin.f32 %v10385, 32.0
      %v10434 = vmin.f32 %v10386, 32.0
      %v10435 = vmin.f32 %v10387, 32.0
      %v10436 = vmin.f32 %v10388, 32.0
      %v10437 = vmin.f32 %v10389, 32.0
      %v10438 = vmin.f32 %v10390, 32.0
      %v10439 = vmin.f32 %v10391, 32.0
      %v10440 = vmin.f32 %v10392, 32.0
      %v10441 = vmin.f32 %v10393, 32.0
      %v10442 = vmin.f32 %v10394, 32.0
      %v10443 = vmin.f32 %v10395, 32.0
      %v10444 = vmin.f32 %v10396, 32.0
      %v10445 = vmin.f32 %v10397, 32.0
      %v10446 = vmin.f32 %v10398, 32.0
      %v10447 = vmin.f32 %v10399, 32.0
      %v10448 = vmin.f32 %v10400, 32.0
      %v10449 = vmin.f32 %v10401, 32.0
      %v10450 = vmin.f32 %v10402, 32.0
      %v10451 = vmin.f32 %v10403, 32.0
      %v10452 = vmin.f32 %v10404, 32.0
      %v10453 = vmin.f32 %v10405, 32.0
      %v10454 = vmin.f32 %v10406, 32.0
      %v10455 = vmin.f32 %v10407, 32.0
      %v10456 = vmin.f32 %v10408, 32.0
      %v10457 = vmin.f32 %v10409, 32.0
      %v10458 = vmin.f32 %v10410, 32.0
      %v10459 = vld [vmem:[%s3 + $0x5] sm:$0x1]
      %v10460 = vperm.slane %v10459, 0
      %v10461 = vmul.f32 %v10411, %v10460
      %v10462 = vmul.f32 %v10412, %v10460
      %v10463 = vmul.f32 %v10413, %v10460
      %v10464 = vmul.f32 %v10414, %v10460
      %v10465 = vmul.f32 %v10415, %v10460
      %v10466 = vmul.f32 %v10416, %v10460
      %v10467 = vmul.f32 %v10417, %v10460
      %v10468 = vmul.f32 %v10418, %v10460
      %v10469 = vmul.f32 %v10419, %v10460
      %v10470 = vmul.f32 %v10420, %v10460
      %v10471 = vmul.f32 %v10421, %v10460
      %v10472 = vmul.f32 %v10422, %v10460
      %v10473 = vmul.f32 %v10423, %v10460
      %v10474 = vmul.f32 %v10424, %v10460
      %v10475 = vmul.f32 %v10425, %v10460
      %v10476 = vmul.f32 %v10426, %v10460
      %v10477 = vmul.f32 %v10427, %v10460
      %v10478 = vmul.f32 %v10428, %v10460
      %v10479 = vmul.f32 %v10429, %v10460
      %v10480 = vmul.f32 %v10430, %v10460
      %v10481 = vmul.f32 %v10431, %v10460
      %v10482 = vmul.f32 %v10432, %v10460
      %v10483 = vmul.f32 %v10433, %v10460
      %v10484 = vmul.f32 %v10434, %v10460
      %v10485 = vmul.f32 %v10435, %v10460
      %v10486 = vmul.f32 %v10436, %v10460
      %v10487 = vmul.f32 %v10437, %v10460
      %v10488 = vmul.f32 %v10438, %v10460
      %v10489 = vmul.f32 %v10439, %v10460
      %v10490 = vmul.f32 %v10440, %v10460
      %v10491 = vmul.f32 %v10441, %v10460
      %v10492 = vmul.f32 %v10442, %v10460
      %v10493 = vmul.f32 %v10443, %v10460
      %v10494 = vmul.f32 %v10444, %v10460
      %v10495 = vmul.f32 %v10445, %v10460
      %v10496 = vmul.f32 %v10446, %v10460
      %v10497 = vmul.f32 %v10447, %v10460
      %v10498 = vmul.f32 %v10448, %v10460
      %v10499 = vmul.f32 %v10449, %v10460
      %v10500 = vmul.f32 %v10450, %v10460
      %v10501 = vmul.f32 %v10451, %v10460
      %v10502 = vmul.f32 %v10452, %v10460
      %v10503 = vmul.f32 %v10453, %v10460
      %v10504 = vmul.f32 %v10454, %v10460
      %v10505 = vmul.f32 %v10455, %v10460
      %v10506 = vmul.f32 %v10456, %v10460
      %v10507 = vmul.f32 %v10457, %v10460
      %v10508 = vmul.f32 %v10458, %v10460
      %10509 = vst.msk [vmem:[%s224] sm:$0xff] %vm398, %v10461
      %10510 = vst.msk [vmem:[%s224 + $0x8] sm:$0xff] %vm398, %v10462
      %10511 = vst.msk [vmem:[%s224 + $0x10] sm:$0xff] %vm398, %v10463
      %10512 = vst.msk [vmem:[%s224 + $0x18] sm:$0xff] %vm398, %v10464
      %10513 = vst.msk [vmem:[%s224 + $0x20] sm:$0xff] %vm398, %v10465
      %10514 = vst.msk [vmem:[%s224 + $0x28] sm:$0xff] %vm398, %v10466
      %10515 = vst.msk [vmem:[%s224 + $0x30] sm:$0xff] %vm398, %v10467
      %10516 = vst.msk [vmem:[%s224 + $0x38] sm:$0xff] %vm398, %v10468
      %10517 = vst.msk [vmem:[%s224 + $0x40] sm:$0xff] %vm398, %v10469
      %10518 = vst.msk [vmem:[%s224 + $0x48] sm:$0xff] %vm398, %v10470
      %10519 = vst.msk [vmem:[%s224 + $0x50] sm:$0xff] %vm398, %v10471
      %10520 = vst.msk [vmem:[%s224 + $0x58] sm:$0xff] %vm398, %v10472
      %10521 = vst.msk [vmem:[%s224 + $0x60] sm:$0xff] %vm398, %v10473
      %10522 = vst.msk [vmem:[%s224 + $0x68] sm:$0xff] %vm398, %v10474
      %10523 = vst.msk [vmem:[%s224 + $0x70] sm:$0xff] %vm398, %v10475
      %10524 = vst.msk [vmem:[%s224 + $0x78] sm:$0xff] %vm398, %v10476
      %10525 = vst.msk [vmem:[%s224 + $0x80] sm:$0xff] %vm398, %v10477
      %10526 = vst.msk [vmem:[%s224 + $0x88] sm:$0xff] %vm398, %v10478
      %10527 = vst.msk [vmem:[%s224 + $0x90] sm:$0xff] %vm398, %v10479
      %10528 = vst.msk [vmem:[%s224 + $0x98] sm:$0xff] %vm398, %v10480
      %10529 = vst.msk [vmem:[%s224 + $0xa0] sm:$0xff] %vm398, %v10481
      %10530 = vst.msk [vmem:[%s224 + $0xa8] sm:$0xff] %vm398, %v10482
      %10531 = vst.msk [vmem:[%s224 + $0xb0] sm:$0xff] %vm398, %v10483
      %10532 = vst.msk [vmem:[%s224 + $0xb8] sm:$0xff] %vm398, %v10484
      %10533 = vst.msk [vmem:[%s224 + $0xc0] sm:$0xff] %vm398, %v10485
      %10534 = vst.msk [vmem:[%s224 + $0xc8] sm:$0xff] %vm398, %v10486
      %10535 = vst.msk [vmem:[%s224 + $0xd0] sm:$0xff] %vm398, %v10487
      %10536 = vst.msk [vmem:[%s224 + $0xd8] sm:$0xff] %vm398, %v10488
      %10537 = vst.msk [vmem:[%s224 + $0xe0] sm:$0xff] %vm398, %v10489
      %10538 = vst.msk [vmem:[%s224 + $0xe8] sm:$0xff] %vm398, %v10490
      %10539 = vst.msk [vmem:[%s224 + $0xf0] sm:$0xff] %vm398, %v10491
      %10540 = vst.msk [vmem:[%s224 + $0xf8] sm:$0xff] %vm398, %v10492
      %10541 = vst.msk [vmem:[%s224 + $0x100] sm:$0xff] %vm398, %v10493
      %10542 = vst.msk [vmem:[%s224 + $0x108] sm:$0xff] %vm398, %v10494
      %10543 = vst.msk [vmem:[%s224 + $0x110] sm:$0xff] %vm398, %v10495
      %10544 = vst.msk [vmem:[%s224 + $0x118] sm:$0xff] %vm398, %v10496
      %10545 = vst.msk [vmem:[%s224 + $0x120] sm:$0xff] %vm398, %v10497
      %10546 = vst.msk [vmem:[%s224 + $0x128] sm:$0xff] %vm398, %v10498
      %10547 = vst.msk [vmem:[%s224 + $0x130] sm:$0xff] %vm398, %v10499
      %10548 = vst.msk [vmem:[%s224 + $0x138] sm:$0xff] %vm398, %v10500
      %10549 = vst.msk [vmem:[%s224 + $0x140] sm:$0xff] %vm398, %v10501
      %10550 = vst.msk [vmem:[%s224 + $0x148] sm:$0xff] %vm398, %v10502
      %10551 = vst.msk [vmem:[%s224 + $0x150] sm:$0xff] %vm398, %v10503
      %10552 = vst.msk [vmem:[%s224 + $0x158] sm:$0xff] %vm398, %v10504
      %10553 = vst.msk [vmem:[%s224 + $0x160] sm:$0xff] %vm398, %v10505
      %10554 = vst.msk [vmem:[%s224 + $0x168] sm:$0xff] %vm398, %v10506
      %10555 = vst.msk [vmem:[%s224 + $0x170] sm:$0xff] %vm398, %v10507
      %10556 = vst.msk [vmem:[%s224 + $0x178] sm:$0xff] %vm398, %v10508
      %p10557 = scmp.lt.s32.totalorder %s16, 1
      %s10558 = scalar_select %p10557, %s16, 1
      %s10559 = smul.addr %s10558, 48
      %s10560 = smul.addr %s10559, 8
      %s10561 = scalar_lea.vmem %s5, %s10560
      // Predicated region
      $region41: #{tpu_custom_call.1} parent=39 // pred_check
        %p10562 = pneg %p144
      $region42: #{tpu_custom_call.1} parent=39 // pred_check_branch
        %10564 = sbr.rel (%p10562) target = $region44
      $region43: #{tpu_custom_call.1} parent=39 // pred_region
        _
      $region44: #{tpu_custom_call.1} parent=39 // pred_fallthru
        _
    $region40: #{tpu_custom_call.1} parent=5 // pred_fallthru
      _
    %p10565 = scmp.le.s32.totalorder 2, %s11
    // Predicated region
    $region45: #{tpu_custom_call.1} parent=5 // pred_check
      %p10566 = pneg %p10565
    $region46: #{tpu_custom_call.1} parent=5 // pred_check_branch
      %10568 = sbr.rel (%p10566) target = $region48
    $region47: #{tpu_custom_call.1} parent=5 // pred_region
      %s10569 = ssub.s32 %s11, 2
      // Predicated region
      $region49: #{tpu_custom_call.1} parent=47 // pred_check
        %p10570 = pneg %p150
      $region50: #{tpu_custom_call.1} parent=47 // pred_check_branch
        %10572 = sbr.rel (%p10570) target = $region52
      $region51: #{tpu_custom_call.1} parent=47 // pred_region
        %p10573 = scmp.lt.s32.totalorder %s17, 1
        %s10574 = scalar_select %p10573, %s17, 1
        %s10575 = smul.addr %s10574, 48
        %s10576 = smul.addr %s10575, 8
        %s10577 = scalar_lea.vmem %s5, %s10576
      $region52: #{tpu_custom_call.1} parent=47 // pred_fallthru
        _
    $region48: #{tpu_custom_call.1} parent=5 // pred_fallthru
      _
  $region6: #{tpu_custom_call.1} parent=0 // loop_footer
    %s15 = sadd.s32 1, %s11
  $region7: #{tpu_custom_call.1} parent=0 // loop_footer_branch
    %10 = sbr.rel target = $region3
  $region8: #{tpu_custom_call.1} parent=0 // loop_exit
    _

</llo_original>
